<compile_context>
chip_gen: v7x
topology: tpu7x:2x2x1
jax: 0.10.0
libtpu: 0.0.40
codegen_flags: <defaults>
</compile_context>

<pallas_src>
import math

import jax
import jax.numpy as jnp
from jax.experimental import pallas as pl
from jax.experimental.pallas import tpu as pltpu


# ----------------------------------------------------------------------------
# Kernel
# ----------------------------------------------------------------------------
def _pos_emb_kernel(pos_ref, freq_ref, phase_ref, out_ref):
    # pos_ref  : (TL, 1)    f32   positions for this tile
    # freq_ref : (1, demb)  f32   [inv_freq | inv_freq]
    # phase_ref: (1, demb)  f32   [0 ... 0 | pi/2 ... pi/2]
    # out_ref  : (TL, demb) out_dtype
    #
    # cos(x) == sin(x + pi/2): one sin over the full width gives a single
    # unmasked, lane-dense full-block store.
    arg = pos_ref[...] * freq_ref[...] + phase_ref[...]          # (TL, demb) f32
    out_ref[...] = jnp.sin(arg).astype(out_ref.dtype)


# ----------------------------------------------------------------------------
# Tiling / VMEM helpers
# ----------------------------------------------------------------------------
_VMEM_BUDGET = 48 << 20          # conservative vs v7x's 64 MiB physical VMEM
_SMALL_FAST_PATH_ELEMS = 1 << 16  # below this, pure-JAX (launch cost dominates)


def _round_up(x, m):
    return ((x + m - 1) // m) * m


def _vmem_estimate(tl, demb, itemsize):
    """Honest per-call VMEM estimate (lane padding + in-kernel temporaries)."""
    demb_pad = _round_up(demb, 128)
    out_block = tl * demb_pad * itemsize          # output tile
    pos_block = tl * 128 * 4                      # (tl,1) f32 lane-pads to 128
    const_block = 8 * demb_pad * 4                # (1,demb) pads to (8,demb_pad)
    temps = 3 * tl * demb_pad * 4                 # arg + sin + cast temporaries
    # double-buffered inputs/outputs + temps
    return 2 * (out_block + pos_block + 2 * const_block) + temps


def _choose_tile(L, demb, itemsize, tile_l):
    if L <= 8:
        return L                                  # single tiny tile
    # At least 4 grid steps when L allows: engages v7x's 2 TCs on the
    # "parallel" axis and gives the pipeline something to double-buffer.
    tl = min(tile_l, max(8, pl.cdiv(L, 4)))
    tl = _round_up(tl, 8)
    # Shrink if the honest VMEM estimate would blow the budget (huge demb).
    while tl > 8 and _vmem_estimate(tl, demb, itemsize) > _VMEM_BUDGET:
        tl = max(8, _round_up(tl // 2, 8))
    return tl


# ----------------------------------------------------------------------------
# Public wrapper (== PositionalEmbedding.forward)
# ----------------------------------------------------------------------------
def positional_embedding(pos_seq, inv_freq, bsz=None,
                         out_dtype=jnp.float32, tile_l=1024):
    """pos_seq: (L,) float, inv_freq: (demb/2,) float -> (L, 1|bsz, demb)."""
    L = pos_seq.shape[0]
    half = inv_freq.shape[0]
    demb = 2 * half
    itemsize = jnp.dtype(out_dtype).itemsize

    pos_f32 = pos_seq.astype(jnp.float32)
    inv_f32 = inv_freq.astype(jnp.float32)

    if L * demb < _SMALL_FAST_PATH_ELEMS:
        # Tiny-shape fast path: let XLA fuse it into the consumer.
        sinusoid = pos_f32[:, None] * inv_f32[None, :]
        pos_emb = jnp.concatenate(
            [jnp.sin(sinusoid), jnp.cos(sinusoid)], axis=-1).astype(out_dtype)
    else:
        pos2d = pos_f32.reshape(L, 1)
        freq_cat = jnp.concatenate([inv_f32, inv_f32]).reshape(1, demb)
        phase = jnp.concatenate(
            [jnp.zeros((half,), jnp.float32),
             jnp.full((half,), jnp.float32(math.pi / 2))]).reshape(1, demb)

        tl = _choose_tile(L, demb, itemsize, tile_l)
        grid = (pl.cdiv(L, tl),)

        cost = pl.CostEstimate(
            flops=2 * L * demb,                    # mul + add per element
            transcendentals=L * demb,              # one sin per element
            bytes_accessed=L * demb * itemsize + L * 4 + 2 * demb * 4,
        )

        vmem_bytes = _vmem_estimate(tl, demb, itemsize)
        vmem_limit = int(min(max(vmem_bytes + (2 << 20), 8 << 20), 56 << 20))

        pos_emb = pl.pallas_call(
            _pos_emb_kernel,
            out_shape=jax.ShapeDtypeStruct((L, demb), out_dtype),
            grid=grid,
            in_specs=[
                pl.BlockSpec((tl, 1), lambda i: (i, 0)),
                pl.BlockSpec((1, demb), lambda i: (0, 0)),
                pl.BlockSpec((1, demb), lambda i: (0, 0)),
            ],
            out_specs=pl.BlockSpec((tl, demb), lambda i: (i, 0)),
            compiler_params=pltpu.CompilerParams(
                dimension_semantics=("parallel",),   # v7x: shard L over 2 TCs
                vmem_limit_bytes=vmem_limit,
            ),
            cost_estimate=cost,
        )(pos2d, freq_cat, phase)

    pos_emb = pos_emb[:, None, :]                    # (L, 1, demb)
    if bsz is not None:
        # torch .expand(-1, bsz, -1): kept as an implicit broadcast so XLA
        # fuses it into the consumer instead of materializing it.
        pos_emb = jnp.broadcast_to(pos_emb, (L, bsz, demb))
    return pos_emb


def make_inv_freq(demb):
    # Matches: 1 / 10000 ** (torch.arange(0.0, demb, 2.0) / demb)
    return 1.0 / (10000.0 ** (jnp.arange(0.0, demb, 2.0) / demb))


def _reference(pos_seq, inv_freq, bsz=None):
    sinusoid = pos_seq[:, None] * inv_freq[None, :]
    ref = jnp.concatenate([jnp.sin(sinusoid), jnp.cos(sinusoid)], axis=-1)
    ref = ref[:, None, :]
    if bsz is not None:
        ref = jnp.broadcast_to(ref, (pos_seq.shape[0], bsz, ref.shape[-1]))
    return ref


if __name__ == "__main__":
    key = jax.random.PRNGKey(0)
    # inv_freq is a deterministic buffer (per __init__); key kept for protocol.
    _ = jax.random.normal(key, (1,))

    # --- small case (module-typical sizes): hits the tiny-shape fast path ---
    demb = 32
    seq_len = 8
    bsz = 2
    pos_seq = jnp.arange(seq_len - 1, -1, -1, dtype=jnp.float32)  # descending
    inv_freq = make_inv_freq(demb)

    out = positional_embedding(pos_seq, inv_freq, bsz=bsz)
    out = jax.block_until_ready(out)
    ref = _reference(pos_seq, inv_freq, bsz=bsz)
    assert out.shape == (seq_len, bsz, demb)
    assert jnp.allclose(out, ref, atol=1e-6)

    # --- tiled case: exercises the multi-step L-grid / pipelined path -------
    demb2 = 256
    L2 = 1024
    pos_seq2 = jnp.arange(L2 - 1, -1, -1, dtype=jnp.float32)
    inv_freq2 = make_inv_freq(demb2)
    out2 = positional_embedding(pos_seq2, inv_freq2, bsz=None)
    out2 = jax.block_until_ready(out2)
    ref2 = _reference(pos_seq2, inv_freq2, bsz=None)
    assert out2.shape == (L2, 1, demb2)
    # cos(x)=sin(x+pi/2) fusion + large-arg range reduction -> ~1e-4 abs error
    assert jnp.allclose(out2, ref2, atol=5e-4)

    # --- ragged last tile (L not a multiple of the tile) ---------------------
    L3 = 1000
    pos_seq3 = jnp.arange(L3 - 1, -1, -1, dtype=jnp.float32)
    out3 = positional_embedding(pos_seq3, inv_freq2, bsz=3)
    out3 = jax.block_until_ready(out3)
    ref3 = _reference(pos_seq3, inv_freq2, bsz=3)
    assert out3.shape == (L3, 3, demb2)
    assert jnp.allclose(out3, ref3, atol=5e-4)

    # --- bf16 output path (halved HBM writeback; still one lane-dense store) -
    out4 = positional_embedding(pos_seq2, inv_freq2, bsz=None,
                                out_dtype=jnp.bfloat16)
    out4 = jax.block_until_ready(out4)
    assert out4.dtype == jnp.bfloat16
    assert jnp.allclose(out4.astype(jnp.float32), ref2, atol=2e-2)

    print("KERNEL_OK")
</pallas_src>

<mosaic_0001>
module attributes {stable_mosaic.version = 11 : i64} {
  func.func @_pos_emb_kernel(%arg0: i32, %arg1: memref<256x1xf32, #tpu.memory_space<vmem>>, %arg2: memref<1x256xf32, #tpu.memory_space<vmem>>, %arg3: memref<1x256xf32, #tpu.memory_space<vmem>>, %arg4: memref<256x256xf32, #tpu.memory_space<vmem>>) attributes {dimension_semantics = [#tpu.dimension_semantics<parallel>], iteration_bounds = array<i64: 4>, scalar_prefetch = 0 : i64, scratch_operands = 0 : i64, tpu.core_type = #tpu.core_type<tc>, window_params = [{transform_indices = @transform_0, window_bounds = array<i64: 256, 1>}, {pipeline_mode = #tpu.pipeline_mode<synchronous>, transform_indices = @transform_1, window_bounds = array<i64: 1, 256>}, {pipeline_mode = #tpu.pipeline_mode<synchronous>, transform_indices = @transform_2, window_bounds = array<i64: 1, 256>}, {transform_indices = @transform_3, window_bounds = array<i64: 256, 256>}]} {
    %c0 = arith.constant 0 : index
    %c0_0 = arith.constant 0 : index
    %0 = vector.load %arg1[%c0, %c0_0] : memref<256x1xf32, #tpu.memory_space<vmem>>, vector<256x1xf32>
    %c0_1 = arith.constant 0 : index
    %c0_2 = arith.constant 0 : index
    %1 = vector.load %arg2[%c0_1, %c0_2] : memref<1x256xf32, #tpu.memory_space<vmem>>, vector<1x256xf32>
    %2 = vector.broadcast %0 : vector<256x1xf32> to vector<256x256xf32>
    %3 = vector.broadcast %1 : vector<1x256xf32> to vector<256x256xf32>
    %4 = arith.mulf %2, %3 : vector<256x256xf32>
    %c0_3 = arith.constant 0 : index
    %c0_4 = arith.constant 0 : index
    %5 = vector.load %arg3[%c0_3, %c0_4] : memref<1x256xf32, #tpu.memory_space<vmem>>, vector<1x256xf32>
    %6 = vector.broadcast %5 : vector<1x256xf32> to vector<256x256xf32>
    %7 = arith.addf %4, %6 : vector<256x256xf32>
    %8 = math.sin %7 : vector<256x256xf32>
    %c0_5 = arith.constant 0 : index
    %c0_6 = arith.constant 0 : index
    %9 = vector.load %arg4[%c0_5, %c0_6] : memref<256x256xf32, #tpu.memory_space<vmem>>, vector<256x256xf32>
    tpu.vector_store %arg4[%c0_5, %c0_6], %8 {strides = array<i32>} : memref<256x256xf32, #tpu.memory_space<vmem>>, vector<256x256xf32>,
    return
  }
  func.func @transform_0(%arg0: i32) -> (i32, i32) {
    %c0_i32 = arith.constant 0 : i32
    %c0_i32_0 = arith.constant 0 : i32
    return %arg0, %c0_i32 : i32, i32
  }
  func.func @transform_1(%arg0: i32) -> (i32, i32) {
    %c0_i32 = arith.constant 0 : i32
    %c0_i32_0 = arith.constant 0 : i32
    %c0_i32_1 = arith.constant 0 : i32
    return %c0_i32, %c0_i32_0 : i32, i32
  }
  func.func @transform_2(%arg0: i32) -> (i32, i32) {
    %c0_i32 = arith.constant 0 : i32
    %c0_i32_0 = arith.constant 0 : i32
    %c0_i32_1 = arith.constant 0 : i32
    return %c0_i32, %c0_i32_0 : i32, i32
  }
  func.func @transform_3(%arg0: i32) -> (i32, i32) {
    %c0_i32 = arith.constant 0 : i32
    %c0_i32_0 = arith.constant 0 : i32
    return %arg0, %c0_i32 : i32, i32
  }
}

</mosaic_0001>

<llo_original>
// kernel: tpu_custom_call.1
$region0: #{tpu_custom_call.1}
  #allocation0 [shape = 'u32[]', space=smem, size = 0x4, offset = 0x4, fixed_abs, tag = 'smem constant byte address 0x4 - core index']
  #allocation1 [shape = 'u32[144,128]{1,0:T(1,128)}', space=vmem, size = 0x12000, scoped, tag = 'internal scratch']
  %s0 = inlined_call_operand.vmem [shape: f32[1024,1], index: 0, kind: input, shape index: {}]
  %s1 = inlined_call_operand.vmem [shape: f32[1,256], index: 1, kind: input, shape index: {}]
  %s2 = inlined_call_operand.vmem [shape: f32[1,256], index: 2, kind: input, shape index: {}]
  %s3 = inlined_call_operand.hbm [shape: f32[1024,256], index: 3, kind: output, shape index: {}]
  %s4 = sld [smem:[#allocation0]]
  $region45: #{tpu_custom_call.1} parent=0
    _
  %s6 = ssub.s32 1, %s4
  %s7 = scalar_select 0, %s6, %s4
  $region1: #{tpu_custom_call.1} parent=0
    #allocation2 [shape = 'u8[524288]{0}', space=vmem, size = 0x80000, scoped, tag = 'output window, operand 0']
    #allocation3 [shape = 's32[2]{0}', space=sflag, size = 0x8, scoped, tag = 'scoped memory for tpu_custom_call.1']
    %8 = vsyncpa [#allocation3], 0
    %s9 = scalar_lea.sflag [#allocation3], 1
    %10 = vsyncpa %s9, 0
    loop: start=0, step=1, limit=6
    $region2: #{tpu_custom_call.1} parent=1 // loop_pre_header
      _
    $region3: #{tpu_custom_call.1} parent=1 // loop_header
      %s12 = sphi 0, %s16
      %p13 = scmp.ge.s32.totalorder %s12, 6
      %s22 = sphi 0, %s24
      %s25 = sphi 0, %s22
      %s26 = sphi 0, %s25
      %s42 = sphi 0, %s26
      %s46 = sphi 0, %s46
      %s48 = sphi 0, %s46
      %s49 = sphi 0, %s48
      %s63 = sphi 0, %s49
      %s67 = sphi 0, %s67
      %s69 = sphi 0, %s67
      %s70 = sphi 0, %s69
      %s84 = sphi 0, %s70
      %s90 = sphi 0, %s92
      %s93 = sphi 0, %s90
      %s94 = sphi 0, %s93
      %s110 = sphi 0, %s94
    $region4: #{tpu_custom_call.1} parent=1 // loop_header_branch
      %15 = sbr.rel (%p13) target = $region8
    $region5: #{tpu_custom_call.1} parent=1 // loop_body
      %s17 = ssub.s32 %s12, 1
      %s18 = ssub.s32 %s12, 2
      %s19 = sadd.s32 %s12, 1
      %s20 = ssub.s32 %s12, %s19
      %p21 = scmp.eq.s32.totalorder %s20, 0
      %s23 = sadd.s32 %s22, 1
      %s24 = scalar_select %p21, %s22, %s23
      %p27 = pneg %p21
      %p28 = scmp.eq.s32.totalorder %s12, 3
      %p29 = por %p27, %p28
      %p30 = scmp.ne.s32.totalorder %s22, %s25
      %p31 = scmp.eq.s32.totalorder %s12, 0
      %p32 = por %p30, %p31
      %p33 = scmp.ne.s32.totalorder %s22, %s25
      %p34 = scmp.eq.s32.totalorder %s17, 3
      %p35 = por %p33, %p34
      %p36 = scmp.ne.s32.totalorder %s25, %s26
      %p37 = scmp.eq.s32.totalorder %s17, 0
      %p38 = por %p36, %p37
      %p39 = scmp.ne.s32.totalorder %s25, %s26
      %p40 = scmp.eq.s32.totalorder %s18, 3
      %p41 = por %p39, %p40
      %p43 = scmp.ne.s32.totalorder %s26, %s42
      %p44 = scmp.eq.s32.totalorder %s18, 0
      %p45 = por %p43, %p44
      %s47 = sadd.s32 %s46, 1
      %p50 = scmp.eq.s32.totalorder %s12, 3
      %p51 = scmp.ne.s32.totalorder %s46, %s48
      %p52 = scmp.eq.s32.totalorder %s12, 0
      %p53 = por %p51, %p52
      %p54 = scmp.ne.s32.totalorder %s46, %s48
      %p55 = scmp.eq.s32.totalorder %s17, 3
      %p56 = por %p54, %p55
      %p57 = scmp.ne.s32.totalorder %s48, %s49
      %p58 = scmp.eq.s32.totalorder %s17, 0
      %p59 = por %p57, %p58
      %p60 = scmp.ne.s32.totalorder %s48, %s49
      %p61 = scmp.eq.s32.totalorder %s18, 3
      %p62 = por %p60, %p61
      %p64 = scmp.ne.s32.totalorder %s49, %s63
      %p65 = scmp.eq.s32.totalorder %s18, 0
      %p66 = por %p64, %p65
      %s68 = sadd.s32 %s67, 1
      %p71 = scmp.eq.s32.totalorder %s12, 3
      %p72 = scmp.ne.s32.totalorder %s67, %s69
      %p73 = scmp.eq.s32.totalorder %s12, 0
      %p74 = por %p72, %p73
      %p75 = scmp.ne.s32.totalorder %s67, %s69
      %p76 = scmp.eq.s32.totalorder %s17, 3
      %p77 = por %p75, %p76
      %p78 = scmp.ne.s32.totalorder %s69, %s70
      %p79 = scmp.eq.s32.totalorder %s17, 0
      %p80 = por %p78, %p79
      %p81 = scmp.ne.s32.totalorder %s69, %s70
      %p82 = scmp.eq.s32.totalorder %s18, 3
      %p83 = por %p81, %p82
      %p85 = scmp.ne.s32.totalorder %s70, %s84
      %p86 = scmp.eq.s32.totalorder %s18, 0
      %p87 = por %p85, %p86
      %s88 = ssub.s32 %s12, %s19
      %p89 = scmp.eq.s32.totalorder %s88, 0
      %s91 = sadd.s32 %s90, 1
      %s92 = scalar_select %p89, %s90, %s91
      %p95 = pneg %p89
      %p96 = scmp.eq.s32.totalorder %s12, 3
      %p97 = por %p95, %p96
      %p98 = scmp.ne.s32.totalorder %s90, %s93
      %p99 = scmp.eq.s32.totalorder %s12, 0
      %p100 = por %p98, %p99
      %p101 = scmp.ne.s32.totalorder %s90, %s93
      %p102 = scmp.eq.s32.totalorder %s17, 3
      %p103 = por %p101, %p102
      %p104 = scmp.ne.s32.totalorder %s93, %s94
      %p105 = scmp.eq.s32.totalorder %s17, 0
      %p106 = por %p104, %p105
      %p107 = scmp.ne.s32.totalorder %s93, %s94
      %p108 = scmp.eq.s32.totalorder %s18, 3
      %p109 = por %p107, %p108
      %p111 = scmp.ne.s32.totalorder %s94, %s110
      %p112 = scmp.eq.s32.totalorder %s18, 0
      %p113 = por %p111, %p112
      %p114 = scmp.le.s32.totalorder 1, %s12
      %p115 = scmp.lt.s32.totalorder %s12, 5
      %p116 = pnand %p114, %p115
      %p117 = pneg %p116
      // Predicated region
      $region9: #{tpu_custom_call.1} parent=5 // pred_check
        _
      $region10: #{tpu_custom_call.1} parent=5 // pred_check_branch
        %119 = sbr.rel (%p116) target = $region12
      $region11: #{tpu_custom_call.1} parent=5 // pred_region
        %s120 = ssub.s32 %s12, 1
        // Predicated region
        $region13: #{tpu_custom_call.1} parent=11 // pred_check
          %p121 = pneg %p59
        $region14: #{tpu_custom_call.1} parent=11 // pred_check_branch
          %123 = sbr.rel (%p121) target = $region16
        $region15: #{tpu_custom_call.1} parent=11 // pred_region
          _
        $region16: #{tpu_custom_call.1} parent=11 // pred_fallthru
          _
        // Predicated region
        $region17: #{tpu_custom_call.1} parent=11 // pred_check
          %p124 = pneg %p80
        $region18: #{tpu_custom_call.1} parent=11 // pred_check_branch
          %126 = sbr.rel (%p124) target = $region20
        $region19: #{tpu_custom_call.1} parent=11 // pred_region
          _
        $region20: #{tpu_custom_call.1} parent=11 // pred_fallthru
          _
      $region12: #{tpu_custom_call.1} parent=5 // pred_fallthru
        _
      %p127 = scmp.lt.s32.totalorder %s12, 4
      // Predicated region
      $region21: #{tpu_custom_call.1} parent=5 // pred_check
        %p128 = pneg %p127
      $region22: #{tpu_custom_call.1} parent=5 // pred_check_branch
        %130 = sbr.rel (%p128) target = $region24
      $region23: #{tpu_custom_call.1} parent=5 // pred_region
        // Predicated region
        $region25: #{tpu_custom_call.1} parent=23 // pred_check
          %p131 = pneg %p32
        $region26: #{tpu_custom_call.1} parent=23 // pred_check_branch
          %133 = sbr.rel (%p131) target = $region28
        $region27: #{tpu_custom_call.1} parent=23 // pred_region
          %s134 = smul.u32 32, %s12
          %p135 = scmp.lt.s32.totalorder %s134, 127
          %s136 = scalar_select %p135, %s134, 127
          %s137 = smul.addr %s136, 8
          %s138 = scalar_lea.vmem %s0, %s137
          %s139 = smul.u32 32, %s12
        $region28: #{tpu_custom_call.1} parent=23 // pred_fallthru
          _
      $region24: #{tpu_custom_call.1} parent=5 // pred_fallthru
        _
      %p140 = scmp.le.s32.totalorder 1, %s12
      %p141 = scmp.lt.s32.totalorder %s12, 5
      %p142 = pnand %p140, %p141
      %p143 = pneg %p142
      // Predicated region
      $region29: #{tpu_custom_call.1} parent=5 // pred_check
        _
      $region30: #{tpu_custom_call.1} parent=5 // pred_check_branch
        %145 = sbr.rel (%p142) target = $region32
      $region31: #{tpu_custom_call.1} parent=5 // pred_region
        %s146 = ssub.s32 %s12, 1
        %s147 = smul.u32 32, %s17
        %p148 = scmp.lt.s32.totalorder %s147, 127
        %s149 = scalar_select %p148, %s147, 127
        %s150 = smul.addr %s149, 8
        %s151 = scalar_lea.vmem %s0, %s150
        %p152 = pneg %p38
        %p153 = pneg %p35
        %p154 = pneg %p59
        %p155 = pneg %p56
        %p156 = pneg %p80
        %p157 = pneg %p77
        %p158 = pneg %p106
        %p159 = pneg %p103
        %s160 = sand.u32 %s93, 1
        %s161 = scalar_lea.sflag [#allocation3], %s160
        %s162 = sand.u32 %s93, 1
        %s163 = smul.addr %s162, 512
        %s164 = scalar_lea.vmem [#allocation2], %s163
        %s165 = smul.u32 32, %s17
        %p166 = scmp.lt.s32.totalorder %s165, 127
        %s167 = scalar_select %p166, %s165, 127
        %s168 = smul.addr %s167, 8
        %s169 = scalar_lea.vmem %s0, %s168
        %s170 = smul.u32 32, %s17
        %s171 = smul.u32 32, %s17
        %v172 = vld [vmem:[%s169] sm:$0xff]
        %v173 = vld [vmem:[%s169 + $0x8] sm:$0xff]
        %v174 = vld [vmem:[%s169 + $0x10] sm:$0xff]
        %v175 = vld [vmem:[%s169 + $0x18] sm:$0xff]
        %v176 = vld [vmem:[%s169 + $0x20] sm:$0xff]
        %v177 = vld [vmem:[%s169 + $0x28] sm:$0xff]
        %v178 = vld [vmem:[%s169 + $0x30] sm:$0xff]
        %v179 = vld [vmem:[%s169 + $0x38] sm:$0xff]
        %v180 = vld [vmem:[%s169 + $0x40] sm:$0xff]
        %v181 = vld [vmem:[%s169 + $0x48] sm:$0xff]
        %v182 = vld [vmem:[%s169 + $0x50] sm:$0xff]
        %v183 = vld [vmem:[%s169 + $0x58] sm:$0xff]
        %v184 = vld [vmem:[%s169 + $0x60] sm:$0xff]
        %v185 = vld [vmem:[%s169 + $0x68] sm:$0xff]
        %v186 = vld [vmem:[%s169 + $0x70] sm:$0xff]
        %v187 = vld [vmem:[%s169 + $0x78] sm:$0xff]
        %v188 = vld [vmem:[%s169 + $0x80] sm:$0xff]
        %v189 = vld [vmem:[%s169 + $0x88] sm:$0xff]
        %v190 = vld [vmem:[%s169 + $0x90] sm:$0xff]
        %v191 = vld [vmem:[%s169 + $0x98] sm:$0xff]
        %v192 = vld [vmem:[%s169 + $0xa0] sm:$0xff]
        %v193 = vld [vmem:[%s169 + $0xa8] sm:$0xff]
        %v194 = vld [vmem:[%s169 + $0xb0] sm:$0xff]
        %v195 = vld [vmem:[%s169 + $0xb8] sm:$0xff]
        %v196 = vld [vmem:[%s169 + $0xc0] sm:$0xff]
        %v197 = vld [vmem:[%s169 + $0xc8] sm:$0xff]
        %v198 = vld [vmem:[%s169 + $0xd0] sm:$0xff]
        %v199 = vld [vmem:[%s169 + $0xd8] sm:$0xff]
        %v200 = vld [vmem:[%s169 + $0xe0] sm:$0xff]
        %v201 = vld [vmem:[%s169 + $0xe8] sm:$0xff]
        %v202 = vld [vmem:[%s169 + $0xf0] sm:$0xff]
        %v203 = vld [vmem:[%s169 + $0xf8] sm:$0xff]
        %v204 = vld [vmem:[%s1] sm:$0x3]
        %206 = vset.pattern.permute.xlu0 0
        %207 = vperm.xlu0 %206, %v172
        %v208 = vpop.permute.xlu0 %207
        %211 = vset.pattern.permute.xlu0 0
        %212 = vperm.xlu0 %211, %v173
        %v213 = vpop.permute.xlu0 %212
        %216 = vset.pattern.permute.xlu0 0
        %217 = vperm.xlu0 %216, %v174
        %v218 = vpop.permute.xlu0 %217
        %221 = vset.pattern.permute.xlu0 0
        %222 = vperm.xlu0 %221, %v175
        %v223 = vpop.permute.xlu0 %222
        %226 = vset.pattern.permute.xlu0 0
        %227 = vperm.xlu0 %226, %v176
        %v228 = vpop.permute.xlu0 %227
        %231 = vset.pattern.permute.xlu0 0
        %232 = vperm.xlu0 %231, %v177
        %v233 = vpop.permute.xlu0 %232
        %236 = vset.pattern.permute.xlu0 0
        %237 = vperm.xlu0 %236, %v178
        %v238 = vpop.permute.xlu0 %237
        %241 = vset.pattern.permute.xlu0 0
        %242 = vperm.xlu0 %241, %v179
        %v243 = vpop.permute.xlu0 %242
        %246 = vset.pattern.permute.xlu0 0
        %247 = vperm.xlu0 %246, %v180
        %v248 = vpop.permute.xlu0 %247
        %251 = vset.pattern.permute.xlu0 0
        %252 = vperm.xlu0 %251, %v181
        %v253 = vpop.permute.xlu0 %252
        %256 = vset.pattern.permute.xlu0 0
        %257 = vperm.xlu0 %256, %v182
        %v258 = vpop.permute.xlu0 %257
        %261 = vset.pattern.permute.xlu0 0
        %262 = vperm.xlu0 %261, %v183
        %v263 = vpop.permute.xlu0 %262
        %266 = vset.pattern.permute.xlu0 0
        %267 = vperm.xlu0 %266, %v184
        %v268 = vpop.permute.xlu0 %267
        %271 = vset.pattern.permute.xlu0 0
        %272 = vperm.xlu0 %271, %v185
        %v273 = vpop.permute.xlu0 %272
        %276 = vset.pattern.permute.xlu0 0
        %277 = vperm.xlu0 %276, %v186
        %v278 = vpop.permute.xlu0 %277
        %281 = vset.pattern.permute.xlu0 0
        %282 = vperm.xlu0 %281, %v187
        %v283 = vpop.permute.xlu0 %282
        %286 = vset.pattern.permute.xlu0 0
        %287 = vperm.xlu0 %286, %v188
        %v288 = vpop.permute.xlu0 %287
        %291 = vset.pattern.permute.xlu0 0
        %292 = vperm.xlu0 %291, %v189
        %v293 = vpop.permute.xlu0 %292
        %296 = vset.pattern.permute.xlu0 0
        %297 = vperm.xlu0 %296, %v190
        %v298 = vpop.permute.xlu0 %297
        %301 = vset.pattern.permute.xlu0 0
        %302 = vperm.xlu0 %301, %v191
        %v303 = vpop.permute.xlu0 %302
        %306 = vset.pattern.permute.xlu0 0
        %307 = vperm.xlu0 %306, %v192
        %v308 = vpop.permute.xlu0 %307
        %311 = vset.pattern.permute.xlu0 0
        %312 = vperm.xlu0 %311, %v193
        %v313 = vpop.permute.xlu0 %312
        %316 = vset.pattern.permute.xlu0 0
        %317 = vperm.xlu0 %316, %v194
        %v318 = vpop.permute.xlu0 %317
        %321 = vset.pattern.permute.xlu0 0
        %322 = vperm.xlu0 %321, %v195
        %v323 = vpop.permute.xlu0 %322
        %326 = vset.pattern.permute.xlu0 0
        %327 = vperm.xlu0 %326, %v196
        %v328 = vpop.permute.xlu0 %327
        %331 = vset.pattern.permute.xlu0 0
        %332 = vperm.xlu0 %331, %v197
        %v333 = vpop.permute.xlu0 %332
        %336 = vset.pattern.permute.xlu0 0
        %337 = vperm.xlu0 %336, %v198
        %v338 = vpop.permute.xlu0 %337
        %341 = vset.pattern.permute.xlu0 0
        %342 = vperm.xlu0 %341, %v199
        %v343 = vpop.permute.xlu0 %342
        %346 = vset.pattern.permute.xlu0 0
        %347 = vperm.xlu0 %346, %v200
        %v348 = vpop.permute.xlu0 %347
        %351 = vset.pattern.permute.xlu0 0
        %352 = vperm.xlu0 %351, %v201
        %v353 = vpop.permute.xlu0 %352
        %356 = vset.pattern.permute.xlu0 0
        %357 = vperm.xlu0 %356, %v202
        %v358 = vpop.permute.xlu0 %357
        %361 = vset.pattern.permute.xlu0 0
        %362 = vperm.xlu0 %361, %v203
        %v363 = vpop.permute.xlu0 %362
        %v366 = vlaneseq
        %v367 = vshrl.u32 %v366, 7
        %v368 = vsub.s32 0, %v367
        %v369 = vrot.slane %v204, %v368
        %v370 = vlaneseq
        %v371 = vshrl.u32 %v370, 7
        %v372 = vsub.s32 1, %v371
        %v373 = vrot.slane %v204, %v372
        %v376 = vmul.f32 %v208, %v369
        %v377 = vmul.f32 %v208, %v373
        %v378 = vmul.f32 %v213, %v369
        %v379 = vmul.f32 %v213, %v373
        %v380 = vmul.f32 %v218, %v369
        %v381 = vmul.f32 %v218, %v373
        %v382 = vmul.f32 %v223, %v369
        %v383 = vmul.f32 %v223, %v373
        %v384 = vmul.f32 %v228, %v369
        %v385 = vmul.f32 %v228, %v373
        %v386 = vmul.f32 %v233, %v369
        %v387 = vmul.f32 %v233, %v373
        %v388 = vmul.f32 %v238, %v369
        %v389 = vmul.f32 %v238, %v373
        %v390 = vmul.f32 %v243, %v369
        %v391 = vmul.f32 %v243, %v373
        %v392 = vmul.f32 %v248, %v369
        %v393 = vmul.f32 %v248, %v373
        %v394 = vmul.f32 %v253, %v369
        %v395 = vmul.f32 %v253, %v373
        %v396 = vmul.f32 %v258, %v369
        %v397 = vmul.f32 %v258, %v373
        %v398 = vmul.f32 %v263, %v369
        %v399 = vmul.f32 %v263, %v373
        %v400 = vmul.f32 %v268, %v369
        %v401 = vmul.f32 %v268, %v373
        %v402 = vmul.f32 %v273, %v369
        %v403 = vmul.f32 %v273, %v373
        %v404 = vmul.f32 %v278, %v369
        %v405 = vmul.f32 %v278, %v373
        %v406 = vmul.f32 %v283, %v369
        %v407 = vmul.f32 %v283, %v373
        %v408 = vmul.f32 %v288, %v369
        %v409 = vmul.f32 %v288, %v373
        %v410 = vmul.f32 %v293, %v369
        %v411 = vmul.f32 %v293, %v373
        %v412 = vmul.f32 %v298, %v369
        %v413 = vmul.f32 %v298, %v373
        %v414 = vmul.f32 %v303, %v369
        %v415 = vmul.f32 %v303, %v373
        %v416 = vmul.f32 %v308, %v369
        %v417 = vmul.f32 %v308, %v373
        %v418 = vmul.f32 %v313, %v369
        %v419 = vmul.f32 %v313, %v373
        %v420 = vmul.f32 %v318, %v369
        %v421 = vmul.f32 %v318, %v373
        %v422 = vmul.f32 %v323, %v369
        %v423 = vmul.f32 %v323, %v373
        %v424 = vmul.f32 %v328, %v369
        %v425 = vmul.f32 %v328, %v373
        %v426 = vmul.f32 %v333, %v369
        %v427 = vmul.f32 %v333, %v373
        %v428 = vmul.f32 %v338, %v369
        %v429 = vmul.f32 %v338, %v373
        %v430 = vmul.f32 %v343, %v369
        %v431 = vmul.f32 %v343, %v373
        %v432 = vmul.f32 %v348, %v369
        %v433 = vmul.f32 %v348, %v373
        %v434 = vmul.f32 %v353, %v369
        %v435 = vmul.f32 %v353, %v373
        %v436 = vmul.f32 %v358, %v369
        %v437 = vmul.f32 %v358, %v373
        %v438 = vmul.f32 %v363, %v369
        %v439 = vmul.f32 %v363, %v373
        %v440 = vld [vmem:[%s2] sm:$0x3]
        %v442 = vlaneseq
        %v443 = vshrl.u32 %v442, 7
        %v444 = vsub.s32 0, %v443
        %v445 = vrot.slane %v440, %v444
        %v446 = vlaneseq
        %v447 = vshrl.u32 %v446, 7
        %v448 = vsub.s32 1, %v447
        %v449 = vrot.slane %v440, %v448
        %v452 = vadd.f32 %v376, %v445
        %v453 = vadd.f32 %v377, %v449
        %v454 = vadd.f32 %v378, %v445
        %v455 = vadd.f32 %v379, %v449
        %v456 = vadd.f32 %v380, %v445
        %v457 = vadd.f32 %v381, %v449
        %v458 = vadd.f32 %v382, %v445
        %v459 = vadd.f32 %v383, %v449
        %v460 = vadd.f32 %v384, %v445
        %v461 = vadd.f32 %v385, %v449
        %v462 = vadd.f32 %v386, %v445
        %v463 = vadd.f32 %v387, %v449
        %v464 = vadd.f32 %v388, %v445
        %v465 = vadd.f32 %v389, %v449
        %v466 = vadd.f32 %v390, %v445
        %v467 = vadd.f32 %v391, %v449
        %v468 = vadd.f32 %v392, %v445
        %v469 = vadd.f32 %v393, %v449
        %v470 = vadd.f32 %v394, %v445
        %v471 = vadd.f32 %v395, %v449
        %v472 = vadd.f32 %v396, %v445
        %v473 = vadd.f32 %v397, %v449
        %v474 = vadd.f32 %v398, %v445
        %v475 = vadd.f32 %v399, %v449
        %v476 = vadd.f32 %v400, %v445
        %v477 = vadd.f32 %v401, %v449
        %v478 = vadd.f32 %v402, %v445
        %v479 = vadd.f32 %v403, %v449
        %v480 = vadd.f32 %v404, %v445
        %v481 = vadd.f32 %v405, %v449
        %v482 = vadd.f32 %v406, %v445
        %v483 = vadd.f32 %v407, %v449
        %v484 = vadd.f32 %v408, %v445
        %v485 = vadd.f32 %v409, %v449
        %v486 = vadd.f32 %v410, %v445
        %v487 = vadd.f32 %v411, %v449
        %v488 = vadd.f32 %v412, %v445
        %v489 = vadd.f32 %v413, %v449
        %v490 = vadd.f32 %v414, %v445
        %v491 = vadd.f32 %v415, %v449
        %v492 = vadd.f32 %v416, %v445
        %v493 = vadd.f32 %v417, %v449
        %v494 = vadd.f32 %v418, %v445
        %v495 = vadd.f32 %v419, %v449
        %v496 = vadd.f32 %v420, %v445
        %v497 = vadd.f32 %v421, %v449
        %v498 = vadd.f32 %v422, %v445
        %v499 = vadd.f32 %v423, %v449
        %v500 = vadd.f32 %v424, %v445
        %v501 = vadd.f32 %v425, %v449
        %v502 = vadd.f32 %v426, %v445
        %v503 = vadd.f32 %v427, %v449
        %v504 = vadd.f32 %v428, %v445
        %v505 = vadd.f32 %v429, %v449
        %v506 = vadd.f32 %v430, %v445
        %v507 = vadd.f32 %v431, %v449
        %v508 = vadd.f32 %v432, %v445
        %v509 = vadd.f32 %v433, %v449
        %v510 = vadd.f32 %v434, %v445
        %v511 = vadd.f32 %v435, %v449
        %v512 = vadd.f32 %v436, %v445
        %v513 = vadd.f32 %v437, %v449
        %v514 = vadd.f32 %v438, %v445
        %v515 = vadd.f32 %v439, %v449
        %v516 = vand.u32 2147483647, %v452
        %vm517 = vcmp.le.f32.partialorder %v516, 0.7853982
        %vm518 = vcmp.lt.s32.totalorder %v452, 0
        %v519 = vand.u32 %v452, 2139095040
        %v520 = vshrl.u32 %v519, 23
        %v521 = vsub.s32 %v520, 127
        %v522 = vand.u32 2147483647, %v452
        %v523 = vand.u32 %v522, 8388607
        %v524 = vor.u32 %v523, 8388608
        %v525 = vsub.s32 0, %v524
        %v526 = vadd.s32 %v521, 1
        %vm527 = vcmp.gt.s32.totalorder %v526, 0
        %v528 = vsel %vm527, %v526, 0
        %v529 = vshrl.u32 %v528, 5
        %v530 = vand.u32 %v528, 31
        %v531 = vsub.s32 32, %v530
        %v532 = vshrl.u32 683565275, %v531
        %v533 = vshll.u32 683565275, %v530
        %v534 = vshrl.u32 2475754826, %v531
        %v535 = vor.u32 %v533, %v534
        %v536 = vshll.u32 2475754826, %v530
        %v537 = vshrl.u32 2131351028, %v531
        %v538 = vor.u32 %v536, %v537
        %v539 = vshll.u32 2131351028, %v530
        %v540 = vshrl.u32 2102212464, %v531
        %v541 = vor.u32 %v539, %v540
        %v542 = vshll.u32 2102212464, %v530
        %v543 = vshrl.u32 920167782, %v531
        %v544 = vor.u32 %v542, %v543
        %v545 = vshll.u32 920167782, %v530
        %v546 = vshrl.u32 1326507024, %v531
        %v547 = vor.u32 %v545, %v546
        %vm548 = vcmp.lt.s32.totalorder %v529, 1
        %vm549 = vcmp.lt.s32.totalorder %v529, 2
        %vm550 = vcmp.lt.s32.totalorder %v529, 3
        %vm551 = vcmp.lt.s32.totalorder %v529, 4
        %v552 = vsel %vm548, %v532, %v535
        %v553 = vsel %vm551, %v541, 2102212464
        %v554 = vsel %vm550, %v538, %v553
        %v555 = vsel %vm549, %v552, %v554
        %v556 = vsel %vm548, %v535, %v538
        %v557 = vsel %vm551, %v544, 920167782
        %v558 = vsel %vm550, %v541, %v557
        %v559 = vsel %vm549, %v556, %v558
        %v560 = vsel %vm548, %v538, %v541
        %v561 = vsel %vm551, %v547, 1326507024
        %v562 = vsel %vm550, %v544, %v561
        %v563 = vsel %vm549, %v560, %v562
        %v564 = vshll.u32 %v524, 8
        %v565 = vmul.u32.u64.compose %v564, %v563
        %v566 = vextract.low.u32 %v565
        %v567 = vextract.high.u32 %v565
        %v568 = vmul.u32.u64.compose %v564, %v559
        %v569 = vextract.low.u32 %v568
        %v570 = vextract.high.u32 %v568
        %v571 = vmul.u32 %v564, %v555
        %v572 = vadd.s32 %v567, %v569
        %vm573 = vc.u32 %v567, %v569
        %v574 = vadd.s32 %v570, 1
        %v575 = vsel %vm573, %v574, %v570
        %v576 = vadd.s32 %v571, %v575
        %v577 = vadd.s32 %v576, 536870912
        %v578 = vshrl.u32 %v577, 30
        %v579 = vshll.u32 %v578, 30
        %v580 = vsub.s32 %v576, %v579
        %vm581 = vcmp.lt.s32.totalorder %v580, 0
        %v582 = vsub.s32 0, %v580
        %v583 = vsel %vm581, %v582, %v580
        %v584 = vclz %v583
        %v585 = vsub.s32 %v584, 2
        %vm586 = vcmp.gt.s32.totalorder 0, %v585
        %v587 = vsel %vm586, 0, %v585
        %v588 = vsub.s32 32, %v587
        %v589 = vshll.u32 %v580, %v587
        %v590 = vshrl.u32 %v572, %v588
        %v591 = vor.u32 %v589, %v590
        %v592 = vsub.s32 4294967266, %v587
        %v593 = vadd.s32 %v592, 127
        %v594 = vshll.u32 %v593, 23
        %v595 = vor.u32 4788187, %v594
        %v596 = vand.u32 2147483647, %v595
        %v598 = vcvt.s32.f32 %v591
        %v599 = vmul.f32 %v598, %v596
        %v600 = vxor.u32 %v599, 2147483648
        %v601 = vsel %vm518, %v600, %v599
        %v602 = vsub.s32 4, %v578
        %v603 = vsel %vm518, %v602, %v578
        %v604 = vsel %vm517, %v452, %v601
        %v605 = vsel %vm517, 0, %v603
        %v606 = vcosq.f32.pop %v604
        %v607 = vsinq.f32.pop %v604
        %vm608 = vweird.f32 %v452
        %v609 = vadd.s32 %v605, 3
        %v610 = vand.u32 %v609, 3
        %vm611 = vcmp.lt.s32.totalorder %v610, 2
        %vm612 = vcmp.eq.s32.totalorder %v610, 0
        %v613 = vxor.u32 %v607, 2147483648
        %v614 = vsel %vm612, %v606, %v613
        %vm615 = vcmp.eq.s32.totalorder %v610, 2
        %v616 = vxor.u32 %v606, 2147483648
        %v617 = vsel %vm615, %v616, %v607
        %v618 = vsel %vm611, %v614, %v617
        %v619 = vsel %vm608, nan, %v618
        %v620 = vand.u32 2147483647, %v453
        %vm621 = vcmp.le.f32.partialorder %v620, 0.7853982
        %vm622 = vcmp.lt.s32.totalorder %v453, 0
        %v623 = vand.u32 %v453, 2139095040
        %v624 = vshrl.u32 %v623, 23
        %v625 = vsub.s32 %v624, 127
        %v626 = vand.u32 2147483647, %v453
        %v627 = vand.u32 %v626, 8388607
        %v628 = vor.u32 %v627, 8388608
        %v629 = vsub.s32 0, %v628
        %v630 = vadd.s32 %v625, 1
        %vm631 = vcmp.gt.s32.totalorder %v630, 0
        %v632 = vsel %vm631, %v630, 0
        %v633 = vshrl.u32 %v632, 5
        %v634 = vand.u32 %v632, 31
        %v635 = vsub.s32 32, %v634
        %v636 = vshrl.u32 683565275, %v635
        %v637 = vshll.u32 683565275, %v634
        %v638 = vshrl.u32 2475754826, %v635
        %v639 = vor.u32 %v637, %v638
        %v640 = vshll.u32 2475754826, %v634
        %v641 = vshrl.u32 2131351028, %v635
        %v642 = vor.u32 %v640, %v641
        %v643 = vshll.u32 2131351028, %v634
        %v644 = vshrl.u32 2102212464, %v635
        %v645 = vor.u32 %v643, %v644
        %v646 = vshll.u32 2102212464, %v634
        %v647 = vshrl.u32 920167782, %v635
        %v648 = vor.u32 %v646, %v647
        %v649 = vshll.u32 920167782, %v634
        %v650 = vshrl.u32 1326507024, %v635
        %v651 = vor.u32 %v649, %v650
        %vm652 = vcmp.lt.s32.totalorder %v633, 1
        %vm653 = vcmp.lt.s32.totalorder %v633, 2
        %vm654 = vcmp.lt.s32.totalorder %v633, 3
        %vm655 = vcmp.lt.s32.totalorder %v633, 4
        %v656 = vsel %vm652, %v636, %v639
        %v657 = vsel %vm655, %v645, 2102212464
        %v658 = vsel %vm654, %v642, %v657
        %v659 = vsel %vm653, %v656, %v658
        %v660 = vsel %vm652, %v639, %v642
        %v661 = vsel %vm655, %v648, 920167782
        %v662 = vsel %vm654, %v645, %v661
        %v663 = vsel %vm653, %v660, %v662
        %v664 = vsel %vm652, %v642, %v645
        %v665 = vsel %vm655, %v651, 1326507024
        %v666 = vsel %vm654, %v648, %v665
        %v667 = vsel %vm653, %v664, %v666
        %v668 = vshll.u32 %v628, 8
        %v669 = vmul.u32.u64.compose %v668, %v667
        %v670 = vextract.low.u32 %v669
        %v671 = vextract.high.u32 %v669
        %v672 = vmul.u32.u64.compose %v668, %v663
        %v673 = vextract.low.u32 %v672
        %v674 = vextract.high.u32 %v672
        %v675 = vmul.u32 %v668, %v659
        %v676 = vadd.s32 %v671, %v673
        %vm677 = vc.u32 %v671, %v673
        %v678 = vadd.s32 %v674, 1
        %v679 = vsel %vm677, %v678, %v674
        %v680 = vadd.s32 %v675, %v679
        %v681 = vadd.s32 %v680, 536870912
        %v682 = vshrl.u32 %v681, 30
        %v683 = vshll.u32 %v682, 30
        %v684 = vsub.s32 %v680, %v683
        %vm685 = vcmp.lt.s32.totalorder %v684, 0
        %v686 = vsub.s32 0, %v684
        %v687 = vsel %vm685, %v686, %v684
        %v688 = vclz %v687
        %v689 = vsub.s32 %v688, 2
        %vm690 = vcmp.gt.s32.totalorder 0, %v689
        %v691 = vsel %vm690, 0, %v689
        %v692 = vsub.s32 32, %v691
        %v693 = vshll.u32 %v684, %v691
        %v694 = vshrl.u32 %v676, %v692
        %v695 = vor.u32 %v693, %v694
        %v696 = vsub.s32 4294967266, %v691
        %v697 = vadd.s32 %v696, 127
        %v698 = vshll.u32 %v697, 23
        %v699 = vor.u32 4788187, %v698
        %v700 = vand.u32 2147483647, %v699
        %v702 = vcvt.s32.f32 %v695
        %v703 = vmul.f32 %v702, %v700
        %v704 = vxor.u32 %v703, 2147483648
        %v705 = vsel %vm622, %v704, %v703
        %v706 = vsub.s32 4, %v682
        %v707 = vsel %vm622, %v706, %v682
        %v708 = vsel %vm621, %v453, %v705
        %v709 = vsel %vm621, 0, %v707
        %v710 = vcosq.f32.pop %v708
        %v711 = vsinq.f32.pop %v708
        %vm712 = vweird.f32 %v453
        %v713 = vadd.s32 %v709, 3
        %v714 = vand.u32 %v713, 3
        %vm715 = vcmp.lt.s32.totalorder %v714, 2
        %vm716 = vcmp.eq.s32.totalorder %v714, 0
        %v717 = vxor.u32 %v711, 2147483648
        %v718 = vsel %vm716, %v710, %v717
        %vm719 = vcmp.eq.s32.totalorder %v714, 2
        %v720 = vxor.u32 %v710, 2147483648
        %v721 = vsel %vm719, %v720, %v711
        %v722 = vsel %vm715, %v718, %v721
        %v723 = vsel %vm712, nan, %v722
        %v724 = vand.u32 2147483647, %v454
        %vm725 = vcmp.le.f32.partialorder %v724, 0.7853982
        %vm726 = vcmp.lt.s32.totalorder %v454, 0
        %v727 = vand.u32 %v454, 2139095040
        %v728 = vshrl.u32 %v727, 23
        %v729 = vsub.s32 %v728, 127
        %v730 = vand.u32 2147483647, %v454
        %v731 = vand.u32 %v730, 8388607
        %v732 = vor.u32 %v731, 8388608
        %v733 = vsub.s32 0, %v732
        %v734 = vadd.s32 %v729, 1
        %vm735 = vcmp.gt.s32.totalorder %v734, 0
        %v736 = vsel %vm735, %v734, 0
        %v737 = vshrl.u32 %v736, 5
        %v738 = vand.u32 %v736, 31
        %v739 = vsub.s32 32, %v738
        %v740 = vshrl.u32 683565275, %v739
        %v741 = vshll.u32 683565275, %v738
        %v742 = vshrl.u32 2475754826, %v739
        %v743 = vor.u32 %v741, %v742
        %v744 = vshll.u32 2475754826, %v738
        %v745 = vshrl.u32 2131351028, %v739
        %v746 = vor.u32 %v744, %v745
        %v747 = vshll.u32 2131351028, %v738
        %v748 = vshrl.u32 2102212464, %v739
        %v749 = vor.u32 %v747, %v748
        %v750 = vshll.u32 2102212464, %v738
        %v751 = vshrl.u32 920167782, %v739
        %v752 = vor.u32 %v750, %v751
        %v753 = vshll.u32 920167782, %v738
        %v754 = vshrl.u32 1326507024, %v739
        %v755 = vor.u32 %v753, %v754
        %vm756 = vcmp.lt.s32.totalorder %v737, 1
        %vm757 = vcmp.lt.s32.totalorder %v737, 2
        %vm758 = vcmp.lt.s32.totalorder %v737, 3
        %vm759 = vcmp.lt.s32.totalorder %v737, 4
        %v760 = vsel %vm756, %v740, %v743
        %v761 = vsel %vm759, %v749, 2102212464
        %v762 = vsel %vm758, %v746, %v761
        %v763 = vsel %vm757, %v760, %v762
        %v764 = vsel %vm756, %v743, %v746
        %v765 = vsel %vm759, %v752, 920167782
        %v766 = vsel %vm758, %v749, %v765
        %v767 = vsel %vm757, %v764, %v766
        %v768 = vsel %vm756, %v746, %v749
        %v769 = vsel %vm759, %v755, 1326507024
        %v770 = vsel %vm758, %v752, %v769
        %v771 = vsel %vm757, %v768, %v770
        %v772 = vshll.u32 %v732, 8
        %v773 = vmul.u32.u64.compose %v772, %v771
        %v774 = vextract.low.u32 %v773
        %v775 = vextract.high.u32 %v773
        %v776 = vmul.u32.u64.compose %v772, %v767
        %v777 = vextract.low.u32 %v776
        %v778 = vextract.high.u32 %v776
        %v779 = vmul.u32 %v772, %v763
        %v780 = vadd.s32 %v775, %v777
        %vm781 = vc.u32 %v775, %v777
        %v782 = vadd.s32 %v778, 1
        %v783 = vsel %vm781, %v782, %v778
        %v784 = vadd.s32 %v779, %v783
        %v785 = vadd.s32 %v784, 536870912
        %v786 = vshrl.u32 %v785, 30
        %v787 = vshll.u32 %v786, 30
        %v788 = vsub.s32 %v784, %v787
        %vm789 = vcmp.lt.s32.totalorder %v788, 0
        %v790 = vsub.s32 0, %v788
        %v791 = vsel %vm789, %v790, %v788
        %v792 = vclz %v791
        %v793 = vsub.s32 %v792, 2
        %vm794 = vcmp.gt.s32.totalorder 0, %v793
        %v795 = vsel %vm794, 0, %v793
        %v796 = vsub.s32 32, %v795
        %v797 = vshll.u32 %v788, %v795
        %v798 = vshrl.u32 %v780, %v796
        %v799 = vor.u32 %v797, %v798
        %v800 = vsub.s32 4294967266, %v795
        %v801 = vadd.s32 %v800, 127
        %v802 = vshll.u32 %v801, 23
        %v803 = vor.u32 4788187, %v802
        %v804 = vand.u32 2147483647, %v803
        %v806 = vcvt.s32.f32 %v799
        %v807 = vmul.f32 %v806, %v804
        %v808 = vxor.u32 %v807, 2147483648
        %v809 = vsel %vm726, %v808, %v807
        %v810 = vsub.s32 4, %v786
        %v811 = vsel %vm726, %v810, %v786
        %v812 = vsel %vm725, %v454, %v809
        %v813 = vsel %vm725, 0, %v811
        %v814 = vcosq.f32.pop %v812
        %v815 = vsinq.f32.pop %v812
        %vm816 = vweird.f32 %v454
        %v817 = vadd.s32 %v813, 3
        %v818 = vand.u32 %v817, 3
        %vm819 = vcmp.lt.s32.totalorder %v818, 2
        %vm820 = vcmp.eq.s32.totalorder %v818, 0
        %v821 = vxor.u32 %v815, 2147483648
        %v822 = vsel %vm820, %v814, %v821
        %vm823 = vcmp.eq.s32.totalorder %v818, 2
        %v824 = vxor.u32 %v814, 2147483648
        %v825 = vsel %vm823, %v824, %v815
        %v826 = vsel %vm819, %v822, %v825
        %v827 = vsel %vm816, nan, %v826
        %v828 = vand.u32 2147483647, %v455
        %vm829 = vcmp.le.f32.partialorder %v828, 0.7853982
        %vm830 = vcmp.lt.s32.totalorder %v455, 0
        %v831 = vand.u32 %v455, 2139095040
        %v832 = vshrl.u32 %v831, 23
        %v833 = vsub.s32 %v832, 127
        %v834 = vand.u32 2147483647, %v455
        %v835 = vand.u32 %v834, 8388607
        %v836 = vor.u32 %v835, 8388608
        %v837 = vsub.s32 0, %v836
        %v838 = vadd.s32 %v833, 1
        %vm839 = vcmp.gt.s32.totalorder %v838, 0
        %v840 = vsel %vm839, %v838, 0
        %v841 = vshrl.u32 %v840, 5
        %v842 = vand.u32 %v840, 31
        %v843 = vsub.s32 32, %v842
        %v844 = vshrl.u32 683565275, %v843
        %v845 = vshll.u32 683565275, %v842
        %v846 = vshrl.u32 2475754826, %v843
        %v847 = vor.u32 %v845, %v846
        %v848 = vshll.u32 2475754826, %v842
        %v849 = vshrl.u32 2131351028, %v843
        %v850 = vor.u32 %v848, %v849
        %v851 = vshll.u32 2131351028, %v842
        %v852 = vshrl.u32 2102212464, %v843
        %v853 = vor.u32 %v851, %v852
        %v854 = vshll.u32 2102212464, %v842
        %v855 = vshrl.u32 920167782, %v843
        %v856 = vor.u32 %v854, %v855
        %v857 = vshll.u32 920167782, %v842
        %v858 = vshrl.u32 1326507024, %v843
        %v859 = vor.u32 %v857, %v858
        %vm860 = vcmp.lt.s32.totalorder %v841, 1
        %vm861 = vcmp.lt.s32.totalorder %v841, 2
        %vm862 = vcmp.lt.s32.totalorder %v841, 3
        %vm863 = vcmp.lt.s32.totalorder %v841, 4
        %v864 = vsel %vm860, %v844, %v847
        %v865 = vsel %vm863, %v853, 2102212464
        %v866 = vsel %vm862, %v850, %v865
        %v867 = vsel %vm861, %v864, %v866
        %v868 = vsel %vm860, %v847, %v850
        %v869 = vsel %vm863, %v856, 920167782
        %v870 = vsel %vm862, %v853, %v869
        %v871 = vsel %vm861, %v868, %v870
        %v872 = vsel %vm860, %v850, %v853
        %v873 = vsel %vm863, %v859, 1326507024
        %v874 = vsel %vm862, %v856, %v873
        %v875 = vsel %vm861, %v872, %v874
        %v876 = vshll.u32 %v836, 8
        %v877 = vmul.u32.u64.compose %v876, %v875
        %v878 = vextract.low.u32 %v877
        %v879 = vextract.high.u32 %v877
        %v880 = vmul.u32.u64.compose %v876, %v871
        %v881 = vextract.low.u32 %v880
        %v882 = vextract.high.u32 %v880
        %v883 = vmul.u32 %v876, %v867
        %v884 = vadd.s32 %v879, %v881
        %vm885 = vc.u32 %v879, %v881
        %v886 = vadd.s32 %v882, 1
        %v887 = vsel %vm885, %v886, %v882
        %v888 = vadd.s32 %v883, %v887
        %v889 = vadd.s32 %v888, 536870912
        %v890 = vshrl.u32 %v889, 30
        %v891 = vshll.u32 %v890, 30
        %v892 = vsub.s32 %v888, %v891
        %vm893 = vcmp.lt.s32.totalorder %v892, 0
        %v894 = vsub.s32 0, %v892
        %v895 = vsel %vm893, %v894, %v892
        %v896 = vclz %v895
        %v897 = vsub.s32 %v896, 2
        %vm898 = vcmp.gt.s32.totalorder 0, %v897
        %v899 = vsel %vm898, 0, %v897
        %v900 = vsub.s32 32, %v899
        %v901 = vshll.u32 %v892, %v899
        %v902 = vshrl.u32 %v884, %v900
        %v903 = vor.u32 %v901, %v902
        %v904 = vsub.s32 4294967266, %v899
        %v905 = vadd.s32 %v904, 127
        %v906 = vshll.u32 %v905, 23
        %v907 = vor.u32 4788187, %v906
        %v908 = vand.u32 2147483647, %v907
        %v910 = vcvt.s32.f32 %v903
        %v911 = vmul.f32 %v910, %v908
        %v912 = vxor.u32 %v911, 2147483648
        %v913 = vsel %vm830, %v912, %v911
        %v914 = vsub.s32 4, %v890
        %v915 = vsel %vm830, %v914, %v890
        %v916 = vsel %vm829, %v455, %v913
        %v917 = vsel %vm829, 0, %v915
        %v918 = vcosq.f32.pop %v916
        %v919 = vsinq.f32.pop %v916
        %vm920 = vweird.f32 %v455
        %v921 = vadd.s32 %v917, 3
        %v922 = vand.u32 %v921, 3
        %vm923 = vcmp.lt.s32.totalorder %v922, 2
        %vm924 = vcmp.eq.s32.totalorder %v922, 0
        %v925 = vxor.u32 %v919, 2147483648
        %v926 = vsel %vm924, %v918, %v925
        %vm927 = vcmp.eq.s32.totalorder %v922, 2
        %v928 = vxor.u32 %v918, 2147483648
        %v929 = vsel %vm927, %v928, %v919
        %v930 = vsel %vm923, %v926, %v929
        %v931 = vsel %vm920, nan, %v930
        %v932 = vand.u32 2147483647, %v456
        %vm933 = vcmp.le.f32.partialorder %v932, 0.7853982
        %vm934 = vcmp.lt.s32.totalorder %v456, 0
        %v935 = vand.u32 %v456, 2139095040
        %v936 = vshrl.u32 %v935, 23
        %v937 = vsub.s32 %v936, 127
        %v938 = vand.u32 2147483647, %v456
        %v939 = vand.u32 %v938, 8388607
        %v940 = vor.u32 %v939, 8388608
        %v941 = vsub.s32 0, %v940
        %v942 = vadd.s32 %v937, 1
        %vm943 = vcmp.gt.s32.totalorder %v942, 0
        %v944 = vsel %vm943, %v942, 0
        %v945 = vshrl.u32 %v944, 5
        %v946 = vand.u32 %v944, 31
        %v947 = vsub.s32 32, %v946
        %v948 = vshrl.u32 683565275, %v947
        %v949 = vshll.u32 683565275, %v946
        %v950 = vshrl.u32 2475754826, %v947
        %v951 = vor.u32 %v949, %v950
        %v952 = vshll.u32 2475754826, %v946
        %v953 = vshrl.u32 2131351028, %v947
        %v954 = vor.u32 %v952, %v953
        %v955 = vshll.u32 2131351028, %v946
        %v956 = vshrl.u32 2102212464, %v947
        %v957 = vor.u32 %v955, %v956
        %v958 = vshll.u32 2102212464, %v946
        %v959 = vshrl.u32 920167782, %v947
        %v960 = vor.u32 %v958, %v959
        %v961 = vshll.u32 920167782, %v946
        %v962 = vshrl.u32 1326507024, %v947
        %v963 = vor.u32 %v961, %v962
        %vm964 = vcmp.lt.s32.totalorder %v945, 1
        %vm965 = vcmp.lt.s32.totalorder %v945, 2
        %vm966 = vcmp.lt.s32.totalorder %v945, 3
        %vm967 = vcmp.lt.s32.totalorder %v945, 4
        %v968 = vsel %vm964, %v948, %v951
        %v969 = vsel %vm967, %v957, 2102212464
        %v970 = vsel %vm966, %v954, %v969
        %v971 = vsel %vm965, %v968, %v970
        %v972 = vsel %vm964, %v951, %v954
        %v973 = vsel %vm967, %v960, 920167782
        %v974 = vsel %vm966, %v957, %v973
        %v975 = vsel %vm965, %v972, %v974
        %v976 = vsel %vm964, %v954, %v957
        %v977 = vsel %vm967, %v963, 1326507024
        %v978 = vsel %vm966, %v960, %v977
        %v979 = vsel %vm965, %v976, %v978
        %v980 = vshll.u32 %v940, 8
        %v981 = vmul.u32.u64.compose %v980, %v979
        %v982 = vextract.low.u32 %v981
        %v983 = vextract.high.u32 %v981
        %v984 = vmul.u32.u64.compose %v980, %v975
        %v985 = vextract.low.u32 %v984
        %v986 = vextract.high.u32 %v984
        %v987 = vmul.u32 %v980, %v971
        %v988 = vadd.s32 %v983, %v985
        %vm989 = vc.u32 %v983, %v985
        %v990 = vadd.s32 %v986, 1
        %v991 = vsel %vm989, %v990, %v986
        %v992 = vadd.s32 %v987, %v991
        %v993 = vadd.s32 %v992, 536870912
        %v994 = vshrl.u32 %v993, 30
        %v995 = vshll.u32 %v994, 30
        %v996 = vsub.s32 %v992, %v995
        %vm997 = vcmp.lt.s32.totalorder %v996, 0
        %v998 = vsub.s32 0, %v996
        %v999 = vsel %vm997, %v998, %v996
        %v1000 = vclz %v999
        %v1001 = vsub.s32 %v1000, 2
        %vm1002 = vcmp.gt.s32.totalorder 0, %v1001
        %v1003 = vsel %vm1002, 0, %v1001
        %v1004 = vsub.s32 32, %v1003
        %v1005 = vshll.u32 %v996, %v1003
        %v1006 = vshrl.u32 %v988, %v1004
        %v1007 = vor.u32 %v1005, %v1006
        %v1008 = vsub.s32 4294967266, %v1003
        %v1009 = vadd.s32 %v1008, 127
        %v1010 = vshll.u32 %v1009, 23
        %v1011 = vor.u32 4788187, %v1010
        %v1012 = vand.u32 2147483647, %v1011
        %v1014 = vcvt.s32.f32 %v1007
        %v1015 = vmul.f32 %v1014, %v1012
        %v1016 = vxor.u32 %v1015, 2147483648
        %v1017 = vsel %vm934, %v1016, %v1015
        %v1018 = vsub.s32 4, %v994
        %v1019 = vsel %vm934, %v1018, %v994
        %v1020 = vsel %vm933, %v456, %v1017
        %v1021 = vsel %vm933, 0, %v1019
        %v1022 = vcosq.f32.pop %v1020
        %v1023 = vsinq.f32.pop %v1020
        %vm1024 = vweird.f32 %v456
        %v1025 = vadd.s32 %v1021, 3
        %v1026 = vand.u32 %v1025, 3
        %vm1027 = vcmp.lt.s32.totalorder %v1026, 2
        %vm1028 = vcmp.eq.s32.totalorder %v1026, 0
        %v1029 = vxor.u32 %v1023, 2147483648
        %v1030 = vsel %vm1028, %v1022, %v1029
        %vm1031 = vcmp.eq.s32.totalorder %v1026, 2
        %v1032 = vxor.u32 %v1022, 2147483648
        %v1033 = vsel %vm1031, %v1032, %v1023
        %v1034 = vsel %vm1027, %v1030, %v1033
        %v1035 = vsel %vm1024, nan, %v1034
        %v1036 = vand.u32 2147483647, %v457
        %vm1037 = vcmp.le.f32.partialorder %v1036, 0.7853982
        %vm1038 = vcmp.lt.s32.totalorder %v457, 0
        %v1039 = vand.u32 %v457, 2139095040
        %v1040 = vshrl.u32 %v1039, 23
        %v1041 = vsub.s32 %v1040, 127
        %v1042 = vand.u32 2147483647, %v457
        %v1043 = vand.u32 %v1042, 8388607
        %v1044 = vor.u32 %v1043, 8388608
        %v1045 = vsub.s32 0, %v1044
        %v1046 = vadd.s32 %v1041, 1
        %vm1047 = vcmp.gt.s32.totalorder %v1046, 0
        %v1048 = vsel %vm1047, %v1046, 0
        %v1049 = vshrl.u32 %v1048, 5
        %v1050 = vand.u32 %v1048, 31
        %v1051 = vsub.s32 32, %v1050
        %v1052 = vshrl.u32 683565275, %v1051
        %v1053 = vshll.u32 683565275, %v1050
        %v1054 = vshrl.u32 2475754826, %v1051
        %v1055 = vor.u32 %v1053, %v1054
        %v1056 = vshll.u32 2475754826, %v1050
        %v1057 = vshrl.u32 2131351028, %v1051
        %v1058 = vor.u32 %v1056, %v1057
        %v1059 = vshll.u32 2131351028, %v1050
        %v1060 = vshrl.u32 2102212464, %v1051
        %v1061 = vor.u32 %v1059, %v1060
        %v1062 = vshll.u32 2102212464, %v1050
        %v1063 = vshrl.u32 920167782, %v1051
        %v1064 = vor.u32 %v1062, %v1063
        %v1065 = vshll.u32 920167782, %v1050
        %v1066 = vshrl.u32 1326507024, %v1051
        %v1067 = vor.u32 %v1065, %v1066
        %vm1068 = vcmp.lt.s32.totalorder %v1049, 1
        %vm1069 = vcmp.lt.s32.totalorder %v1049, 2
        %vm1070 = vcmp.lt.s32.totalorder %v1049, 3
        %vm1071 = vcmp.lt.s32.totalorder %v1049, 4
        %v1072 = vsel %vm1068, %v1052, %v1055
        %v1073 = vsel %vm1071, %v1061, 2102212464
        %v1074 = vsel %vm1070, %v1058, %v1073
        %v1075 = vsel %vm1069, %v1072, %v1074
        %v1076 = vsel %vm1068, %v1055, %v1058
        %v1077 = vsel %vm1071, %v1064, 920167782
        %v1078 = vsel %vm1070, %v1061, %v1077
        %v1079 = vsel %vm1069, %v1076, %v1078
        %v1080 = vsel %vm1068, %v1058, %v1061
        %v1081 = vsel %vm1071, %v1067, 1326507024
        %v1082 = vsel %vm1070, %v1064, %v1081
        %v1083 = vsel %vm1069, %v1080, %v1082
        %v1084 = vshll.u32 %v1044, 8
        %v1085 = vmul.u32.u64.compose %v1084, %v1083
        %v1086 = vextract.low.u32 %v1085
        %v1087 = vextract.high.u32 %v1085
        %v1088 = vmul.u32.u64.compose %v1084, %v1079
        %v1089 = vextract.low.u32 %v1088
        %v1090 = vextract.high.u32 %v1088
        %v1091 = vmul.u32 %v1084, %v1075
        %v1092 = vadd.s32 %v1087, %v1089
        %vm1093 = vc.u32 %v1087, %v1089
        %v1094 = vadd.s32 %v1090, 1
        %v1095 = vsel %vm1093, %v1094, %v1090
        %v1096 = vadd.s32 %v1091, %v1095
        %v1097 = vadd.s32 %v1096, 536870912
        %v1098 = vshrl.u32 %v1097, 30
        %v1099 = vshll.u32 %v1098, 30
        %v1100 = vsub.s32 %v1096, %v1099
        %vm1101 = vcmp.lt.s32.totalorder %v1100, 0
        %v1102 = vsub.s32 0, %v1100
        %v1103 = vsel %vm1101, %v1102, %v1100
        %v1104 = vclz %v1103
        %v1105 = vsub.s32 %v1104, 2
        %vm1106 = vcmp.gt.s32.totalorder 0, %v1105
        %v1107 = vsel %vm1106, 0, %v1105
        %v1108 = vsub.s32 32, %v1107
        %v1109 = vshll.u32 %v1100, %v1107
        %v1110 = vshrl.u32 %v1092, %v1108
        %v1111 = vor.u32 %v1109, %v1110
        %v1112 = vsub.s32 4294967266, %v1107
        %v1113 = vadd.s32 %v1112, 127
        %v1114 = vshll.u32 %v1113, 23
        %v1115 = vor.u32 4788187, %v1114
        %v1116 = vand.u32 2147483647, %v1115
        %v1118 = vcvt.s32.f32 %v1111
        %v1119 = vmul.f32 %v1118, %v1116
        %v1120 = vxor.u32 %v1119, 2147483648
        %v1121 = vsel %vm1038, %v1120, %v1119
        %v1122 = vsub.s32 4, %v1098
        %v1123 = vsel %vm1038, %v1122, %v1098
        %v1124 = vsel %vm1037, %v457, %v1121
        %v1125 = vsel %vm1037, 0, %v1123
        %v1126 = vcosq.f32.pop %v1124
        %v1127 = vsinq.f32.pop %v1124
        %vm1128 = vweird.f32 %v457
        %v1129 = vadd.s32 %v1125, 3
        %v1130 = vand.u32 %v1129, 3
        %vm1131 = vcmp.lt.s32.totalorder %v1130, 2
        %vm1132 = vcmp.eq.s32.totalorder %v1130, 0
        %v1133 = vxor.u32 %v1127, 2147483648
        %v1134 = vsel %vm1132, %v1126, %v1133
        %vm1135 = vcmp.eq.s32.totalorder %v1130, 2
        %v1136 = vxor.u32 %v1126, 2147483648
        %v1137 = vsel %vm1135, %v1136, %v1127
        %v1138 = vsel %vm1131, %v1134, %v1137
        %v1139 = vsel %vm1128, nan, %v1138
        %v1140 = vand.u32 2147483647, %v458
        %vm1141 = vcmp.le.f32.partialorder %v1140, 0.7853982
        %vm1142 = vcmp.lt.s32.totalorder %v458, 0
        %v1143 = vand.u32 %v458, 2139095040
        %v1144 = vshrl.u32 %v1143, 23
        %v1145 = vsub.s32 %v1144, 127
        %v1146 = vand.u32 2147483647, %v458
        %v1147 = vand.u32 %v1146, 8388607
        %v1148 = vor.u32 %v1147, 8388608
        %v1149 = vsub.s32 0, %v1148
        %v1150 = vadd.s32 %v1145, 1
        %vm1151 = vcmp.gt.s32.totalorder %v1150, 0
        %v1152 = vsel %vm1151, %v1150, 0
        %v1153 = vshrl.u32 %v1152, 5
        %v1154 = vand.u32 %v1152, 31
        %v1155 = vsub.s32 32, %v1154
        %v1156 = vshrl.u32 683565275, %v1155
        %v1157 = vshll.u32 683565275, %v1154
        %v1158 = vshrl.u32 2475754826, %v1155
        %v1159 = vor.u32 %v1157, %v1158
        %v1160 = vshll.u32 2475754826, %v1154
        %v1161 = vshrl.u32 2131351028, %v1155
        %v1162 = vor.u32 %v1160, %v1161
        %v1163 = vshll.u32 2131351028, %v1154
        %v1164 = vshrl.u32 2102212464, %v1155
        %v1165 = vor.u32 %v1163, %v1164
        %v1166 = vshll.u32 2102212464, %v1154
        %v1167 = vshrl.u32 920167782, %v1155
        %v1168 = vor.u32 %v1166, %v1167
        %v1169 = vshll.u32 920167782, %v1154
        %v1170 = vshrl.u32 1326507024, %v1155
        %v1171 = vor.u32 %v1169, %v1170
        %vm1172 = vcmp.lt.s32.totalorder %v1153, 1
        %vm1173 = vcmp.lt.s32.totalorder %v1153, 2
        %vm1174 = vcmp.lt.s32.totalorder %v1153, 3
        %vm1175 = vcmp.lt.s32.totalorder %v1153, 4
        %v1176 = vsel %vm1172, %v1156, %v1159
        %v1177 = vsel %vm1175, %v1165, 2102212464
        %v1178 = vsel %vm1174, %v1162, %v1177
        %v1179 = vsel %vm1173, %v1176, %v1178
        %v1180 = vsel %vm1172, %v1159, %v1162
        %v1181 = vsel %vm1175, %v1168, 920167782
        %v1182 = vsel %vm1174, %v1165, %v1181
        %v1183 = vsel %vm1173, %v1180, %v1182
        %v1184 = vsel %vm1172, %v1162, %v1165
        %v1185 = vsel %vm1175, %v1171, 1326507024
        %v1186 = vsel %vm1174, %v1168, %v1185
        %v1187 = vsel %vm1173, %v1184, %v1186
        %v1188 = vshll.u32 %v1148, 8
        %v1189 = vmul.u32.u64.compose %v1188, %v1187
        %v1190 = vextract.low.u32 %v1189
        %v1191 = vextract.high.u32 %v1189
        %v1192 = vmul.u32.u64.compose %v1188, %v1183
        %v1193 = vextract.low.u32 %v1192
        %v1194 = vextract.high.u32 %v1192
        %v1195 = vmul.u32 %v1188, %v1179
        %v1196 = vadd.s32 %v1191, %v1193
        %vm1197 = vc.u32 %v1191, %v1193
        %v1198 = vadd.s32 %v1194, 1
        %v1199 = vsel %vm1197, %v1198, %v1194
        %v1200 = vadd.s32 %v1195, %v1199
        %v1201 = vadd.s32 %v1200, 536870912
        %v1202 = vshrl.u32 %v1201, 30
        %v1203 = vshll.u32 %v1202, 30
        %v1204 = vsub.s32 %v1200, %v1203
        %vm1205 = vcmp.lt.s32.totalorder %v1204, 0
        %v1206 = vsub.s32 0, %v1204
        %v1207 = vsel %vm1205, %v1206, %v1204
        %v1208 = vclz %v1207
        %v1209 = vsub.s32 %v1208, 2
        %vm1210 = vcmp.gt.s32.totalorder 0, %v1209
        %v1211 = vsel %vm1210, 0, %v1209
        %v1212 = vsub.s32 32, %v1211
        %v1213 = vshll.u32 %v1204, %v1211
        %v1214 = vshrl.u32 %v1196, %v1212
        %v1215 = vor.u32 %v1213, %v1214
        %v1216 = vsub.s32 4294967266, %v1211
        %v1217 = vadd.s32 %v1216, 127
        %v1218 = vshll.u32 %v1217, 23
        %v1219 = vor.u32 4788187, %v1218
        %v1220 = vand.u32 2147483647, %v1219
        %v1222 = vcvt.s32.f32 %v1215
        %v1223 = vmul.f32 %v1222, %v1220
        %v1224 = vxor.u32 %v1223, 2147483648
        %v1225 = vsel %vm1142, %v1224, %v1223
        %v1226 = vsub.s32 4, %v1202
        %v1227 = vsel %vm1142, %v1226, %v1202
        %v1228 = vsel %vm1141, %v458, %v1225
        %v1229 = vsel %vm1141, 0, %v1227
        %v1230 = vcosq.f32.pop %v1228
        %v1231 = vsinq.f32.pop %v1228
        %vm1232 = vweird.f32 %v458
        %v1233 = vadd.s32 %v1229, 3
        %v1234 = vand.u32 %v1233, 3
        %vm1235 = vcmp.lt.s32.totalorder %v1234, 2
        %vm1236 = vcmp.eq.s32.totalorder %v1234, 0
        %v1237 = vxor.u32 %v1231, 2147483648
        %v1238 = vsel %vm1236, %v1230, %v1237
        %vm1239 = vcmp.eq.s32.totalorder %v1234, 2
        %v1240 = vxor.u32 %v1230, 2147483648
        %v1241 = vsel %vm1239, %v1240, %v1231
        %v1242 = vsel %vm1235, %v1238, %v1241
        %v1243 = vsel %vm1232, nan, %v1242
        %v1244 = vand.u32 2147483647, %v459
        %vm1245 = vcmp.le.f32.partialorder %v1244, 0.7853982
        %vm1246 = vcmp.lt.s32.totalorder %v459, 0
        %v1247 = vand.u32 %v459, 2139095040
        %v1248 = vshrl.u32 %v1247, 23
        %v1249 = vsub.s32 %v1248, 127
        %v1250 = vand.u32 2147483647, %v459
        %v1251 = vand.u32 %v1250, 8388607
        %v1252 = vor.u32 %v1251, 8388608
        %v1253 = vsub.s32 0, %v1252
        %v1254 = vadd.s32 %v1249, 1
        %vm1255 = vcmp.gt.s32.totalorder %v1254, 0
        %v1256 = vsel %vm1255, %v1254, 0
        %v1257 = vshrl.u32 %v1256, 5
        %v1258 = vand.u32 %v1256, 31
        %v1259 = vsub.s32 32, %v1258
        %v1260 = vshrl.u32 683565275, %v1259
        %v1261 = vshll.u32 683565275, %v1258
        %v1262 = vshrl.u32 2475754826, %v1259
        %v1263 = vor.u32 %v1261, %v1262
        %v1264 = vshll.u32 2475754826, %v1258
        %v1265 = vshrl.u32 2131351028, %v1259
        %v1266 = vor.u32 %v1264, %v1265
        %v1267 = vshll.u32 2131351028, %v1258
        %v1268 = vshrl.u32 2102212464, %v1259
        %v1269 = vor.u32 %v1267, %v1268
        %v1270 = vshll.u32 2102212464, %v1258
        %v1271 = vshrl.u32 920167782, %v1259
        %v1272 = vor.u32 %v1270, %v1271
        %v1273 = vshll.u32 920167782, %v1258
        %v1274 = vshrl.u32 1326507024, %v1259
        %v1275 = vor.u32 %v1273, %v1274
        %vm1276 = vcmp.lt.s32.totalorder %v1257, 1
        %vm1277 = vcmp.lt.s32.totalorder %v1257, 2
        %vm1278 = vcmp.lt.s32.totalorder %v1257, 3
        %vm1279 = vcmp.lt.s32.totalorder %v1257, 4
        %v1280 = vsel %vm1276, %v1260, %v1263
        %v1281 = vsel %vm1279, %v1269, 2102212464
        %v1282 = vsel %vm1278, %v1266, %v1281
        %v1283 = vsel %vm1277, %v1280, %v1282
        %v1284 = vsel %vm1276, %v1263, %v1266
        %v1285 = vsel %vm1279, %v1272, 920167782
        %v1286 = vsel %vm1278, %v1269, %v1285
        %v1287 = vsel %vm1277, %v1284, %v1286
        %v1288 = vsel %vm1276, %v1266, %v1269
        %v1289 = vsel %vm1279, %v1275, 1326507024
        %v1290 = vsel %vm1278, %v1272, %v1289
        %v1291 = vsel %vm1277, %v1288, %v1290
        %v1292 = vshll.u32 %v1252, 8
        %v1293 = vmul.u32.u64.compose %v1292, %v1291
        %v1294 = vextract.low.u32 %v1293
        %v1295 = vextract.high.u32 %v1293
        %v1296 = vmul.u32.u64.compose %v1292, %v1287
        %v1297 = vextract.low.u32 %v1296
        %v1298 = vextract.high.u32 %v1296
        %v1299 = vmul.u32 %v1292, %v1283
        %v1300 = vadd.s32 %v1295, %v1297
        %vm1301 = vc.u32 %v1295, %v1297
        %v1302 = vadd.s32 %v1298, 1
        %v1303 = vsel %vm1301, %v1302, %v1298
        %v1304 = vadd.s32 %v1299, %v1303
        %v1305 = vadd.s32 %v1304, 536870912
        %v1306 = vshrl.u32 %v1305, 30
        %v1307 = vshll.u32 %v1306, 30
        %v1308 = vsub.s32 %v1304, %v1307
        %vm1309 = vcmp.lt.s32.totalorder %v1308, 0
        %v1310 = vsub.s32 0, %v1308
        %v1311 = vsel %vm1309, %v1310, %v1308
        %v1312 = vclz %v1311
        %v1313 = vsub.s32 %v1312, 2
        %vm1314 = vcmp.gt.s32.totalorder 0, %v1313
        %v1315 = vsel %vm1314, 0, %v1313
        %v1316 = vsub.s32 32, %v1315
        %v1317 = vshll.u32 %v1308, %v1315
        %v1318 = vshrl.u32 %v1300, %v1316
        %v1319 = vor.u32 %v1317, %v1318
        %v1320 = vsub.s32 4294967266, %v1315
        %v1321 = vadd.s32 %v1320, 127
        %v1322 = vshll.u32 %v1321, 23
        %v1323 = vor.u32 4788187, %v1322
        %v1324 = vand.u32 2147483647, %v1323
        %v1326 = vcvt.s32.f32 %v1319
        %v1327 = vmul.f32 %v1326, %v1324
        %v1328 = vxor.u32 %v1327, 2147483648
        %v1329 = vsel %vm1246, %v1328, %v1327
        %v1330 = vsub.s32 4, %v1306
        %v1331 = vsel %vm1246, %v1330, %v1306
        %v1332 = vsel %vm1245, %v459, %v1329
        %v1333 = vsel %vm1245, 0, %v1331
        %v1334 = vcosq.f32.pop %v1332
        %v1335 = vsinq.f32.pop %v1332
        %vm1336 = vweird.f32 %v459
        %v1337 = vadd.s32 %v1333, 3
        %v1338 = vand.u32 %v1337, 3
        %vm1339 = vcmp.lt.s32.totalorder %v1338, 2
        %vm1340 = vcmp.eq.s32.totalorder %v1338, 0
        %v1341 = vxor.u32 %v1335, 2147483648
        %v1342 = vsel %vm1340, %v1334, %v1341
        %vm1343 = vcmp.eq.s32.totalorder %v1338, 2
        %v1344 = vxor.u32 %v1334, 2147483648
        %v1345 = vsel %vm1343, %v1344, %v1335
        %v1346 = vsel %vm1339, %v1342, %v1345
        %v1347 = vsel %vm1336, nan, %v1346
        %v1348 = vand.u32 2147483647, %v460
        %vm1349 = vcmp.le.f32.partialorder %v1348, 0.7853982
        %vm1350 = vcmp.lt.s32.totalorder %v460, 0
        %v1351 = vand.u32 %v460, 2139095040
        %v1352 = vshrl.u32 %v1351, 23
        %v1353 = vsub.s32 %v1352, 127
        %v1354 = vand.u32 2147483647, %v460
        %v1355 = vand.u32 %v1354, 8388607
        %v1356 = vor.u32 %v1355, 8388608
        %v1357 = vsub.s32 0, %v1356
        %v1358 = vadd.s32 %v1353, 1
        %vm1359 = vcmp.gt.s32.totalorder %v1358, 0
        %v1360 = vsel %vm1359, %v1358, 0
        %v1361 = vshrl.u32 %v1360, 5
        %v1362 = vand.u32 %v1360, 31
        %v1363 = vsub.s32 32, %v1362
        %v1364 = vshrl.u32 683565275, %v1363
        %v1365 = vshll.u32 683565275, %v1362
        %v1366 = vshrl.u32 2475754826, %v1363
        %v1367 = vor.u32 %v1365, %v1366
        %v1368 = vshll.u32 2475754826, %v1362
        %v1369 = vshrl.u32 2131351028, %v1363
        %v1370 = vor.u32 %v1368, %v1369
        %v1371 = vshll.u32 2131351028, %v1362
        %v1372 = vshrl.u32 2102212464, %v1363
        %v1373 = vor.u32 %v1371, %v1372
        %v1374 = vshll.u32 2102212464, %v1362
        %v1375 = vshrl.u32 920167782, %v1363
        %v1376 = vor.u32 %v1374, %v1375
        %v1377 = vshll.u32 920167782, %v1362
        %v1378 = vshrl.u32 1326507024, %v1363
        %v1379 = vor.u32 %v1377, %v1378
        %vm1380 = vcmp.lt.s32.totalorder %v1361, 1
        %vm1381 = vcmp.lt.s32.totalorder %v1361, 2
        %vm1382 = vcmp.lt.s32.totalorder %v1361, 3
        %vm1383 = vcmp.lt.s32.totalorder %v1361, 4
        %v1384 = vsel %vm1380, %v1364, %v1367
        %v1385 = vsel %vm1383, %v1373, 2102212464
        %v1386 = vsel %vm1382, %v1370, %v1385
        %v1387 = vsel %vm1381, %v1384, %v1386
        %v1388 = vsel %vm1380, %v1367, %v1370
        %v1389 = vsel %vm1383, %v1376, 920167782
        %v1390 = vsel %vm1382, %v1373, %v1389
        %v1391 = vsel %vm1381, %v1388, %v1390
        %v1392 = vsel %vm1380, %v1370, %v1373
        %v1393 = vsel %vm1383, %v1379, 1326507024
        %v1394 = vsel %vm1382, %v1376, %v1393
        %v1395 = vsel %vm1381, %v1392, %v1394
        %v1396 = vshll.u32 %v1356, 8
        %v1397 = vmul.u32.u64.compose %v1396, %v1395
        %v1398 = vextract.low.u32 %v1397
        %v1399 = vextract.high.u32 %v1397
        %v1400 = vmul.u32.u64.compose %v1396, %v1391
        %v1401 = vextract.low.u32 %v1400
        %v1402 = vextract.high.u32 %v1400
        %v1403 = vmul.u32 %v1396, %v1387
        %v1404 = vadd.s32 %v1399, %v1401
        %vm1405 = vc.u32 %v1399, %v1401
        %v1406 = vadd.s32 %v1402, 1
        %v1407 = vsel %vm1405, %v1406, %v1402
        %v1408 = vadd.s32 %v1403, %v1407
        %v1409 = vadd.s32 %v1408, 536870912
        %v1410 = vshrl.u32 %v1409, 30
        %v1411 = vshll.u32 %v1410, 30
        %v1412 = vsub.s32 %v1408, %v1411
        %vm1413 = vcmp.lt.s32.totalorder %v1412, 0
        %v1414 = vsub.s32 0, %v1412
        %v1415 = vsel %vm1413, %v1414, %v1412
        %v1416 = vclz %v1415
        %v1417 = vsub.s32 %v1416, 2
        %vm1418 = vcmp.gt.s32.totalorder 0, %v1417
        %v1419 = vsel %vm1418, 0, %v1417
        %v1420 = vsub.s32 32, %v1419
        %v1421 = vshll.u32 %v1412, %v1419
        %v1422 = vshrl.u32 %v1404, %v1420
        %v1423 = vor.u32 %v1421, %v1422
        %v1424 = vsub.s32 4294967266, %v1419
        %v1425 = vadd.s32 %v1424, 127
        %v1426 = vshll.u32 %v1425, 23
        %v1427 = vor.u32 4788187, %v1426
        %v1428 = vand.u32 2147483647, %v1427
        %v1430 = vcvt.s32.f32 %v1423
        %v1431 = vmul.f32 %v1430, %v1428
        %v1432 = vxor.u32 %v1431, 2147483648
        %v1433 = vsel %vm1350, %v1432, %v1431
        %v1434 = vsub.s32 4, %v1410
        %v1435 = vsel %vm1350, %v1434, %v1410
        %v1436 = vsel %vm1349, %v460, %v1433
        %v1437 = vsel %vm1349, 0, %v1435
        %v1438 = vcosq.f32.pop %v1436
        %v1439 = vsinq.f32.pop %v1436
        %vm1440 = vweird.f32 %v460
        %v1441 = vadd.s32 %v1437, 3
        %v1442 = vand.u32 %v1441, 3
        %vm1443 = vcmp.lt.s32.totalorder %v1442, 2
        %vm1444 = vcmp.eq.s32.totalorder %v1442, 0
        %v1445 = vxor.u32 %v1439, 2147483648
        %v1446 = vsel %vm1444, %v1438, %v1445
        %vm1447 = vcmp.eq.s32.totalorder %v1442, 2
        %v1448 = vxor.u32 %v1438, 2147483648
        %v1449 = vsel %vm1447, %v1448, %v1439
        %v1450 = vsel %vm1443, %v1446, %v1449
        %v1451 = vsel %vm1440, nan, %v1450
        %v1452 = vand.u32 2147483647, %v461
        %vm1453 = vcmp.le.f32.partialorder %v1452, 0.7853982
        %vm1454 = vcmp.lt.s32.totalorder %v461, 0
        %v1455 = vand.u32 %v461, 2139095040
        %v1456 = vshrl.u32 %v1455, 23
        %v1457 = vsub.s32 %v1456, 127
        %v1458 = vand.u32 2147483647, %v461
        %v1459 = vand.u32 %v1458, 8388607
        %v1460 = vor.u32 %v1459, 8388608
        %v1461 = vsub.s32 0, %v1460
        %v1462 = vadd.s32 %v1457, 1
        %vm1463 = vcmp.gt.s32.totalorder %v1462, 0
        %v1464 = vsel %vm1463, %v1462, 0
        %v1465 = vshrl.u32 %v1464, 5
        %v1466 = vand.u32 %v1464, 31
        %v1467 = vsub.s32 32, %v1466
        %v1468 = vshrl.u32 683565275, %v1467
        %v1469 = vshll.u32 683565275, %v1466
        %v1470 = vshrl.u32 2475754826, %v1467
        %v1471 = vor.u32 %v1469, %v1470
        %v1472 = vshll.u32 2475754826, %v1466
        %v1473 = vshrl.u32 2131351028, %v1467
        %v1474 = vor.u32 %v1472, %v1473
        %v1475 = vshll.u32 2131351028, %v1466
        %v1476 = vshrl.u32 2102212464, %v1467
        %v1477 = vor.u32 %v1475, %v1476
        %v1478 = vshll.u32 2102212464, %v1466
        %v1479 = vshrl.u32 920167782, %v1467
        %v1480 = vor.u32 %v1478, %v1479
        %v1481 = vshll.u32 920167782, %v1466
        %v1482 = vshrl.u32 1326507024, %v1467
        %v1483 = vor.u32 %v1481, %v1482
        %vm1484 = vcmp.lt.s32.totalorder %v1465, 1
        %vm1485 = vcmp.lt.s32.totalorder %v1465, 2
        %vm1486 = vcmp.lt.s32.totalorder %v1465, 3
        %vm1487 = vcmp.lt.s32.totalorder %v1465, 4
        %v1488 = vsel %vm1484, %v1468, %v1471
        %v1489 = vsel %vm1487, %v1477, 2102212464
        %v1490 = vsel %vm1486, %v1474, %v1489
        %v1491 = vsel %vm1485, %v1488, %v1490
        %v1492 = vsel %vm1484, %v1471, %v1474
        %v1493 = vsel %vm1487, %v1480, 920167782
        %v1494 = vsel %vm1486, %v1477, %v1493
        %v1495 = vsel %vm1485, %v1492, %v1494
        %v1496 = vsel %vm1484, %v1474, %v1477
        %v1497 = vsel %vm1487, %v1483, 1326507024
        %v1498 = vsel %vm1486, %v1480, %v1497
        %v1499 = vsel %vm1485, %v1496, %v1498
        %v1500 = vshll.u32 %v1460, 8
        %v1501 = vmul.u32.u64.compose %v1500, %v1499
        %v1502 = vextract.low.u32 %v1501
        %v1503 = vextract.high.u32 %v1501
        %v1504 = vmul.u32.u64.compose %v1500, %v1495
        %v1505 = vextract.low.u32 %v1504
        %v1506 = vextract.high.u32 %v1504
        %v1507 = vmul.u32 %v1500, %v1491
        %v1508 = vadd.s32 %v1503, %v1505
        %vm1509 = vc.u32 %v1503, %v1505
        %v1510 = vadd.s32 %v1506, 1
        %v1511 = vsel %vm1509, %v1510, %v1506
        %v1512 = vadd.s32 %v1507, %v1511
        %v1513 = vadd.s32 %v1512, 536870912
        %v1514 = vshrl.u32 %v1513, 30
        %v1515 = vshll.u32 %v1514, 30
        %v1516 = vsub.s32 %v1512, %v1515
        %vm1517 = vcmp.lt.s32.totalorder %v1516, 0
        %v1518 = vsub.s32 0, %v1516
        %v1519 = vsel %vm1517, %v1518, %v1516
        %v1520 = vclz %v1519
        %v1521 = vsub.s32 %v1520, 2
        %vm1522 = vcmp.gt.s32.totalorder 0, %v1521
        %v1523 = vsel %vm1522, 0, %v1521
        %v1524 = vsub.s32 32, %v1523
        %v1525 = vshll.u32 %v1516, %v1523
        %v1526 = vshrl.u32 %v1508, %v1524
        %v1527 = vor.u32 %v1525, %v1526
        %v1528 = vsub.s32 4294967266, %v1523
        %v1529 = vadd.s32 %v1528, 127
        %v1530 = vshll.u32 %v1529, 23
        %v1531 = vor.u32 4788187, %v1530
        %v1532 = vand.u32 2147483647, %v1531
        %v1534 = vcvt.s32.f32 %v1527
        %v1535 = vmul.f32 %v1534, %v1532
        %v1536 = vxor.u32 %v1535, 2147483648
        %v1537 = vsel %vm1454, %v1536, %v1535
        %v1538 = vsub.s32 4, %v1514
        %v1539 = vsel %vm1454, %v1538, %v1514
        %v1540 = vsel %vm1453, %v461, %v1537
        %v1541 = vsel %vm1453, 0, %v1539
        %v1542 = vcosq.f32.pop %v1540
        %v1543 = vsinq.f32.pop %v1540
        %vm1544 = vweird.f32 %v461
        %v1545 = vadd.s32 %v1541, 3
        %v1546 = vand.u32 %v1545, 3
        %vm1547 = vcmp.lt.s32.totalorder %v1546, 2
        %vm1548 = vcmp.eq.s32.totalorder %v1546, 0
        %v1549 = vxor.u32 %v1543, 2147483648
        %v1550 = vsel %vm1548, %v1542, %v1549
        %vm1551 = vcmp.eq.s32.totalorder %v1546, 2
        %v1552 = vxor.u32 %v1542, 2147483648
        %v1553 = vsel %vm1551, %v1552, %v1543
        %v1554 = vsel %vm1547, %v1550, %v1553
        %v1555 = vsel %vm1544, nan, %v1554
        %v1556 = vand.u32 2147483647, %v462
        %vm1557 = vcmp.le.f32.partialorder %v1556, 0.7853982
        %vm1558 = vcmp.lt.s32.totalorder %v462, 0
        %v1559 = vand.u32 %v462, 2139095040
        %v1560 = vshrl.u32 %v1559, 23
        %v1561 = vsub.s32 %v1560, 127
        %v1562 = vand.u32 2147483647, %v462
        %v1563 = vand.u32 %v1562, 8388607
        %v1564 = vor.u32 %v1563, 8388608
        %v1565 = vsub.s32 0, %v1564
        %v1566 = vadd.s32 %v1561, 1
        %vm1567 = vcmp.gt.s32.totalorder %v1566, 0
        %v1568 = vsel %vm1567, %v1566, 0
        %v1569 = vshrl.u32 %v1568, 5
        %v1570 = vand.u32 %v1568, 31
        %v1571 = vsub.s32 32, %v1570
        %v1572 = vshrl.u32 683565275, %v1571
        %v1573 = vshll.u32 683565275, %v1570
        %v1574 = vshrl.u32 2475754826, %v1571
        %v1575 = vor.u32 %v1573, %v1574
        %v1576 = vshll.u32 2475754826, %v1570
        %v1577 = vshrl.u32 2131351028, %v1571
        %v1578 = vor.u32 %v1576, %v1577
        %v1579 = vshll.u32 2131351028, %v1570
        %v1580 = vshrl.u32 2102212464, %v1571
        %v1581 = vor.u32 %v1579, %v1580
        %v1582 = vshll.u32 2102212464, %v1570
        %v1583 = vshrl.u32 920167782, %v1571
        %v1584 = vor.u32 %v1582, %v1583
        %v1585 = vshll.u32 920167782, %v1570
        %v1586 = vshrl.u32 1326507024, %v1571
        %v1587 = vor.u32 %v1585, %v1586
        %vm1588 = vcmp.lt.s32.totalorder %v1569, 1
        %vm1589 = vcmp.lt.s32.totalorder %v1569, 2
        %vm1590 = vcmp.lt.s32.totalorder %v1569, 3
        %vm1591 = vcmp.lt.s32.totalorder %v1569, 4
        %v1592 = vsel %vm1588, %v1572, %v1575
        %v1593 = vsel %vm1591, %v1581, 2102212464
        %v1594 = vsel %vm1590, %v1578, %v1593
        %v1595 = vsel %vm1589, %v1592, %v1594
        %v1596 = vsel %vm1588, %v1575, %v1578
        %v1597 = vsel %vm1591, %v1584, 920167782
        %v1598 = vsel %vm1590, %v1581, %v1597
        %v1599 = vsel %vm1589, %v1596, %v1598
        %v1600 = vsel %vm1588, %v1578, %v1581
        %v1601 = vsel %vm1591, %v1587, 1326507024
        %v1602 = vsel %vm1590, %v1584, %v1601
        %v1603 = vsel %vm1589, %v1600, %v1602
        %v1604 = vshll.u32 %v1564, 8
        %v1605 = vmul.u32.u64.compose %v1604, %v1603
        %v1606 = vextract.low.u32 %v1605
        %v1607 = vextract.high.u32 %v1605
        %v1608 = vmul.u32.u64.compose %v1604, %v1599
        %v1609 = vextract.low.u32 %v1608
        %v1610 = vextract.high.u32 %v1608
        %v1611 = vmul.u32 %v1604, %v1595
        %v1612 = vadd.s32 %v1607, %v1609
        %vm1613 = vc.u32 %v1607, %v1609
        %v1614 = vadd.s32 %v1610, 1
        %v1615 = vsel %vm1613, %v1614, %v1610
        %v1616 = vadd.s32 %v1611, %v1615
        %v1617 = vadd.s32 %v1616, 536870912
        %v1618 = vshrl.u32 %v1617, 30
        %v1619 = vshll.u32 %v1618, 30
        %v1620 = vsub.s32 %v1616, %v1619
        %vm1621 = vcmp.lt.s32.totalorder %v1620, 0
        %v1622 = vsub.s32 0, %v1620
        %v1623 = vsel %vm1621, %v1622, %v1620
        %v1624 = vclz %v1623
        %v1625 = vsub.s32 %v1624, 2
        %vm1626 = vcmp.gt.s32.totalorder 0, %v1625
        %v1627 = vsel %vm1626, 0, %v1625
        %v1628 = vsub.s32 32, %v1627
        %v1629 = vshll.u32 %v1620, %v1627
        %v1630 = vshrl.u32 %v1612, %v1628
        %v1631 = vor.u32 %v1629, %v1630
        %v1632 = vsub.s32 4294967266, %v1627
        %v1633 = vadd.s32 %v1632, 127
        %v1634 = vshll.u32 %v1633, 23
        %v1635 = vor.u32 4788187, %v1634
        %v1636 = vand.u32 2147483647, %v1635
        %v1638 = vcvt.s32.f32 %v1631
        %v1639 = vmul.f32 %v1638, %v1636
        %v1640 = vxor.u32 %v1639, 2147483648
        %v1641 = vsel %vm1558, %v1640, %v1639
        %v1642 = vsub.s32 4, %v1618
        %v1643 = vsel %vm1558, %v1642, %v1618
        %v1644 = vsel %vm1557, %v462, %v1641
        %v1645 = vsel %vm1557, 0, %v1643
        %v1646 = vcosq.f32.pop %v1644
        %v1647 = vsinq.f32.pop %v1644
        %vm1648 = vweird.f32 %v462
        %v1649 = vadd.s32 %v1645, 3
        %v1650 = vand.u32 %v1649, 3
        %vm1651 = vcmp.lt.s32.totalorder %v1650, 2
        %vm1652 = vcmp.eq.s32.totalorder %v1650, 0
        %v1653 = vxor.u32 %v1647, 2147483648
        %v1654 = vsel %vm1652, %v1646, %v1653
        %vm1655 = vcmp.eq.s32.totalorder %v1650, 2
        %v1656 = vxor.u32 %v1646, 2147483648
        %v1657 = vsel %vm1655, %v1656, %v1647
        %v1658 = vsel %vm1651, %v1654, %v1657
        %v1659 = vsel %vm1648, nan, %v1658
        %v1660 = vand.u32 2147483647, %v463
        %vm1661 = vcmp.le.f32.partialorder %v1660, 0.7853982
        %vm1662 = vcmp.lt.s32.totalorder %v463, 0
        %v1663 = vand.u32 %v463, 2139095040
        %v1664 = vshrl.u32 %v1663, 23
        %v1665 = vsub.s32 %v1664, 127
        %v1666 = vand.u32 2147483647, %v463
        %v1667 = vand.u32 %v1666, 8388607
        %v1668 = vor.u32 %v1667, 8388608
        %v1669 = vsub.s32 0, %v1668
        %v1670 = vadd.s32 %v1665, 1
        %vm1671 = vcmp.gt.s32.totalorder %v1670, 0
        %v1672 = vsel %vm1671, %v1670, 0
        %v1673 = vshrl.u32 %v1672, 5
        %v1674 = vand.u32 %v1672, 31
        %v1675 = vsub.s32 32, %v1674
        %v1676 = vshrl.u32 683565275, %v1675
        %v1677 = vshll.u32 683565275, %v1674
        %v1678 = vshrl.u32 2475754826, %v1675
        %v1679 = vor.u32 %v1677, %v1678
        %v1680 = vshll.u32 2475754826, %v1674
        %v1681 = vshrl.u32 2131351028, %v1675
        %v1682 = vor.u32 %v1680, %v1681
        %v1683 = vshll.u32 2131351028, %v1674
        %v1684 = vshrl.u32 2102212464, %v1675
        %v1685 = vor.u32 %v1683, %v1684
        %v1686 = vshll.u32 2102212464, %v1674
        %v1687 = vshrl.u32 920167782, %v1675
        %v1688 = vor.u32 %v1686, %v1687
        %v1689 = vshll.u32 920167782, %v1674
        %v1690 = vshrl.u32 1326507024, %v1675
        %v1691 = vor.u32 %v1689, %v1690
        %vm1692 = vcmp.lt.s32.totalorder %v1673, 1
        %vm1693 = vcmp.lt.s32.totalorder %v1673, 2
        %vm1694 = vcmp.lt.s32.totalorder %v1673, 3
        %vm1695 = vcmp.lt.s32.totalorder %v1673, 4
        %v1696 = vsel %vm1692, %v1676, %v1679
        %v1697 = vsel %vm1695, %v1685, 2102212464
        %v1698 = vsel %vm1694, %v1682, %v1697
        %v1699 = vsel %vm1693, %v1696, %v1698
        %v1700 = vsel %vm1692, %v1679, %v1682
        %v1701 = vsel %vm1695, %v1688, 920167782
        %v1702 = vsel %vm1694, %v1685, %v1701
        %v1703 = vsel %vm1693, %v1700, %v1702
        %v1704 = vsel %vm1692, %v1682, %v1685
        %v1705 = vsel %vm1695, %v1691, 1326507024
        %v1706 = vsel %vm1694, %v1688, %v1705
        %v1707 = vsel %vm1693, %v1704, %v1706
        %v1708 = vshll.u32 %v1668, 8
        %v1709 = vmul.u32.u64.compose %v1708, %v1707
        %v1710 = vextract.low.u32 %v1709
        %v1711 = vextract.high.u32 %v1709
        %v1712 = vmul.u32.u64.compose %v1708, %v1703
        %v1713 = vextract.low.u32 %v1712
        %v1714 = vextract.high.u32 %v1712
        %v1715 = vmul.u32 %v1708, %v1699
        %v1716 = vadd.s32 %v1711, %v1713
        %vm1717 = vc.u32 %v1711, %v1713
        %v1718 = vadd.s32 %v1714, 1
        %v1719 = vsel %vm1717, %v1718, %v1714
        %v1720 = vadd.s32 %v1715, %v1719
        %v1721 = vadd.s32 %v1720, 536870912
        %v1722 = vshrl.u32 %v1721, 30
        %v1723 = vshll.u32 %v1722, 30
        %v1724 = vsub.s32 %v1720, %v1723
        %vm1725 = vcmp.lt.s32.totalorder %v1724, 0
        %v1726 = vsub.s32 0, %v1724
        %v1727 = vsel %vm1725, %v1726, %v1724
        %v1728 = vclz %v1727
        %v1729 = vsub.s32 %v1728, 2
        %vm1730 = vcmp.gt.s32.totalorder 0, %v1729
        %v1731 = vsel %vm1730, 0, %v1729
        %v1732 = vsub.s32 32, %v1731
        %v1733 = vshll.u32 %v1724, %v1731
        %v1734 = vshrl.u32 %v1716, %v1732
        %v1735 = vor.u32 %v1733, %v1734
        %v1736 = vsub.s32 4294967266, %v1731
        %v1737 = vadd.s32 %v1736, 127
        %v1738 = vshll.u32 %v1737, 23
        %v1739 = vor.u32 4788187, %v1738
        %v1740 = vand.u32 2147483647, %v1739
        %v1742 = vcvt.s32.f32 %v1735
        %v1743 = vmul.f32 %v1742, %v1740
        %v1744 = vxor.u32 %v1743, 2147483648
        %v1745 = vsel %vm1662, %v1744, %v1743
        %v1746 = vsub.s32 4, %v1722
        %v1747 = vsel %vm1662, %v1746, %v1722
        %v1748 = vsel %vm1661, %v463, %v1745
        %v1749 = vsel %vm1661, 0, %v1747
        %v1750 = vcosq.f32.pop %v1748
        %v1751 = vsinq.f32.pop %v1748
        %vm1752 = vweird.f32 %v463
        %v1753 = vadd.s32 %v1749, 3
        %v1754 = vand.u32 %v1753, 3
        %vm1755 = vcmp.lt.s32.totalorder %v1754, 2
        %vm1756 = vcmp.eq.s32.totalorder %v1754, 0
        %v1757 = vxor.u32 %v1751, 2147483648
        %v1758 = vsel %vm1756, %v1750, %v1757
        %vm1759 = vcmp.eq.s32.totalorder %v1754, 2
        %v1760 = vxor.u32 %v1750, 2147483648
        %v1761 = vsel %vm1759, %v1760, %v1751
        %v1762 = vsel %vm1755, %v1758, %v1761
        %v1763 = vsel %vm1752, nan, %v1762
        %v1764 = vand.u32 2147483647, %v464
        %vm1765 = vcmp.le.f32.partialorder %v1764, 0.7853982
        %vm1766 = vcmp.lt.s32.totalorder %v464, 0
        %v1767 = vand.u32 %v464, 2139095040
        %v1768 = vshrl.u32 %v1767, 23
        %v1769 = vsub.s32 %v1768, 127
        %v1770 = vand.u32 2147483647, %v464
        %v1771 = vand.u32 %v1770, 8388607
        %v1772 = vor.u32 %v1771, 8388608
        %v1773 = vsub.s32 0, %v1772
        %v1774 = vadd.s32 %v1769, 1
        %vm1775 = vcmp.gt.s32.totalorder %v1774, 0
        %v1776 = vsel %vm1775, %v1774, 0
        %v1777 = vshrl.u32 %v1776, 5
        %v1778 = vand.u32 %v1776, 31
        %v1779 = vsub.s32 32, %v1778
        %v1780 = vshrl.u32 683565275, %v1779
        %v1781 = vshll.u32 683565275, %v1778
        %v1782 = vshrl.u32 2475754826, %v1779
        %v1783 = vor.u32 %v1781, %v1782
        %v1784 = vshll.u32 2475754826, %v1778
        %v1785 = vshrl.u32 2131351028, %v1779
        %v1786 = vor.u32 %v1784, %v1785
        %v1787 = vshll.u32 2131351028, %v1778
        %v1788 = vshrl.u32 2102212464, %v1779
        %v1789 = vor.u32 %v1787, %v1788
        %v1790 = vshll.u32 2102212464, %v1778
        %v1791 = vshrl.u32 920167782, %v1779
        %v1792 = vor.u32 %v1790, %v1791
        %v1793 = vshll.u32 920167782, %v1778
        %v1794 = vshrl.u32 1326507024, %v1779
        %v1795 = vor.u32 %v1793, %v1794
        %vm1796 = vcmp.lt.s32.totalorder %v1777, 1
        %vm1797 = vcmp.lt.s32.totalorder %v1777, 2
        %vm1798 = vcmp.lt.s32.totalorder %v1777, 3
        %vm1799 = vcmp.lt.s32.totalorder %v1777, 4
        %v1800 = vsel %vm1796, %v1780, %v1783
        %v1801 = vsel %vm1799, %v1789, 2102212464
        %v1802 = vsel %vm1798, %v1786, %v1801
        %v1803 = vsel %vm1797, %v1800, %v1802
        %v1804 = vsel %vm1796, %v1783, %v1786
        %v1805 = vsel %vm1799, %v1792, 920167782
        %v1806 = vsel %vm1798, %v1789, %v1805
        %v1807 = vsel %vm1797, %v1804, %v1806
        %v1808 = vsel %vm1796, %v1786, %v1789
        %v1809 = vsel %vm1799, %v1795, 1326507024
        %v1810 = vsel %vm1798, %v1792, %v1809
        %v1811 = vsel %vm1797, %v1808, %v1810
        %v1812 = vshll.u32 %v1772, 8
        %v1813 = vmul.u32.u64.compose %v1812, %v1811
        %v1814 = vextract.low.u32 %v1813
        %v1815 = vextract.high.u32 %v1813
        %v1816 = vmul.u32.u64.compose %v1812, %v1807
        %v1817 = vextract.low.u32 %v1816
        %v1818 = vextract.high.u32 %v1816
        %v1819 = vmul.u32 %v1812, %v1803
        %v1820 = vadd.s32 %v1815, %v1817
        %vm1821 = vc.u32 %v1815, %v1817
        %v1822 = vadd.s32 %v1818, 1
        %v1823 = vsel %vm1821, %v1822, %v1818
        %v1824 = vadd.s32 %v1819, %v1823
        %v1825 = vadd.s32 %v1824, 536870912
        %v1826 = vshrl.u32 %v1825, 30
        %v1827 = vshll.u32 %v1826, 30
        %v1828 = vsub.s32 %v1824, %v1827
        %vm1829 = vcmp.lt.s32.totalorder %v1828, 0
        %v1830 = vsub.s32 0, %v1828
        %v1831 = vsel %vm1829, %v1830, %v1828
        %v1832 = vclz %v1831
        %v1833 = vsub.s32 %v1832, 2
        %vm1834 = vcmp.gt.s32.totalorder 0, %v1833
        %v1835 = vsel %vm1834, 0, %v1833
        %v1836 = vsub.s32 32, %v1835
        %v1837 = vshll.u32 %v1828, %v1835
        %v1838 = vshrl.u32 %v1820, %v1836
        %v1839 = vor.u32 %v1837, %v1838
        %v1840 = vsub.s32 4294967266, %v1835
        %v1841 = vadd.s32 %v1840, 127
        %v1842 = vshll.u32 %v1841, 23
        %v1843 = vor.u32 4788187, %v1842
        %v1844 = vand.u32 2147483647, %v1843
        %v1846 = vcvt.s32.f32 %v1839
        %v1847 = vmul.f32 %v1846, %v1844
        %v1848 = vxor.u32 %v1847, 2147483648
        %v1849 = vsel %vm1766, %v1848, %v1847
        %v1850 = vsub.s32 4, %v1826
        %v1851 = vsel %vm1766, %v1850, %v1826
        %v1852 = vsel %vm1765, %v464, %v1849
        %v1853 = vsel %vm1765, 0, %v1851
        %v1854 = vcosq.f32.pop %v1852
        %v1855 = vsinq.f32.pop %v1852
        %vm1856 = vweird.f32 %v464
        %v1857 = vadd.s32 %v1853, 3
        %v1858 = vand.u32 %v1857, 3
        %vm1859 = vcmp.lt.s32.totalorder %v1858, 2
        %vm1860 = vcmp.eq.s32.totalorder %v1858, 0
        %v1861 = vxor.u32 %v1855, 2147483648
        %v1862 = vsel %vm1860, %v1854, %v1861
        %vm1863 = vcmp.eq.s32.totalorder %v1858, 2
        %v1864 = vxor.u32 %v1854, 2147483648
        %v1865 = vsel %vm1863, %v1864, %v1855
        %v1866 = vsel %vm1859, %v1862, %v1865
        %v1867 = vsel %vm1856, nan, %v1866
        %v1868 = vand.u32 2147483647, %v465
        %vm1869 = vcmp.le.f32.partialorder %v1868, 0.7853982
        %vm1870 = vcmp.lt.s32.totalorder %v465, 0
        %v1871 = vand.u32 %v465, 2139095040
        %v1872 = vshrl.u32 %v1871, 23
        %v1873 = vsub.s32 %v1872, 127
        %v1874 = vand.u32 2147483647, %v465
        %v1875 = vand.u32 %v1874, 8388607
        %v1876 = vor.u32 %v1875, 8388608
        %v1877 = vsub.s32 0, %v1876
        %v1878 = vadd.s32 %v1873, 1
        %vm1879 = vcmp.gt.s32.totalorder %v1878, 0
        %v1880 = vsel %vm1879, %v1878, 0
        %v1881 = vshrl.u32 %v1880, 5
        %v1882 = vand.u32 %v1880, 31
        %v1883 = vsub.s32 32, %v1882
        %v1884 = vshrl.u32 683565275, %v1883
        %v1885 = vshll.u32 683565275, %v1882
        %v1886 = vshrl.u32 2475754826, %v1883
        %v1887 = vor.u32 %v1885, %v1886
        %v1888 = vshll.u32 2475754826, %v1882
        %v1889 = vshrl.u32 2131351028, %v1883
        %v1890 = vor.u32 %v1888, %v1889
        %v1891 = vshll.u32 2131351028, %v1882
        %v1892 = vshrl.u32 2102212464, %v1883
        %v1893 = vor.u32 %v1891, %v1892
        %v1894 = vshll.u32 2102212464, %v1882
        %v1895 = vshrl.u32 920167782, %v1883
        %v1896 = vor.u32 %v1894, %v1895
        %v1897 = vshll.u32 920167782, %v1882
        %v1898 = vshrl.u32 1326507024, %v1883
        %v1899 = vor.u32 %v1897, %v1898
        %vm1900 = vcmp.lt.s32.totalorder %v1881, 1
        %vm1901 = vcmp.lt.s32.totalorder %v1881, 2
        %vm1902 = vcmp.lt.s32.totalorder %v1881, 3
        %vm1903 = vcmp.lt.s32.totalorder %v1881, 4
        %v1904 = vsel %vm1900, %v1884, %v1887
        %v1905 = vsel %vm1903, %v1893, 2102212464
        %v1906 = vsel %vm1902, %v1890, %v1905
        %v1907 = vsel %vm1901, %v1904, %v1906
        %v1908 = vsel %vm1900, %v1887, %v1890
        %v1909 = vsel %vm1903, %v1896, 920167782
        %v1910 = vsel %vm1902, %v1893, %v1909
        %v1911 = vsel %vm1901, %v1908, %v1910
        %v1912 = vsel %vm1900, %v1890, %v1893
        %v1913 = vsel %vm1903, %v1899, 1326507024
        %v1914 = vsel %vm1902, %v1896, %v1913
        %v1915 = vsel %vm1901, %v1912, %v1914
        %v1916 = vshll.u32 %v1876, 8
        %v1917 = vmul.u32.u64.compose %v1916, %v1915
        %v1918 = vextract.low.u32 %v1917
        %v1919 = vextract.high.u32 %v1917
        %v1920 = vmul.u32.u64.compose %v1916, %v1911
        %v1921 = vextract.low.u32 %v1920
        %v1922 = vextract.high.u32 %v1920
        %v1923 = vmul.u32 %v1916, %v1907
        %v1924 = vadd.s32 %v1919, %v1921
        %vm1925 = vc.u32 %v1919, %v1921
        %v1926 = vadd.s32 %v1922, 1
        %v1927 = vsel %vm1925, %v1926, %v1922
        %v1928 = vadd.s32 %v1923, %v1927
        %v1929 = vadd.s32 %v1928, 536870912
        %v1930 = vshrl.u32 %v1929, 30
        %v1931 = vshll.u32 %v1930, 30
        %v1932 = vsub.s32 %v1928, %v1931
        %vm1933 = vcmp.lt.s32.totalorder %v1932, 0
        %v1934 = vsub.s32 0, %v1932
        %v1935 = vsel %vm1933, %v1934, %v1932
        %v1936 = vclz %v1935
        %v1937 = vsub.s32 %v1936, 2
        %vm1938 = vcmp.gt.s32.totalorder 0, %v1937
        %v1939 = vsel %vm1938, 0, %v1937
        %v1940 = vsub.s32 32, %v1939
        %v1941 = vshll.u32 %v1932, %v1939
        %v1942 = vshrl.u32 %v1924, %v1940
        %v1943 = vor.u32 %v1941, %v1942
        %v1944 = vsub.s32 4294967266, %v1939
        %v1945 = vadd.s32 %v1944, 127
        %v1946 = vshll.u32 %v1945, 23
        %v1947 = vor.u32 4788187, %v1946
        %v1948 = vand.u32 2147483647, %v1947
        %v1950 = vcvt.s32.f32 %v1943
        %v1951 = vmul.f32 %v1950, %v1948
        %v1952 = vxor.u32 %v1951, 2147483648
        %v1953 = vsel %vm1870, %v1952, %v1951
        %v1954 = vsub.s32 4, %v1930
        %v1955 = vsel %vm1870, %v1954, %v1930
        %v1956 = vsel %vm1869, %v465, %v1953
        %v1957 = vsel %vm1869, 0, %v1955
        %v1958 = vcosq.f32.pop %v1956
        %v1959 = vsinq.f32.pop %v1956
        %vm1960 = vweird.f32 %v465
        %v1961 = vadd.s32 %v1957, 3
        %v1962 = vand.u32 %v1961, 3
        %vm1963 = vcmp.lt.s32.totalorder %v1962, 2
        %vm1964 = vcmp.eq.s32.totalorder %v1962, 0
        %v1965 = vxor.u32 %v1959, 2147483648
        %v1966 = vsel %vm1964, %v1958, %v1965
        %vm1967 = vcmp.eq.s32.totalorder %v1962, 2
        %v1968 = vxor.u32 %v1958, 2147483648
        %v1969 = vsel %vm1967, %v1968, %v1959
        %v1970 = vsel %vm1963, %v1966, %v1969
        %v1971 = vsel %vm1960, nan, %v1970
        %v1972 = vand.u32 2147483647, %v466
        %vm1973 = vcmp.le.f32.partialorder %v1972, 0.7853982
        %vm1974 = vcmp.lt.s32.totalorder %v466, 0
        %v1975 = vand.u32 %v466, 2139095040
        %v1976 = vshrl.u32 %v1975, 23
        %v1977 = vsub.s32 %v1976, 127
        %v1978 = vand.u32 2147483647, %v466
        %v1979 = vand.u32 %v1978, 8388607
        %v1980 = vor.u32 %v1979, 8388608
        %v1981 = vsub.s32 0, %v1980
        %v1982 = vadd.s32 %v1977, 1
        %vm1983 = vcmp.gt.s32.totalorder %v1982, 0
        %v1984 = vsel %vm1983, %v1982, 0
        %v1985 = vshrl.u32 %v1984, 5
        %v1986 = vand.u32 %v1984, 31
        %v1987 = vsub.s32 32, %v1986
        %v1988 = vshrl.u32 683565275, %v1987
        %v1989 = vshll.u32 683565275, %v1986
        %v1990 = vshrl.u32 2475754826, %v1987
        %v1991 = vor.u32 %v1989, %v1990
        %v1992 = vshll.u32 2475754826, %v1986
        %v1993 = vshrl.u32 2131351028, %v1987
        %v1994 = vor.u32 %v1992, %v1993
        %v1995 = vshll.u32 2131351028, %v1986
        %v1996 = vshrl.u32 2102212464, %v1987
        %v1997 = vor.u32 %v1995, %v1996
        %v1998 = vshll.u32 2102212464, %v1986
        %v1999 = vshrl.u32 920167782, %v1987
        %v2000 = vor.u32 %v1998, %v1999
        %v2001 = vshll.u32 920167782, %v1986
        %v2002 = vshrl.u32 1326507024, %v1987
        %v2003 = vor.u32 %v2001, %v2002
        %vm2004 = vcmp.lt.s32.totalorder %v1985, 1
        %vm2005 = vcmp.lt.s32.totalorder %v1985, 2
        %vm2006 = vcmp.lt.s32.totalorder %v1985, 3
        %vm2007 = vcmp.lt.s32.totalorder %v1985, 4
        %v2008 = vsel %vm2004, %v1988, %v1991
        %v2009 = vsel %vm2007, %v1997, 2102212464
        %v2010 = vsel %vm2006, %v1994, %v2009
        %v2011 = vsel %vm2005, %v2008, %v2010
        %v2012 = vsel %vm2004, %v1991, %v1994
        %v2013 = vsel %vm2007, %v2000, 920167782
        %v2014 = vsel %vm2006, %v1997, %v2013
        %v2015 = vsel %vm2005, %v2012, %v2014
        %v2016 = vsel %vm2004, %v1994, %v1997
        %v2017 = vsel %vm2007, %v2003, 1326507024
        %v2018 = vsel %vm2006, %v2000, %v2017
        %v2019 = vsel %vm2005, %v2016, %v2018
        %v2020 = vshll.u32 %v1980, 8
        %v2021 = vmul.u32.u64.compose %v2020, %v2019
        %v2022 = vextract.low.u32 %v2021
        %v2023 = vextract.high.u32 %v2021
        %v2024 = vmul.u32.u64.compose %v2020, %v2015
        %v2025 = vextract.low.u32 %v2024
        %v2026 = vextract.high.u32 %v2024
        %v2027 = vmul.u32 %v2020, %v2011
        %v2028 = vadd.s32 %v2023, %v2025
        %vm2029 = vc.u32 %v2023, %v2025
        %v2030 = vadd.s32 %v2026, 1
        %v2031 = vsel %vm2029, %v2030, %v2026
        %v2032 = vadd.s32 %v2027, %v2031
        %v2033 = vadd.s32 %v2032, 536870912
        %v2034 = vshrl.u32 %v2033, 30
        %v2035 = vshll.u32 %v2034, 30
        %v2036 = vsub.s32 %v2032, %v2035
        %vm2037 = vcmp.lt.s32.totalorder %v2036, 0
        %v2038 = vsub.s32 0, %v2036
        %v2039 = vsel %vm2037, %v2038, %v2036
        %v2040 = vclz %v2039
        %v2041 = vsub.s32 %v2040, 2
        %vm2042 = vcmp.gt.s32.totalorder 0, %v2041
        %v2043 = vsel %vm2042, 0, %v2041
        %v2044 = vsub.s32 32, %v2043
        %v2045 = vshll.u32 %v2036, %v2043
        %v2046 = vshrl.u32 %v2028, %v2044
        %v2047 = vor.u32 %v2045, %v2046
        %v2048 = vsub.s32 4294967266, %v2043
        %v2049 = vadd.s32 %v2048, 127
        %v2050 = vshll.u32 %v2049, 23
        %v2051 = vor.u32 4788187, %v2050
        %v2052 = vand.u32 2147483647, %v2051
        %v2054 = vcvt.s32.f32 %v2047
        %v2055 = vmul.f32 %v2054, %v2052
        %v2056 = vxor.u32 %v2055, 2147483648
        %v2057 = vsel %vm1974, %v2056, %v2055
        %v2058 = vsub.s32 4, %v2034
        %v2059 = vsel %vm1974, %v2058, %v2034
        %v2060 = vsel %vm1973, %v466, %v2057
        %v2061 = vsel %vm1973, 0, %v2059
        %v2062 = vcosq.f32.pop %v2060
        %v2063 = vsinq.f32.pop %v2060
        %vm2064 = vweird.f32 %v466
        %v2065 = vadd.s32 %v2061, 3
        %v2066 = vand.u32 %v2065, 3
        %vm2067 = vcmp.lt.s32.totalorder %v2066, 2
        %vm2068 = vcmp.eq.s32.totalorder %v2066, 0
        %v2069 = vxor.u32 %v2063, 2147483648
        %v2070 = vsel %vm2068, %v2062, %v2069
        %vm2071 = vcmp.eq.s32.totalorder %v2066, 2
        %v2072 = vxor.u32 %v2062, 2147483648
        %v2073 = vsel %vm2071, %v2072, %v2063
        %v2074 = vsel %vm2067, %v2070, %v2073
        %v2075 = vsel %vm2064, nan, %v2074
        %v2076 = vand.u32 2147483647, %v467
        %vm2077 = vcmp.le.f32.partialorder %v2076, 0.7853982
        %vm2078 = vcmp.lt.s32.totalorder %v467, 0
        %v2079 = vand.u32 %v467, 2139095040
        %v2080 = vshrl.u32 %v2079, 23
        %v2081 = vsub.s32 %v2080, 127
        %v2082 = vand.u32 2147483647, %v467
        %v2083 = vand.u32 %v2082, 8388607
        %v2084 = vor.u32 %v2083, 8388608
        %v2085 = vsub.s32 0, %v2084
        %v2086 = vadd.s32 %v2081, 1
        %vm2087 = vcmp.gt.s32.totalorder %v2086, 0
        %v2088 = vsel %vm2087, %v2086, 0
        %v2089 = vshrl.u32 %v2088, 5
        %v2090 = vand.u32 %v2088, 31
        %v2091 = vsub.s32 32, %v2090
        %v2092 = vshrl.u32 683565275, %v2091
        %v2093 = vshll.u32 683565275, %v2090
        %v2094 = vshrl.u32 2475754826, %v2091
        %v2095 = vor.u32 %v2093, %v2094
        %v2096 = vshll.u32 2475754826, %v2090
        %v2097 = vshrl.u32 2131351028, %v2091
        %v2098 = vor.u32 %v2096, %v2097
        %v2099 = vshll.u32 2131351028, %v2090
        %v2100 = vshrl.u32 2102212464, %v2091
        %v2101 = vor.u32 %v2099, %v2100
        %v2102 = vshll.u32 2102212464, %v2090
        %v2103 = vshrl.u32 920167782, %v2091
        %v2104 = vor.u32 %v2102, %v2103
        %v2105 = vshll.u32 920167782, %v2090
        %v2106 = vshrl.u32 1326507024, %v2091
        %v2107 = vor.u32 %v2105, %v2106
        %vm2108 = vcmp.lt.s32.totalorder %v2089, 1
        %vm2109 = vcmp.lt.s32.totalorder %v2089, 2
        %vm2110 = vcmp.lt.s32.totalorder %v2089, 3
        %vm2111 = vcmp.lt.s32.totalorder %v2089, 4
        %v2112 = vsel %vm2108, %v2092, %v2095
        %v2113 = vsel %vm2111, %v2101, 2102212464
        %v2114 = vsel %vm2110, %v2098, %v2113
        %v2115 = vsel %vm2109, %v2112, %v2114
        %v2116 = vsel %vm2108, %v2095, %v2098
        %v2117 = vsel %vm2111, %v2104, 920167782
        %v2118 = vsel %vm2110, %v2101, %v2117
        %v2119 = vsel %vm2109, %v2116, %v2118
        %v2120 = vsel %vm2108, %v2098, %v2101
        %v2121 = vsel %vm2111, %v2107, 1326507024
        %v2122 = vsel %vm2110, %v2104, %v2121
        %v2123 = vsel %vm2109, %v2120, %v2122
        %v2124 = vshll.u32 %v2084, 8
        %v2125 = vmul.u32.u64.compose %v2124, %v2123
        %v2126 = vextract.low.u32 %v2125
        %v2127 = vextract.high.u32 %v2125
        %v2128 = vmul.u32.u64.compose %v2124, %v2119
        %v2129 = vextract.low.u32 %v2128
        %v2130 = vextract.high.u32 %v2128
        %v2131 = vmul.u32 %v2124, %v2115
        %v2132 = vadd.s32 %v2127, %v2129
        %vm2133 = vc.u32 %v2127, %v2129
        %v2134 = vadd.s32 %v2130, 1
        %v2135 = vsel %vm2133, %v2134, %v2130
        %v2136 = vadd.s32 %v2131, %v2135
        %v2137 = vadd.s32 %v2136, 536870912
        %v2138 = vshrl.u32 %v2137, 30
        %v2139 = vshll.u32 %v2138, 30
        %v2140 = vsub.s32 %v2136, %v2139
        %vm2141 = vcmp.lt.s32.totalorder %v2140, 0
        %v2142 = vsub.s32 0, %v2140
        %v2143 = vsel %vm2141, %v2142, %v2140
        %v2144 = vclz %v2143
        %v2145 = vsub.s32 %v2144, 2
        %vm2146 = vcmp.gt.s32.totalorder 0, %v2145
        %v2147 = vsel %vm2146, 0, %v2145
        %v2148 = vsub.s32 32, %v2147
        %v2149 = vshll.u32 %v2140, %v2147
        %v2150 = vshrl.u32 %v2132, %v2148
        %v2151 = vor.u32 %v2149, %v2150
        %v2152 = vsub.s32 4294967266, %v2147
        %v2153 = vadd.s32 %v2152, 127
        %v2154 = vshll.u32 %v2153, 23
        %v2155 = vor.u32 4788187, %v2154
        %v2156 = vand.u32 2147483647, %v2155
        %v2158 = vcvt.s32.f32 %v2151
        %v2159 = vmul.f32 %v2158, %v2156
        %v2160 = vxor.u32 %v2159, 2147483648
        %v2161 = vsel %vm2078, %v2160, %v2159
        %v2162 = vsub.s32 4, %v2138
        %v2163 = vsel %vm2078, %v2162, %v2138
        %v2164 = vsel %vm2077, %v467, %v2161
        %v2165 = vsel %vm2077, 0, %v2163
        %v2166 = vcosq.f32.pop %v2164
        %v2167 = vsinq.f32.pop %v2164
        %vm2168 = vweird.f32 %v467
        %v2169 = vadd.s32 %v2165, 3
        %v2170 = vand.u32 %v2169, 3
        %vm2171 = vcmp.lt.s32.totalorder %v2170, 2
        %vm2172 = vcmp.eq.s32.totalorder %v2170, 0
        %v2173 = vxor.u32 %v2167, 2147483648
        %v2174 = vsel %vm2172, %v2166, %v2173
        %vm2175 = vcmp.eq.s32.totalorder %v2170, 2
        %v2176 = vxor.u32 %v2166, 2147483648
        %v2177 = vsel %vm2175, %v2176, %v2167
        %v2178 = vsel %vm2171, %v2174, %v2177
        %v2179 = vsel %vm2168, nan, %v2178
        %v2180 = vand.u32 2147483647, %v468
        %vm2181 = vcmp.le.f32.partialorder %v2180, 0.7853982
        %vm2182 = vcmp.lt.s32.totalorder %v468, 0
        %v2183 = vand.u32 %v468, 2139095040
        %v2184 = vshrl.u32 %v2183, 23
        %v2185 = vsub.s32 %v2184, 127
        %v2186 = vand.u32 2147483647, %v468
        %v2187 = vand.u32 %v2186, 8388607
        %v2188 = vor.u32 %v2187, 8388608
        %v2189 = vsub.s32 0, %v2188
        %v2190 = vadd.s32 %v2185, 1
        %vm2191 = vcmp.gt.s32.totalorder %v2190, 0
        %v2192 = vsel %vm2191, %v2190, 0
        %v2193 = vshrl.u32 %v2192, 5
        %v2194 = vand.u32 %v2192, 31
        %v2195 = vsub.s32 32, %v2194
        %v2196 = vshrl.u32 683565275, %v2195
        %v2197 = vshll.u32 683565275, %v2194
        %v2198 = vshrl.u32 2475754826, %v2195
        %v2199 = vor.u32 %v2197, %v2198
        %v2200 = vshll.u32 2475754826, %v2194
        %v2201 = vshrl.u32 2131351028, %v2195
        %v2202 = vor.u32 %v2200, %v2201
        %v2203 = vshll.u32 2131351028, %v2194
        %v2204 = vshrl.u32 2102212464, %v2195
        %v2205 = vor.u32 %v2203, %v2204
        %v2206 = vshll.u32 2102212464, %v2194
        %v2207 = vshrl.u32 920167782, %v2195
        %v2208 = vor.u32 %v2206, %v2207
        %v2209 = vshll.u32 920167782, %v2194
        %v2210 = vshrl.u32 1326507024, %v2195
        %v2211 = vor.u32 %v2209, %v2210
        %vm2212 = vcmp.lt.s32.totalorder %v2193, 1
        %vm2213 = vcmp.lt.s32.totalorder %v2193, 2
        %vm2214 = vcmp.lt.s32.totalorder %v2193, 3
        %vm2215 = vcmp.lt.s32.totalorder %v2193, 4
        %v2216 = vsel %vm2212, %v2196, %v2199
        %v2217 = vsel %vm2215, %v2205, 2102212464
        %v2218 = vsel %vm2214, %v2202, %v2217
        %v2219 = vsel %vm2213, %v2216, %v2218
        %v2220 = vsel %vm2212, %v2199, %v2202
        %v2221 = vsel %vm2215, %v2208, 920167782
        %v2222 = vsel %vm2214, %v2205, %v2221
        %v2223 = vsel %vm2213, %v2220, %v2222
        %v2224 = vsel %vm2212, %v2202, %v2205
        %v2225 = vsel %vm2215, %v2211, 1326507024
        %v2226 = vsel %vm2214, %v2208, %v2225
        %v2227 = vsel %vm2213, %v2224, %v2226
        %v2228 = vshll.u32 %v2188, 8
        %v2229 = vmul.u32.u64.compose %v2228, %v2227
        %v2230 = vextract.low.u32 %v2229
        %v2231 = vextract.high.u32 %v2229
        %v2232 = vmul.u32.u64.compose %v2228, %v2223
        %v2233 = vextract.low.u32 %v2232
        %v2234 = vextract.high.u32 %v2232
        %v2235 = vmul.u32 %v2228, %v2219
        %v2236 = vadd.s32 %v2231, %v2233
        %vm2237 = vc.u32 %v2231, %v2233
        %v2238 = vadd.s32 %v2234, 1
        %v2239 = vsel %vm2237, %v2238, %v2234
        %v2240 = vadd.s32 %v2235, %v2239
        %v2241 = vadd.s32 %v2240, 536870912
        %v2242 = vshrl.u32 %v2241, 30
        %v2243 = vshll.u32 %v2242, 30
        %v2244 = vsub.s32 %v2240, %v2243
        %vm2245 = vcmp.lt.s32.totalorder %v2244, 0
        %v2246 = vsub.s32 0, %v2244
        %v2247 = vsel %vm2245, %v2246, %v2244
        %v2248 = vclz %v2247
        %v2249 = vsub.s32 %v2248, 2
        %vm2250 = vcmp.gt.s32.totalorder 0, %v2249
        %v2251 = vsel %vm2250, 0, %v2249
        %v2252 = vsub.s32 32, %v2251
        %v2253 = vshll.u32 %v2244, %v2251
        %v2254 = vshrl.u32 %v2236, %v2252
        %v2255 = vor.u32 %v2253, %v2254
        %v2256 = vsub.s32 4294967266, %v2251
        %v2257 = vadd.s32 %v2256, 127
        %v2258 = vshll.u32 %v2257, 23
        %v2259 = vor.u32 4788187, %v2258
        %v2260 = vand.u32 2147483647, %v2259
        %v2262 = vcvt.s32.f32 %v2255
        %v2263 = vmul.f32 %v2262, %v2260
        %v2264 = vxor.u32 %v2263, 2147483648
        %v2265 = vsel %vm2182, %v2264, %v2263
        %v2266 = vsub.s32 4, %v2242
        %v2267 = vsel %vm2182, %v2266, %v2242
        %v2268 = vsel %vm2181, %v468, %v2265
        %v2269 = vsel %vm2181, 0, %v2267
        %v2270 = vcosq.f32.pop %v2268
        %v2271 = vsinq.f32.pop %v2268
        %vm2272 = vweird.f32 %v468
        %v2273 = vadd.s32 %v2269, 3
        %v2274 = vand.u32 %v2273, 3
        %vm2275 = vcmp.lt.s32.totalorder %v2274, 2
        %vm2276 = vcmp.eq.s32.totalorder %v2274, 0
        %v2277 = vxor.u32 %v2271, 2147483648
        %v2278 = vsel %vm2276, %v2270, %v2277
        %vm2279 = vcmp.eq.s32.totalorder %v2274, 2
        %v2280 = vxor.u32 %v2270, 2147483648
        %v2281 = vsel %vm2279, %v2280, %v2271
        %v2282 = vsel %vm2275, %v2278, %v2281
        %v2283 = vsel %vm2272, nan, %v2282
        %v2284 = vand.u32 2147483647, %v469
        %vm2285 = vcmp.le.f32.partialorder %v2284, 0.7853982
        %vm2286 = vcmp.lt.s32.totalorder %v469, 0
        %v2287 = vand.u32 %v469, 2139095040
        %v2288 = vshrl.u32 %v2287, 23
        %v2289 = vsub.s32 %v2288, 127
        %v2290 = vand.u32 2147483647, %v469
        %v2291 = vand.u32 %v2290, 8388607
        %v2292 = vor.u32 %v2291, 8388608
        %v2293 = vsub.s32 0, %v2292
        %v2294 = vadd.s32 %v2289, 1
        %vm2295 = vcmp.gt.s32.totalorder %v2294, 0
        %v2296 = vsel %vm2295, %v2294, 0
        %v2297 = vshrl.u32 %v2296, 5
        %v2298 = vand.u32 %v2296, 31
        %v2299 = vsub.s32 32, %v2298
        %v2300 = vshrl.u32 683565275, %v2299
        %v2301 = vshll.u32 683565275, %v2298
        %v2302 = vshrl.u32 2475754826, %v2299
        %v2303 = vor.u32 %v2301, %v2302
        %v2304 = vshll.u32 2475754826, %v2298
        %v2305 = vshrl.u32 2131351028, %v2299
        %v2306 = vor.u32 %v2304, %v2305
        %v2307 = vshll.u32 2131351028, %v2298
        %v2308 = vshrl.u32 2102212464, %v2299
        %v2309 = vor.u32 %v2307, %v2308
        %v2310 = vshll.u32 2102212464, %v2298
        %v2311 = vshrl.u32 920167782, %v2299
        %v2312 = vor.u32 %v2310, %v2311
        %v2313 = vshll.u32 920167782, %v2298
        %v2314 = vshrl.u32 1326507024, %v2299
        %v2315 = vor.u32 %v2313, %v2314
        %vm2316 = vcmp.lt.s32.totalorder %v2297, 1
        %vm2317 = vcmp.lt.s32.totalorder %v2297, 2
        %vm2318 = vcmp.lt.s32.totalorder %v2297, 3
        %vm2319 = vcmp.lt.s32.totalorder %v2297, 4
        %v2320 = vsel %vm2316, %v2300, %v2303
        %v2321 = vsel %vm2319, %v2309, 2102212464
        %v2322 = vsel %vm2318, %v2306, %v2321
        %v2323 = vsel %vm2317, %v2320, %v2322
        %v2324 = vsel %vm2316, %v2303, %v2306
        %v2325 = vsel %vm2319, %v2312, 920167782
        %v2326 = vsel %vm2318, %v2309, %v2325
        %v2327 = vsel %vm2317, %v2324, %v2326
        %v2328 = vsel %vm2316, %v2306, %v2309
        %v2329 = vsel %vm2319, %v2315, 1326507024
        %v2330 = vsel %vm2318, %v2312, %v2329
        %v2331 = vsel %vm2317, %v2328, %v2330
        %v2332 = vshll.u32 %v2292, 8
        %v2333 = vmul.u32.u64.compose %v2332, %v2331
        %v2334 = vextract.low.u32 %v2333
        %v2335 = vextract.high.u32 %v2333
        %v2336 = vmul.u32.u64.compose %v2332, %v2327
        %v2337 = vextract.low.u32 %v2336
        %v2338 = vextract.high.u32 %v2336
        %v2339 = vmul.u32 %v2332, %v2323
        %v2340 = vadd.s32 %v2335, %v2337
        %vm2341 = vc.u32 %v2335, %v2337
        %v2342 = vadd.s32 %v2338, 1
        %v2343 = vsel %vm2341, %v2342, %v2338
        %v2344 = vadd.s32 %v2339, %v2343
        %v2345 = vadd.s32 %v2344, 536870912
        %v2346 = vshrl.u32 %v2345, 30
        %v2347 = vshll.u32 %v2346, 30
        %v2348 = vsub.s32 %v2344, %v2347
        %vm2349 = vcmp.lt.s32.totalorder %v2348, 0
        %v2350 = vsub.s32 0, %v2348
        %v2351 = vsel %vm2349, %v2350, %v2348
        %v2352 = vclz %v2351
        %v2353 = vsub.s32 %v2352, 2
        %vm2354 = vcmp.gt.s32.totalorder 0, %v2353
        %v2355 = vsel %vm2354, 0, %v2353
        %v2356 = vsub.s32 32, %v2355
        %v2357 = vshll.u32 %v2348, %v2355
        %v2358 = vshrl.u32 %v2340, %v2356
        %v2359 = vor.u32 %v2357, %v2358
        %v2360 = vsub.s32 4294967266, %v2355
        %v2361 = vadd.s32 %v2360, 127
        %v2362 = vshll.u32 %v2361, 23
        %v2363 = vor.u32 4788187, %v2362
        %v2364 = vand.u32 2147483647, %v2363
        %v2366 = vcvt.s32.f32 %v2359
        %v2367 = vmul.f32 %v2366, %v2364
        %v2368 = vxor.u32 %v2367, 2147483648
        %v2369 = vsel %vm2286, %v2368, %v2367
        %v2370 = vsub.s32 4, %v2346
        %v2371 = vsel %vm2286, %v2370, %v2346
        %v2372 = vsel %vm2285, %v469, %v2369
        %v2373 = vsel %vm2285, 0, %v2371
        %v2374 = vcosq.f32.pop %v2372
        %v2375 = vsinq.f32.pop %v2372
        %vm2376 = vweird.f32 %v469
        %v2377 = vadd.s32 %v2373, 3
        %v2378 = vand.u32 %v2377, 3
        %vm2379 = vcmp.lt.s32.totalorder %v2378, 2
        %vm2380 = vcmp.eq.s32.totalorder %v2378, 0
        %v2381 = vxor.u32 %v2375, 2147483648
        %v2382 = vsel %vm2380, %v2374, %v2381
        %vm2383 = vcmp.eq.s32.totalorder %v2378, 2
        %v2384 = vxor.u32 %v2374, 2147483648
        %v2385 = vsel %vm2383, %v2384, %v2375
        %v2386 = vsel %vm2379, %v2382, %v2385
        %v2387 = vsel %vm2376, nan, %v2386
        %v2388 = vand.u32 2147483647, %v470
        %vm2389 = vcmp.le.f32.partialorder %v2388, 0.7853982
        %vm2390 = vcmp.lt.s32.totalorder %v470, 0
        %v2391 = vand.u32 %v470, 2139095040
        %v2392 = vshrl.u32 %v2391, 23
        %v2393 = vsub.s32 %v2392, 127
        %v2394 = vand.u32 2147483647, %v470
        %v2395 = vand.u32 %v2394, 8388607
        %v2396 = vor.u32 %v2395, 8388608
        %v2397 = vsub.s32 0, %v2396
        %v2398 = vadd.s32 %v2393, 1
        %vm2399 = vcmp.gt.s32.totalorder %v2398, 0
        %v2400 = vsel %vm2399, %v2398, 0
        %v2401 = vshrl.u32 %v2400, 5
        %v2402 = vand.u32 %v2400, 31
        %v2403 = vsub.s32 32, %v2402
        %v2404 = vshrl.u32 683565275, %v2403
        %v2405 = vshll.u32 683565275, %v2402
        %v2406 = vshrl.u32 2475754826, %v2403
        %v2407 = vor.u32 %v2405, %v2406
        %v2408 = vshll.u32 2475754826, %v2402
        %v2409 = vshrl.u32 2131351028, %v2403
        %v2410 = vor.u32 %v2408, %v2409
        %v2411 = vshll.u32 2131351028, %v2402
        %v2412 = vshrl.u32 2102212464, %v2403
        %v2413 = vor.u32 %v2411, %v2412
        %v2414 = vshll.u32 2102212464, %v2402
        %v2415 = vshrl.u32 920167782, %v2403
        %v2416 = vor.u32 %v2414, %v2415
        %v2417 = vshll.u32 920167782, %v2402
        %v2418 = vshrl.u32 1326507024, %v2403
        %v2419 = vor.u32 %v2417, %v2418
        %vm2420 = vcmp.lt.s32.totalorder %v2401, 1
        %vm2421 = vcmp.lt.s32.totalorder %v2401, 2
        %vm2422 = vcmp.lt.s32.totalorder %v2401, 3
        %vm2423 = vcmp.lt.s32.totalorder %v2401, 4
        %v2424 = vsel %vm2420, %v2404, %v2407
        %v2425 = vsel %vm2423, %v2413, 2102212464
        %v2426 = vsel %vm2422, %v2410, %v2425
        %v2427 = vsel %vm2421, %v2424, %v2426
        %v2428 = vsel %vm2420, %v2407, %v2410
        %v2429 = vsel %vm2423, %v2416, 920167782
        %v2430 = vsel %vm2422, %v2413, %v2429
        %v2431 = vsel %vm2421, %v2428, %v2430
        %v2432 = vsel %vm2420, %v2410, %v2413
        %v2433 = vsel %vm2423, %v2419, 1326507024
        %v2434 = vsel %vm2422, %v2416, %v2433
        %v2435 = vsel %vm2421, %v2432, %v2434
        %v2436 = vshll.u32 %v2396, 8
        %v2437 = vmul.u32.u64.compose %v2436, %v2435
        %v2438 = vextract.low.u32 %v2437
        %v2439 = vextract.high.u32 %v2437
        %v2440 = vmul.u32.u64.compose %v2436, %v2431
        %v2441 = vextract.low.u32 %v2440
        %v2442 = vextract.high.u32 %v2440
        %v2443 = vmul.u32 %v2436, %v2427
        %v2444 = vadd.s32 %v2439, %v2441
        %vm2445 = vc.u32 %v2439, %v2441
        %v2446 = vadd.s32 %v2442, 1
        %v2447 = vsel %vm2445, %v2446, %v2442
        %v2448 = vadd.s32 %v2443, %v2447
        %v2449 = vadd.s32 %v2448, 536870912
        %v2450 = vshrl.u32 %v2449, 30
        %v2451 = vshll.u32 %v2450, 30
        %v2452 = vsub.s32 %v2448, %v2451
        %vm2453 = vcmp.lt.s32.totalorder %v2452, 0
        %v2454 = vsub.s32 0, %v2452
        %v2455 = vsel %vm2453, %v2454, %v2452
        %v2456 = vclz %v2455
        %v2457 = vsub.s32 %v2456, 2
        %vm2458 = vcmp.gt.s32.totalorder 0, %v2457
        %v2459 = vsel %vm2458, 0, %v2457
        %v2460 = vsub.s32 32, %v2459
        %v2461 = vshll.u32 %v2452, %v2459
        %v2462 = vshrl.u32 %v2444, %v2460
        %v2463 = vor.u32 %v2461, %v2462
        %v2464 = vsub.s32 4294967266, %v2459
        %v2465 = vadd.s32 %v2464, 127
        %v2466 = vshll.u32 %v2465, 23
        %v2467 = vor.u32 4788187, %v2466
        %v2468 = vand.u32 2147483647, %v2467
        %v2470 = vcvt.s32.f32 %v2463
        %v2471 = vmul.f32 %v2470, %v2468
        %v2472 = vxor.u32 %v2471, 2147483648
        %v2473 = vsel %vm2390, %v2472, %v2471
        %v2474 = vsub.s32 4, %v2450
        %v2475 = vsel %vm2390, %v2474, %v2450
        %v2476 = vsel %vm2389, %v470, %v2473
        %v2477 = vsel %vm2389, 0, %v2475
        %v2478 = vcosq.f32.pop %v2476
        %v2479 = vsinq.f32.pop %v2476
        %vm2480 = vweird.f32 %v470
        %v2481 = vadd.s32 %v2477, 3
        %v2482 = vand.u32 %v2481, 3
        %vm2483 = vcmp.lt.s32.totalorder %v2482, 2
        %vm2484 = vcmp.eq.s32.totalorder %v2482, 0
        %v2485 = vxor.u32 %v2479, 2147483648
        %v2486 = vsel %vm2484, %v2478, %v2485
        %vm2487 = vcmp.eq.s32.totalorder %v2482, 2
        %v2488 = vxor.u32 %v2478, 2147483648
        %v2489 = vsel %vm2487, %v2488, %v2479
        %v2490 = vsel %vm2483, %v2486, %v2489
        %v2491 = vsel %vm2480, nan, %v2490
        %v2492 = vand.u32 2147483647, %v471
        %vm2493 = vcmp.le.f32.partialorder %v2492, 0.7853982
        %vm2494 = vcmp.lt.s32.totalorder %v471, 0
        %v2495 = vand.u32 %v471, 2139095040
        %v2496 = vshrl.u32 %v2495, 23
        %v2497 = vsub.s32 %v2496, 127
        %v2498 = vand.u32 2147483647, %v471
        %v2499 = vand.u32 %v2498, 8388607
        %v2500 = vor.u32 %v2499, 8388608
        %v2501 = vsub.s32 0, %v2500
        %v2502 = vadd.s32 %v2497, 1
        %vm2503 = vcmp.gt.s32.totalorder %v2502, 0
        %v2504 = vsel %vm2503, %v2502, 0
        %v2505 = vshrl.u32 %v2504, 5
        %v2506 = vand.u32 %v2504, 31
        %v2507 = vsub.s32 32, %v2506
        %v2508 = vshrl.u32 683565275, %v2507
        %v2509 = vshll.u32 683565275, %v2506
        %v2510 = vshrl.u32 2475754826, %v2507
        %v2511 = vor.u32 %v2509, %v2510
        %v2512 = vshll.u32 2475754826, %v2506
        %v2513 = vshrl.u32 2131351028, %v2507
        %v2514 = vor.u32 %v2512, %v2513
        %v2515 = vshll.u32 2131351028, %v2506
        %v2516 = vshrl.u32 2102212464, %v2507
        %v2517 = vor.u32 %v2515, %v2516
        %v2518 = vshll.u32 2102212464, %v2506
        %v2519 = vshrl.u32 920167782, %v2507
        %v2520 = vor.u32 %v2518, %v2519
        %v2521 = vshll.u32 920167782, %v2506
        %v2522 = vshrl.u32 1326507024, %v2507
        %v2523 = vor.u32 %v2521, %v2522
        %vm2524 = vcmp.lt.s32.totalorder %v2505, 1
        %vm2525 = vcmp.lt.s32.totalorder %v2505, 2
        %vm2526 = vcmp.lt.s32.totalorder %v2505, 3
        %vm2527 = vcmp.lt.s32.totalorder %v2505, 4
        %v2528 = vsel %vm2524, %v2508, %v2511
        %v2529 = vsel %vm2527, %v2517, 2102212464
        %v2530 = vsel %vm2526, %v2514, %v2529
        %v2531 = vsel %vm2525, %v2528, %v2530
        %v2532 = vsel %vm2524, %v2511, %v2514
        %v2533 = vsel %vm2527, %v2520, 920167782
        %v2534 = vsel %vm2526, %v2517, %v2533
        %v2535 = vsel %vm2525, %v2532, %v2534
        %v2536 = vsel %vm2524, %v2514, %v2517
        %v2537 = vsel %vm2527, %v2523, 1326507024
        %v2538 = vsel %vm2526, %v2520, %v2537
        %v2539 = vsel %vm2525, %v2536, %v2538
        %v2540 = vshll.u32 %v2500, 8
        %v2541 = vmul.u32.u64.compose %v2540, %v2539
        %v2542 = vextract.low.u32 %v2541
        %v2543 = vextract.high.u32 %v2541
        %v2544 = vmul.u32.u64.compose %v2540, %v2535
        %v2545 = vextract.low.u32 %v2544
        %v2546 = vextract.high.u32 %v2544
        %v2547 = vmul.u32 %v2540, %v2531
        %v2548 = vadd.s32 %v2543, %v2545
        %vm2549 = vc.u32 %v2543, %v2545
        %v2550 = vadd.s32 %v2546, 1
        %v2551 = vsel %vm2549, %v2550, %v2546
        %v2552 = vadd.s32 %v2547, %v2551
        %v2553 = vadd.s32 %v2552, 536870912
        %v2554 = vshrl.u32 %v2553, 30
        %v2555 = vshll.u32 %v2554, 30
        %v2556 = vsub.s32 %v2552, %v2555
        %vm2557 = vcmp.lt.s32.totalorder %v2556, 0
        %v2558 = vsub.s32 0, %v2556
        %v2559 = vsel %vm2557, %v2558, %v2556
        %v2560 = vclz %v2559
        %v2561 = vsub.s32 %v2560, 2
        %vm2562 = vcmp.gt.s32.totalorder 0, %v2561
        %v2563 = vsel %vm2562, 0, %v2561
        %v2564 = vsub.s32 32, %v2563
        %v2565 = vshll.u32 %v2556, %v2563
        %v2566 = vshrl.u32 %v2548, %v2564
        %v2567 = vor.u32 %v2565, %v2566
        %v2568 = vsub.s32 4294967266, %v2563
        %v2569 = vadd.s32 %v2568, 127
        %v2570 = vshll.u32 %v2569, 23
        %v2571 = vor.u32 4788187, %v2570
        %v2572 = vand.u32 2147483647, %v2571
        %v2574 = vcvt.s32.f32 %v2567
        %v2575 = vmul.f32 %v2574, %v2572
        %v2576 = vxor.u32 %v2575, 2147483648
        %v2577 = vsel %vm2494, %v2576, %v2575
        %v2578 = vsub.s32 4, %v2554
        %v2579 = vsel %vm2494, %v2578, %v2554
        %v2580 = vsel %vm2493, %v471, %v2577
        %v2581 = vsel %vm2493, 0, %v2579
        %v2582 = vcosq.f32.pop %v2580
        %v2583 = vsinq.f32.pop %v2580
        %vm2584 = vweird.f32 %v471
        %v2585 = vadd.s32 %v2581, 3
        %v2586 = vand.u32 %v2585, 3
        %vm2587 = vcmp.lt.s32.totalorder %v2586, 2
        %vm2588 = vcmp.eq.s32.totalorder %v2586, 0
        %v2589 = vxor.u32 %v2583, 2147483648
        %v2590 = vsel %vm2588, %v2582, %v2589
        %vm2591 = vcmp.eq.s32.totalorder %v2586, 2
        %v2592 = vxor.u32 %v2582, 2147483648
        %v2593 = vsel %vm2591, %v2592, %v2583
        %v2594 = vsel %vm2587, %v2590, %v2593
        %v2595 = vsel %vm2584, nan, %v2594
        %v2596 = vand.u32 2147483647, %v472
        %vm2597 = vcmp.le.f32.partialorder %v2596, 0.7853982
        %vm2598 = vcmp.lt.s32.totalorder %v472, 0
        %v2599 = vand.u32 %v472, 2139095040
        %v2600 = vshrl.u32 %v2599, 23
        %v2601 = vsub.s32 %v2600, 127
        %v2602 = vand.u32 2147483647, %v472
        %v2603 = vand.u32 %v2602, 8388607
        %v2604 = vor.u32 %v2603, 8388608
        %v2605 = vsub.s32 0, %v2604
        %v2606 = vadd.s32 %v2601, 1
        %vm2607 = vcmp.gt.s32.totalorder %v2606, 0
        %v2608 = vsel %vm2607, %v2606, 0
        %v2609 = vshrl.u32 %v2608, 5
        %v2610 = vand.u32 %v2608, 31
        %v2611 = vsub.s32 32, %v2610
        %v2612 = vshrl.u32 683565275, %v2611
        %v2613 = vshll.u32 683565275, %v2610
        %v2614 = vshrl.u32 2475754826, %v2611
        %v2615 = vor.u32 %v2613, %v2614
        %v2616 = vshll.u32 2475754826, %v2610
        %v2617 = vshrl.u32 2131351028, %v2611
        %v2618 = vor.u32 %v2616, %v2617
        %v2619 = vshll.u32 2131351028, %v2610
        %v2620 = vshrl.u32 2102212464, %v2611
        %v2621 = vor.u32 %v2619, %v2620
        %v2622 = vshll.u32 2102212464, %v2610
        %v2623 = vshrl.u32 920167782, %v2611
        %v2624 = vor.u32 %v2622, %v2623
        %v2625 = vshll.u32 920167782, %v2610
        %v2626 = vshrl.u32 1326507024, %v2611
        %v2627 = vor.u32 %v2625, %v2626
        %vm2628 = vcmp.lt.s32.totalorder %v2609, 1
        %vm2629 = vcmp.lt.s32.totalorder %v2609, 2
        %vm2630 = vcmp.lt.s32.totalorder %v2609, 3
        %vm2631 = vcmp.lt.s32.totalorder %v2609, 4
        %v2632 = vsel %vm2628, %v2612, %v2615
        %v2633 = vsel %vm2631, %v2621, 2102212464
        %v2634 = vsel %vm2630, %v2618, %v2633
        %v2635 = vsel %vm2629, %v2632, %v2634
        %v2636 = vsel %vm2628, %v2615, %v2618
        %v2637 = vsel %vm2631, %v2624, 920167782
        %v2638 = vsel %vm2630, %v2621, %v2637
        %v2639 = vsel %vm2629, %v2636, %v2638
        %v2640 = vsel %vm2628, %v2618, %v2621
        %v2641 = vsel %vm2631, %v2627, 1326507024
        %v2642 = vsel %vm2630, %v2624, %v2641
        %v2643 = vsel %vm2629, %v2640, %v2642
        %v2644 = vshll.u32 %v2604, 8
        %v2645 = vmul.u32.u64.compose %v2644, %v2643
        %v2646 = vextract.low.u32 %v2645
        %v2647 = vextract.high.u32 %v2645
        %v2648 = vmul.u32.u64.compose %v2644, %v2639
        %v2649 = vextract.low.u32 %v2648
        %v2650 = vextract.high.u32 %v2648
        %v2651 = vmul.u32 %v2644, %v2635
        %v2652 = vadd.s32 %v2647, %v2649
        %vm2653 = vc.u32 %v2647, %v2649
        %v2654 = vadd.s32 %v2650, 1
        %v2655 = vsel %vm2653, %v2654, %v2650
        %v2656 = vadd.s32 %v2651, %v2655
        %v2657 = vadd.s32 %v2656, 536870912
        %v2658 = vshrl.u32 %v2657, 30
        %v2659 = vshll.u32 %v2658, 30
        %v2660 = vsub.s32 %v2656, %v2659
        %vm2661 = vcmp.lt.s32.totalorder %v2660, 0
        %v2662 = vsub.s32 0, %v2660
        %v2663 = vsel %vm2661, %v2662, %v2660
        %v2664 = vclz %v2663
        %v2665 = vsub.s32 %v2664, 2
        %vm2666 = vcmp.gt.s32.totalorder 0, %v2665
        %v2667 = vsel %vm2666, 0, %v2665
        %v2668 = vsub.s32 32, %v2667
        %v2669 = vshll.u32 %v2660, %v2667
        %v2670 = vshrl.u32 %v2652, %v2668
        %v2671 = vor.u32 %v2669, %v2670
        %v2672 = vsub.s32 4294967266, %v2667
        %v2673 = vadd.s32 %v2672, 127
        %v2674 = vshll.u32 %v2673, 23
        %v2675 = vor.u32 4788187, %v2674
        %v2676 = vand.u32 2147483647, %v2675
        %v2678 = vcvt.s32.f32 %v2671
        %v2679 = vmul.f32 %v2678, %v2676
        %v2680 = vxor.u32 %v2679, 2147483648
        %v2681 = vsel %vm2598, %v2680, %v2679
        %v2682 = vsub.s32 4, %v2658
        %v2683 = vsel %vm2598, %v2682, %v2658
        %v2684 = vsel %vm2597, %v472, %v2681
        %v2685 = vsel %vm2597, 0, %v2683
        %v2686 = vcosq.f32.pop %v2684
        %v2687 = vsinq.f32.pop %v2684
        %vm2688 = vweird.f32 %v472
        %v2689 = vadd.s32 %v2685, 3
        %v2690 = vand.u32 %v2689, 3
        %vm2691 = vcmp.lt.s32.totalorder %v2690, 2
        %vm2692 = vcmp.eq.s32.totalorder %v2690, 0
        %v2693 = vxor.u32 %v2687, 2147483648
        %v2694 = vsel %vm2692, %v2686, %v2693
        %vm2695 = vcmp.eq.s32.totalorder %v2690, 2
        %v2696 = vxor.u32 %v2686, 2147483648
        %v2697 = vsel %vm2695, %v2696, %v2687
        %v2698 = vsel %vm2691, %v2694, %v2697
        %v2699 = vsel %vm2688, nan, %v2698
        %v2700 = vand.u32 2147483647, %v473
        %vm2701 = vcmp.le.f32.partialorder %v2700, 0.7853982
        %vm2702 = vcmp.lt.s32.totalorder %v473, 0
        %v2703 = vand.u32 %v473, 2139095040
        %v2704 = vshrl.u32 %v2703, 23
        %v2705 = vsub.s32 %v2704, 127
        %v2706 = vand.u32 2147483647, %v473
        %v2707 = vand.u32 %v2706, 8388607
        %v2708 = vor.u32 %v2707, 8388608
        %v2709 = vsub.s32 0, %v2708
        %v2710 = vadd.s32 %v2705, 1
        %vm2711 = vcmp.gt.s32.totalorder %v2710, 0
        %v2712 = vsel %vm2711, %v2710, 0
        %v2713 = vshrl.u32 %v2712, 5
        %v2714 = vand.u32 %v2712, 31
        %v2715 = vsub.s32 32, %v2714
        %v2716 = vshrl.u32 683565275, %v2715
        %v2717 = vshll.u32 683565275, %v2714
        %v2718 = vshrl.u32 2475754826, %v2715
        %v2719 = vor.u32 %v2717, %v2718
        %v2720 = vshll.u32 2475754826, %v2714
        %v2721 = vshrl.u32 2131351028, %v2715
        %v2722 = vor.u32 %v2720, %v2721
        %v2723 = vshll.u32 2131351028, %v2714
        %v2724 = vshrl.u32 2102212464, %v2715
        %v2725 = vor.u32 %v2723, %v2724
        %v2726 = vshll.u32 2102212464, %v2714
        %v2727 = vshrl.u32 920167782, %v2715
        %v2728 = vor.u32 %v2726, %v2727
        %v2729 = vshll.u32 920167782, %v2714
        %v2730 = vshrl.u32 1326507024, %v2715
        %v2731 = vor.u32 %v2729, %v2730
        %vm2732 = vcmp.lt.s32.totalorder %v2713, 1
        %vm2733 = vcmp.lt.s32.totalorder %v2713, 2
        %vm2734 = vcmp.lt.s32.totalorder %v2713, 3
        %vm2735 = vcmp.lt.s32.totalorder %v2713, 4
        %v2736 = vsel %vm2732, %v2716, %v2719
        %v2737 = vsel %vm2735, %v2725, 2102212464
        %v2738 = vsel %vm2734, %v2722, %v2737
        %v2739 = vsel %vm2733, %v2736, %v2738
        %v2740 = vsel %vm2732, %v2719, %v2722
        %v2741 = vsel %vm2735, %v2728, 920167782
        %v2742 = vsel %vm2734, %v2725, %v2741
        %v2743 = vsel %vm2733, %v2740, %v2742
        %v2744 = vsel %vm2732, %v2722, %v2725
        %v2745 = vsel %vm2735, %v2731, 1326507024
        %v2746 = vsel %vm2734, %v2728, %v2745
        %v2747 = vsel %vm2733, %v2744, %v2746
        %v2748 = vshll.u32 %v2708, 8
        %v2749 = vmul.u32.u64.compose %v2748, %v2747
        %v2750 = vextract.low.u32 %v2749
        %v2751 = vextract.high.u32 %v2749
        %v2752 = vmul.u32.u64.compose %v2748, %v2743
        %v2753 = vextract.low.u32 %v2752
        %v2754 = vextract.high.u32 %v2752
        %v2755 = vmul.u32 %v2748, %v2739
        %v2756 = vadd.s32 %v2751, %v2753
        %vm2757 = vc.u32 %v2751, %v2753
        %v2758 = vadd.s32 %v2754, 1
        %v2759 = vsel %vm2757, %v2758, %v2754
        %v2760 = vadd.s32 %v2755, %v2759
        %v2761 = vadd.s32 %v2760, 536870912
        %v2762 = vshrl.u32 %v2761, 30
        %v2763 = vshll.u32 %v2762, 30
        %v2764 = vsub.s32 %v2760, %v2763
        %vm2765 = vcmp.lt.s32.totalorder %v2764, 0
        %v2766 = vsub.s32 0, %v2764
        %v2767 = vsel %vm2765, %v2766, %v2764
        %v2768 = vclz %v2767
        %v2769 = vsub.s32 %v2768, 2
        %vm2770 = vcmp.gt.s32.totalorder 0, %v2769
        %v2771 = vsel %vm2770, 0, %v2769
        %v2772 = vsub.s32 32, %v2771
        %v2773 = vshll.u32 %v2764, %v2771
        %v2774 = vshrl.u32 %v2756, %v2772
        %v2775 = vor.u32 %v2773, %v2774
        %v2776 = vsub.s32 4294967266, %v2771
        %v2777 = vadd.s32 %v2776, 127
        %v2778 = vshll.u32 %v2777, 23
        %v2779 = vor.u32 4788187, %v2778
        %v2780 = vand.u32 2147483647, %v2779
        %v2782 = vcvt.s32.f32 %v2775
        %v2783 = vmul.f32 %v2782, %v2780
        %v2784 = vxor.u32 %v2783, 2147483648
        %v2785 = vsel %vm2702, %v2784, %v2783
        %v2786 = vsub.s32 4, %v2762
        %v2787 = vsel %vm2702, %v2786, %v2762
        %v2788 = vsel %vm2701, %v473, %v2785
        %v2789 = vsel %vm2701, 0, %v2787
        %v2790 = vcosq.f32.pop %v2788
        %v2791 = vsinq.f32.pop %v2788
        %vm2792 = vweird.f32 %v473
        %v2793 = vadd.s32 %v2789, 3
        %v2794 = vand.u32 %v2793, 3
        %vm2795 = vcmp.lt.s32.totalorder %v2794, 2
        %vm2796 = vcmp.eq.s32.totalorder %v2794, 0
        %v2797 = vxor.u32 %v2791, 2147483648
        %v2798 = vsel %vm2796, %v2790, %v2797
        %vm2799 = vcmp.eq.s32.totalorder %v2794, 2
        %v2800 = vxor.u32 %v2790, 2147483648
        %v2801 = vsel %vm2799, %v2800, %v2791
        %v2802 = vsel %vm2795, %v2798, %v2801
        %v2803 = vsel %vm2792, nan, %v2802
        %v2804 = vand.u32 2147483647, %v474
        %vm2805 = vcmp.le.f32.partialorder %v2804, 0.7853982
        %vm2806 = vcmp.lt.s32.totalorder %v474, 0
        %v2807 = vand.u32 %v474, 2139095040
        %v2808 = vshrl.u32 %v2807, 23
        %v2809 = vsub.s32 %v2808, 127
        %v2810 = vand.u32 2147483647, %v474
        %v2811 = vand.u32 %v2810, 8388607
        %v2812 = vor.u32 %v2811, 8388608
        %v2813 = vsub.s32 0, %v2812
        %v2814 = vadd.s32 %v2809, 1
        %vm2815 = vcmp.gt.s32.totalorder %v2814, 0
        %v2816 = vsel %vm2815, %v2814, 0
        %v2817 = vshrl.u32 %v2816, 5
        %v2818 = vand.u32 %v2816, 31
        %v2819 = vsub.s32 32, %v2818
        %v2820 = vshrl.u32 683565275, %v2819
        %v2821 = vshll.u32 683565275, %v2818
        %v2822 = vshrl.u32 2475754826, %v2819
        %v2823 = vor.u32 %v2821, %v2822
        %v2824 = vshll.u32 2475754826, %v2818
        %v2825 = vshrl.u32 2131351028, %v2819
        %v2826 = vor.u32 %v2824, %v2825
        %v2827 = vshll.u32 2131351028, %v2818
        %v2828 = vshrl.u32 2102212464, %v2819
        %v2829 = vor.u32 %v2827, %v2828
        %v2830 = vshll.u32 2102212464, %v2818
        %v2831 = vshrl.u32 920167782, %v2819
        %v2832 = vor.u32 %v2830, %v2831
        %v2833 = vshll.u32 920167782, %v2818
        %v2834 = vshrl.u32 1326507024, %v2819
        %v2835 = vor.u32 %v2833, %v2834
        %vm2836 = vcmp.lt.s32.totalorder %v2817, 1
        %vm2837 = vcmp.lt.s32.totalorder %v2817, 2
        %vm2838 = vcmp.lt.s32.totalorder %v2817, 3
        %vm2839 = vcmp.lt.s32.totalorder %v2817, 4
        %v2840 = vsel %vm2836, %v2820, %v2823
        %v2841 = vsel %vm2839, %v2829, 2102212464
        %v2842 = vsel %vm2838, %v2826, %v2841
        %v2843 = vsel %vm2837, %v2840, %v2842
        %v2844 = vsel %vm2836, %v2823, %v2826
        %v2845 = vsel %vm2839, %v2832, 920167782
        %v2846 = vsel %vm2838, %v2829, %v2845
        %v2847 = vsel %vm2837, %v2844, %v2846
        %v2848 = vsel %vm2836, %v2826, %v2829
        %v2849 = vsel %vm2839, %v2835, 1326507024
        %v2850 = vsel %vm2838, %v2832, %v2849
        %v2851 = vsel %vm2837, %v2848, %v2850
        %v2852 = vshll.u32 %v2812, 8
        %v2853 = vmul.u32.u64.compose %v2852, %v2851
        %v2854 = vextract.low.u32 %v2853
        %v2855 = vextract.high.u32 %v2853
        %v2856 = vmul.u32.u64.compose %v2852, %v2847
        %v2857 = vextract.low.u32 %v2856
        %v2858 = vextract.high.u32 %v2856
        %v2859 = vmul.u32 %v2852, %v2843
        %v2860 = vadd.s32 %v2855, %v2857
        %vm2861 = vc.u32 %v2855, %v2857
        %v2862 = vadd.s32 %v2858, 1
        %v2863 = vsel %vm2861, %v2862, %v2858
        %v2864 = vadd.s32 %v2859, %v2863
        %v2865 = vadd.s32 %v2864, 536870912
        %v2866 = vshrl.u32 %v2865, 30
        %v2867 = vshll.u32 %v2866, 30
        %v2868 = vsub.s32 %v2864, %v2867
        %vm2869 = vcmp.lt.s32.totalorder %v2868, 0
        %v2870 = vsub.s32 0, %v2868
        %v2871 = vsel %vm2869, %v2870, %v2868
        %v2872 = vclz %v2871
        %v2873 = vsub.s32 %v2872, 2
        %vm2874 = vcmp.gt.s32.totalorder 0, %v2873
        %v2875 = vsel %vm2874, 0, %v2873
        %v2876 = vsub.s32 32, %v2875
        %v2877 = vshll.u32 %v2868, %v2875
        %v2878 = vshrl.u32 %v2860, %v2876
        %v2879 = vor.u32 %v2877, %v2878
        %v2880 = vsub.s32 4294967266, %v2875
        %v2881 = vadd.s32 %v2880, 127
        %v2882 = vshll.u32 %v2881, 23
        %v2883 = vor.u32 4788187, %v2882
        %v2884 = vand.u32 2147483647, %v2883
        %v2886 = vcvt.s32.f32 %v2879
        %v2887 = vmul.f32 %v2886, %v2884
        %v2888 = vxor.u32 %v2887, 2147483648
        %v2889 = vsel %vm2806, %v2888, %v2887
        %v2890 = vsub.s32 4, %v2866
        %v2891 = vsel %vm2806, %v2890, %v2866
        %v2892 = vsel %vm2805, %v474, %v2889
        %v2893 = vsel %vm2805, 0, %v2891
        %v2894 = vcosq.f32.pop %v2892
        %v2895 = vsinq.f32.pop %v2892
        %vm2896 = vweird.f32 %v474
        %v2897 = vadd.s32 %v2893, 3
        %v2898 = vand.u32 %v2897, 3
        %vm2899 = vcmp.lt.s32.totalorder %v2898, 2
        %vm2900 = vcmp.eq.s32.totalorder %v2898, 0
        %v2901 = vxor.u32 %v2895, 2147483648
        %v2902 = vsel %vm2900, %v2894, %v2901
        %vm2903 = vcmp.eq.s32.totalorder %v2898, 2
        %v2904 = vxor.u32 %v2894, 2147483648
        %v2905 = vsel %vm2903, %v2904, %v2895
        %v2906 = vsel %vm2899, %v2902, %v2905
        %v2907 = vsel %vm2896, nan, %v2906
        %v2908 = vand.u32 2147483647, %v475
        %vm2909 = vcmp.le.f32.partialorder %v2908, 0.7853982
        %vm2910 = vcmp.lt.s32.totalorder %v475, 0
        %v2911 = vand.u32 %v475, 2139095040
        %v2912 = vshrl.u32 %v2911, 23
        %v2913 = vsub.s32 %v2912, 127
        %v2914 = vand.u32 2147483647, %v475
        %v2915 = vand.u32 %v2914, 8388607
        %v2916 = vor.u32 %v2915, 8388608
        %v2917 = vsub.s32 0, %v2916
        %v2918 = vadd.s32 %v2913, 1
        %vm2919 = vcmp.gt.s32.totalorder %v2918, 0
        %v2920 = vsel %vm2919, %v2918, 0
        %v2921 = vshrl.u32 %v2920, 5
        %v2922 = vand.u32 %v2920, 31
        %v2923 = vsub.s32 32, %v2922
        %v2924 = vshrl.u32 683565275, %v2923
        %v2925 = vshll.u32 683565275, %v2922
        %v2926 = vshrl.u32 2475754826, %v2923
        %v2927 = vor.u32 %v2925, %v2926
        %v2928 = vshll.u32 2475754826, %v2922
        %v2929 = vshrl.u32 2131351028, %v2923
        %v2930 = vor.u32 %v2928, %v2929
        %v2931 = vshll.u32 2131351028, %v2922
        %v2932 = vshrl.u32 2102212464, %v2923
        %v2933 = vor.u32 %v2931, %v2932
        %v2934 = vshll.u32 2102212464, %v2922
        %v2935 = vshrl.u32 920167782, %v2923
        %v2936 = vor.u32 %v2934, %v2935
        %v2937 = vshll.u32 920167782, %v2922
        %v2938 = vshrl.u32 1326507024, %v2923
        %v2939 = vor.u32 %v2937, %v2938
        %vm2940 = vcmp.lt.s32.totalorder %v2921, 1
        %vm2941 = vcmp.lt.s32.totalorder %v2921, 2
        %vm2942 = vcmp.lt.s32.totalorder %v2921, 3
        %vm2943 = vcmp.lt.s32.totalorder %v2921, 4
        %v2944 = vsel %vm2940, %v2924, %v2927
        %v2945 = vsel %vm2943, %v2933, 2102212464
        %v2946 = vsel %vm2942, %v2930, %v2945
        %v2947 = vsel %vm2941, %v2944, %v2946
        %v2948 = vsel %vm2940, %v2927, %v2930
        %v2949 = vsel %vm2943, %v2936, 920167782
        %v2950 = vsel %vm2942, %v2933, %v2949
        %v2951 = vsel %vm2941, %v2948, %v2950
        %v2952 = vsel %vm2940, %v2930, %v2933
        %v2953 = vsel %vm2943, %v2939, 1326507024
        %v2954 = vsel %vm2942, %v2936, %v2953
        %v2955 = vsel %vm2941, %v2952, %v2954
        %v2956 = vshll.u32 %v2916, 8
        %v2957 = vmul.u32.u64.compose %v2956, %v2955
        %v2958 = vextract.low.u32 %v2957
        %v2959 = vextract.high.u32 %v2957
        %v2960 = vmul.u32.u64.compose %v2956, %v2951
        %v2961 = vextract.low.u32 %v2960
        %v2962 = vextract.high.u32 %v2960
        %v2963 = vmul.u32 %v2956, %v2947
        %v2964 = vadd.s32 %v2959, %v2961
        %vm2965 = vc.u32 %v2959, %v2961
        %v2966 = vadd.s32 %v2962, 1
        %v2967 = vsel %vm2965, %v2966, %v2962
        %v2968 = vadd.s32 %v2963, %v2967
        %v2969 = vadd.s32 %v2968, 536870912
        %v2970 = vshrl.u32 %v2969, 30
        %v2971 = vshll.u32 %v2970, 30
        %v2972 = vsub.s32 %v2968, %v2971
        %vm2973 = vcmp.lt.s32.totalorder %v2972, 0
        %v2974 = vsub.s32 0, %v2972
        %v2975 = vsel %vm2973, %v2974, %v2972
        %v2976 = vclz %v2975
        %v2977 = vsub.s32 %v2976, 2
        %vm2978 = vcmp.gt.s32.totalorder 0, %v2977
        %v2979 = vsel %vm2978, 0, %v2977
        %v2980 = vsub.s32 32, %v2979
        %v2981 = vshll.u32 %v2972, %v2979
        %v2982 = vshrl.u32 %v2964, %v2980
        %v2983 = vor.u32 %v2981, %v2982
        %v2984 = vsub.s32 4294967266, %v2979
        %v2985 = vadd.s32 %v2984, 127
        %v2986 = vshll.u32 %v2985, 23
        %v2987 = vor.u32 4788187, %v2986
        %v2988 = vand.u32 2147483647, %v2987
        %v2990 = vcvt.s32.f32 %v2983
        %v2991 = vmul.f32 %v2990, %v2988
        %v2992 = vxor.u32 %v2991, 2147483648
        %v2993 = vsel %vm2910, %v2992, %v2991
        %v2994 = vsub.s32 4, %v2970
        %v2995 = vsel %vm2910, %v2994, %v2970
        %v2996 = vsel %vm2909, %v475, %v2993
        %v2997 = vsel %vm2909, 0, %v2995
        %v2998 = vcosq.f32.pop %v2996
        %v2999 = vsinq.f32.pop %v2996
        %vm3000 = vweird.f32 %v475
        %v3001 = vadd.s32 %v2997, 3
        %v3002 = vand.u32 %v3001, 3
        %vm3003 = vcmp.lt.s32.totalorder %v3002, 2
        %vm3004 = vcmp.eq.s32.totalorder %v3002, 0
        %v3005 = vxor.u32 %v2999, 2147483648
        %v3006 = vsel %vm3004, %v2998, %v3005
        %vm3007 = vcmp.eq.s32.totalorder %v3002, 2
        %v3008 = vxor.u32 %v2998, 2147483648
        %v3009 = vsel %vm3007, %v3008, %v2999
        %v3010 = vsel %vm3003, %v3006, %v3009
        %v3011 = vsel %vm3000, nan, %v3010
        %v3012 = vand.u32 2147483647, %v476
        %vm3013 = vcmp.le.f32.partialorder %v3012, 0.7853982
        %vm3014 = vcmp.lt.s32.totalorder %v476, 0
        %v3015 = vand.u32 %v476, 2139095040
        %v3016 = vshrl.u32 %v3015, 23
        %v3017 = vsub.s32 %v3016, 127
        %v3018 = vand.u32 2147483647, %v476
        %v3019 = vand.u32 %v3018, 8388607
        %v3020 = vor.u32 %v3019, 8388608
        %v3021 = vsub.s32 0, %v3020
        %v3022 = vadd.s32 %v3017, 1
        %vm3023 = vcmp.gt.s32.totalorder %v3022, 0
        %v3024 = vsel %vm3023, %v3022, 0
        %v3025 = vshrl.u32 %v3024, 5
        %v3026 = vand.u32 %v3024, 31
        %v3027 = vsub.s32 32, %v3026
        %v3028 = vshrl.u32 683565275, %v3027
        %v3029 = vshll.u32 683565275, %v3026
        %v3030 = vshrl.u32 2475754826, %v3027
        %v3031 = vor.u32 %v3029, %v3030
        %v3032 = vshll.u32 2475754826, %v3026
        %v3033 = vshrl.u32 2131351028, %v3027
        %v3034 = vor.u32 %v3032, %v3033
        %v3035 = vshll.u32 2131351028, %v3026
        %v3036 = vshrl.u32 2102212464, %v3027
        %v3037 = vor.u32 %v3035, %v3036
        %v3038 = vshll.u32 2102212464, %v3026
        %v3039 = vshrl.u32 920167782, %v3027
        %v3040 = vor.u32 %v3038, %v3039
        %v3041 = vshll.u32 920167782, %v3026
        %v3042 = vshrl.u32 1326507024, %v3027
        %v3043 = vor.u32 %v3041, %v3042
        %vm3044 = vcmp.lt.s32.totalorder %v3025, 1
        %vm3045 = vcmp.lt.s32.totalorder %v3025, 2
        %vm3046 = vcmp.lt.s32.totalorder %v3025, 3
        %vm3047 = vcmp.lt.s32.totalorder %v3025, 4
        %v3048 = vsel %vm3044, %v3028, %v3031
        %v3049 = vsel %vm3047, %v3037, 2102212464
        %v3050 = vsel %vm3046, %v3034, %v3049
        %v3051 = vsel %vm3045, %v3048, %v3050
        %v3052 = vsel %vm3044, %v3031, %v3034
        %v3053 = vsel %vm3047, %v3040, 920167782
        %v3054 = vsel %vm3046, %v3037, %v3053
        %v3055 = vsel %vm3045, %v3052, %v3054
        %v3056 = vsel %vm3044, %v3034, %v3037
        %v3057 = vsel %vm3047, %v3043, 1326507024
        %v3058 = vsel %vm3046, %v3040, %v3057
        %v3059 = vsel %vm3045, %v3056, %v3058
        %v3060 = vshll.u32 %v3020, 8
        %v3061 = vmul.u32.u64.compose %v3060, %v3059
        %v3062 = vextract.low.u32 %v3061
        %v3063 = vextract.high.u32 %v3061
        %v3064 = vmul.u32.u64.compose %v3060, %v3055
        %v3065 = vextract.low.u32 %v3064
        %v3066 = vextract.high.u32 %v3064
        %v3067 = vmul.u32 %v3060, %v3051
        %v3068 = vadd.s32 %v3063, %v3065
        %vm3069 = vc.u32 %v3063, %v3065
        %v3070 = vadd.s32 %v3066, 1
        %v3071 = vsel %vm3069, %v3070, %v3066
        %v3072 = vadd.s32 %v3067, %v3071
        %v3073 = vadd.s32 %v3072, 536870912
        %v3074 = vshrl.u32 %v3073, 30
        %v3075 = vshll.u32 %v3074, 30
        %v3076 = vsub.s32 %v3072, %v3075
        %vm3077 = vcmp.lt.s32.totalorder %v3076, 0
        %v3078 = vsub.s32 0, %v3076
        %v3079 = vsel %vm3077, %v3078, %v3076
        %v3080 = vclz %v3079
        %v3081 = vsub.s32 %v3080, 2
        %vm3082 = vcmp.gt.s32.totalorder 0, %v3081
        %v3083 = vsel %vm3082, 0, %v3081
        %v3084 = vsub.s32 32, %v3083
        %v3085 = vshll.u32 %v3076, %v3083
        %v3086 = vshrl.u32 %v3068, %v3084
        %v3087 = vor.u32 %v3085, %v3086
        %v3088 = vsub.s32 4294967266, %v3083
        %v3089 = vadd.s32 %v3088, 127
        %v3090 = vshll.u32 %v3089, 23
        %v3091 = vor.u32 4788187, %v3090
        %v3092 = vand.u32 2147483647, %v3091
        %v3094 = vcvt.s32.f32 %v3087
        %v3095 = vmul.f32 %v3094, %v3092
        %v3096 = vxor.u32 %v3095, 2147483648
        %v3097 = vsel %vm3014, %v3096, %v3095
        %v3098 = vsub.s32 4, %v3074
        %v3099 = vsel %vm3014, %v3098, %v3074
        %v3100 = vsel %vm3013, %v476, %v3097
        %v3101 = vsel %vm3013, 0, %v3099
        %v3102 = vcosq.f32.pop %v3100
        %v3103 = vsinq.f32.pop %v3100
        %vm3104 = vweird.f32 %v476
        %v3105 = vadd.s32 %v3101, 3
        %v3106 = vand.u32 %v3105, 3
        %vm3107 = vcmp.lt.s32.totalorder %v3106, 2
        %vm3108 = vcmp.eq.s32.totalorder %v3106, 0
        %v3109 = vxor.u32 %v3103, 2147483648
        %v3110 = vsel %vm3108, %v3102, %v3109
        %vm3111 = vcmp.eq.s32.totalorder %v3106, 2
        %v3112 = vxor.u32 %v3102, 2147483648
        %v3113 = vsel %vm3111, %v3112, %v3103
        %v3114 = vsel %vm3107, %v3110, %v3113
        %v3115 = vsel %vm3104, nan, %v3114
        %v3116 = vand.u32 2147483647, %v477
        %vm3117 = vcmp.le.f32.partialorder %v3116, 0.7853982
        %vm3118 = vcmp.lt.s32.totalorder %v477, 0
        %v3119 = vand.u32 %v477, 2139095040
        %v3120 = vshrl.u32 %v3119, 23
        %v3121 = vsub.s32 %v3120, 127
        %v3122 = vand.u32 2147483647, %v477
        %v3123 = vand.u32 %v3122, 8388607
        %v3124 = vor.u32 %v3123, 8388608
        %v3125 = vsub.s32 0, %v3124
        %v3126 = vadd.s32 %v3121, 1
        %vm3127 = vcmp.gt.s32.totalorder %v3126, 0
        %v3128 = vsel %vm3127, %v3126, 0
        %v3129 = vshrl.u32 %v3128, 5
        %v3130 = vand.u32 %v3128, 31
        %v3131 = vsub.s32 32, %v3130
        %v3132 = vshrl.u32 683565275, %v3131
        %v3133 = vshll.u32 683565275, %v3130
        %v3134 = vshrl.u32 2475754826, %v3131
        %v3135 = vor.u32 %v3133, %v3134
        %v3136 = vshll.u32 2475754826, %v3130
        %v3137 = vshrl.u32 2131351028, %v3131
        %v3138 = vor.u32 %v3136, %v3137
        %v3139 = vshll.u32 2131351028, %v3130
        %v3140 = vshrl.u32 2102212464, %v3131
        %v3141 = vor.u32 %v3139, %v3140
        %v3142 = vshll.u32 2102212464, %v3130
        %v3143 = vshrl.u32 920167782, %v3131
        %v3144 = vor.u32 %v3142, %v3143
        %v3145 = vshll.u32 920167782, %v3130
        %v3146 = vshrl.u32 1326507024, %v3131
        %v3147 = vor.u32 %v3145, %v3146
        %vm3148 = vcmp.lt.s32.totalorder %v3129, 1
        %vm3149 = vcmp.lt.s32.totalorder %v3129, 2
        %vm3150 = vcmp.lt.s32.totalorder %v3129, 3
        %vm3151 = vcmp.lt.s32.totalorder %v3129, 4
        %v3152 = vsel %vm3148, %v3132, %v3135
        %v3153 = vsel %vm3151, %v3141, 2102212464
        %v3154 = vsel %vm3150, %v3138, %v3153
        %v3155 = vsel %vm3149, %v3152, %v3154
        %v3156 = vsel %vm3148, %v3135, %v3138
        %v3157 = vsel %vm3151, %v3144, 920167782
        %v3158 = vsel %vm3150, %v3141, %v3157
        %v3159 = vsel %vm3149, %v3156, %v3158
        %v3160 = vsel %vm3148, %v3138, %v3141
        %v3161 = vsel %vm3151, %v3147, 1326507024
        %v3162 = vsel %vm3150, %v3144, %v3161
        %v3163 = vsel %vm3149, %v3160, %v3162
        %v3164 = vshll.u32 %v3124, 8
        %v3165 = vmul.u32.u64.compose %v3164, %v3163
        %v3166 = vextract.low.u32 %v3165
        %v3167 = vextract.high.u32 %v3165
        %v3168 = vmul.u32.u64.compose %v3164, %v3159
        %v3169 = vextract.low.u32 %v3168
        %v3170 = vextract.high.u32 %v3168
        %v3171 = vmul.u32 %v3164, %v3155
        %v3172 = vadd.s32 %v3167, %v3169
        %vm3173 = vc.u32 %v3167, %v3169
        %v3174 = vadd.s32 %v3170, 1
        %v3175 = vsel %vm3173, %v3174, %v3170
        %v3176 = vadd.s32 %v3171, %v3175
        %v3177 = vadd.s32 %v3176, 536870912
        %v3178 = vshrl.u32 %v3177, 30
        %v3179 = vshll.u32 %v3178, 30
        %v3180 = vsub.s32 %v3176, %v3179
        %vm3181 = vcmp.lt.s32.totalorder %v3180, 0
        %v3182 = vsub.s32 0, %v3180
        %v3183 = vsel %vm3181, %v3182, %v3180
        %v3184 = vclz %v3183
        %v3185 = vsub.s32 %v3184, 2
        %vm3186 = vcmp.gt.s32.totalorder 0, %v3185
        %v3187 = vsel %vm3186, 0, %v3185
        %v3188 = vsub.s32 32, %v3187
        %v3189 = vshll.u32 %v3180, %v3187
        %v3190 = vshrl.u32 %v3172, %v3188
        %v3191 = vor.u32 %v3189, %v3190
        %v3192 = vsub.s32 4294967266, %v3187
        %v3193 = vadd.s32 %v3192, 127
        %v3194 = vshll.u32 %v3193, 23
        %v3195 = vor.u32 4788187, %v3194
        %v3196 = vand.u32 2147483647, %v3195
        %v3198 = vcvt.s32.f32 %v3191
        %v3199 = vmul.f32 %v3198, %v3196
        %v3200 = vxor.u32 %v3199, 2147483648
        %v3201 = vsel %vm3118, %v3200, %v3199
        %v3202 = vsub.s32 4, %v3178
        %v3203 = vsel %vm3118, %v3202, %v3178
        %v3204 = vsel %vm3117, %v477, %v3201
        %v3205 = vsel %vm3117, 0, %v3203
        %v3206 = vcosq.f32.pop %v3204
        %v3207 = vsinq.f32.pop %v3204
        %vm3208 = vweird.f32 %v477
        %v3209 = vadd.s32 %v3205, 3
        %v3210 = vand.u32 %v3209, 3
        %vm3211 = vcmp.lt.s32.totalorder %v3210, 2
        %vm3212 = vcmp.eq.s32.totalorder %v3210, 0
        %v3213 = vxor.u32 %v3207, 2147483648
        %v3214 = vsel %vm3212, %v3206, %v3213
        %vm3215 = vcmp.eq.s32.totalorder %v3210, 2
        %v3216 = vxor.u32 %v3206, 2147483648
        %v3217 = vsel %vm3215, %v3216, %v3207
        %v3218 = vsel %vm3211, %v3214, %v3217
        %v3219 = vsel %vm3208, nan, %v3218
        %v3220 = vand.u32 2147483647, %v478
        %vm3221 = vcmp.le.f32.partialorder %v3220, 0.7853982
        %vm3222 = vcmp.lt.s32.totalorder %v478, 0
        %v3223 = vand.u32 %v478, 2139095040
        %v3224 = vshrl.u32 %v3223, 23
        %v3225 = vsub.s32 %v3224, 127
        %v3226 = vand.u32 2147483647, %v478
        %v3227 = vand.u32 %v3226, 8388607
        %v3228 = vor.u32 %v3227, 8388608
        %v3229 = vsub.s32 0, %v3228
        %v3230 = vadd.s32 %v3225, 1
        %vm3231 = vcmp.gt.s32.totalorder %v3230, 0
        %v3232 = vsel %vm3231, %v3230, 0
        %v3233 = vshrl.u32 %v3232, 5
        %v3234 = vand.u32 %v3232, 31
        %v3235 = vsub.s32 32, %v3234
        %v3236 = vshrl.u32 683565275, %v3235
        %v3237 = vshll.u32 683565275, %v3234
        %v3238 = vshrl.u32 2475754826, %v3235
        %v3239 = vor.u32 %v3237, %v3238
        %v3240 = vshll.u32 2475754826, %v3234
        %v3241 = vshrl.u32 2131351028, %v3235
        %v3242 = vor.u32 %v3240, %v3241
        %v3243 = vshll.u32 2131351028, %v3234
        %v3244 = vshrl.u32 2102212464, %v3235
        %v3245 = vor.u32 %v3243, %v3244
        %v3246 = vshll.u32 2102212464, %v3234
        %v3247 = vshrl.u32 920167782, %v3235
        %v3248 = vor.u32 %v3246, %v3247
        %v3249 = vshll.u32 920167782, %v3234
        %v3250 = vshrl.u32 1326507024, %v3235
        %v3251 = vor.u32 %v3249, %v3250
        %vm3252 = vcmp.lt.s32.totalorder %v3233, 1
        %vm3253 = vcmp.lt.s32.totalorder %v3233, 2
        %vm3254 = vcmp.lt.s32.totalorder %v3233, 3
        %vm3255 = vcmp.lt.s32.totalorder %v3233, 4
        %v3256 = vsel %vm3252, %v3236, %v3239
        %v3257 = vsel %vm3255, %v3245, 2102212464
        %v3258 = vsel %vm3254, %v3242, %v3257
        %v3259 = vsel %vm3253, %v3256, %v3258
        %v3260 = vsel %vm3252, %v3239, %v3242
        %v3261 = vsel %vm3255, %v3248, 920167782
        %v3262 = vsel %vm3254, %v3245, %v3261
        %v3263 = vsel %vm3253, %v3260, %v3262
        %v3264 = vsel %vm3252, %v3242, %v3245
        %v3265 = vsel %vm3255, %v3251, 1326507024
        %v3266 = vsel %vm3254, %v3248, %v3265
        %v3267 = vsel %vm3253, %v3264, %v3266
        %v3268 = vshll.u32 %v3228, 8
        %v3269 = vmul.u32.u64.compose %v3268, %v3267
        %v3270 = vextract.low.u32 %v3269
        %v3271 = vextract.high.u32 %v3269
        %v3272 = vmul.u32.u64.compose %v3268, %v3263
        %v3273 = vextract.low.u32 %v3272
        %v3274 = vextract.high.u32 %v3272
        %v3275 = vmul.u32 %v3268, %v3259
        %v3276 = vadd.s32 %v3271, %v3273
        %vm3277 = vc.u32 %v3271, %v3273
        %v3278 = vadd.s32 %v3274, 1
        %v3279 = vsel %vm3277, %v3278, %v3274
        %v3280 = vadd.s32 %v3275, %v3279
        %v3281 = vadd.s32 %v3280, 536870912
        %v3282 = vshrl.u32 %v3281, 30
        %v3283 = vshll.u32 %v3282, 30
        %v3284 = vsub.s32 %v3280, %v3283
        %vm3285 = vcmp.lt.s32.totalorder %v3284, 0
        %v3286 = vsub.s32 0, %v3284
        %v3287 = vsel %vm3285, %v3286, %v3284
        %v3288 = vclz %v3287
        %v3289 = vsub.s32 %v3288, 2
        %vm3290 = vcmp.gt.s32.totalorder 0, %v3289
        %v3291 = vsel %vm3290, 0, %v3289
        %v3292 = vsub.s32 32, %v3291
        %v3293 = vshll.u32 %v3284, %v3291
        %v3294 = vshrl.u32 %v3276, %v3292
        %v3295 = vor.u32 %v3293, %v3294
        %v3296 = vsub.s32 4294967266, %v3291
        %v3297 = vadd.s32 %v3296, 127
        %v3298 = vshll.u32 %v3297, 23
        %v3299 = vor.u32 4788187, %v3298
        %v3300 = vand.u32 2147483647, %v3299
        %v3302 = vcvt.s32.f32 %v3295
        %v3303 = vmul.f32 %v3302, %v3300
        %v3304 = vxor.u32 %v3303, 2147483648
        %v3305 = vsel %vm3222, %v3304, %v3303
        %v3306 = vsub.s32 4, %v3282
        %v3307 = vsel %vm3222, %v3306, %v3282
        %v3308 = vsel %vm3221, %v478, %v3305
        %v3309 = vsel %vm3221, 0, %v3307
        %v3310 = vcosq.f32.pop %v3308
        %v3311 = vsinq.f32.pop %v3308
        %vm3312 = vweird.f32 %v478
        %v3313 = vadd.s32 %v3309, 3
        %v3314 = vand.u32 %v3313, 3
        %vm3315 = vcmp.lt.s32.totalorder %v3314, 2
        %vm3316 = vcmp.eq.s32.totalorder %v3314, 0
        %v3317 = vxor.u32 %v3311, 2147483648
        %v3318 = vsel %vm3316, %v3310, %v3317
        %vm3319 = vcmp.eq.s32.totalorder %v3314, 2
        %v3320 = vxor.u32 %v3310, 2147483648
        %v3321 = vsel %vm3319, %v3320, %v3311
        %v3322 = vsel %vm3315, %v3318, %v3321
        %v3323 = vsel %vm3312, nan, %v3322
        %v3324 = vand.u32 2147483647, %v479
        %vm3325 = vcmp.le.f32.partialorder %v3324, 0.7853982
        %vm3326 = vcmp.lt.s32.totalorder %v479, 0
        %v3327 = vand.u32 %v479, 2139095040
        %v3328 = vshrl.u32 %v3327, 23
        %v3329 = vsub.s32 %v3328, 127
        %v3330 = vand.u32 2147483647, %v479
        %v3331 = vand.u32 %v3330, 8388607
        %v3332 = vor.u32 %v3331, 8388608
        %v3333 = vsub.s32 0, %v3332
        %v3334 = vadd.s32 %v3329, 1
        %vm3335 = vcmp.gt.s32.totalorder %v3334, 0
        %v3336 = vsel %vm3335, %v3334, 0
        %v3337 = vshrl.u32 %v3336, 5
        %v3338 = vand.u32 %v3336, 31
        %v3339 = vsub.s32 32, %v3338
        %v3340 = vshrl.u32 683565275, %v3339
        %v3341 = vshll.u32 683565275, %v3338
        %v3342 = vshrl.u32 2475754826, %v3339
        %v3343 = vor.u32 %v3341, %v3342
        %v3344 = vshll.u32 2475754826, %v3338
        %v3345 = vshrl.u32 2131351028, %v3339
        %v3346 = vor.u32 %v3344, %v3345
        %v3347 = vshll.u32 2131351028, %v3338
        %v3348 = vshrl.u32 2102212464, %v3339
        %v3349 = vor.u32 %v3347, %v3348
        %v3350 = vshll.u32 2102212464, %v3338
        %v3351 = vshrl.u32 920167782, %v3339
        %v3352 = vor.u32 %v3350, %v3351
        %v3353 = vshll.u32 920167782, %v3338
        %v3354 = vshrl.u32 1326507024, %v3339
        %v3355 = vor.u32 %v3353, %v3354
        %vm3356 = vcmp.lt.s32.totalorder %v3337, 1
        %vm3357 = vcmp.lt.s32.totalorder %v3337, 2
        %vm3358 = vcmp.lt.s32.totalorder %v3337, 3
        %vm3359 = vcmp.lt.s32.totalorder %v3337, 4
        %v3360 = vsel %vm3356, %v3340, %v3343
        %v3361 = vsel %vm3359, %v3349, 2102212464
        %v3362 = vsel %vm3358, %v3346, %v3361
        %v3363 = vsel %vm3357, %v3360, %v3362
        %v3364 = vsel %vm3356, %v3343, %v3346
        %v3365 = vsel %vm3359, %v3352, 920167782
        %v3366 = vsel %vm3358, %v3349, %v3365
        %v3367 = vsel %vm3357, %v3364, %v3366
        %v3368 = vsel %vm3356, %v3346, %v3349
        %v3369 = vsel %vm3359, %v3355, 1326507024
        %v3370 = vsel %vm3358, %v3352, %v3369
        %v3371 = vsel %vm3357, %v3368, %v3370
        %v3372 = vshll.u32 %v3332, 8
        %v3373 = vmul.u32.u64.compose %v3372, %v3371
        %v3374 = vextract.low.u32 %v3373
        %v3375 = vextract.high.u32 %v3373
        %v3376 = vmul.u32.u64.compose %v3372, %v3367
        %v3377 = vextract.low.u32 %v3376
        %v3378 = vextract.high.u32 %v3376
        %v3379 = vmul.u32 %v3372, %v3363
        %v3380 = vadd.s32 %v3375, %v3377
        %vm3381 = vc.u32 %v3375, %v3377
        %v3382 = vadd.s32 %v3378, 1
        %v3383 = vsel %vm3381, %v3382, %v3378
        %v3384 = vadd.s32 %v3379, %v3383
        %v3385 = vadd.s32 %v3384, 536870912
        %v3386 = vshrl.u32 %v3385, 30
        %v3387 = vshll.u32 %v3386, 30
        %v3388 = vsub.s32 %v3384, %v3387
        %vm3389 = vcmp.lt.s32.totalorder %v3388, 0
        %v3390 = vsub.s32 0, %v3388
        %v3391 = vsel %vm3389, %v3390, %v3388
        %v3392 = vclz %v3391
        %v3393 = vsub.s32 %v3392, 2
        %vm3394 = vcmp.gt.s32.totalorder 0, %v3393
        %v3395 = vsel %vm3394, 0, %v3393
        %v3396 = vsub.s32 32, %v3395
        %v3397 = vshll.u32 %v3388, %v3395
        %v3398 = vshrl.u32 %v3380, %v3396
        %v3399 = vor.u32 %v3397, %v3398
        %v3400 = vsub.s32 4294967266, %v3395
        %v3401 = vadd.s32 %v3400, 127
        %v3402 = vshll.u32 %v3401, 23
        %v3403 = vor.u32 4788187, %v3402
        %v3404 = vand.u32 2147483647, %v3403
        %v3406 = vcvt.s32.f32 %v3399
        %v3407 = vmul.f32 %v3406, %v3404
        %v3408 = vxor.u32 %v3407, 2147483648
        %v3409 = vsel %vm3326, %v3408, %v3407
        %v3410 = vsub.s32 4, %v3386
        %v3411 = vsel %vm3326, %v3410, %v3386
        %v3412 = vsel %vm3325, %v479, %v3409
        %v3413 = vsel %vm3325, 0, %v3411
        %v3414 = vcosq.f32.pop %v3412
        %v3415 = vsinq.f32.pop %v3412
        %vm3416 = vweird.f32 %v479
        %v3417 = vadd.s32 %v3413, 3
        %v3418 = vand.u32 %v3417, 3
        %vm3419 = vcmp.lt.s32.totalorder %v3418, 2
        %vm3420 = vcmp.eq.s32.totalorder %v3418, 0
        %v3421 = vxor.u32 %v3415, 2147483648
        %v3422 = vsel %vm3420, %v3414, %v3421
        %vm3423 = vcmp.eq.s32.totalorder %v3418, 2
        %v3424 = vxor.u32 %v3414, 2147483648
        %v3425 = vsel %vm3423, %v3424, %v3415
        %v3426 = vsel %vm3419, %v3422, %v3425
        %v3427 = vsel %vm3416, nan, %v3426
        %v3428 = vand.u32 2147483647, %v480
        %vm3429 = vcmp.le.f32.partialorder %v3428, 0.7853982
        %vm3430 = vcmp.lt.s32.totalorder %v480, 0
        %v3431 = vand.u32 %v480, 2139095040
        %v3432 = vshrl.u32 %v3431, 23
        %v3433 = vsub.s32 %v3432, 127
        %v3434 = vand.u32 2147483647, %v480
        %v3435 = vand.u32 %v3434, 8388607
        %v3436 = vor.u32 %v3435, 8388608
        %v3437 = vsub.s32 0, %v3436
        %v3438 = vadd.s32 %v3433, 1
        %vm3439 = vcmp.gt.s32.totalorder %v3438, 0
        %v3440 = vsel %vm3439, %v3438, 0
        %v3441 = vshrl.u32 %v3440, 5
        %v3442 = vand.u32 %v3440, 31
        %v3443 = vsub.s32 32, %v3442
        %v3444 = vshrl.u32 683565275, %v3443
        %v3445 = vshll.u32 683565275, %v3442
        %v3446 = vshrl.u32 2475754826, %v3443
        %v3447 = vor.u32 %v3445, %v3446
        %v3448 = vshll.u32 2475754826, %v3442
        %v3449 = vshrl.u32 2131351028, %v3443
        %v3450 = vor.u32 %v3448, %v3449
        %v3451 = vshll.u32 2131351028, %v3442
        %v3452 = vshrl.u32 2102212464, %v3443
        %v3453 = vor.u32 %v3451, %v3452
        %v3454 = vshll.u32 2102212464, %v3442
        %v3455 = vshrl.u32 920167782, %v3443
        %v3456 = vor.u32 %v3454, %v3455
        %v3457 = vshll.u32 920167782, %v3442
        %v3458 = vshrl.u32 1326507024, %v3443
        %v3459 = vor.u32 %v3457, %v3458
        %vm3460 = vcmp.lt.s32.totalorder %v3441, 1
        %vm3461 = vcmp.lt.s32.totalorder %v3441, 2
        %vm3462 = vcmp.lt.s32.totalorder %v3441, 3
        %vm3463 = vcmp.lt.s32.totalorder %v3441, 4
        %v3464 = vsel %vm3460, %v3444, %v3447
        %v3465 = vsel %vm3463, %v3453, 2102212464
        %v3466 = vsel %vm3462, %v3450, %v3465
        %v3467 = vsel %vm3461, %v3464, %v3466
        %v3468 = vsel %vm3460, %v3447, %v3450
        %v3469 = vsel %vm3463, %v3456, 920167782
        %v3470 = vsel %vm3462, %v3453, %v3469
        %v3471 = vsel %vm3461, %v3468, %v3470
        %v3472 = vsel %vm3460, %v3450, %v3453
        %v3473 = vsel %vm3463, %v3459, 1326507024
        %v3474 = vsel %vm3462, %v3456, %v3473
        %v3475 = vsel %vm3461, %v3472, %v3474
        %v3476 = vshll.u32 %v3436, 8
        %v3477 = vmul.u32.u64.compose %v3476, %v3475
        %v3478 = vextract.low.u32 %v3477
        %v3479 = vextract.high.u32 %v3477
        %v3480 = vmul.u32.u64.compose %v3476, %v3471
        %v3481 = vextract.low.u32 %v3480
        %v3482 = vextract.high.u32 %v3480
        %v3483 = vmul.u32 %v3476, %v3467
        %v3484 = vadd.s32 %v3479, %v3481
        %vm3485 = vc.u32 %v3479, %v3481
        %v3486 = vadd.s32 %v3482, 1
        %v3487 = vsel %vm3485, %v3486, %v3482
        %v3488 = vadd.s32 %v3483, %v3487
        %v3489 = vadd.s32 %v3488, 536870912
        %v3490 = vshrl.u32 %v3489, 30
        %v3491 = vshll.u32 %v3490, 30
        %v3492 = vsub.s32 %v3488, %v3491
        %vm3493 = vcmp.lt.s32.totalorder %v3492, 0
        %v3494 = vsub.s32 0, %v3492
        %v3495 = vsel %vm3493, %v3494, %v3492
        %v3496 = vclz %v3495
        %v3497 = vsub.s32 %v3496, 2
        %vm3498 = vcmp.gt.s32.totalorder 0, %v3497
        %v3499 = vsel %vm3498, 0, %v3497
        %v3500 = vsub.s32 32, %v3499
        %v3501 = vshll.u32 %v3492, %v3499
        %v3502 = vshrl.u32 %v3484, %v3500
        %v3503 = vor.u32 %v3501, %v3502
        %v3504 = vsub.s32 4294967266, %v3499
        %v3505 = vadd.s32 %v3504, 127
        %v3506 = vshll.u32 %v3505, 23
        %v3507 = vor.u32 4788187, %v3506
        %v3508 = vand.u32 2147483647, %v3507
        %v3510 = vcvt.s32.f32 %v3503
        %v3511 = vmul.f32 %v3510, %v3508
        %v3512 = vxor.u32 %v3511, 2147483648
        %v3513 = vsel %vm3430, %v3512, %v3511
        %v3514 = vsub.s32 4, %v3490
        %v3515 = vsel %vm3430, %v3514, %v3490
        %v3516 = vsel %vm3429, %v480, %v3513
        %v3517 = vsel %vm3429, 0, %v3515
        %v3518 = vcosq.f32.pop %v3516
        %v3519 = vsinq.f32.pop %v3516
        %vm3520 = vweird.f32 %v480
        %v3521 = vadd.s32 %v3517, 3
        %v3522 = vand.u32 %v3521, 3
        %vm3523 = vcmp.lt.s32.totalorder %v3522, 2
        %vm3524 = vcmp.eq.s32.totalorder %v3522, 0
        %v3525 = vxor.u32 %v3519, 2147483648
        %v3526 = vsel %vm3524, %v3518, %v3525
        %vm3527 = vcmp.eq.s32.totalorder %v3522, 2
        %v3528 = vxor.u32 %v3518, 2147483648
        %v3529 = vsel %vm3527, %v3528, %v3519
        %v3530 = vsel %vm3523, %v3526, %v3529
        %v3531 = vsel %vm3520, nan, %v3530
        %v3532 = vand.u32 2147483647, %v481
        %vm3533 = vcmp.le.f32.partialorder %v3532, 0.7853982
        %vm3534 = vcmp.lt.s32.totalorder %v481, 0
        %v3535 = vand.u32 %v481, 2139095040
        %v3536 = vshrl.u32 %v3535, 23
        %v3537 = vsub.s32 %v3536, 127
        %v3538 = vand.u32 2147483647, %v481
        %v3539 = vand.u32 %v3538, 8388607
        %v3540 = vor.u32 %v3539, 8388608
        %v3541 = vsub.s32 0, %v3540
        %v3542 = vadd.s32 %v3537, 1
        %vm3543 = vcmp.gt.s32.totalorder %v3542, 0
        %v3544 = vsel %vm3543, %v3542, 0
        %v3545 = vshrl.u32 %v3544, 5
        %v3546 = vand.u32 %v3544, 31
        %v3547 = vsub.s32 32, %v3546
        %v3548 = vshrl.u32 683565275, %v3547
        %v3549 = vshll.u32 683565275, %v3546
        %v3550 = vshrl.u32 2475754826, %v3547
        %v3551 = vor.u32 %v3549, %v3550
        %v3552 = vshll.u32 2475754826, %v3546
        %v3553 = vshrl.u32 2131351028, %v3547
        %v3554 = vor.u32 %v3552, %v3553
        %v3555 = vshll.u32 2131351028, %v3546
        %v3556 = vshrl.u32 2102212464, %v3547
        %v3557 = vor.u32 %v3555, %v3556
        %v3558 = vshll.u32 2102212464, %v3546
        %v3559 = vshrl.u32 920167782, %v3547
        %v3560 = vor.u32 %v3558, %v3559
        %v3561 = vshll.u32 920167782, %v3546
        %v3562 = vshrl.u32 1326507024, %v3547
        %v3563 = vor.u32 %v3561, %v3562
        %vm3564 = vcmp.lt.s32.totalorder %v3545, 1
        %vm3565 = vcmp.lt.s32.totalorder %v3545, 2
        %vm3566 = vcmp.lt.s32.totalorder %v3545, 3
        %vm3567 = vcmp.lt.s32.totalorder %v3545, 4
        %v3568 = vsel %vm3564, %v3548, %v3551
        %v3569 = vsel %vm3567, %v3557, 2102212464
        %v3570 = vsel %vm3566, %v3554, %v3569
        %v3571 = vsel %vm3565, %v3568, %v3570
        %v3572 = vsel %vm3564, %v3551, %v3554
        %v3573 = vsel %vm3567, %v3560, 920167782
        %v3574 = vsel %vm3566, %v3557, %v3573
        %v3575 = vsel %vm3565, %v3572, %v3574
        %v3576 = vsel %vm3564, %v3554, %v3557
        %v3577 = vsel %vm3567, %v3563, 1326507024
        %v3578 = vsel %vm3566, %v3560, %v3577
        %v3579 = vsel %vm3565, %v3576, %v3578
        %v3580 = vshll.u32 %v3540, 8
        %v3581 = vmul.u32.u64.compose %v3580, %v3579
        %v3582 = vextract.low.u32 %v3581
        %v3583 = vextract.high.u32 %v3581
        %v3584 = vmul.u32.u64.compose %v3580, %v3575
        %v3585 = vextract.low.u32 %v3584
        %v3586 = vextract.high.u32 %v3584
        %v3587 = vmul.u32 %v3580, %v3571
        %v3588 = vadd.s32 %v3583, %v3585
        %vm3589 = vc.u32 %v3583, %v3585
        %v3590 = vadd.s32 %v3586, 1
        %v3591 = vsel %vm3589, %v3590, %v3586
        %v3592 = vadd.s32 %v3587, %v3591
        %v3593 = vadd.s32 %v3592, 536870912
        %v3594 = vshrl.u32 %v3593, 30
        %v3595 = vshll.u32 %v3594, 30
        %v3596 = vsub.s32 %v3592, %v3595
        %vm3597 = vcmp.lt.s32.totalorder %v3596, 0
        %v3598 = vsub.s32 0, %v3596
        %v3599 = vsel %vm3597, %v3598, %v3596
        %v3600 = vclz %v3599
        %v3601 = vsub.s32 %v3600, 2
        %vm3602 = vcmp.gt.s32.totalorder 0, %v3601
        %v3603 = vsel %vm3602, 0, %v3601
        %v3604 = vsub.s32 32, %v3603
        %v3605 = vshll.u32 %v3596, %v3603
        %v3606 = vshrl.u32 %v3588, %v3604
        %v3607 = vor.u32 %v3605, %v3606
        %v3608 = vsub.s32 4294967266, %v3603
        %v3609 = vadd.s32 %v3608, 127
        %v3610 = vshll.u32 %v3609, 23
        %v3611 = vor.u32 4788187, %v3610
        %v3612 = vand.u32 2147483647, %v3611
        %v3614 = vcvt.s32.f32 %v3607
        %v3615 = vmul.f32 %v3614, %v3612
        %v3616 = vxor.u32 %v3615, 2147483648
        %v3617 = vsel %vm3534, %v3616, %v3615
        %v3618 = vsub.s32 4, %v3594
        %v3619 = vsel %vm3534, %v3618, %v3594
        %v3620 = vsel %vm3533, %v481, %v3617
        %v3621 = vsel %vm3533, 0, %v3619
        %v3622 = vcosq.f32.pop %v3620
        %v3623 = vsinq.f32.pop %v3620
        %vm3624 = vweird.f32 %v481
        %v3625 = vadd.s32 %v3621, 3
        %v3626 = vand.u32 %v3625, 3
        %vm3627 = vcmp.lt.s32.totalorder %v3626, 2
        %vm3628 = vcmp.eq.s32.totalorder %v3626, 0
        %v3629 = vxor.u32 %v3623, 2147483648
        %v3630 = vsel %vm3628, %v3622, %v3629
        %vm3631 = vcmp.eq.s32.totalorder %v3626, 2
        %v3632 = vxor.u32 %v3622, 2147483648
        %v3633 = vsel %vm3631, %v3632, %v3623
        %v3634 = vsel %vm3627, %v3630, %v3633
        %v3635 = vsel %vm3624, nan, %v3634
        %v3636 = vand.u32 2147483647, %v482
        %vm3637 = vcmp.le.f32.partialorder %v3636, 0.7853982
        %vm3638 = vcmp.lt.s32.totalorder %v482, 0
        %v3639 = vand.u32 %v482, 2139095040
        %v3640 = vshrl.u32 %v3639, 23
        %v3641 = vsub.s32 %v3640, 127
        %v3642 = vand.u32 2147483647, %v482
        %v3643 = vand.u32 %v3642, 8388607
        %v3644 = vor.u32 %v3643, 8388608
        %v3645 = vsub.s32 0, %v3644
        %v3646 = vadd.s32 %v3641, 1
        %vm3647 = vcmp.gt.s32.totalorder %v3646, 0
        %v3648 = vsel %vm3647, %v3646, 0
        %v3649 = vshrl.u32 %v3648, 5
        %v3650 = vand.u32 %v3648, 31
        %v3651 = vsub.s32 32, %v3650
        %v3652 = vshrl.u32 683565275, %v3651
        %v3653 = vshll.u32 683565275, %v3650
        %v3654 = vshrl.u32 2475754826, %v3651
        %v3655 = vor.u32 %v3653, %v3654
        %v3656 = vshll.u32 2475754826, %v3650
        %v3657 = vshrl.u32 2131351028, %v3651
        %v3658 = vor.u32 %v3656, %v3657
        %v3659 = vshll.u32 2131351028, %v3650
        %v3660 = vshrl.u32 2102212464, %v3651
        %v3661 = vor.u32 %v3659, %v3660
        %v3662 = vshll.u32 2102212464, %v3650
        %v3663 = vshrl.u32 920167782, %v3651
        %v3664 = vor.u32 %v3662, %v3663
        %v3665 = vshll.u32 920167782, %v3650
        %v3666 = vshrl.u32 1326507024, %v3651
        %v3667 = vor.u32 %v3665, %v3666
        %vm3668 = vcmp.lt.s32.totalorder %v3649, 1
        %vm3669 = vcmp.lt.s32.totalorder %v3649, 2
        %vm3670 = vcmp.lt.s32.totalorder %v3649, 3
        %vm3671 = vcmp.lt.s32.totalorder %v3649, 4
        %v3672 = vsel %vm3668, %v3652, %v3655
        %v3673 = vsel %vm3671, %v3661, 2102212464
        %v3674 = vsel %vm3670, %v3658, %v3673
        %v3675 = vsel %vm3669, %v3672, %v3674
        %v3676 = vsel %vm3668, %v3655, %v3658
        %v3677 = vsel %vm3671, %v3664, 920167782
        %v3678 = vsel %vm3670, %v3661, %v3677
        %v3679 = vsel %vm3669, %v3676, %v3678
        %v3680 = vsel %vm3668, %v3658, %v3661
        %v3681 = vsel %vm3671, %v3667, 1326507024
        %v3682 = vsel %vm3670, %v3664, %v3681
        %v3683 = vsel %vm3669, %v3680, %v3682
        %v3684 = vshll.u32 %v3644, 8
        %v3685 = vmul.u32.u64.compose %v3684, %v3683
        %v3686 = vextract.low.u32 %v3685
        %v3687 = vextract.high.u32 %v3685
        %v3688 = vmul.u32.u64.compose %v3684, %v3679
        %v3689 = vextract.low.u32 %v3688
        %v3690 = vextract.high.u32 %v3688
        %v3691 = vmul.u32 %v3684, %v3675
        %v3692 = vadd.s32 %v3687, %v3689
        %vm3693 = vc.u32 %v3687, %v3689
        %v3694 = vadd.s32 %v3690, 1
        %v3695 = vsel %vm3693, %v3694, %v3690
        %v3696 = vadd.s32 %v3691, %v3695
        %v3697 = vadd.s32 %v3696, 536870912
        %v3698 = vshrl.u32 %v3697, 30
        %v3699 = vshll.u32 %v3698, 30
        %v3700 = vsub.s32 %v3696, %v3699
        %vm3701 = vcmp.lt.s32.totalorder %v3700, 0
        %v3702 = vsub.s32 0, %v3700
        %v3703 = vsel %vm3701, %v3702, %v3700
        %v3704 = vclz %v3703
        %v3705 = vsub.s32 %v3704, 2
        %vm3706 = vcmp.gt.s32.totalorder 0, %v3705
        %v3707 = vsel %vm3706, 0, %v3705
        %v3708 = vsub.s32 32, %v3707
        %v3709 = vshll.u32 %v3700, %v3707
        %v3710 = vshrl.u32 %v3692, %v3708
        %v3711 = vor.u32 %v3709, %v3710
        %v3712 = vsub.s32 4294967266, %v3707
        %v3713 = vadd.s32 %v3712, 127
        %v3714 = vshll.u32 %v3713, 23
        %v3715 = vor.u32 4788187, %v3714
        %v3716 = vand.u32 2147483647, %v3715
        %v3718 = vcvt.s32.f32 %v3711
        %v3719 = vmul.f32 %v3718, %v3716
        %v3720 = vxor.u32 %v3719, 2147483648
        %v3721 = vsel %vm3638, %v3720, %v3719
        %v3722 = vsub.s32 4, %v3698
        %v3723 = vsel %vm3638, %v3722, %v3698
        %v3724 = vsel %vm3637, %v482, %v3721
        %v3725 = vsel %vm3637, 0, %v3723
        %v3726 = vcosq.f32.pop %v3724
        %v3727 = vsinq.f32.pop %v3724
        %vm3728 = vweird.f32 %v482
        %v3729 = vadd.s32 %v3725, 3
        %v3730 = vand.u32 %v3729, 3
        %vm3731 = vcmp.lt.s32.totalorder %v3730, 2
        %vm3732 = vcmp.eq.s32.totalorder %v3730, 0
        %v3733 = vxor.u32 %v3727, 2147483648
        %v3734 = vsel %vm3732, %v3726, %v3733
        %vm3735 = vcmp.eq.s32.totalorder %v3730, 2
        %v3736 = vxor.u32 %v3726, 2147483648
        %v3737 = vsel %vm3735, %v3736, %v3727
        %v3738 = vsel %vm3731, %v3734, %v3737
        %v3739 = vsel %vm3728, nan, %v3738
        %v3740 = vand.u32 2147483647, %v483
        %vm3741 = vcmp.le.f32.partialorder %v3740, 0.7853982
        %vm3742 = vcmp.lt.s32.totalorder %v483, 0
        %v3743 = vand.u32 %v483, 2139095040
        %v3744 = vshrl.u32 %v3743, 23
        %v3745 = vsub.s32 %v3744, 127
        %v3746 = vand.u32 2147483647, %v483
        %v3747 = vand.u32 %v3746, 8388607
        %v3748 = vor.u32 %v3747, 8388608
        %v3749 = vsub.s32 0, %v3748
        %v3750 = vadd.s32 %v3745, 1
        %vm3751 = vcmp.gt.s32.totalorder %v3750, 0
        %v3752 = vsel %vm3751, %v3750, 0
        %v3753 = vshrl.u32 %v3752, 5
        %v3754 = vand.u32 %v3752, 31
        %v3755 = vsub.s32 32, %v3754
        %v3756 = vshrl.u32 683565275, %v3755
        %v3757 = vshll.u32 683565275, %v3754
        %v3758 = vshrl.u32 2475754826, %v3755
        %v3759 = vor.u32 %v3757, %v3758
        %v3760 = vshll.u32 2475754826, %v3754
        %v3761 = vshrl.u32 2131351028, %v3755
        %v3762 = vor.u32 %v3760, %v3761
        %v3763 = vshll.u32 2131351028, %v3754
        %v3764 = vshrl.u32 2102212464, %v3755
        %v3765 = vor.u32 %v3763, %v3764
        %v3766 = vshll.u32 2102212464, %v3754
        %v3767 = vshrl.u32 920167782, %v3755
        %v3768 = vor.u32 %v3766, %v3767
        %v3769 = vshll.u32 920167782, %v3754
        %v3770 = vshrl.u32 1326507024, %v3755
        %v3771 = vor.u32 %v3769, %v3770
        %vm3772 = vcmp.lt.s32.totalorder %v3753, 1
        %vm3773 = vcmp.lt.s32.totalorder %v3753, 2
        %vm3774 = vcmp.lt.s32.totalorder %v3753, 3
        %vm3775 = vcmp.lt.s32.totalorder %v3753, 4
        %v3776 = vsel %vm3772, %v3756, %v3759
        %v3777 = vsel %vm3775, %v3765, 2102212464
        %v3778 = vsel %vm3774, %v3762, %v3777
        %v3779 = vsel %vm3773, %v3776, %v3778
        %v3780 = vsel %vm3772, %v3759, %v3762
        %v3781 = vsel %vm3775, %v3768, 920167782
        %v3782 = vsel %vm3774, %v3765, %v3781
        %v3783 = vsel %vm3773, %v3780, %v3782
        %v3784 = vsel %vm3772, %v3762, %v3765
        %v3785 = vsel %vm3775, %v3771, 1326507024
        %v3786 = vsel %vm3774, %v3768, %v3785
        %v3787 = vsel %vm3773, %v3784, %v3786
        %v3788 = vshll.u32 %v3748, 8
        %v3789 = vmul.u32.u64.compose %v3788, %v3787
        %v3790 = vextract.low.u32 %v3789
        %v3791 = vextract.high.u32 %v3789
        %v3792 = vmul.u32.u64.compose %v3788, %v3783
        %v3793 = vextract.low.u32 %v3792
        %v3794 = vextract.high.u32 %v3792
        %v3795 = vmul.u32 %v3788, %v3779
        %v3796 = vadd.s32 %v3791, %v3793
        %vm3797 = vc.u32 %v3791, %v3793
        %v3798 = vadd.s32 %v3794, 1
        %v3799 = vsel %vm3797, %v3798, %v3794
        %v3800 = vadd.s32 %v3795, %v3799
        %v3801 = vadd.s32 %v3800, 536870912
        %v3802 = vshrl.u32 %v3801, 30
        %v3803 = vshll.u32 %v3802, 30
        %v3804 = vsub.s32 %v3800, %v3803
        %vm3805 = vcmp.lt.s32.totalorder %v3804, 0
        %v3806 = vsub.s32 0, %v3804
        %v3807 = vsel %vm3805, %v3806, %v3804
        %v3808 = vclz %v3807
        %v3809 = vsub.s32 %v3808, 2
        %vm3810 = vcmp.gt.s32.totalorder 0, %v3809
        %v3811 = vsel %vm3810, 0, %v3809
        %v3812 = vsub.s32 32, %v3811
        %v3813 = vshll.u32 %v3804, %v3811
        %v3814 = vshrl.u32 %v3796, %v3812
        %v3815 = vor.u32 %v3813, %v3814
        %v3816 = vsub.s32 4294967266, %v3811
        %v3817 = vadd.s32 %v3816, 127
        %v3818 = vshll.u32 %v3817, 23
        %v3819 = vor.u32 4788187, %v3818
        %v3820 = vand.u32 2147483647, %v3819
        %v3822 = vcvt.s32.f32 %v3815
        %v3823 = vmul.f32 %v3822, %v3820
        %v3824 = vxor.u32 %v3823, 2147483648
        %v3825 = vsel %vm3742, %v3824, %v3823
        %v3826 = vsub.s32 4, %v3802
        %v3827 = vsel %vm3742, %v3826, %v3802
        %v3828 = vsel %vm3741, %v483, %v3825
        %v3829 = vsel %vm3741, 0, %v3827
        %v3830 = vcosq.f32.pop %v3828
        %v3831 = vsinq.f32.pop %v3828
        %vm3832 = vweird.f32 %v483
        %v3833 = vadd.s32 %v3829, 3
        %v3834 = vand.u32 %v3833, 3
        %vm3835 = vcmp.lt.s32.totalorder %v3834, 2
        %vm3836 = vcmp.eq.s32.totalorder %v3834, 0
        %v3837 = vxor.u32 %v3831, 2147483648
        %v3838 = vsel %vm3836, %v3830, %v3837
        %vm3839 = vcmp.eq.s32.totalorder %v3834, 2
        %v3840 = vxor.u32 %v3830, 2147483648
        %v3841 = vsel %vm3839, %v3840, %v3831
        %v3842 = vsel %vm3835, %v3838, %v3841
        %v3843 = vsel %vm3832, nan, %v3842
        %v3844 = vand.u32 2147483647, %v484
        %vm3845 = vcmp.le.f32.partialorder %v3844, 0.7853982
        %vm3846 = vcmp.lt.s32.totalorder %v484, 0
        %v3847 = vand.u32 %v484, 2139095040
        %v3848 = vshrl.u32 %v3847, 23
        %v3849 = vsub.s32 %v3848, 127
        %v3850 = vand.u32 2147483647, %v484
        %v3851 = vand.u32 %v3850, 8388607
        %v3852 = vor.u32 %v3851, 8388608
        %v3853 = vsub.s32 0, %v3852
        %v3854 = vadd.s32 %v3849, 1
        %vm3855 = vcmp.gt.s32.totalorder %v3854, 0
        %v3856 = vsel %vm3855, %v3854, 0
        %v3857 = vshrl.u32 %v3856, 5
        %v3858 = vand.u32 %v3856, 31
        %v3859 = vsub.s32 32, %v3858
        %v3860 = vshrl.u32 683565275, %v3859
        %v3861 = vshll.u32 683565275, %v3858
        %v3862 = vshrl.u32 2475754826, %v3859
        %v3863 = vor.u32 %v3861, %v3862
        %v3864 = vshll.u32 2475754826, %v3858
        %v3865 = vshrl.u32 2131351028, %v3859
        %v3866 = vor.u32 %v3864, %v3865
        %v3867 = vshll.u32 2131351028, %v3858
        %v3868 = vshrl.u32 2102212464, %v3859
        %v3869 = vor.u32 %v3867, %v3868
        %v3870 = vshll.u32 2102212464, %v3858
        %v3871 = vshrl.u32 920167782, %v3859
        %v3872 = vor.u32 %v3870, %v3871
        %v3873 = vshll.u32 920167782, %v3858
        %v3874 = vshrl.u32 1326507024, %v3859
        %v3875 = vor.u32 %v3873, %v3874
        %vm3876 = vcmp.lt.s32.totalorder %v3857, 1
        %vm3877 = vcmp.lt.s32.totalorder %v3857, 2
        %vm3878 = vcmp.lt.s32.totalorder %v3857, 3
        %vm3879 = vcmp.lt.s32.totalorder %v3857, 4
        %v3880 = vsel %vm3876, %v3860, %v3863
        %v3881 = vsel %vm3879, %v3869, 2102212464
        %v3882 = vsel %vm3878, %v3866, %v3881
        %v3883 = vsel %vm3877, %v3880, %v3882
        %v3884 = vsel %vm3876, %v3863, %v3866
        %v3885 = vsel %vm3879, %v3872, 920167782
        %v3886 = vsel %vm3878, %v3869, %v3885
        %v3887 = vsel %vm3877, %v3884, %v3886
        %v3888 = vsel %vm3876, %v3866, %v3869
        %v3889 = vsel %vm3879, %v3875, 1326507024
        %v3890 = vsel %vm3878, %v3872, %v3889
        %v3891 = vsel %vm3877, %v3888, %v3890
        %v3892 = vshll.u32 %v3852, 8
        %v3893 = vmul.u32.u64.compose %v3892, %v3891
        %v3894 = vextract.low.u32 %v3893
        %v3895 = vextract.high.u32 %v3893
        %v3896 = vmul.u32.u64.compose %v3892, %v3887
        %v3897 = vextract.low.u32 %v3896
        %v3898 = vextract.high.u32 %v3896
        %v3899 = vmul.u32 %v3892, %v3883
        %v3900 = vadd.s32 %v3895, %v3897
        %vm3901 = vc.u32 %v3895, %v3897
        %v3902 = vadd.s32 %v3898, 1
        %v3903 = vsel %vm3901, %v3902, %v3898
        %v3904 = vadd.s32 %v3899, %v3903
        %v3905 = vadd.s32 %v3904, 536870912
        %v3906 = vshrl.u32 %v3905, 30
        %v3907 = vshll.u32 %v3906, 30
        %v3908 = vsub.s32 %v3904, %v3907
        %vm3909 = vcmp.lt.s32.totalorder %v3908, 0
        %v3910 = vsub.s32 0, %v3908
        %v3911 = vsel %vm3909, %v3910, %v3908
        %v3912 = vclz %v3911
        %v3913 = vsub.s32 %v3912, 2
        %vm3914 = vcmp.gt.s32.totalorder 0, %v3913
        %v3915 = vsel %vm3914, 0, %v3913
        %v3916 = vsub.s32 32, %v3915
        %v3917 = vshll.u32 %v3908, %v3915
        %v3918 = vshrl.u32 %v3900, %v3916
        %v3919 = vor.u32 %v3917, %v3918
        %v3920 = vsub.s32 4294967266, %v3915
        %v3921 = vadd.s32 %v3920, 127
        %v3922 = vshll.u32 %v3921, 23
        %v3923 = vor.u32 4788187, %v3922
        %v3924 = vand.u32 2147483647, %v3923
        %v3926 = vcvt.s32.f32 %v3919
        %v3927 = vmul.f32 %v3926, %v3924
        %v3928 = vxor.u32 %v3927, 2147483648
        %v3929 = vsel %vm3846, %v3928, %v3927
        %v3930 = vsub.s32 4, %v3906
        %v3931 = vsel %vm3846, %v3930, %v3906
        %v3932 = vsel %vm3845, %v484, %v3929
        %v3933 = vsel %vm3845, 0, %v3931
        %v3934 = vcosq.f32.pop %v3932
        %v3935 = vsinq.f32.pop %v3932
        %vm3936 = vweird.f32 %v484
        %v3937 = vadd.s32 %v3933, 3
        %v3938 = vand.u32 %v3937, 3
        %vm3939 = vcmp.lt.s32.totalorder %v3938, 2
        %vm3940 = vcmp.eq.s32.totalorder %v3938, 0
        %v3941 = vxor.u32 %v3935, 2147483648
        %v3942 = vsel %vm3940, %v3934, %v3941
        %vm3943 = vcmp.eq.s32.totalorder %v3938, 2
        %v3944 = vxor.u32 %v3934, 2147483648
        %v3945 = vsel %vm3943, %v3944, %v3935
        %v3946 = vsel %vm3939, %v3942, %v3945
        %v3947 = vsel %vm3936, nan, %v3946
        %v3948 = vand.u32 2147483647, %v485
        %vm3949 = vcmp.le.f32.partialorder %v3948, 0.7853982
        %vm3950 = vcmp.lt.s32.totalorder %v485, 0
        %v3951 = vand.u32 %v485, 2139095040
        %v3952 = vshrl.u32 %v3951, 23
        %v3953 = vsub.s32 %v3952, 127
        %v3954 = vand.u32 2147483647, %v485
        %v3955 = vand.u32 %v3954, 8388607
        %v3956 = vor.u32 %v3955, 8388608
        %v3957 = vsub.s32 0, %v3956
        %v3958 = vadd.s32 %v3953, 1
        %vm3959 = vcmp.gt.s32.totalorder %v3958, 0
        %v3960 = vsel %vm3959, %v3958, 0
        %v3961 = vshrl.u32 %v3960, 5
        %v3962 = vand.u32 %v3960, 31
        %v3963 = vsub.s32 32, %v3962
        %v3964 = vshrl.u32 683565275, %v3963
        %v3965 = vshll.u32 683565275, %v3962
        %v3966 = vshrl.u32 2475754826, %v3963
        %v3967 = vor.u32 %v3965, %v3966
        %v3968 = vshll.u32 2475754826, %v3962
        %v3969 = vshrl.u32 2131351028, %v3963
        %v3970 = vor.u32 %v3968, %v3969
        %v3971 = vshll.u32 2131351028, %v3962
        %v3972 = vshrl.u32 2102212464, %v3963
        %v3973 = vor.u32 %v3971, %v3972
        %v3974 = vshll.u32 2102212464, %v3962
        %v3975 = vshrl.u32 920167782, %v3963
        %v3976 = vor.u32 %v3974, %v3975
        %v3977 = vshll.u32 920167782, %v3962
        %v3978 = vshrl.u32 1326507024, %v3963
        %v3979 = vor.u32 %v3977, %v3978
        %vm3980 = vcmp.lt.s32.totalorder %v3961, 1
        %vm3981 = vcmp.lt.s32.totalorder %v3961, 2
        %vm3982 = vcmp.lt.s32.totalorder %v3961, 3
        %vm3983 = vcmp.lt.s32.totalorder %v3961, 4
        %v3984 = vsel %vm3980, %v3964, %v3967
        %v3985 = vsel %vm3983, %v3973, 2102212464
        %v3986 = vsel %vm3982, %v3970, %v3985
        %v3987 = vsel %vm3981, %v3984, %v3986
        %v3988 = vsel %vm3980, %v3967, %v3970
        %v3989 = vsel %vm3983, %v3976, 920167782
        %v3990 = vsel %vm3982, %v3973, %v3989
        %v3991 = vsel %vm3981, %v3988, %v3990
        %v3992 = vsel %vm3980, %v3970, %v3973
        %v3993 = vsel %vm3983, %v3979, 1326507024
        %v3994 = vsel %vm3982, %v3976, %v3993
        %v3995 = vsel %vm3981, %v3992, %v3994
        %v3996 = vshll.u32 %v3956, 8
        %v3997 = vmul.u32.u64.compose %v3996, %v3995
        %v3998 = vextract.low.u32 %v3997
        %v3999 = vextract.high.u32 %v3997
        %v4000 = vmul.u32.u64.compose %v3996, %v3991
        %v4001 = vextract.low.u32 %v4000
        %v4002 = vextract.high.u32 %v4000
        %v4003 = vmul.u32 %v3996, %v3987
        %v4004 = vadd.s32 %v3999, %v4001
        %vm4005 = vc.u32 %v3999, %v4001
        %v4006 = vadd.s32 %v4002, 1
        %v4007 = vsel %vm4005, %v4006, %v4002
        %v4008 = vadd.s32 %v4003, %v4007
        %v4009 = vadd.s32 %v4008, 536870912
        %v4010 = vshrl.u32 %v4009, 30
        %v4011 = vshll.u32 %v4010, 30
        %v4012 = vsub.s32 %v4008, %v4011
        %vm4013 = vcmp.lt.s32.totalorder %v4012, 0
        %v4014 = vsub.s32 0, %v4012
        %v4015 = vsel %vm4013, %v4014, %v4012
        %v4016 = vclz %v4015
        %v4017 = vsub.s32 %v4016, 2
        %vm4018 = vcmp.gt.s32.totalorder 0, %v4017
        %v4019 = vsel %vm4018, 0, %v4017
        %v4020 = vsub.s32 32, %v4019
        %v4021 = vshll.u32 %v4012, %v4019
        %v4022 = vshrl.u32 %v4004, %v4020
        %v4023 = vor.u32 %v4021, %v4022
        %v4024 = vsub.s32 4294967266, %v4019
        %v4025 = vadd.s32 %v4024, 127
        %v4026 = vshll.u32 %v4025, 23
        %v4027 = vor.u32 4788187, %v4026
        %v4028 = vand.u32 2147483647, %v4027
        %v4030 = vcvt.s32.f32 %v4023
        %v4031 = vmul.f32 %v4030, %v4028
        %v4032 = vxor.u32 %v4031, 2147483648
        %v4033 = vsel %vm3950, %v4032, %v4031
        %v4034 = vsub.s32 4, %v4010
        %v4035 = vsel %vm3950, %v4034, %v4010
        %v4036 = vsel %vm3949, %v485, %v4033
        %v4037 = vsel %vm3949, 0, %v4035
        %v4038 = vcosq.f32.pop %v4036
        %v4039 = vsinq.f32.pop %v4036
        %vm4040 = vweird.f32 %v485
        %v4041 = vadd.s32 %v4037, 3
        %v4042 = vand.u32 %v4041, 3
        %vm4043 = vcmp.lt.s32.totalorder %v4042, 2
        %vm4044 = vcmp.eq.s32.totalorder %v4042, 0
        %v4045 = vxor.u32 %v4039, 2147483648
        %v4046 = vsel %vm4044, %v4038, %v4045
        %vm4047 = vcmp.eq.s32.totalorder %v4042, 2
        %v4048 = vxor.u32 %v4038, 2147483648
        %v4049 = vsel %vm4047, %v4048, %v4039
        %v4050 = vsel %vm4043, %v4046, %v4049
        %v4051 = vsel %vm4040, nan, %v4050
        %v4052 = vand.u32 2147483647, %v486
        %vm4053 = vcmp.le.f32.partialorder %v4052, 0.7853982
        %vm4054 = vcmp.lt.s32.totalorder %v486, 0
        %v4055 = vand.u32 %v486, 2139095040
        %v4056 = vshrl.u32 %v4055, 23
        %v4057 = vsub.s32 %v4056, 127
        %v4058 = vand.u32 2147483647, %v486
        %v4059 = vand.u32 %v4058, 8388607
        %v4060 = vor.u32 %v4059, 8388608
        %v4061 = vsub.s32 0, %v4060
        %v4062 = vadd.s32 %v4057, 1
        %vm4063 = vcmp.gt.s32.totalorder %v4062, 0
        %v4064 = vsel %vm4063, %v4062, 0
        %v4065 = vshrl.u32 %v4064, 5
        %v4066 = vand.u32 %v4064, 31
        %v4067 = vsub.s32 32, %v4066
        %v4068 = vshrl.u32 683565275, %v4067
        %v4069 = vshll.u32 683565275, %v4066
        %v4070 = vshrl.u32 2475754826, %v4067
        %v4071 = vor.u32 %v4069, %v4070
        %v4072 = vshll.u32 2475754826, %v4066
        %v4073 = vshrl.u32 2131351028, %v4067
        %v4074 = vor.u32 %v4072, %v4073
        %v4075 = vshll.u32 2131351028, %v4066
        %v4076 = vshrl.u32 2102212464, %v4067
        %v4077 = vor.u32 %v4075, %v4076
        %v4078 = vshll.u32 2102212464, %v4066
        %v4079 = vshrl.u32 920167782, %v4067
        %v4080 = vor.u32 %v4078, %v4079
        %v4081 = vshll.u32 920167782, %v4066
        %v4082 = vshrl.u32 1326507024, %v4067
        %v4083 = vor.u32 %v4081, %v4082
        %vm4084 = vcmp.lt.s32.totalorder %v4065, 1
        %vm4085 = vcmp.lt.s32.totalorder %v4065, 2
        %vm4086 = vcmp.lt.s32.totalorder %v4065, 3
        %vm4087 = vcmp.lt.s32.totalorder %v4065, 4
        %v4088 = vsel %vm4084, %v4068, %v4071
        %v4089 = vsel %vm4087, %v4077, 2102212464
        %v4090 = vsel %vm4086, %v4074, %v4089
        %v4091 = vsel %vm4085, %v4088, %v4090
        %v4092 = vsel %vm4084, %v4071, %v4074
        %v4093 = vsel %vm4087, %v4080, 920167782
        %v4094 = vsel %vm4086, %v4077, %v4093
        %v4095 = vsel %vm4085, %v4092, %v4094
        %v4096 = vsel %vm4084, %v4074, %v4077
        %v4097 = vsel %vm4087, %v4083, 1326507024
        %v4098 = vsel %vm4086, %v4080, %v4097
        %v4099 = vsel %vm4085, %v4096, %v4098
        %v4100 = vshll.u32 %v4060, 8
        %v4101 = vmul.u32.u64.compose %v4100, %v4099
        %v4102 = vextract.low.u32 %v4101
        %v4103 = vextract.high.u32 %v4101
        %v4104 = vmul.u32.u64.compose %v4100, %v4095
        %v4105 = vextract.low.u32 %v4104
        %v4106 = vextract.high.u32 %v4104
        %v4107 = vmul.u32 %v4100, %v4091
        %v4108 = vadd.s32 %v4103, %v4105
        %vm4109 = vc.u32 %v4103, %v4105
        %v4110 = vadd.s32 %v4106, 1
        %v4111 = vsel %vm4109, %v4110, %v4106
        %v4112 = vadd.s32 %v4107, %v4111
        %v4113 = vadd.s32 %v4112, 536870912
        %v4114 = vshrl.u32 %v4113, 30
        %v4115 = vshll.u32 %v4114, 30
        %v4116 = vsub.s32 %v4112, %v4115
        %vm4117 = vcmp.lt.s32.totalorder %v4116, 0
        %v4118 = vsub.s32 0, %v4116
        %v4119 = vsel %vm4117, %v4118, %v4116
        %v4120 = vclz %v4119
        %v4121 = vsub.s32 %v4120, 2
        %vm4122 = vcmp.gt.s32.totalorder 0, %v4121
        %v4123 = vsel %vm4122, 0, %v4121
        %v4124 = vsub.s32 32, %v4123
        %v4125 = vshll.u32 %v4116, %v4123
        %v4126 = vshrl.u32 %v4108, %v4124
        %v4127 = vor.u32 %v4125, %v4126
        %v4128 = vsub.s32 4294967266, %v4123
        %v4129 = vadd.s32 %v4128, 127
        %v4130 = vshll.u32 %v4129, 23
        %v4131 = vor.u32 4788187, %v4130
        %v4132 = vand.u32 2147483647, %v4131
        %v4134 = vcvt.s32.f32 %v4127
        %v4135 = vmul.f32 %v4134, %v4132
        %v4136 = vxor.u32 %v4135, 2147483648
        %v4137 = vsel %vm4054, %v4136, %v4135
        %v4138 = vsub.s32 4, %v4114
        %v4139 = vsel %vm4054, %v4138, %v4114
        %v4140 = vsel %vm4053, %v486, %v4137
        %v4141 = vsel %vm4053, 0, %v4139
        %v4142 = vcosq.f32.pop %v4140
        %v4143 = vsinq.f32.pop %v4140
        %vm4144 = vweird.f32 %v486
        %v4145 = vadd.s32 %v4141, 3
        %v4146 = vand.u32 %v4145, 3
        %vm4147 = vcmp.lt.s32.totalorder %v4146, 2
        %vm4148 = vcmp.eq.s32.totalorder %v4146, 0
        %v4149 = vxor.u32 %v4143, 2147483648
        %v4150 = vsel %vm4148, %v4142, %v4149
        %vm4151 = vcmp.eq.s32.totalorder %v4146, 2
        %v4152 = vxor.u32 %v4142, 2147483648
        %v4153 = vsel %vm4151, %v4152, %v4143
        %v4154 = vsel %vm4147, %v4150, %v4153
        %v4155 = vsel %vm4144, nan, %v4154
        %v4156 = vand.u32 2147483647, %v487
        %vm4157 = vcmp.le.f32.partialorder %v4156, 0.7853982
        %vm4158 = vcmp.lt.s32.totalorder %v487, 0
        %v4159 = vand.u32 %v487, 2139095040
        %v4160 = vshrl.u32 %v4159, 23
        %v4161 = vsub.s32 %v4160, 127
        %v4162 = vand.u32 2147483647, %v487
        %v4163 = vand.u32 %v4162, 8388607
        %v4164 = vor.u32 %v4163, 8388608
        %v4165 = vsub.s32 0, %v4164
        %v4166 = vadd.s32 %v4161, 1
        %vm4167 = vcmp.gt.s32.totalorder %v4166, 0
        %v4168 = vsel %vm4167, %v4166, 0
        %v4169 = vshrl.u32 %v4168, 5
        %v4170 = vand.u32 %v4168, 31
        %v4171 = vsub.s32 32, %v4170
        %v4172 = vshrl.u32 683565275, %v4171
        %v4173 = vshll.u32 683565275, %v4170
        %v4174 = vshrl.u32 2475754826, %v4171
        %v4175 = vor.u32 %v4173, %v4174
        %v4176 = vshll.u32 2475754826, %v4170
        %v4177 = vshrl.u32 2131351028, %v4171
        %v4178 = vor.u32 %v4176, %v4177
        %v4179 = vshll.u32 2131351028, %v4170
        %v4180 = vshrl.u32 2102212464, %v4171
        %v4181 = vor.u32 %v4179, %v4180
        %v4182 = vshll.u32 2102212464, %v4170
        %v4183 = vshrl.u32 920167782, %v4171
        %v4184 = vor.u32 %v4182, %v4183
        %v4185 = vshll.u32 920167782, %v4170
        %v4186 = vshrl.u32 1326507024, %v4171
        %v4187 = vor.u32 %v4185, %v4186
        %vm4188 = vcmp.lt.s32.totalorder %v4169, 1
        %vm4189 = vcmp.lt.s32.totalorder %v4169, 2
        %vm4190 = vcmp.lt.s32.totalorder %v4169, 3
        %vm4191 = vcmp.lt.s32.totalorder %v4169, 4
        %v4192 = vsel %vm4188, %v4172, %v4175
        %v4193 = vsel %vm4191, %v4181, 2102212464
        %v4194 = vsel %vm4190, %v4178, %v4193
        %v4195 = vsel %vm4189, %v4192, %v4194
        %v4196 = vsel %vm4188, %v4175, %v4178
        %v4197 = vsel %vm4191, %v4184, 920167782
        %v4198 = vsel %vm4190, %v4181, %v4197
        %v4199 = vsel %vm4189, %v4196, %v4198
        %v4200 = vsel %vm4188, %v4178, %v4181
        %v4201 = vsel %vm4191, %v4187, 1326507024
        %v4202 = vsel %vm4190, %v4184, %v4201
        %v4203 = vsel %vm4189, %v4200, %v4202
        %v4204 = vshll.u32 %v4164, 8
        %v4205 = vmul.u32.u64.compose %v4204, %v4203
        %v4206 = vextract.low.u32 %v4205
        %v4207 = vextract.high.u32 %v4205
        %v4208 = vmul.u32.u64.compose %v4204, %v4199
        %v4209 = vextract.low.u32 %v4208
        %v4210 = vextract.high.u32 %v4208
        %v4211 = vmul.u32 %v4204, %v4195
        %v4212 = vadd.s32 %v4207, %v4209
        %vm4213 = vc.u32 %v4207, %v4209
        %v4214 = vadd.s32 %v4210, 1
        %v4215 = vsel %vm4213, %v4214, %v4210
        %v4216 = vadd.s32 %v4211, %v4215
        %v4217 = vadd.s32 %v4216, 536870912
        %v4218 = vshrl.u32 %v4217, 30
        %v4219 = vshll.u32 %v4218, 30
        %v4220 = vsub.s32 %v4216, %v4219
        %vm4221 = vcmp.lt.s32.totalorder %v4220, 0
        %v4222 = vsub.s32 0, %v4220
        %v4223 = vsel %vm4221, %v4222, %v4220
        %v4224 = vclz %v4223
        %v4225 = vsub.s32 %v4224, 2
        %vm4226 = vcmp.gt.s32.totalorder 0, %v4225
        %v4227 = vsel %vm4226, 0, %v4225
        %v4228 = vsub.s32 32, %v4227
        %v4229 = vshll.u32 %v4220, %v4227
        %v4230 = vshrl.u32 %v4212, %v4228
        %v4231 = vor.u32 %v4229, %v4230
        %v4232 = vsub.s32 4294967266, %v4227
        %v4233 = vadd.s32 %v4232, 127
        %v4234 = vshll.u32 %v4233, 23
        %v4235 = vor.u32 4788187, %v4234
        %v4236 = vand.u32 2147483647, %v4235
        %v4238 = vcvt.s32.f32 %v4231
        %v4239 = vmul.f32 %v4238, %v4236
        %v4240 = vxor.u32 %v4239, 2147483648
        %v4241 = vsel %vm4158, %v4240, %v4239
        %v4242 = vsub.s32 4, %v4218
        %v4243 = vsel %vm4158, %v4242, %v4218
        %v4244 = vsel %vm4157, %v487, %v4241
        %v4245 = vsel %vm4157, 0, %v4243
        %v4246 = vcosq.f32.pop %v4244
        %v4247 = vsinq.f32.pop %v4244
        %vm4248 = vweird.f32 %v487
        %v4249 = vadd.s32 %v4245, 3
        %v4250 = vand.u32 %v4249, 3
        %vm4251 = vcmp.lt.s32.totalorder %v4250, 2
        %vm4252 = vcmp.eq.s32.totalorder %v4250, 0
        %v4253 = vxor.u32 %v4247, 2147483648
        %v4254 = vsel %vm4252, %v4246, %v4253
        %vm4255 = vcmp.eq.s32.totalorder %v4250, 2
        %v4256 = vxor.u32 %v4246, 2147483648
        %v4257 = vsel %vm4255, %v4256, %v4247
        %v4258 = vsel %vm4251, %v4254, %v4257
        %v4259 = vsel %vm4248, nan, %v4258
        %v4260 = vand.u32 2147483647, %v488
        %vm4261 = vcmp.le.f32.partialorder %v4260, 0.7853982
        %vm4262 = vcmp.lt.s32.totalorder %v488, 0
        %v4263 = vand.u32 %v488, 2139095040
        %v4264 = vshrl.u32 %v4263, 23
        %v4265 = vsub.s32 %v4264, 127
        %v4266 = vand.u32 2147483647, %v488
        %v4267 = vand.u32 %v4266, 8388607
        %v4268 = vor.u32 %v4267, 8388608
        %v4269 = vsub.s32 0, %v4268
        %v4270 = vadd.s32 %v4265, 1
        %vm4271 = vcmp.gt.s32.totalorder %v4270, 0
        %v4272 = vsel %vm4271, %v4270, 0
        %v4273 = vshrl.u32 %v4272, 5
        %v4274 = vand.u32 %v4272, 31
        %v4275 = vsub.s32 32, %v4274
        %v4276 = vshrl.u32 683565275, %v4275
        %v4277 = vshll.u32 683565275, %v4274
        %v4278 = vshrl.u32 2475754826, %v4275
        %v4279 = vor.u32 %v4277, %v4278
        %v4280 = vshll.u32 2475754826, %v4274
        %v4281 = vshrl.u32 2131351028, %v4275
        %v4282 = vor.u32 %v4280, %v4281
        %v4283 = vshll.u32 2131351028, %v4274
        %v4284 = vshrl.u32 2102212464, %v4275
        %v4285 = vor.u32 %v4283, %v4284
        %v4286 = vshll.u32 2102212464, %v4274
        %v4287 = vshrl.u32 920167782, %v4275
        %v4288 = vor.u32 %v4286, %v4287
        %v4289 = vshll.u32 920167782, %v4274
        %v4290 = vshrl.u32 1326507024, %v4275
        %v4291 = vor.u32 %v4289, %v4290
        %vm4292 = vcmp.lt.s32.totalorder %v4273, 1
        %vm4293 = vcmp.lt.s32.totalorder %v4273, 2
        %vm4294 = vcmp.lt.s32.totalorder %v4273, 3
        %vm4295 = vcmp.lt.s32.totalorder %v4273, 4
        %v4296 = vsel %vm4292, %v4276, %v4279
        %v4297 = vsel %vm4295, %v4285, 2102212464
        %v4298 = vsel %vm4294, %v4282, %v4297
        %v4299 = vsel %vm4293, %v4296, %v4298
        %v4300 = vsel %vm4292, %v4279, %v4282
        %v4301 = vsel %vm4295, %v4288, 920167782
        %v4302 = vsel %vm4294, %v4285, %v4301
        %v4303 = vsel %vm4293, %v4300, %v4302
        %v4304 = vsel %vm4292, %v4282, %v4285
        %v4305 = vsel %vm4295, %v4291, 1326507024
        %v4306 = vsel %vm4294, %v4288, %v4305
        %v4307 = vsel %vm4293, %v4304, %v4306
        %v4308 = vshll.u32 %v4268, 8
        %v4309 = vmul.u32.u64.compose %v4308, %v4307
        %v4310 = vextract.low.u32 %v4309
        %v4311 = vextract.high.u32 %v4309
        %v4312 = vmul.u32.u64.compose %v4308, %v4303
        %v4313 = vextract.low.u32 %v4312
        %v4314 = vextract.high.u32 %v4312
        %v4315 = vmul.u32 %v4308, %v4299
        %v4316 = vadd.s32 %v4311, %v4313
        %vm4317 = vc.u32 %v4311, %v4313
        %v4318 = vadd.s32 %v4314, 1
        %v4319 = vsel %vm4317, %v4318, %v4314
        %v4320 = vadd.s32 %v4315, %v4319
        %v4321 = vadd.s32 %v4320, 536870912
        %v4322 = vshrl.u32 %v4321, 30
        %v4323 = vshll.u32 %v4322, 30
        %v4324 = vsub.s32 %v4320, %v4323
        %vm4325 = vcmp.lt.s32.totalorder %v4324, 0
        %v4326 = vsub.s32 0, %v4324
        %v4327 = vsel %vm4325, %v4326, %v4324
        %v4328 = vclz %v4327
        %v4329 = vsub.s32 %v4328, 2
        %vm4330 = vcmp.gt.s32.totalorder 0, %v4329
        %v4331 = vsel %vm4330, 0, %v4329
        %v4332 = vsub.s32 32, %v4331
        %v4333 = vshll.u32 %v4324, %v4331
        %v4334 = vshrl.u32 %v4316, %v4332
        %v4335 = vor.u32 %v4333, %v4334
        %v4336 = vsub.s32 4294967266, %v4331
        %v4337 = vadd.s32 %v4336, 127
        %v4338 = vshll.u32 %v4337, 23
        %v4339 = vor.u32 4788187, %v4338
        %v4340 = vand.u32 2147483647, %v4339
        %v4342 = vcvt.s32.f32 %v4335
        %v4343 = vmul.f32 %v4342, %v4340
        %v4344 = vxor.u32 %v4343, 2147483648
        %v4345 = vsel %vm4262, %v4344, %v4343
        %v4346 = vsub.s32 4, %v4322
        %v4347 = vsel %vm4262, %v4346, %v4322
        %v4348 = vsel %vm4261, %v488, %v4345
        %v4349 = vsel %vm4261, 0, %v4347
        %v4350 = vcosq.f32.pop %v4348
        %v4351 = vsinq.f32.pop %v4348
        %vm4352 = vweird.f32 %v488
        %v4353 = vadd.s32 %v4349, 3
        %v4354 = vand.u32 %v4353, 3
        %vm4355 = vcmp.lt.s32.totalorder %v4354, 2
        %vm4356 = vcmp.eq.s32.totalorder %v4354, 0
        %v4357 = vxor.u32 %v4351, 2147483648
        %v4358 = vsel %vm4356, %v4350, %v4357
        %vm4359 = vcmp.eq.s32.totalorder %v4354, 2
        %v4360 = vxor.u32 %v4350, 2147483648
        %v4361 = vsel %vm4359, %v4360, %v4351
        %v4362 = vsel %vm4355, %v4358, %v4361
        %v4363 = vsel %vm4352, nan, %v4362
        %v4364 = vand.u32 2147483647, %v489
        %vm4365 = vcmp.le.f32.partialorder %v4364, 0.7853982
        %vm4366 = vcmp.lt.s32.totalorder %v489, 0
        %v4367 = vand.u32 %v489, 2139095040
        %v4368 = vshrl.u32 %v4367, 23
        %v4369 = vsub.s32 %v4368, 127
        %v4370 = vand.u32 2147483647, %v489
        %v4371 = vand.u32 %v4370, 8388607
        %v4372 = vor.u32 %v4371, 8388608
        %v4373 = vsub.s32 0, %v4372
        %v4374 = vadd.s32 %v4369, 1
        %vm4375 = vcmp.gt.s32.totalorder %v4374, 0
        %v4376 = vsel %vm4375, %v4374, 0
        %v4377 = vshrl.u32 %v4376, 5
        %v4378 = vand.u32 %v4376, 31
        %v4379 = vsub.s32 32, %v4378
        %v4380 = vshrl.u32 683565275, %v4379
        %v4381 = vshll.u32 683565275, %v4378
        %v4382 = vshrl.u32 2475754826, %v4379
        %v4383 = vor.u32 %v4381, %v4382
        %v4384 = vshll.u32 2475754826, %v4378
        %v4385 = vshrl.u32 2131351028, %v4379
        %v4386 = vor.u32 %v4384, %v4385
        %v4387 = vshll.u32 2131351028, %v4378
        %v4388 = vshrl.u32 2102212464, %v4379
        %v4389 = vor.u32 %v4387, %v4388
        %v4390 = vshll.u32 2102212464, %v4378
        %v4391 = vshrl.u32 920167782, %v4379
        %v4392 = vor.u32 %v4390, %v4391
        %v4393 = vshll.u32 920167782, %v4378
        %v4394 = vshrl.u32 1326507024, %v4379
        %v4395 = vor.u32 %v4393, %v4394
        %vm4396 = vcmp.lt.s32.totalorder %v4377, 1
        %vm4397 = vcmp.lt.s32.totalorder %v4377, 2
        %vm4398 = vcmp.lt.s32.totalorder %v4377, 3
        %vm4399 = vcmp.lt.s32.totalorder %v4377, 4
        %v4400 = vsel %vm4396, %v4380, %v4383
        %v4401 = vsel %vm4399, %v4389, 2102212464
        %v4402 = vsel %vm4398, %v4386, %v4401
        %v4403 = vsel %vm4397, %v4400, %v4402
        %v4404 = vsel %vm4396, %v4383, %v4386
        %v4405 = vsel %vm4399, %v4392, 920167782
        %v4406 = vsel %vm4398, %v4389, %v4405
        %v4407 = vsel %vm4397, %v4404, %v4406
        %v4408 = vsel %vm4396, %v4386, %v4389
        %v4409 = vsel %vm4399, %v4395, 1326507024
        %v4410 = vsel %vm4398, %v4392, %v4409
        %v4411 = vsel %vm4397, %v4408, %v4410
        %v4412 = vshll.u32 %v4372, 8
        %v4413 = vmul.u32.u64.compose %v4412, %v4411
        %v4414 = vextract.low.u32 %v4413
        %v4415 = vextract.high.u32 %v4413
        %v4416 = vmul.u32.u64.compose %v4412, %v4407
        %v4417 = vextract.low.u32 %v4416
        %v4418 = vextract.high.u32 %v4416
        %v4419 = vmul.u32 %v4412, %v4403
        %v4420 = vadd.s32 %v4415, %v4417
        %vm4421 = vc.u32 %v4415, %v4417
        %v4422 = vadd.s32 %v4418, 1
        %v4423 = vsel %vm4421, %v4422, %v4418
        %v4424 = vadd.s32 %v4419, %v4423
        %v4425 = vadd.s32 %v4424, 536870912
        %v4426 = vshrl.u32 %v4425, 30
        %v4427 = vshll.u32 %v4426, 30
        %v4428 = vsub.s32 %v4424, %v4427
        %vm4429 = vcmp.lt.s32.totalorder %v4428, 0
        %v4430 = vsub.s32 0, %v4428
        %v4431 = vsel %vm4429, %v4430, %v4428
        %v4432 = vclz %v4431
        %v4433 = vsub.s32 %v4432, 2
        %vm4434 = vcmp.gt.s32.totalorder 0, %v4433
        %v4435 = vsel %vm4434, 0, %v4433
        %v4436 = vsub.s32 32, %v4435
        %v4437 = vshll.u32 %v4428, %v4435
        %v4438 = vshrl.u32 %v4420, %v4436
        %v4439 = vor.u32 %v4437, %v4438
        %v4440 = vsub.s32 4294967266, %v4435
        %v4441 = vadd.s32 %v4440, 127
        %v4442 = vshll.u32 %v4441, 23
        %v4443 = vor.u32 4788187, %v4442
        %v4444 = vand.u32 2147483647, %v4443
        %v4446 = vcvt.s32.f32 %v4439
        %v4447 = vmul.f32 %v4446, %v4444
        %v4448 = vxor.u32 %v4447, 2147483648
        %v4449 = vsel %vm4366, %v4448, %v4447
        %v4450 = vsub.s32 4, %v4426
        %v4451 = vsel %vm4366, %v4450, %v4426
        %v4452 = vsel %vm4365, %v489, %v4449
        %v4453 = vsel %vm4365, 0, %v4451
        %v4454 = vcosq.f32.pop %v4452
        %v4455 = vsinq.f32.pop %v4452
        %vm4456 = vweird.f32 %v489
        %v4457 = vadd.s32 %v4453, 3
        %v4458 = vand.u32 %v4457, 3
        %vm4459 = vcmp.lt.s32.totalorder %v4458, 2
        %vm4460 = vcmp.eq.s32.totalorder %v4458, 0
        %v4461 = vxor.u32 %v4455, 2147483648
        %v4462 = vsel %vm4460, %v4454, %v4461
        %vm4463 = vcmp.eq.s32.totalorder %v4458, 2
        %v4464 = vxor.u32 %v4454, 2147483648
        %v4465 = vsel %vm4463, %v4464, %v4455
        %v4466 = vsel %vm4459, %v4462, %v4465
        %v4467 = vsel %vm4456, nan, %v4466
        %v4468 = vand.u32 2147483647, %v490
        %vm4469 = vcmp.le.f32.partialorder %v4468, 0.7853982
        %vm4470 = vcmp.lt.s32.totalorder %v490, 0
        %v4471 = vand.u32 %v490, 2139095040
        %v4472 = vshrl.u32 %v4471, 23
        %v4473 = vsub.s32 %v4472, 127
        %v4474 = vand.u32 2147483647, %v490
        %v4475 = vand.u32 %v4474, 8388607
        %v4476 = vor.u32 %v4475, 8388608
        %v4477 = vsub.s32 0, %v4476
        %v4478 = vadd.s32 %v4473, 1
        %vm4479 = vcmp.gt.s32.totalorder %v4478, 0
        %v4480 = vsel %vm4479, %v4478, 0
        %v4481 = vshrl.u32 %v4480, 5
        %v4482 = vand.u32 %v4480, 31
        %v4483 = vsub.s32 32, %v4482
        %v4484 = vshrl.u32 683565275, %v4483
        %v4485 = vshll.u32 683565275, %v4482
        %v4486 = vshrl.u32 2475754826, %v4483
        %v4487 = vor.u32 %v4485, %v4486
        %v4488 = vshll.u32 2475754826, %v4482
        %v4489 = vshrl.u32 2131351028, %v4483
        %v4490 = vor.u32 %v4488, %v4489
        %v4491 = vshll.u32 2131351028, %v4482
        %v4492 = vshrl.u32 2102212464, %v4483
        %v4493 = vor.u32 %v4491, %v4492
        %v4494 = vshll.u32 2102212464, %v4482
        %v4495 = vshrl.u32 920167782, %v4483
        %v4496 = vor.u32 %v4494, %v4495
        %v4497 = vshll.u32 920167782, %v4482
        %v4498 = vshrl.u32 1326507024, %v4483
        %v4499 = vor.u32 %v4497, %v4498
        %vm4500 = vcmp.lt.s32.totalorder %v4481, 1
        %vm4501 = vcmp.lt.s32.totalorder %v4481, 2
        %vm4502 = vcmp.lt.s32.totalorder %v4481, 3
        %vm4503 = vcmp.lt.s32.totalorder %v4481, 4
        %v4504 = vsel %vm4500, %v4484, %v4487
        %v4505 = vsel %vm4503, %v4493, 2102212464
        %v4506 = vsel %vm4502, %v4490, %v4505
        %v4507 = vsel %vm4501, %v4504, %v4506
        %v4508 = vsel %vm4500, %v4487, %v4490
        %v4509 = vsel %vm4503, %v4496, 920167782
        %v4510 = vsel %vm4502, %v4493, %v4509
        %v4511 = vsel %vm4501, %v4508, %v4510
        %v4512 = vsel %vm4500, %v4490, %v4493
        %v4513 = vsel %vm4503, %v4499, 1326507024
        %v4514 = vsel %vm4502, %v4496, %v4513
        %v4515 = vsel %vm4501, %v4512, %v4514
        %v4516 = vshll.u32 %v4476, 8
        %v4517 = vmul.u32.u64.compose %v4516, %v4515
        %v4518 = vextract.low.u32 %v4517
        %v4519 = vextract.high.u32 %v4517
        %v4520 = vmul.u32.u64.compose %v4516, %v4511
        %v4521 = vextract.low.u32 %v4520
        %v4522 = vextract.high.u32 %v4520
        %v4523 = vmul.u32 %v4516, %v4507
        %v4524 = vadd.s32 %v4519, %v4521
        %vm4525 = vc.u32 %v4519, %v4521
        %v4526 = vadd.s32 %v4522, 1
        %v4527 = vsel %vm4525, %v4526, %v4522
        %v4528 = vadd.s32 %v4523, %v4527
        %v4529 = vadd.s32 %v4528, 536870912
        %v4530 = vshrl.u32 %v4529, 30
        %v4531 = vshll.u32 %v4530, 30
        %v4532 = vsub.s32 %v4528, %v4531
        %vm4533 = vcmp.lt.s32.totalorder %v4532, 0
        %v4534 = vsub.s32 0, %v4532
        %v4535 = vsel %vm4533, %v4534, %v4532
        %v4536 = vclz %v4535
        %v4537 = vsub.s32 %v4536, 2
        %vm4538 = vcmp.gt.s32.totalorder 0, %v4537
        %v4539 = vsel %vm4538, 0, %v4537
        %v4540 = vsub.s32 32, %v4539
        %v4541 = vshll.u32 %v4532, %v4539
        %v4542 = vshrl.u32 %v4524, %v4540
        %v4543 = vor.u32 %v4541, %v4542
        %v4544 = vsub.s32 4294967266, %v4539
        %v4545 = vadd.s32 %v4544, 127
        %v4546 = vshll.u32 %v4545, 23
        %v4547 = vor.u32 4788187, %v4546
        %v4548 = vand.u32 2147483647, %v4547
        %v4550 = vcvt.s32.f32 %v4543
        %v4551 = vmul.f32 %v4550, %v4548
        %v4552 = vxor.u32 %v4551, 2147483648
        %v4553 = vsel %vm4470, %v4552, %v4551
        %v4554 = vsub.s32 4, %v4530
        %v4555 = vsel %vm4470, %v4554, %v4530
        %v4556 = vsel %vm4469, %v490, %v4553
        %v4557 = vsel %vm4469, 0, %v4555
        %v4558 = vcosq.f32.pop %v4556
        %v4559 = vsinq.f32.pop %v4556
        %vm4560 = vweird.f32 %v490
        %v4561 = vadd.s32 %v4557, 3
        %v4562 = vand.u32 %v4561, 3
        %vm4563 = vcmp.lt.s32.totalorder %v4562, 2
        %vm4564 = vcmp.eq.s32.totalorder %v4562, 0
        %v4565 = vxor.u32 %v4559, 2147483648
        %v4566 = vsel %vm4564, %v4558, %v4565
        %vm4567 = vcmp.eq.s32.totalorder %v4562, 2
        %v4568 = vxor.u32 %v4558, 2147483648
        %v4569 = vsel %vm4567, %v4568, %v4559
        %v4570 = vsel %vm4563, %v4566, %v4569
        %v4571 = vsel %vm4560, nan, %v4570
        %v4572 = vand.u32 2147483647, %v491
        %vm4573 = vcmp.le.f32.partialorder %v4572, 0.7853982
        %vm4574 = vcmp.lt.s32.totalorder %v491, 0
        %v4575 = vand.u32 %v491, 2139095040
        %v4576 = vshrl.u32 %v4575, 23
        %v4577 = vsub.s32 %v4576, 127
        %v4578 = vand.u32 2147483647, %v491
        %v4579 = vand.u32 %v4578, 8388607
        %v4580 = vor.u32 %v4579, 8388608
        %v4581 = vsub.s32 0, %v4580
        %v4582 = vadd.s32 %v4577, 1
        %vm4583 = vcmp.gt.s32.totalorder %v4582, 0
        %v4584 = vsel %vm4583, %v4582, 0
        %v4585 = vshrl.u32 %v4584, 5
        %v4586 = vand.u32 %v4584, 31
        %v4587 = vsub.s32 32, %v4586
        %v4588 = vshrl.u32 683565275, %v4587
        %v4589 = vshll.u32 683565275, %v4586
        %v4590 = vshrl.u32 2475754826, %v4587
        %v4591 = vor.u32 %v4589, %v4590
        %v4592 = vshll.u32 2475754826, %v4586
        %v4593 = vshrl.u32 2131351028, %v4587
        %v4594 = vor.u32 %v4592, %v4593
        %v4595 = vshll.u32 2131351028, %v4586
        %v4596 = vshrl.u32 2102212464, %v4587
        %v4597 = vor.u32 %v4595, %v4596
        %v4598 = vshll.u32 2102212464, %v4586
        %v4599 = vshrl.u32 920167782, %v4587
        %v4600 = vor.u32 %v4598, %v4599
        %v4601 = vshll.u32 920167782, %v4586
        %v4602 = vshrl.u32 1326507024, %v4587
        %v4603 = vor.u32 %v4601, %v4602
        %vm4604 = vcmp.lt.s32.totalorder %v4585, 1
        %vm4605 = vcmp.lt.s32.totalorder %v4585, 2
        %vm4606 = vcmp.lt.s32.totalorder %v4585, 3
        %vm4607 = vcmp.lt.s32.totalorder %v4585, 4
        %v4608 = vsel %vm4604, %v4588, %v4591
        %v4609 = vsel %vm4607, %v4597, 2102212464
        %v4610 = vsel %vm4606, %v4594, %v4609
        %v4611 = vsel %vm4605, %v4608, %v4610
        %v4612 = vsel %vm4604, %v4591, %v4594
        %v4613 = vsel %vm4607, %v4600, 920167782
        %v4614 = vsel %vm4606, %v4597, %v4613
        %v4615 = vsel %vm4605, %v4612, %v4614
        %v4616 = vsel %vm4604, %v4594, %v4597
        %v4617 = vsel %vm4607, %v4603, 1326507024
        %v4618 = vsel %vm4606, %v4600, %v4617
        %v4619 = vsel %vm4605, %v4616, %v4618
        %v4620 = vshll.u32 %v4580, 8
        %v4621 = vmul.u32.u64.compose %v4620, %v4619
        %v4622 = vextract.low.u32 %v4621
        %v4623 = vextract.high.u32 %v4621
        %v4624 = vmul.u32.u64.compose %v4620, %v4615
        %v4625 = vextract.low.u32 %v4624
        %v4626 = vextract.high.u32 %v4624
        %v4627 = vmul.u32 %v4620, %v4611
        %v4628 = vadd.s32 %v4623, %v4625
        %vm4629 = vc.u32 %v4623, %v4625
        %v4630 = vadd.s32 %v4626, 1
        %v4631 = vsel %vm4629, %v4630, %v4626
        %v4632 = vadd.s32 %v4627, %v4631
        %v4633 = vadd.s32 %v4632, 536870912
        %v4634 = vshrl.u32 %v4633, 30
        %v4635 = vshll.u32 %v4634, 30
        %v4636 = vsub.s32 %v4632, %v4635
        %vm4637 = vcmp.lt.s32.totalorder %v4636, 0
        %v4638 = vsub.s32 0, %v4636
        %v4639 = vsel %vm4637, %v4638, %v4636
        %v4640 = vclz %v4639
        %v4641 = vsub.s32 %v4640, 2
        %vm4642 = vcmp.gt.s32.totalorder 0, %v4641
        %v4643 = vsel %vm4642, 0, %v4641
        %v4644 = vsub.s32 32, %v4643
        %v4645 = vshll.u32 %v4636, %v4643
        %v4646 = vshrl.u32 %v4628, %v4644
        %v4647 = vor.u32 %v4645, %v4646
        %v4648 = vsub.s32 4294967266, %v4643
        %v4649 = vadd.s32 %v4648, 127
        %v4650 = vshll.u32 %v4649, 23
        %v4651 = vor.u32 4788187, %v4650
        %v4652 = vand.u32 2147483647, %v4651
        %v4654 = vcvt.s32.f32 %v4647
        %v4655 = vmul.f32 %v4654, %v4652
        %v4656 = vxor.u32 %v4655, 2147483648
        %v4657 = vsel %vm4574, %v4656, %v4655
        %v4658 = vsub.s32 4, %v4634
        %v4659 = vsel %vm4574, %v4658, %v4634
        %v4660 = vsel %vm4573, %v491, %v4657
        %v4661 = vsel %vm4573, 0, %v4659
        %v4662 = vcosq.f32.pop %v4660
        %v4663 = vsinq.f32.pop %v4660
        %vm4664 = vweird.f32 %v491
        %v4665 = vadd.s32 %v4661, 3
        %v4666 = vand.u32 %v4665, 3
        %vm4667 = vcmp.lt.s32.totalorder %v4666, 2
        %vm4668 = vcmp.eq.s32.totalorder %v4666, 0
        %v4669 = vxor.u32 %v4663, 2147483648
        %v4670 = vsel %vm4668, %v4662, %v4669
        %vm4671 = vcmp.eq.s32.totalorder %v4666, 2
        %v4672 = vxor.u32 %v4662, 2147483648
        %v4673 = vsel %vm4671, %v4672, %v4663
        %v4674 = vsel %vm4667, %v4670, %v4673
        %v4675 = vsel %vm4664, nan, %v4674
        %v4676 = vand.u32 2147483647, %v492
        %vm4677 = vcmp.le.f32.partialorder %v4676, 0.7853982
        %vm4678 = vcmp.lt.s32.totalorder %v492, 0
        %v4679 = vand.u32 %v492, 2139095040
        %v4680 = vshrl.u32 %v4679, 23
        %v4681 = vsub.s32 %v4680, 127
        %v4682 = vand.u32 2147483647, %v492
        %v4683 = vand.u32 %v4682, 8388607
        %v4684 = vor.u32 %v4683, 8388608
        %v4685 = vsub.s32 0, %v4684
        %v4686 = vadd.s32 %v4681, 1
        %vm4687 = vcmp.gt.s32.totalorder %v4686, 0
        %v4688 = vsel %vm4687, %v4686, 0
        %v4689 = vshrl.u32 %v4688, 5
        %v4690 = vand.u32 %v4688, 31
        %v4691 = vsub.s32 32, %v4690
        %v4692 = vshrl.u32 683565275, %v4691
        %v4693 = vshll.u32 683565275, %v4690
        %v4694 = vshrl.u32 2475754826, %v4691
        %v4695 = vor.u32 %v4693, %v4694
        %v4696 = vshll.u32 2475754826, %v4690
        %v4697 = vshrl.u32 2131351028, %v4691
        %v4698 = vor.u32 %v4696, %v4697
        %v4699 = vshll.u32 2131351028, %v4690
        %v4700 = vshrl.u32 2102212464, %v4691
        %v4701 = vor.u32 %v4699, %v4700
        %v4702 = vshll.u32 2102212464, %v4690
        %v4703 = vshrl.u32 920167782, %v4691
        %v4704 = vor.u32 %v4702, %v4703
        %v4705 = vshll.u32 920167782, %v4690
        %v4706 = vshrl.u32 1326507024, %v4691
        %v4707 = vor.u32 %v4705, %v4706
        %vm4708 = vcmp.lt.s32.totalorder %v4689, 1
        %vm4709 = vcmp.lt.s32.totalorder %v4689, 2
        %vm4710 = vcmp.lt.s32.totalorder %v4689, 3
        %vm4711 = vcmp.lt.s32.totalorder %v4689, 4
        %v4712 = vsel %vm4708, %v4692, %v4695
        %v4713 = vsel %vm4711, %v4701, 2102212464
        %v4714 = vsel %vm4710, %v4698, %v4713
        %v4715 = vsel %vm4709, %v4712, %v4714
        %v4716 = vsel %vm4708, %v4695, %v4698
        %v4717 = vsel %vm4711, %v4704, 920167782
        %v4718 = vsel %vm4710, %v4701, %v4717
        %v4719 = vsel %vm4709, %v4716, %v4718
        %v4720 = vsel %vm4708, %v4698, %v4701
        %v4721 = vsel %vm4711, %v4707, 1326507024
        %v4722 = vsel %vm4710, %v4704, %v4721
        %v4723 = vsel %vm4709, %v4720, %v4722
        %v4724 = vshll.u32 %v4684, 8
        %v4725 = vmul.u32.u64.compose %v4724, %v4723
        %v4726 = vextract.low.u32 %v4725
        %v4727 = vextract.high.u32 %v4725
        %v4728 = vmul.u32.u64.compose %v4724, %v4719
        %v4729 = vextract.low.u32 %v4728
        %v4730 = vextract.high.u32 %v4728
        %v4731 = vmul.u32 %v4724, %v4715
        %v4732 = vadd.s32 %v4727, %v4729
        %vm4733 = vc.u32 %v4727, %v4729
        %v4734 = vadd.s32 %v4730, 1
        %v4735 = vsel %vm4733, %v4734, %v4730
        %v4736 = vadd.s32 %v4731, %v4735
        %v4737 = vadd.s32 %v4736, 536870912
        %v4738 = vshrl.u32 %v4737, 30
        %v4739 = vshll.u32 %v4738, 30
        %v4740 = vsub.s32 %v4736, %v4739
        %vm4741 = vcmp.lt.s32.totalorder %v4740, 0
        %v4742 = vsub.s32 0, %v4740
        %v4743 = vsel %vm4741, %v4742, %v4740
        %v4744 = vclz %v4743
        %v4745 = vsub.s32 %v4744, 2
        %vm4746 = vcmp.gt.s32.totalorder 0, %v4745
        %v4747 = vsel %vm4746, 0, %v4745
        %v4748 = vsub.s32 32, %v4747
        %v4749 = vshll.u32 %v4740, %v4747
        %v4750 = vshrl.u32 %v4732, %v4748
        %v4751 = vor.u32 %v4749, %v4750
        %v4752 = vsub.s32 4294967266, %v4747
        %v4753 = vadd.s32 %v4752, 127
        %v4754 = vshll.u32 %v4753, 23
        %v4755 = vor.u32 4788187, %v4754
        %v4756 = vand.u32 2147483647, %v4755
        %v4758 = vcvt.s32.f32 %v4751
        %v4759 = vmul.f32 %v4758, %v4756
        %v4760 = vxor.u32 %v4759, 2147483648
        %v4761 = vsel %vm4678, %v4760, %v4759
        %v4762 = vsub.s32 4, %v4738
        %v4763 = vsel %vm4678, %v4762, %v4738
        %v4764 = vsel %vm4677, %v492, %v4761
        %v4765 = vsel %vm4677, 0, %v4763
        %v4766 = vcosq.f32.pop %v4764
        %v4767 = vsinq.f32.pop %v4764
        %vm4768 = vweird.f32 %v492
        %v4769 = vadd.s32 %v4765, 3
        %v4770 = vand.u32 %v4769, 3
        %vm4771 = vcmp.lt.s32.totalorder %v4770, 2
        %vm4772 = vcmp.eq.s32.totalorder %v4770, 0
        %v4773 = vxor.u32 %v4767, 2147483648
        %v4774 = vsel %vm4772, %v4766, %v4773
        %vm4775 = vcmp.eq.s32.totalorder %v4770, 2
        %v4776 = vxor.u32 %v4766, 2147483648
        %v4777 = vsel %vm4775, %v4776, %v4767
        %v4778 = vsel %vm4771, %v4774, %v4777
        %v4779 = vsel %vm4768, nan, %v4778
        %v4780 = vand.u32 2147483647, %v493
        %vm4781 = vcmp.le.f32.partialorder %v4780, 0.7853982
        %vm4782 = vcmp.lt.s32.totalorder %v493, 0
        %v4783 = vand.u32 %v493, 2139095040
        %v4784 = vshrl.u32 %v4783, 23
        %v4785 = vsub.s32 %v4784, 127
        %v4786 = vand.u32 2147483647, %v493
        %v4787 = vand.u32 %v4786, 8388607
        %v4788 = vor.u32 %v4787, 8388608
        %v4789 = vsub.s32 0, %v4788
        %v4790 = vadd.s32 %v4785, 1
        %vm4791 = vcmp.gt.s32.totalorder %v4790, 0
        %v4792 = vsel %vm4791, %v4790, 0
        %v4793 = vshrl.u32 %v4792, 5
        %v4794 = vand.u32 %v4792, 31
        %v4795 = vsub.s32 32, %v4794
        %v4796 = vshrl.u32 683565275, %v4795
        %v4797 = vshll.u32 683565275, %v4794
        %v4798 = vshrl.u32 2475754826, %v4795
        %v4799 = vor.u32 %v4797, %v4798
        %v4800 = vshll.u32 2475754826, %v4794
        %v4801 = vshrl.u32 2131351028, %v4795
        %v4802 = vor.u32 %v4800, %v4801
        %v4803 = vshll.u32 2131351028, %v4794
        %v4804 = vshrl.u32 2102212464, %v4795
        %v4805 = vor.u32 %v4803, %v4804
        %v4806 = vshll.u32 2102212464, %v4794
        %v4807 = vshrl.u32 920167782, %v4795
        %v4808 = vor.u32 %v4806, %v4807
        %v4809 = vshll.u32 920167782, %v4794
        %v4810 = vshrl.u32 1326507024, %v4795
        %v4811 = vor.u32 %v4809, %v4810
        %vm4812 = vcmp.lt.s32.totalorder %v4793, 1
        %vm4813 = vcmp.lt.s32.totalorder %v4793, 2
        %vm4814 = vcmp.lt.s32.totalorder %v4793, 3
        %vm4815 = vcmp.lt.s32.totalorder %v4793, 4
        %v4816 = vsel %vm4812, %v4796, %v4799
        %v4817 = vsel %vm4815, %v4805, 2102212464
        %v4818 = vsel %vm4814, %v4802, %v4817
        %v4819 = vsel %vm4813, %v4816, %v4818
        %v4820 = vsel %vm4812, %v4799, %v4802
        %v4821 = vsel %vm4815, %v4808, 920167782
        %v4822 = vsel %vm4814, %v4805, %v4821
        %v4823 = vsel %vm4813, %v4820, %v4822
        %v4824 = vsel %vm4812, %v4802, %v4805
        %v4825 = vsel %vm4815, %v4811, 1326507024
        %v4826 = vsel %vm4814, %v4808, %v4825
        %v4827 = vsel %vm4813, %v4824, %v4826
        %v4828 = vshll.u32 %v4788, 8
        %v4829 = vmul.u32.u64.compose %v4828, %v4827
        %v4830 = vextract.low.u32 %v4829
        %v4831 = vextract.high.u32 %v4829
        %v4832 = vmul.u32.u64.compose %v4828, %v4823
        %v4833 = vextract.low.u32 %v4832
        %v4834 = vextract.high.u32 %v4832
        %v4835 = vmul.u32 %v4828, %v4819
        %v4836 = vadd.s32 %v4831, %v4833
        %vm4837 = vc.u32 %v4831, %v4833
        %v4838 = vadd.s32 %v4834, 1
        %v4839 = vsel %vm4837, %v4838, %v4834
        %v4840 = vadd.s32 %v4835, %v4839
        %v4841 = vadd.s32 %v4840, 536870912
        %v4842 = vshrl.u32 %v4841, 30
        %v4843 = vshll.u32 %v4842, 30
        %v4844 = vsub.s32 %v4840, %v4843
        %vm4845 = vcmp.lt.s32.totalorder %v4844, 0
        %v4846 = vsub.s32 0, %v4844
        %v4847 = vsel %vm4845, %v4846, %v4844
        %v4848 = vclz %v4847
        %v4849 = vsub.s32 %v4848, 2
        %vm4850 = vcmp.gt.s32.totalorder 0, %v4849
        %v4851 = vsel %vm4850, 0, %v4849
        %v4852 = vsub.s32 32, %v4851
        %v4853 = vshll.u32 %v4844, %v4851
        %v4854 = vshrl.u32 %v4836, %v4852
        %v4855 = vor.u32 %v4853, %v4854
        %v4856 = vsub.s32 4294967266, %v4851
        %v4857 = vadd.s32 %v4856, 127
        %v4858 = vshll.u32 %v4857, 23
        %v4859 = vor.u32 4788187, %v4858
        %v4860 = vand.u32 2147483647, %v4859
        %v4862 = vcvt.s32.f32 %v4855
        %v4863 = vmul.f32 %v4862, %v4860
        %v4864 = vxor.u32 %v4863, 2147483648
        %v4865 = vsel %vm4782, %v4864, %v4863
        %v4866 = vsub.s32 4, %v4842
        %v4867 = vsel %vm4782, %v4866, %v4842
        %v4868 = vsel %vm4781, %v493, %v4865
        %v4869 = vsel %vm4781, 0, %v4867
        %v4870 = vcosq.f32.pop %v4868
        %v4871 = vsinq.f32.pop %v4868
        %vm4872 = vweird.f32 %v493
        %v4873 = vadd.s32 %v4869, 3
        %v4874 = vand.u32 %v4873, 3
        %vm4875 = vcmp.lt.s32.totalorder %v4874, 2
        %vm4876 = vcmp.eq.s32.totalorder %v4874, 0
        %v4877 = vxor.u32 %v4871, 2147483648
        %v4878 = vsel %vm4876, %v4870, %v4877
        %vm4879 = vcmp.eq.s32.totalorder %v4874, 2
        %v4880 = vxor.u32 %v4870, 2147483648
        %v4881 = vsel %vm4879, %v4880, %v4871
        %v4882 = vsel %vm4875, %v4878, %v4881
        %v4883 = vsel %vm4872, nan, %v4882
        %v4884 = vand.u32 2147483647, %v494
        %vm4885 = vcmp.le.f32.partialorder %v4884, 0.7853982
        %vm4886 = vcmp.lt.s32.totalorder %v494, 0
        %v4887 = vand.u32 %v494, 2139095040
        %v4888 = vshrl.u32 %v4887, 23
        %v4889 = vsub.s32 %v4888, 127
        %v4890 = vand.u32 2147483647, %v494
        %v4891 = vand.u32 %v4890, 8388607
        %v4892 = vor.u32 %v4891, 8388608
        %v4893 = vsub.s32 0, %v4892
        %v4894 = vadd.s32 %v4889, 1
        %vm4895 = vcmp.gt.s32.totalorder %v4894, 0
        %v4896 = vsel %vm4895, %v4894, 0
        %v4897 = vshrl.u32 %v4896, 5
        %v4898 = vand.u32 %v4896, 31
        %v4899 = vsub.s32 32, %v4898
        %v4900 = vshrl.u32 683565275, %v4899
        %v4901 = vshll.u32 683565275, %v4898
        %v4902 = vshrl.u32 2475754826, %v4899
        %v4903 = vor.u32 %v4901, %v4902
        %v4904 = vshll.u32 2475754826, %v4898
        %v4905 = vshrl.u32 2131351028, %v4899
        %v4906 = vor.u32 %v4904, %v4905
        %v4907 = vshll.u32 2131351028, %v4898
        %v4908 = vshrl.u32 2102212464, %v4899
        %v4909 = vor.u32 %v4907, %v4908
        %v4910 = vshll.u32 2102212464, %v4898
        %v4911 = vshrl.u32 920167782, %v4899
        %v4912 = vor.u32 %v4910, %v4911
        %v4913 = vshll.u32 920167782, %v4898
        %v4914 = vshrl.u32 1326507024, %v4899
        %v4915 = vor.u32 %v4913, %v4914
        %vm4916 = vcmp.lt.s32.totalorder %v4897, 1
        %vm4917 = vcmp.lt.s32.totalorder %v4897, 2
        %vm4918 = vcmp.lt.s32.totalorder %v4897, 3
        %vm4919 = vcmp.lt.s32.totalorder %v4897, 4
        %v4920 = vsel %vm4916, %v4900, %v4903
        %v4921 = vsel %vm4919, %v4909, 2102212464
        %v4922 = vsel %vm4918, %v4906, %v4921
        %v4923 = vsel %vm4917, %v4920, %v4922
        %v4924 = vsel %vm4916, %v4903, %v4906
        %v4925 = vsel %vm4919, %v4912, 920167782
        %v4926 = vsel %vm4918, %v4909, %v4925
        %v4927 = vsel %vm4917, %v4924, %v4926
        %v4928 = vsel %vm4916, %v4906, %v4909
        %v4929 = vsel %vm4919, %v4915, 1326507024
        %v4930 = vsel %vm4918, %v4912, %v4929
        %v4931 = vsel %vm4917, %v4928, %v4930
        %v4932 = vshll.u32 %v4892, 8
        %v4933 = vmul.u32.u64.compose %v4932, %v4931
        %v4934 = vextract.low.u32 %v4933
        %v4935 = vextract.high.u32 %v4933
        %v4936 = vmul.u32.u64.compose %v4932, %v4927
        %v4937 = vextract.low.u32 %v4936
        %v4938 = vextract.high.u32 %v4936
        %v4939 = vmul.u32 %v4932, %v4923
        %v4940 = vadd.s32 %v4935, %v4937
        %vm4941 = vc.u32 %v4935, %v4937
        %v4942 = vadd.s32 %v4938, 1
        %v4943 = vsel %vm4941, %v4942, %v4938
        %v4944 = vadd.s32 %v4939, %v4943
        %v4945 = vadd.s32 %v4944, 536870912
        %v4946 = vshrl.u32 %v4945, 30
        %v4947 = vshll.u32 %v4946, 30
        %v4948 = vsub.s32 %v4944, %v4947
        %vm4949 = vcmp.lt.s32.totalorder %v4948, 0
        %v4950 = vsub.s32 0, %v4948
        %v4951 = vsel %vm4949, %v4950, %v4948
        %v4952 = vclz %v4951
        %v4953 = vsub.s32 %v4952, 2
        %vm4954 = vcmp.gt.s32.totalorder 0, %v4953
        %v4955 = vsel %vm4954, 0, %v4953
        %v4956 = vsub.s32 32, %v4955
        %v4957 = vshll.u32 %v4948, %v4955
        %v4958 = vshrl.u32 %v4940, %v4956
        %v4959 = vor.u32 %v4957, %v4958
        %v4960 = vsub.s32 4294967266, %v4955
        %v4961 = vadd.s32 %v4960, 127
        %v4962 = vshll.u32 %v4961, 23
        %v4963 = vor.u32 4788187, %v4962
        %v4964 = vand.u32 2147483647, %v4963
        %v4966 = vcvt.s32.f32 %v4959
        %v4967 = vmul.f32 %v4966, %v4964
        %v4968 = vxor.u32 %v4967, 2147483648
        %v4969 = vsel %vm4886, %v4968, %v4967
        %v4970 = vsub.s32 4, %v4946
        %v4971 = vsel %vm4886, %v4970, %v4946
        %v4972 = vsel %vm4885, %v494, %v4969
        %v4973 = vsel %vm4885, 0, %v4971
        %v4974 = vcosq.f32.pop %v4972
        %v4975 = vsinq.f32.pop %v4972
        %vm4976 = vweird.f32 %v494
        %v4977 = vadd.s32 %v4973, 3
        %v4978 = vand.u32 %v4977, 3
        %vm4979 = vcmp.lt.s32.totalorder %v4978, 2
        %vm4980 = vcmp.eq.s32.totalorder %v4978, 0
        %v4981 = vxor.u32 %v4975, 2147483648
        %v4982 = vsel %vm4980, %v4974, %v4981
        %vm4983 = vcmp.eq.s32.totalorder %v4978, 2
        %v4984 = vxor.u32 %v4974, 2147483648
        %v4985 = vsel %vm4983, %v4984, %v4975
        %v4986 = vsel %vm4979, %v4982, %v4985
        %v4987 = vsel %vm4976, nan, %v4986
        %v4988 = vand.u32 2147483647, %v495
        %vm4989 = vcmp.le.f32.partialorder %v4988, 0.7853982
        %vm4990 = vcmp.lt.s32.totalorder %v495, 0
        %v4991 = vand.u32 %v495, 2139095040
        %v4992 = vshrl.u32 %v4991, 23
        %v4993 = vsub.s32 %v4992, 127
        %v4994 = vand.u32 2147483647, %v495
        %v4995 = vand.u32 %v4994, 8388607
        %v4996 = vor.u32 %v4995, 8388608
        %v4997 = vsub.s32 0, %v4996
        %v4998 = vadd.s32 %v4993, 1
        %vm4999 = vcmp.gt.s32.totalorder %v4998, 0
        %v5000 = vsel %vm4999, %v4998, 0
        %v5001 = vshrl.u32 %v5000, 5
        %v5002 = vand.u32 %v5000, 31
        %v5003 = vsub.s32 32, %v5002
        %v5004 = vshrl.u32 683565275, %v5003
        %v5005 = vshll.u32 683565275, %v5002
        %v5006 = vshrl.u32 2475754826, %v5003
        %v5007 = vor.u32 %v5005, %v5006
        %v5008 = vshll.u32 2475754826, %v5002
        %v5009 = vshrl.u32 2131351028, %v5003
        %v5010 = vor.u32 %v5008, %v5009
        %v5011 = vshll.u32 2131351028, %v5002
        %v5012 = vshrl.u32 2102212464, %v5003
        %v5013 = vor.u32 %v5011, %v5012
        %v5014 = vshll.u32 2102212464, %v5002
        %v5015 = vshrl.u32 920167782, %v5003
        %v5016 = vor.u32 %v5014, %v5015
        %v5017 = vshll.u32 920167782, %v5002
        %v5018 = vshrl.u32 1326507024, %v5003
        %v5019 = vor.u32 %v5017, %v5018
        %vm5020 = vcmp.lt.s32.totalorder %v5001, 1
        %vm5021 = vcmp.lt.s32.totalorder %v5001, 2
        %vm5022 = vcmp.lt.s32.totalorder %v5001, 3
        %vm5023 = vcmp.lt.s32.totalorder %v5001, 4
        %v5024 = vsel %vm5020, %v5004, %v5007
        %v5025 = vsel %vm5023, %v5013, 2102212464
        %v5026 = vsel %vm5022, %v5010, %v5025
        %v5027 = vsel %vm5021, %v5024, %v5026
        %v5028 = vsel %vm5020, %v5007, %v5010
        %v5029 = vsel %vm5023, %v5016, 920167782
        %v5030 = vsel %vm5022, %v5013, %v5029
        %v5031 = vsel %vm5021, %v5028, %v5030
        %v5032 = vsel %vm5020, %v5010, %v5013
        %v5033 = vsel %vm5023, %v5019, 1326507024
        %v5034 = vsel %vm5022, %v5016, %v5033
        %v5035 = vsel %vm5021, %v5032, %v5034
        %v5036 = vshll.u32 %v4996, 8
        %v5037 = vmul.u32.u64.compose %v5036, %v5035
        %v5038 = vextract.low.u32 %v5037
        %v5039 = vextract.high.u32 %v5037
        %v5040 = vmul.u32.u64.compose %v5036, %v5031
        %v5041 = vextract.low.u32 %v5040
        %v5042 = vextract.high.u32 %v5040
        %v5043 = vmul.u32 %v5036, %v5027
        %v5044 = vadd.s32 %v5039, %v5041
        %vm5045 = vc.u32 %v5039, %v5041
        %v5046 = vadd.s32 %v5042, 1
        %v5047 = vsel %vm5045, %v5046, %v5042
        %v5048 = vadd.s32 %v5043, %v5047
        %v5049 = vadd.s32 %v5048, 536870912
        %v5050 = vshrl.u32 %v5049, 30
        %v5051 = vshll.u32 %v5050, 30
        %v5052 = vsub.s32 %v5048, %v5051
        %vm5053 = vcmp.lt.s32.totalorder %v5052, 0
        %v5054 = vsub.s32 0, %v5052
        %v5055 = vsel %vm5053, %v5054, %v5052
        %v5056 = vclz %v5055
        %v5057 = vsub.s32 %v5056, 2
        %vm5058 = vcmp.gt.s32.totalorder 0, %v5057
        %v5059 = vsel %vm5058, 0, %v5057
        %v5060 = vsub.s32 32, %v5059
        %v5061 = vshll.u32 %v5052, %v5059
        %v5062 = vshrl.u32 %v5044, %v5060
        %v5063 = vor.u32 %v5061, %v5062
        %v5064 = vsub.s32 4294967266, %v5059
        %v5065 = vadd.s32 %v5064, 127
        %v5066 = vshll.u32 %v5065, 23
        %v5067 = vor.u32 4788187, %v5066
        %v5068 = vand.u32 2147483647, %v5067
        %v5070 = vcvt.s32.f32 %v5063
        %v5071 = vmul.f32 %v5070, %v5068
        %v5072 = vxor.u32 %v5071, 2147483648
        %v5073 = vsel %vm4990, %v5072, %v5071
        %v5074 = vsub.s32 4, %v5050
        %v5075 = vsel %vm4990, %v5074, %v5050
        %v5076 = vsel %vm4989, %v495, %v5073
        %v5077 = vsel %vm4989, 0, %v5075
        %v5078 = vcosq.f32.pop %v5076
        %v5079 = vsinq.f32.pop %v5076
        %vm5080 = vweird.f32 %v495
        %v5081 = vadd.s32 %v5077, 3
        %v5082 = vand.u32 %v5081, 3
        %vm5083 = vcmp.lt.s32.totalorder %v5082, 2
        %vm5084 = vcmp.eq.s32.totalorder %v5082, 0
        %v5085 = vxor.u32 %v5079, 2147483648
        %v5086 = vsel %vm5084, %v5078, %v5085
        %vm5087 = vcmp.eq.s32.totalorder %v5082, 2
        %v5088 = vxor.u32 %v5078, 2147483648
        %v5089 = vsel %vm5087, %v5088, %v5079
        %v5090 = vsel %vm5083, %v5086, %v5089
        %v5091 = vsel %vm5080, nan, %v5090
        %v5092 = vand.u32 2147483647, %v496
        %vm5093 = vcmp.le.f32.partialorder %v5092, 0.7853982
        %vm5094 = vcmp.lt.s32.totalorder %v496, 0
        %v5095 = vand.u32 %v496, 2139095040
        %v5096 = vshrl.u32 %v5095, 23
        %v5097 = vsub.s32 %v5096, 127
        %v5098 = vand.u32 2147483647, %v496
        %v5099 = vand.u32 %v5098, 8388607
        %v5100 = vor.u32 %v5099, 8388608
        %v5101 = vsub.s32 0, %v5100
        %v5102 = vadd.s32 %v5097, 1
        %vm5103 = vcmp.gt.s32.totalorder %v5102, 0
        %v5104 = vsel %vm5103, %v5102, 0
        %v5105 = vshrl.u32 %v5104, 5
        %v5106 = vand.u32 %v5104, 31
        %v5107 = vsub.s32 32, %v5106
        %v5108 = vshrl.u32 683565275, %v5107
        %v5109 = vshll.u32 683565275, %v5106
        %v5110 = vshrl.u32 2475754826, %v5107
        %v5111 = vor.u32 %v5109, %v5110
        %v5112 = vshll.u32 2475754826, %v5106
        %v5113 = vshrl.u32 2131351028, %v5107
        %v5114 = vor.u32 %v5112, %v5113
        %v5115 = vshll.u32 2131351028, %v5106
        %v5116 = vshrl.u32 2102212464, %v5107
        %v5117 = vor.u32 %v5115, %v5116
        %v5118 = vshll.u32 2102212464, %v5106
        %v5119 = vshrl.u32 920167782, %v5107
        %v5120 = vor.u32 %v5118, %v5119
        %v5121 = vshll.u32 920167782, %v5106
        %v5122 = vshrl.u32 1326507024, %v5107
        %v5123 = vor.u32 %v5121, %v5122
        %vm5124 = vcmp.lt.s32.totalorder %v5105, 1
        %vm5125 = vcmp.lt.s32.totalorder %v5105, 2
        %vm5126 = vcmp.lt.s32.totalorder %v5105, 3
        %vm5127 = vcmp.lt.s32.totalorder %v5105, 4
        %v5128 = vsel %vm5124, %v5108, %v5111
        %v5129 = vsel %vm5127, %v5117, 2102212464
        %v5130 = vsel %vm5126, %v5114, %v5129
        %v5131 = vsel %vm5125, %v5128, %v5130
        %v5132 = vsel %vm5124, %v5111, %v5114
        %v5133 = vsel %vm5127, %v5120, 920167782
        %v5134 = vsel %vm5126, %v5117, %v5133
        %v5135 = vsel %vm5125, %v5132, %v5134
        %v5136 = vsel %vm5124, %v5114, %v5117
        %v5137 = vsel %vm5127, %v5123, 1326507024
        %v5138 = vsel %vm5126, %v5120, %v5137
        %v5139 = vsel %vm5125, %v5136, %v5138
        %v5140 = vshll.u32 %v5100, 8
        %v5141 = vmul.u32.u64.compose %v5140, %v5139
        %v5142 = vextract.low.u32 %v5141
        %v5143 = vextract.high.u32 %v5141
        %v5144 = vmul.u32.u64.compose %v5140, %v5135
        %v5145 = vextract.low.u32 %v5144
        %v5146 = vextract.high.u32 %v5144
        %v5147 = vmul.u32 %v5140, %v5131
        %v5148 = vadd.s32 %v5143, %v5145
        %vm5149 = vc.u32 %v5143, %v5145
        %v5150 = vadd.s32 %v5146, 1
        %v5151 = vsel %vm5149, %v5150, %v5146
        %v5152 = vadd.s32 %v5147, %v5151
        %v5153 = vadd.s32 %v5152, 536870912
        %v5154 = vshrl.u32 %v5153, 30
        %v5155 = vshll.u32 %v5154, 30
        %v5156 = vsub.s32 %v5152, %v5155
        %vm5157 = vcmp.lt.s32.totalorder %v5156, 0
        %v5158 = vsub.s32 0, %v5156
        %v5159 = vsel %vm5157, %v5158, %v5156
        %v5160 = vclz %v5159
        %v5161 = vsub.s32 %v5160, 2
        %vm5162 = vcmp.gt.s32.totalorder 0, %v5161
        %v5163 = vsel %vm5162, 0, %v5161
        %v5164 = vsub.s32 32, %v5163
        %v5165 = vshll.u32 %v5156, %v5163
        %v5166 = vshrl.u32 %v5148, %v5164
        %v5167 = vor.u32 %v5165, %v5166
        %v5168 = vsub.s32 4294967266, %v5163
        %v5169 = vadd.s32 %v5168, 127
        %v5170 = vshll.u32 %v5169, 23
        %v5171 = vor.u32 4788187, %v5170
        %v5172 = vand.u32 2147483647, %v5171
        %v5174 = vcvt.s32.f32 %v5167
        %v5175 = vmul.f32 %v5174, %v5172
        %v5176 = vxor.u32 %v5175, 2147483648
        %v5177 = vsel %vm5094, %v5176, %v5175
        %v5178 = vsub.s32 4, %v5154
        %v5179 = vsel %vm5094, %v5178, %v5154
        %v5180 = vsel %vm5093, %v496, %v5177
        %v5181 = vsel %vm5093, 0, %v5179
        %v5182 = vcosq.f32.pop %v5180
        %v5183 = vsinq.f32.pop %v5180
        %vm5184 = vweird.f32 %v496
        %v5185 = vadd.s32 %v5181, 3
        %v5186 = vand.u32 %v5185, 3
        %vm5187 = vcmp.lt.s32.totalorder %v5186, 2
        %vm5188 = vcmp.eq.s32.totalorder %v5186, 0
        %v5189 = vxor.u32 %v5183, 2147483648
        %v5190 = vsel %vm5188, %v5182, %v5189
        %vm5191 = vcmp.eq.s32.totalorder %v5186, 2
        %v5192 = vxor.u32 %v5182, 2147483648
        %v5193 = vsel %vm5191, %v5192, %v5183
        %v5194 = vsel %vm5187, %v5190, %v5193
        %v5195 = vsel %vm5184, nan, %v5194
        %v5196 = vand.u32 2147483647, %v497
        %vm5197 = vcmp.le.f32.partialorder %v5196, 0.7853982
        %vm5198 = vcmp.lt.s32.totalorder %v497, 0
        %v5199 = vand.u32 %v497, 2139095040
        %v5200 = vshrl.u32 %v5199, 23
        %v5201 = vsub.s32 %v5200, 127
        %v5202 = vand.u32 2147483647, %v497
        %v5203 = vand.u32 %v5202, 8388607
        %v5204 = vor.u32 %v5203, 8388608
        %v5205 = vsub.s32 0, %v5204
        %v5206 = vadd.s32 %v5201, 1
        %vm5207 = vcmp.gt.s32.totalorder %v5206, 0
        %v5208 = vsel %vm5207, %v5206, 0
        %v5209 = vshrl.u32 %v5208, 5
        %v5210 = vand.u32 %v5208, 31
        %v5211 = vsub.s32 32, %v5210
        %v5212 = vshrl.u32 683565275, %v5211
        %v5213 = vshll.u32 683565275, %v5210
        %v5214 = vshrl.u32 2475754826, %v5211
        %v5215 = vor.u32 %v5213, %v5214
        %v5216 = vshll.u32 2475754826, %v5210
        %v5217 = vshrl.u32 2131351028, %v5211
        %v5218 = vor.u32 %v5216, %v5217
        %v5219 = vshll.u32 2131351028, %v5210
        %v5220 = vshrl.u32 2102212464, %v5211
        %v5221 = vor.u32 %v5219, %v5220
        %v5222 = vshll.u32 2102212464, %v5210
        %v5223 = vshrl.u32 920167782, %v5211
        %v5224 = vor.u32 %v5222, %v5223
        %v5225 = vshll.u32 920167782, %v5210
        %v5226 = vshrl.u32 1326507024, %v5211
        %v5227 = vor.u32 %v5225, %v5226
        %vm5228 = vcmp.lt.s32.totalorder %v5209, 1
        %vm5229 = vcmp.lt.s32.totalorder %v5209, 2
        %vm5230 = vcmp.lt.s32.totalorder %v5209, 3
        %vm5231 = vcmp.lt.s32.totalorder %v5209, 4
        %v5232 = vsel %vm5228, %v5212, %v5215
        %v5233 = vsel %vm5231, %v5221, 2102212464
        %v5234 = vsel %vm5230, %v5218, %v5233
        %v5235 = vsel %vm5229, %v5232, %v5234
        %v5236 = vsel %vm5228, %v5215, %v5218
        %v5237 = vsel %vm5231, %v5224, 920167782
        %v5238 = vsel %vm5230, %v5221, %v5237
        %v5239 = vsel %vm5229, %v5236, %v5238
        %v5240 = vsel %vm5228, %v5218, %v5221
        %v5241 = vsel %vm5231, %v5227, 1326507024
        %v5242 = vsel %vm5230, %v5224, %v5241
        %v5243 = vsel %vm5229, %v5240, %v5242
        %v5244 = vshll.u32 %v5204, 8
        %v5245 = vmul.u32.u64.compose %v5244, %v5243
        %v5246 = vextract.low.u32 %v5245
        %v5247 = vextract.high.u32 %v5245
        %v5248 = vmul.u32.u64.compose %v5244, %v5239
        %v5249 = vextract.low.u32 %v5248
        %v5250 = vextract.high.u32 %v5248
        %v5251 = vmul.u32 %v5244, %v5235
        %v5252 = vadd.s32 %v5247, %v5249
        %vm5253 = vc.u32 %v5247, %v5249
        %v5254 = vadd.s32 %v5250, 1
        %v5255 = vsel %vm5253, %v5254, %v5250
        %v5256 = vadd.s32 %v5251, %v5255
        %v5257 = vadd.s32 %v5256, 536870912
        %v5258 = vshrl.u32 %v5257, 30
        %v5259 = vshll.u32 %v5258, 30
        %v5260 = vsub.s32 %v5256, %v5259
        %vm5261 = vcmp.lt.s32.totalorder %v5260, 0
        %v5262 = vsub.s32 0, %v5260
        %v5263 = vsel %vm5261, %v5262, %v5260
        %v5264 = vclz %v5263
        %v5265 = vsub.s32 %v5264, 2
        %vm5266 = vcmp.gt.s32.totalorder 0, %v5265
        %v5267 = vsel %vm5266, 0, %v5265
        %v5268 = vsub.s32 32, %v5267
        %v5269 = vshll.u32 %v5260, %v5267
        %v5270 = vshrl.u32 %v5252, %v5268
        %v5271 = vor.u32 %v5269, %v5270
        %v5272 = vsub.s32 4294967266, %v5267
        %v5273 = vadd.s32 %v5272, 127
        %v5274 = vshll.u32 %v5273, 23
        %v5275 = vor.u32 4788187, %v5274
        %v5276 = vand.u32 2147483647, %v5275
        %v5278 = vcvt.s32.f32 %v5271
        %v5279 = vmul.f32 %v5278, %v5276
        %v5280 = vxor.u32 %v5279, 2147483648
        %v5281 = vsel %vm5198, %v5280, %v5279
        %v5282 = vsub.s32 4, %v5258
        %v5283 = vsel %vm5198, %v5282, %v5258
        %v5284 = vsel %vm5197, %v497, %v5281
        %v5285 = vsel %vm5197, 0, %v5283
        %v5286 = vcosq.f32.pop %v5284
        %v5287 = vsinq.f32.pop %v5284
        %vm5288 = vweird.f32 %v497
        %v5289 = vadd.s32 %v5285, 3
        %v5290 = vand.u32 %v5289, 3
        %vm5291 = vcmp.lt.s32.totalorder %v5290, 2
        %vm5292 = vcmp.eq.s32.totalorder %v5290, 0
        %v5293 = vxor.u32 %v5287, 2147483648
        %v5294 = vsel %vm5292, %v5286, %v5293
        %vm5295 = vcmp.eq.s32.totalorder %v5290, 2
        %v5296 = vxor.u32 %v5286, 2147483648
        %v5297 = vsel %vm5295, %v5296, %v5287
        %v5298 = vsel %vm5291, %v5294, %v5297
        %v5299 = vsel %vm5288, nan, %v5298
        %v5300 = vand.u32 2147483647, %v498
        %vm5301 = vcmp.le.f32.partialorder %v5300, 0.7853982
        %vm5302 = vcmp.lt.s32.totalorder %v498, 0
        %v5303 = vand.u32 %v498, 2139095040
        %v5304 = vshrl.u32 %v5303, 23
        %v5305 = vsub.s32 %v5304, 127
        %v5306 = vand.u32 2147483647, %v498
        %v5307 = vand.u32 %v5306, 8388607
        %v5308 = vor.u32 %v5307, 8388608
        %v5309 = vsub.s32 0, %v5308
        %v5310 = vadd.s32 %v5305, 1
        %vm5311 = vcmp.gt.s32.totalorder %v5310, 0
        %v5312 = vsel %vm5311, %v5310, 0
        %v5313 = vshrl.u32 %v5312, 5
        %v5314 = vand.u32 %v5312, 31
        %v5315 = vsub.s32 32, %v5314
        %v5316 = vshrl.u32 683565275, %v5315
        %v5317 = vshll.u32 683565275, %v5314
        %v5318 = vshrl.u32 2475754826, %v5315
        %v5319 = vor.u32 %v5317, %v5318
        %v5320 = vshll.u32 2475754826, %v5314
        %v5321 = vshrl.u32 2131351028, %v5315
        %v5322 = vor.u32 %v5320, %v5321
        %v5323 = vshll.u32 2131351028, %v5314
        %v5324 = vshrl.u32 2102212464, %v5315
        %v5325 = vor.u32 %v5323, %v5324
        %v5326 = vshll.u32 2102212464, %v5314
        %v5327 = vshrl.u32 920167782, %v5315
        %v5328 = vor.u32 %v5326, %v5327
        %v5329 = vshll.u32 920167782, %v5314
        %v5330 = vshrl.u32 1326507024, %v5315
        %v5331 = vor.u32 %v5329, %v5330
        %vm5332 = vcmp.lt.s32.totalorder %v5313, 1
        %vm5333 = vcmp.lt.s32.totalorder %v5313, 2
        %vm5334 = vcmp.lt.s32.totalorder %v5313, 3
        %vm5335 = vcmp.lt.s32.totalorder %v5313, 4
        %v5336 = vsel %vm5332, %v5316, %v5319
        %v5337 = vsel %vm5335, %v5325, 2102212464
        %v5338 = vsel %vm5334, %v5322, %v5337
        %v5339 = vsel %vm5333, %v5336, %v5338
        %v5340 = vsel %vm5332, %v5319, %v5322
        %v5341 = vsel %vm5335, %v5328, 920167782
        %v5342 = vsel %vm5334, %v5325, %v5341
        %v5343 = vsel %vm5333, %v5340, %v5342
        %v5344 = vsel %vm5332, %v5322, %v5325
        %v5345 = vsel %vm5335, %v5331, 1326507024
        %v5346 = vsel %vm5334, %v5328, %v5345
        %v5347 = vsel %vm5333, %v5344, %v5346
        %v5348 = vshll.u32 %v5308, 8
        %v5349 = vmul.u32.u64.compose %v5348, %v5347
        %v5350 = vextract.low.u32 %v5349
        %v5351 = vextract.high.u32 %v5349
        %v5352 = vmul.u32.u64.compose %v5348, %v5343
        %v5353 = vextract.low.u32 %v5352
        %v5354 = vextract.high.u32 %v5352
        %v5355 = vmul.u32 %v5348, %v5339
        %v5356 = vadd.s32 %v5351, %v5353
        %vm5357 = vc.u32 %v5351, %v5353
        %v5358 = vadd.s32 %v5354, 1
        %v5359 = vsel %vm5357, %v5358, %v5354
        %v5360 = vadd.s32 %v5355, %v5359
        %v5361 = vadd.s32 %v5360, 536870912
        %v5362 = vshrl.u32 %v5361, 30
        %v5363 = vshll.u32 %v5362, 30
        %v5364 = vsub.s32 %v5360, %v5363
        %vm5365 = vcmp.lt.s32.totalorder %v5364, 0
        %v5366 = vsub.s32 0, %v5364
        %v5367 = vsel %vm5365, %v5366, %v5364
        %v5368 = vclz %v5367
        %v5369 = vsub.s32 %v5368, 2
        %vm5370 = vcmp.gt.s32.totalorder 0, %v5369
        %v5371 = vsel %vm5370, 0, %v5369
        %v5372 = vsub.s32 32, %v5371
        %v5373 = vshll.u32 %v5364, %v5371
        %v5374 = vshrl.u32 %v5356, %v5372
        %v5375 = vor.u32 %v5373, %v5374
        %v5376 = vsub.s32 4294967266, %v5371
        %v5377 = vadd.s32 %v5376, 127
        %v5378 = vshll.u32 %v5377, 23
        %v5379 = vor.u32 4788187, %v5378
        %v5380 = vand.u32 2147483647, %v5379
        %v5382 = vcvt.s32.f32 %v5375
        %v5383 = vmul.f32 %v5382, %v5380
        %v5384 = vxor.u32 %v5383, 2147483648
        %v5385 = vsel %vm5302, %v5384, %v5383
        %v5386 = vsub.s32 4, %v5362
        %v5387 = vsel %vm5302, %v5386, %v5362
        %v5388 = vsel %vm5301, %v498, %v5385
        %v5389 = vsel %vm5301, 0, %v5387
        %v5390 = vcosq.f32.pop %v5388
        %v5391 = vsinq.f32.pop %v5388
        %vm5392 = vweird.f32 %v498
        %v5393 = vadd.s32 %v5389, 3
        %v5394 = vand.u32 %v5393, 3
        %vm5395 = vcmp.lt.s32.totalorder %v5394, 2
        %vm5396 = vcmp.eq.s32.totalorder %v5394, 0
        %v5397 = vxor.u32 %v5391, 2147483648
        %v5398 = vsel %vm5396, %v5390, %v5397
        %vm5399 = vcmp.eq.s32.totalorder %v5394, 2
        %v5400 = vxor.u32 %v5390, 2147483648
        %v5401 = vsel %vm5399, %v5400, %v5391
        %v5402 = vsel %vm5395, %v5398, %v5401
        %v5403 = vsel %vm5392, nan, %v5402
        %v5404 = vand.u32 2147483647, %v499
        %vm5405 = vcmp.le.f32.partialorder %v5404, 0.7853982
        %vm5406 = vcmp.lt.s32.totalorder %v499, 0
        %v5407 = vand.u32 %v499, 2139095040
        %v5408 = vshrl.u32 %v5407, 23
        %v5409 = vsub.s32 %v5408, 127
        %v5410 = vand.u32 2147483647, %v499
        %v5411 = vand.u32 %v5410, 8388607
        %v5412 = vor.u32 %v5411, 8388608
        %v5413 = vsub.s32 0, %v5412
        %v5414 = vadd.s32 %v5409, 1
        %vm5415 = vcmp.gt.s32.totalorder %v5414, 0
        %v5416 = vsel %vm5415, %v5414, 0
        %v5417 = vshrl.u32 %v5416, 5
        %v5418 = vand.u32 %v5416, 31
        %v5419 = vsub.s32 32, %v5418
        %v5420 = vshrl.u32 683565275, %v5419
        %v5421 = vshll.u32 683565275, %v5418
        %v5422 = vshrl.u32 2475754826, %v5419
        %v5423 = vor.u32 %v5421, %v5422
        %v5424 = vshll.u32 2475754826, %v5418
        %v5425 = vshrl.u32 2131351028, %v5419
        %v5426 = vor.u32 %v5424, %v5425
        %v5427 = vshll.u32 2131351028, %v5418
        %v5428 = vshrl.u32 2102212464, %v5419
        %v5429 = vor.u32 %v5427, %v5428
        %v5430 = vshll.u32 2102212464, %v5418
        %v5431 = vshrl.u32 920167782, %v5419
        %v5432 = vor.u32 %v5430, %v5431
        %v5433 = vshll.u32 920167782, %v5418
        %v5434 = vshrl.u32 1326507024, %v5419
        %v5435 = vor.u32 %v5433, %v5434
        %vm5436 = vcmp.lt.s32.totalorder %v5417, 1
        %vm5437 = vcmp.lt.s32.totalorder %v5417, 2
        %vm5438 = vcmp.lt.s32.totalorder %v5417, 3
        %vm5439 = vcmp.lt.s32.totalorder %v5417, 4
        %v5440 = vsel %vm5436, %v5420, %v5423
        %v5441 = vsel %vm5439, %v5429, 2102212464
        %v5442 = vsel %vm5438, %v5426, %v5441
        %v5443 = vsel %vm5437, %v5440, %v5442
        %v5444 = vsel %vm5436, %v5423, %v5426
        %v5445 = vsel %vm5439, %v5432, 920167782
        %v5446 = vsel %vm5438, %v5429, %v5445
        %v5447 = vsel %vm5437, %v5444, %v5446
        %v5448 = vsel %vm5436, %v5426, %v5429
        %v5449 = vsel %vm5439, %v5435, 1326507024
        %v5450 = vsel %vm5438, %v5432, %v5449
        %v5451 = vsel %vm5437, %v5448, %v5450
        %v5452 = vshll.u32 %v5412, 8
        %v5453 = vmul.u32.u64.compose %v5452, %v5451
        %v5454 = vextract.low.u32 %v5453
        %v5455 = vextract.high.u32 %v5453
        %v5456 = vmul.u32.u64.compose %v5452, %v5447
        %v5457 = vextract.low.u32 %v5456
        %v5458 = vextract.high.u32 %v5456
        %v5459 = vmul.u32 %v5452, %v5443
        %v5460 = vadd.s32 %v5455, %v5457
        %vm5461 = vc.u32 %v5455, %v5457
        %v5462 = vadd.s32 %v5458, 1
        %v5463 = vsel %vm5461, %v5462, %v5458
        %v5464 = vadd.s32 %v5459, %v5463
        %v5465 = vadd.s32 %v5464, 536870912
        %v5466 = vshrl.u32 %v5465, 30
        %v5467 = vshll.u32 %v5466, 30
        %v5468 = vsub.s32 %v5464, %v5467
        %vm5469 = vcmp.lt.s32.totalorder %v5468, 0
        %v5470 = vsub.s32 0, %v5468
        %v5471 = vsel %vm5469, %v5470, %v5468
        %v5472 = vclz %v5471
        %v5473 = vsub.s32 %v5472, 2
        %vm5474 = vcmp.gt.s32.totalorder 0, %v5473
        %v5475 = vsel %vm5474, 0, %v5473
        %v5476 = vsub.s32 32, %v5475
        %v5477 = vshll.u32 %v5468, %v5475
        %v5478 = vshrl.u32 %v5460, %v5476
        %v5479 = vor.u32 %v5477, %v5478
        %v5480 = vsub.s32 4294967266, %v5475
        %v5481 = vadd.s32 %v5480, 127
        %v5482 = vshll.u32 %v5481, 23
        %v5483 = vor.u32 4788187, %v5482
        %v5484 = vand.u32 2147483647, %v5483
        %v5486 = vcvt.s32.f32 %v5479
        %v5487 = vmul.f32 %v5486, %v5484
        %v5488 = vxor.u32 %v5487, 2147483648
        %v5489 = vsel %vm5406, %v5488, %v5487
        %v5490 = vsub.s32 4, %v5466
        %v5491 = vsel %vm5406, %v5490, %v5466
        %v5492 = vsel %vm5405, %v499, %v5489
        %v5493 = vsel %vm5405, 0, %v5491
        %v5494 = vcosq.f32.pop %v5492
        %v5495 = vsinq.f32.pop %v5492
        %vm5496 = vweird.f32 %v499
        %v5497 = vadd.s32 %v5493, 3
        %v5498 = vand.u32 %v5497, 3
        %vm5499 = vcmp.lt.s32.totalorder %v5498, 2
        %vm5500 = vcmp.eq.s32.totalorder %v5498, 0
        %v5501 = vxor.u32 %v5495, 2147483648
        %v5502 = vsel %vm5500, %v5494, %v5501
        %vm5503 = vcmp.eq.s32.totalorder %v5498, 2
        %v5504 = vxor.u32 %v5494, 2147483648
        %v5505 = vsel %vm5503, %v5504, %v5495
        %v5506 = vsel %vm5499, %v5502, %v5505
        %v5507 = vsel %vm5496, nan, %v5506
        %v5508 = vand.u32 2147483647, %v500
        %vm5509 = vcmp.le.f32.partialorder %v5508, 0.7853982
        %vm5510 = vcmp.lt.s32.totalorder %v500, 0
        %v5511 = vand.u32 %v500, 2139095040
        %v5512 = vshrl.u32 %v5511, 23
        %v5513 = vsub.s32 %v5512, 127
        %v5514 = vand.u32 2147483647, %v500
        %v5515 = vand.u32 %v5514, 8388607
        %v5516 = vor.u32 %v5515, 8388608
        %v5517 = vsub.s32 0, %v5516
        %v5518 = vadd.s32 %v5513, 1
        %vm5519 = vcmp.gt.s32.totalorder %v5518, 0
        %v5520 = vsel %vm5519, %v5518, 0
        %v5521 = vshrl.u32 %v5520, 5
        %v5522 = vand.u32 %v5520, 31
        %v5523 = vsub.s32 32, %v5522
        %v5524 = vshrl.u32 683565275, %v5523
        %v5525 = vshll.u32 683565275, %v5522
        %v5526 = vshrl.u32 2475754826, %v5523
        %v5527 = vor.u32 %v5525, %v5526
        %v5528 = vshll.u32 2475754826, %v5522
        %v5529 = vshrl.u32 2131351028, %v5523
        %v5530 = vor.u32 %v5528, %v5529
        %v5531 = vshll.u32 2131351028, %v5522
        %v5532 = vshrl.u32 2102212464, %v5523
        %v5533 = vor.u32 %v5531, %v5532
        %v5534 = vshll.u32 2102212464, %v5522
        %v5535 = vshrl.u32 920167782, %v5523
        %v5536 = vor.u32 %v5534, %v5535
        %v5537 = vshll.u32 920167782, %v5522
        %v5538 = vshrl.u32 1326507024, %v5523
        %v5539 = vor.u32 %v5537, %v5538
        %vm5540 = vcmp.lt.s32.totalorder %v5521, 1
        %vm5541 = vcmp.lt.s32.totalorder %v5521, 2
        %vm5542 = vcmp.lt.s32.totalorder %v5521, 3
        %vm5543 = vcmp.lt.s32.totalorder %v5521, 4
        %v5544 = vsel %vm5540, %v5524, %v5527
        %v5545 = vsel %vm5543, %v5533, 2102212464
        %v5546 = vsel %vm5542, %v5530, %v5545
        %v5547 = vsel %vm5541, %v5544, %v5546
        %v5548 = vsel %vm5540, %v5527, %v5530
        %v5549 = vsel %vm5543, %v5536, 920167782
        %v5550 = vsel %vm5542, %v5533, %v5549
        %v5551 = vsel %vm5541, %v5548, %v5550
        %v5552 = vsel %vm5540, %v5530, %v5533
        %v5553 = vsel %vm5543, %v5539, 1326507024
        %v5554 = vsel %vm5542, %v5536, %v5553
        %v5555 = vsel %vm5541, %v5552, %v5554
        %v5556 = vshll.u32 %v5516, 8
        %v5557 = vmul.u32.u64.compose %v5556, %v5555
        %v5558 = vextract.low.u32 %v5557
        %v5559 = vextract.high.u32 %v5557
        %v5560 = vmul.u32.u64.compose %v5556, %v5551
        %v5561 = vextract.low.u32 %v5560
        %v5562 = vextract.high.u32 %v5560
        %v5563 = vmul.u32 %v5556, %v5547
        %v5564 = vadd.s32 %v5559, %v5561
        %vm5565 = vc.u32 %v5559, %v5561
        %v5566 = vadd.s32 %v5562, 1
        %v5567 = vsel %vm5565, %v5566, %v5562
        %v5568 = vadd.s32 %v5563, %v5567
        %v5569 = vadd.s32 %v5568, 536870912
        %v5570 = vshrl.u32 %v5569, 30
        %v5571 = vshll.u32 %v5570, 30
        %v5572 = vsub.s32 %v5568, %v5571
        %vm5573 = vcmp.lt.s32.totalorder %v5572, 0
        %v5574 = vsub.s32 0, %v5572
        %v5575 = vsel %vm5573, %v5574, %v5572
        %v5576 = vclz %v5575
        %v5577 = vsub.s32 %v5576, 2
        %vm5578 = vcmp.gt.s32.totalorder 0, %v5577
        %v5579 = vsel %vm5578, 0, %v5577
        %v5580 = vsub.s32 32, %v5579
        %v5581 = vshll.u32 %v5572, %v5579
        %v5582 = vshrl.u32 %v5564, %v5580
        %v5583 = vor.u32 %v5581, %v5582
        %v5584 = vsub.s32 4294967266, %v5579
        %v5585 = vadd.s32 %v5584, 127
        %v5586 = vshll.u32 %v5585, 23
        %v5587 = vor.u32 4788187, %v5586
        %v5588 = vand.u32 2147483647, %v5587
        %v5590 = vcvt.s32.f32 %v5583
        %v5591 = vmul.f32 %v5590, %v5588
        %v5592 = vxor.u32 %v5591, 2147483648
        %v5593 = vsel %vm5510, %v5592, %v5591
        %v5594 = vsub.s32 4, %v5570
        %v5595 = vsel %vm5510, %v5594, %v5570
        %v5596 = vsel %vm5509, %v500, %v5593
        %v5597 = vsel %vm5509, 0, %v5595
        %v5598 = vcosq.f32.pop %v5596
        %v5599 = vsinq.f32.pop %v5596
        %vm5600 = vweird.f32 %v500
        %v5601 = vadd.s32 %v5597, 3
        %v5602 = vand.u32 %v5601, 3
        %vm5603 = vcmp.lt.s32.totalorder %v5602, 2
        %vm5604 = vcmp.eq.s32.totalorder %v5602, 0
        %v5605 = vxor.u32 %v5599, 2147483648
        %v5606 = vsel %vm5604, %v5598, %v5605
        %vm5607 = vcmp.eq.s32.totalorder %v5602, 2
        %v5608 = vxor.u32 %v5598, 2147483648
        %v5609 = vsel %vm5607, %v5608, %v5599
        %v5610 = vsel %vm5603, %v5606, %v5609
        %v5611 = vsel %vm5600, nan, %v5610
        %v5612 = vand.u32 2147483647, %v501
        %vm5613 = vcmp.le.f32.partialorder %v5612, 0.7853982
        %vm5614 = vcmp.lt.s32.totalorder %v501, 0
        %v5615 = vand.u32 %v501, 2139095040
        %v5616 = vshrl.u32 %v5615, 23
        %v5617 = vsub.s32 %v5616, 127
        %v5618 = vand.u32 2147483647, %v501
        %v5619 = vand.u32 %v5618, 8388607
        %v5620 = vor.u32 %v5619, 8388608
        %v5621 = vsub.s32 0, %v5620
        %v5622 = vadd.s32 %v5617, 1
        %vm5623 = vcmp.gt.s32.totalorder %v5622, 0
        %v5624 = vsel %vm5623, %v5622, 0
        %v5625 = vshrl.u32 %v5624, 5
        %v5626 = vand.u32 %v5624, 31
        %v5627 = vsub.s32 32, %v5626
        %v5628 = vshrl.u32 683565275, %v5627
        %v5629 = vshll.u32 683565275, %v5626
        %v5630 = vshrl.u32 2475754826, %v5627
        %v5631 = vor.u32 %v5629, %v5630
        %v5632 = vshll.u32 2475754826, %v5626
        %v5633 = vshrl.u32 2131351028, %v5627
        %v5634 = vor.u32 %v5632, %v5633
        %v5635 = vshll.u32 2131351028, %v5626
        %v5636 = vshrl.u32 2102212464, %v5627
        %v5637 = vor.u32 %v5635, %v5636
        %v5638 = vshll.u32 2102212464, %v5626
        %v5639 = vshrl.u32 920167782, %v5627
        %v5640 = vor.u32 %v5638, %v5639
        %v5641 = vshll.u32 920167782, %v5626
        %v5642 = vshrl.u32 1326507024, %v5627
        %v5643 = vor.u32 %v5641, %v5642
        %vm5644 = vcmp.lt.s32.totalorder %v5625, 1
        %vm5645 = vcmp.lt.s32.totalorder %v5625, 2
        %vm5646 = vcmp.lt.s32.totalorder %v5625, 3
        %vm5647 = vcmp.lt.s32.totalorder %v5625, 4
        %v5648 = vsel %vm5644, %v5628, %v5631
        %v5649 = vsel %vm5647, %v5637, 2102212464
        %v5650 = vsel %vm5646, %v5634, %v5649
        %v5651 = vsel %vm5645, %v5648, %v5650
        %v5652 = vsel %vm5644, %v5631, %v5634
        %v5653 = vsel %vm5647, %v5640, 920167782
        %v5654 = vsel %vm5646, %v5637, %v5653
        %v5655 = vsel %vm5645, %v5652, %v5654
        %v5656 = vsel %vm5644, %v5634, %v5637
        %v5657 = vsel %vm5647, %v5643, 1326507024
        %v5658 = vsel %vm5646, %v5640, %v5657
        %v5659 = vsel %vm5645, %v5656, %v5658
        %v5660 = vshll.u32 %v5620, 8
        %v5661 = vmul.u32.u64.compose %v5660, %v5659
        %v5662 = vextract.low.u32 %v5661
        %v5663 = vextract.high.u32 %v5661
        %v5664 = vmul.u32.u64.compose %v5660, %v5655
        %v5665 = vextract.low.u32 %v5664
        %v5666 = vextract.high.u32 %v5664
        %v5667 = vmul.u32 %v5660, %v5651
        %v5668 = vadd.s32 %v5663, %v5665
        %vm5669 = vc.u32 %v5663, %v5665
        %v5670 = vadd.s32 %v5666, 1
        %v5671 = vsel %vm5669, %v5670, %v5666
        %v5672 = vadd.s32 %v5667, %v5671
        %v5673 = vadd.s32 %v5672, 536870912
        %v5674 = vshrl.u32 %v5673, 30
        %v5675 = vshll.u32 %v5674, 30
        %v5676 = vsub.s32 %v5672, %v5675
        %vm5677 = vcmp.lt.s32.totalorder %v5676, 0
        %v5678 = vsub.s32 0, %v5676
        %v5679 = vsel %vm5677, %v5678, %v5676
        %v5680 = vclz %v5679
        %v5681 = vsub.s32 %v5680, 2
        %vm5682 = vcmp.gt.s32.totalorder 0, %v5681
        %v5683 = vsel %vm5682, 0, %v5681
        %v5684 = vsub.s32 32, %v5683
        %v5685 = vshll.u32 %v5676, %v5683
        %v5686 = vshrl.u32 %v5668, %v5684
        %v5687 = vor.u32 %v5685, %v5686
        %v5688 = vsub.s32 4294967266, %v5683
        %v5689 = vadd.s32 %v5688, 127
        %v5690 = vshll.u32 %v5689, 23
        %v5691 = vor.u32 4788187, %v5690
        %v5692 = vand.u32 2147483647, %v5691
        %v5694 = vcvt.s32.f32 %v5687
        %v5695 = vmul.f32 %v5694, %v5692
        %v5696 = vxor.u32 %v5695, 2147483648
        %v5697 = vsel %vm5614, %v5696, %v5695
        %v5698 = vsub.s32 4, %v5674
        %v5699 = vsel %vm5614, %v5698, %v5674
        %v5700 = vsel %vm5613, %v501, %v5697
        %v5701 = vsel %vm5613, 0, %v5699
        %v5702 = vcosq.f32.pop %v5700
        %v5703 = vsinq.f32.pop %v5700
        %vm5704 = vweird.f32 %v501
        %v5705 = vadd.s32 %v5701, 3
        %v5706 = vand.u32 %v5705, 3
        %vm5707 = vcmp.lt.s32.totalorder %v5706, 2
        %vm5708 = vcmp.eq.s32.totalorder %v5706, 0
        %v5709 = vxor.u32 %v5703, 2147483648
        %v5710 = vsel %vm5708, %v5702, %v5709
        %vm5711 = vcmp.eq.s32.totalorder %v5706, 2
        %v5712 = vxor.u32 %v5702, 2147483648
        %v5713 = vsel %vm5711, %v5712, %v5703
        %v5714 = vsel %vm5707, %v5710, %v5713
        %v5715 = vsel %vm5704, nan, %v5714
        %v5716 = vand.u32 2147483647, %v502
        %vm5717 = vcmp.le.f32.partialorder %v5716, 0.7853982
        %vm5718 = vcmp.lt.s32.totalorder %v502, 0
        %v5719 = vand.u32 %v502, 2139095040
        %v5720 = vshrl.u32 %v5719, 23
        %v5721 = vsub.s32 %v5720, 127
        %v5722 = vand.u32 2147483647, %v502
        %v5723 = vand.u32 %v5722, 8388607
        %v5724 = vor.u32 %v5723, 8388608
        %v5725 = vsub.s32 0, %v5724
        %v5726 = vadd.s32 %v5721, 1
        %vm5727 = vcmp.gt.s32.totalorder %v5726, 0
        %v5728 = vsel %vm5727, %v5726, 0
        %v5729 = vshrl.u32 %v5728, 5
        %v5730 = vand.u32 %v5728, 31
        %v5731 = vsub.s32 32, %v5730
        %v5732 = vshrl.u32 683565275, %v5731
        %v5733 = vshll.u32 683565275, %v5730
        %v5734 = vshrl.u32 2475754826, %v5731
        %v5735 = vor.u32 %v5733, %v5734
        %v5736 = vshll.u32 2475754826, %v5730
        %v5737 = vshrl.u32 2131351028, %v5731
        %v5738 = vor.u32 %v5736, %v5737
        %v5739 = vshll.u32 2131351028, %v5730
        %v5740 = vshrl.u32 2102212464, %v5731
        %v5741 = vor.u32 %v5739, %v5740
        %v5742 = vshll.u32 2102212464, %v5730
        %v5743 = vshrl.u32 920167782, %v5731
        %v5744 = vor.u32 %v5742, %v5743
        %v5745 = vshll.u32 920167782, %v5730
        %v5746 = vshrl.u32 1326507024, %v5731
        %v5747 = vor.u32 %v5745, %v5746
        %vm5748 = vcmp.lt.s32.totalorder %v5729, 1
        %vm5749 = vcmp.lt.s32.totalorder %v5729, 2
        %vm5750 = vcmp.lt.s32.totalorder %v5729, 3
        %vm5751 = vcmp.lt.s32.totalorder %v5729, 4
        %v5752 = vsel %vm5748, %v5732, %v5735
        %v5753 = vsel %vm5751, %v5741, 2102212464
        %v5754 = vsel %vm5750, %v5738, %v5753
        %v5755 = vsel %vm5749, %v5752, %v5754
        %v5756 = vsel %vm5748, %v5735, %v5738
        %v5757 = vsel %vm5751, %v5744, 920167782
        %v5758 = vsel %vm5750, %v5741, %v5757
        %v5759 = vsel %vm5749, %v5756, %v5758
        %v5760 = vsel %vm5748, %v5738, %v5741
        %v5761 = vsel %vm5751, %v5747, 1326507024
        %v5762 = vsel %vm5750, %v5744, %v5761
        %v5763 = vsel %vm5749, %v5760, %v5762
        %v5764 = vshll.u32 %v5724, 8
        %v5765 = vmul.u32.u64.compose %v5764, %v5763
        %v5766 = vextract.low.u32 %v5765
        %v5767 = vextract.high.u32 %v5765
        %v5768 = vmul.u32.u64.compose %v5764, %v5759
        %v5769 = vextract.low.u32 %v5768
        %v5770 = vextract.high.u32 %v5768
        %v5771 = vmul.u32 %v5764, %v5755
        %v5772 = vadd.s32 %v5767, %v5769
        %vm5773 = vc.u32 %v5767, %v5769
        %v5774 = vadd.s32 %v5770, 1
        %v5775 = vsel %vm5773, %v5774, %v5770
        %v5776 = vadd.s32 %v5771, %v5775
        %v5777 = vadd.s32 %v5776, 536870912
        %v5778 = vshrl.u32 %v5777, 30
        %v5779 = vshll.u32 %v5778, 30
        %v5780 = vsub.s32 %v5776, %v5779
        %vm5781 = vcmp.lt.s32.totalorder %v5780, 0
        %v5782 = vsub.s32 0, %v5780
        %v5783 = vsel %vm5781, %v5782, %v5780
        %v5784 = vclz %v5783
        %v5785 = vsub.s32 %v5784, 2
        %vm5786 = vcmp.gt.s32.totalorder 0, %v5785
        %v5787 = vsel %vm5786, 0, %v5785
        %v5788 = vsub.s32 32, %v5787
        %v5789 = vshll.u32 %v5780, %v5787
        %v5790 = vshrl.u32 %v5772, %v5788
        %v5791 = vor.u32 %v5789, %v5790
        %v5792 = vsub.s32 4294967266, %v5787
        %v5793 = vadd.s32 %v5792, 127
        %v5794 = vshll.u32 %v5793, 23
        %v5795 = vor.u32 4788187, %v5794
        %v5796 = vand.u32 2147483647, %v5795
        %v5798 = vcvt.s32.f32 %v5791
        %v5799 = vmul.f32 %v5798, %v5796
        %v5800 = vxor.u32 %v5799, 2147483648
        %v5801 = vsel %vm5718, %v5800, %v5799
        %v5802 = vsub.s32 4, %v5778
        %v5803 = vsel %vm5718, %v5802, %v5778
        %v5804 = vsel %vm5717, %v502, %v5801
        %v5805 = vsel %vm5717, 0, %v5803
        %v5806 = vcosq.f32.pop %v5804
        %v5807 = vsinq.f32.pop %v5804
        %vm5808 = vweird.f32 %v502
        %v5809 = vadd.s32 %v5805, 3
        %v5810 = vand.u32 %v5809, 3
        %vm5811 = vcmp.lt.s32.totalorder %v5810, 2
        %vm5812 = vcmp.eq.s32.totalorder %v5810, 0
        %v5813 = vxor.u32 %v5807, 2147483648
        %v5814 = vsel %vm5812, %v5806, %v5813
        %vm5815 = vcmp.eq.s32.totalorder %v5810, 2
        %v5816 = vxor.u32 %v5806, 2147483648
        %v5817 = vsel %vm5815, %v5816, %v5807
        %v5818 = vsel %vm5811, %v5814, %v5817
        %v5819 = vsel %vm5808, nan, %v5818
        %v5820 = vand.u32 2147483647, %v503
        %vm5821 = vcmp.le.f32.partialorder %v5820, 0.7853982
        %vm5822 = vcmp.lt.s32.totalorder %v503, 0
        %v5823 = vand.u32 %v503, 2139095040
        %v5824 = vshrl.u32 %v5823, 23
        %v5825 = vsub.s32 %v5824, 127
        %v5826 = vand.u32 2147483647, %v503
        %v5827 = vand.u32 %v5826, 8388607
        %v5828 = vor.u32 %v5827, 8388608
        %v5829 = vsub.s32 0, %v5828
        %v5830 = vadd.s32 %v5825, 1
        %vm5831 = vcmp.gt.s32.totalorder %v5830, 0
        %v5832 = vsel %vm5831, %v5830, 0
        %v5833 = vshrl.u32 %v5832, 5
        %v5834 = vand.u32 %v5832, 31
        %v5835 = vsub.s32 32, %v5834
        %v5836 = vshrl.u32 683565275, %v5835
        %v5837 = vshll.u32 683565275, %v5834
        %v5838 = vshrl.u32 2475754826, %v5835
        %v5839 = vor.u32 %v5837, %v5838
        %v5840 = vshll.u32 2475754826, %v5834
        %v5841 = vshrl.u32 2131351028, %v5835
        %v5842 = vor.u32 %v5840, %v5841
        %v5843 = vshll.u32 2131351028, %v5834
        %v5844 = vshrl.u32 2102212464, %v5835
        %v5845 = vor.u32 %v5843, %v5844
        %v5846 = vshll.u32 2102212464, %v5834
        %v5847 = vshrl.u32 920167782, %v5835
        %v5848 = vor.u32 %v5846, %v5847
        %v5849 = vshll.u32 920167782, %v5834
        %v5850 = vshrl.u32 1326507024, %v5835
        %v5851 = vor.u32 %v5849, %v5850
        %vm5852 = vcmp.lt.s32.totalorder %v5833, 1
        %vm5853 = vcmp.lt.s32.totalorder %v5833, 2
        %vm5854 = vcmp.lt.s32.totalorder %v5833, 3
        %vm5855 = vcmp.lt.s32.totalorder %v5833, 4
        %v5856 = vsel %vm5852, %v5836, %v5839
        %v5857 = vsel %vm5855, %v5845, 2102212464
        %v5858 = vsel %vm5854, %v5842, %v5857
        %v5859 = vsel %vm5853, %v5856, %v5858
        %v5860 = vsel %vm5852, %v5839, %v5842
        %v5861 = vsel %vm5855, %v5848, 920167782
        %v5862 = vsel %vm5854, %v5845, %v5861
        %v5863 = vsel %vm5853, %v5860, %v5862
        %v5864 = vsel %vm5852, %v5842, %v5845
        %v5865 = vsel %vm5855, %v5851, 1326507024
        %v5866 = vsel %vm5854, %v5848, %v5865
        %v5867 = vsel %vm5853, %v5864, %v5866
        %v5868 = vshll.u32 %v5828, 8
        %v5869 = vmul.u32.u64.compose %v5868, %v5867
        %v5870 = vextract.low.u32 %v5869
        %v5871 = vextract.high.u32 %v5869
        %v5872 = vmul.u32.u64.compose %v5868, %v5863
        %v5873 = vextract.low.u32 %v5872
        %v5874 = vextract.high.u32 %v5872
        %v5875 = vmul.u32 %v5868, %v5859
        %v5876 = vadd.s32 %v5871, %v5873
        %vm5877 = vc.u32 %v5871, %v5873
        %v5878 = vadd.s32 %v5874, 1
        %v5879 = vsel %vm5877, %v5878, %v5874
        %v5880 = vadd.s32 %v5875, %v5879
        %v5881 = vadd.s32 %v5880, 536870912
        %v5882 = vshrl.u32 %v5881, 30
        %v5883 = vshll.u32 %v5882, 30
        %v5884 = vsub.s32 %v5880, %v5883
        %vm5885 = vcmp.lt.s32.totalorder %v5884, 0
        %v5886 = vsub.s32 0, %v5884
        %v5887 = vsel %vm5885, %v5886, %v5884
        %v5888 = vclz %v5887
        %v5889 = vsub.s32 %v5888, 2
        %vm5890 = vcmp.gt.s32.totalorder 0, %v5889
        %v5891 = vsel %vm5890, 0, %v5889
        %v5892 = vsub.s32 32, %v5891
        %v5893 = vshll.u32 %v5884, %v5891
        %v5894 = vshrl.u32 %v5876, %v5892
        %v5895 = vor.u32 %v5893, %v5894
        %v5896 = vsub.s32 4294967266, %v5891
        %v5897 = vadd.s32 %v5896, 127
        %v5898 = vshll.u32 %v5897, 23
        %v5899 = vor.u32 4788187, %v5898
        %v5900 = vand.u32 2147483647, %v5899
        %v5902 = vcvt.s32.f32 %v5895
        %v5903 = vmul.f32 %v5902, %v5900
        %v5904 = vxor.u32 %v5903, 2147483648
        %v5905 = vsel %vm5822, %v5904, %v5903
        %v5906 = vsub.s32 4, %v5882
        %v5907 = vsel %vm5822, %v5906, %v5882
        %v5908 = vsel %vm5821, %v503, %v5905
        %v5909 = vsel %vm5821, 0, %v5907
        %v5910 = vcosq.f32.pop %v5908
        %v5911 = vsinq.f32.pop %v5908
        %vm5912 = vweird.f32 %v503
        %v5913 = vadd.s32 %v5909, 3
        %v5914 = vand.u32 %v5913, 3
        %vm5915 = vcmp.lt.s32.totalorder %v5914, 2
        %vm5916 = vcmp.eq.s32.totalorder %v5914, 0
        %v5917 = vxor.u32 %v5911, 2147483648
        %v5918 = vsel %vm5916, %v5910, %v5917
        %vm5919 = vcmp.eq.s32.totalorder %v5914, 2
        %v5920 = vxor.u32 %v5910, 2147483648
        %v5921 = vsel %vm5919, %v5920, %v5911
        %v5922 = vsel %vm5915, %v5918, %v5921
        %v5923 = vsel %vm5912, nan, %v5922
        %v5924 = vand.u32 2147483647, %v504
        %vm5925 = vcmp.le.f32.partialorder %v5924, 0.7853982
        %vm5926 = vcmp.lt.s32.totalorder %v504, 0
        %v5927 = vand.u32 %v504, 2139095040
        %v5928 = vshrl.u32 %v5927, 23
        %v5929 = vsub.s32 %v5928, 127
        %v5930 = vand.u32 2147483647, %v504
        %v5931 = vand.u32 %v5930, 8388607
        %v5932 = vor.u32 %v5931, 8388608
        %v5933 = vsub.s32 0, %v5932
        %v5934 = vadd.s32 %v5929, 1
        %vm5935 = vcmp.gt.s32.totalorder %v5934, 0
        %v5936 = vsel %vm5935, %v5934, 0
        %v5937 = vshrl.u32 %v5936, 5
        %v5938 = vand.u32 %v5936, 31
        %v5939 = vsub.s32 32, %v5938
        %v5940 = vshrl.u32 683565275, %v5939
        %v5941 = vshll.u32 683565275, %v5938
        %v5942 = vshrl.u32 2475754826, %v5939
        %v5943 = vor.u32 %v5941, %v5942
        %v5944 = vshll.u32 2475754826, %v5938
        %v5945 = vshrl.u32 2131351028, %v5939
        %v5946 = vor.u32 %v5944, %v5945
        %v5947 = vshll.u32 2131351028, %v5938
        %v5948 = vshrl.u32 2102212464, %v5939
        %v5949 = vor.u32 %v5947, %v5948
        %v5950 = vshll.u32 2102212464, %v5938
        %v5951 = vshrl.u32 920167782, %v5939
        %v5952 = vor.u32 %v5950, %v5951
        %v5953 = vshll.u32 920167782, %v5938
        %v5954 = vshrl.u32 1326507024, %v5939
        %v5955 = vor.u32 %v5953, %v5954
        %vm5956 = vcmp.lt.s32.totalorder %v5937, 1
        %vm5957 = vcmp.lt.s32.totalorder %v5937, 2
        %vm5958 = vcmp.lt.s32.totalorder %v5937, 3
        %vm5959 = vcmp.lt.s32.totalorder %v5937, 4
        %v5960 = vsel %vm5956, %v5940, %v5943
        %v5961 = vsel %vm5959, %v5949, 2102212464
        %v5962 = vsel %vm5958, %v5946, %v5961
        %v5963 = vsel %vm5957, %v5960, %v5962
        %v5964 = vsel %vm5956, %v5943, %v5946
        %v5965 = vsel %vm5959, %v5952, 920167782
        %v5966 = vsel %vm5958, %v5949, %v5965
        %v5967 = vsel %vm5957, %v5964, %v5966
        %v5968 = vsel %vm5956, %v5946, %v5949
        %v5969 = vsel %vm5959, %v5955, 1326507024
        %v5970 = vsel %vm5958, %v5952, %v5969
        %v5971 = vsel %vm5957, %v5968, %v5970
        %v5972 = vshll.u32 %v5932, 8
        %v5973 = vmul.u32.u64.compose %v5972, %v5971
        %v5974 = vextract.low.u32 %v5973
        %v5975 = vextract.high.u32 %v5973
        %v5976 = vmul.u32.u64.compose %v5972, %v5967
        %v5977 = vextract.low.u32 %v5976
        %v5978 = vextract.high.u32 %v5976
        %v5979 = vmul.u32 %v5972, %v5963
        %v5980 = vadd.s32 %v5975, %v5977
        %vm5981 = vc.u32 %v5975, %v5977
        %v5982 = vadd.s32 %v5978, 1
        %v5983 = vsel %vm5981, %v5982, %v5978
        %v5984 = vadd.s32 %v5979, %v5983
        %v5985 = vadd.s32 %v5984, 536870912
        %v5986 = vshrl.u32 %v5985, 30
        %v5987 = vshll.u32 %v5986, 30
        %v5988 = vsub.s32 %v5984, %v5987
        %vm5989 = vcmp.lt.s32.totalorder %v5988, 0
        %v5990 = vsub.s32 0, %v5988
        %v5991 = vsel %vm5989, %v5990, %v5988
        %v5992 = vclz %v5991
        %v5993 = vsub.s32 %v5992, 2
        %vm5994 = vcmp.gt.s32.totalorder 0, %v5993
        %v5995 = vsel %vm5994, 0, %v5993
        %v5996 = vsub.s32 32, %v5995
        %v5997 = vshll.u32 %v5988, %v5995
        %v5998 = vshrl.u32 %v5980, %v5996
        %v5999 = vor.u32 %v5997, %v5998
        %v6000 = vsub.s32 4294967266, %v5995
        %v6001 = vadd.s32 %v6000, 127
        %v6002 = vshll.u32 %v6001, 23
        %v6003 = vor.u32 4788187, %v6002
        %v6004 = vand.u32 2147483647, %v6003
        %v6006 = vcvt.s32.f32 %v5999
        %v6007 = vmul.f32 %v6006, %v6004
        %v6008 = vxor.u32 %v6007, 2147483648
        %v6009 = vsel %vm5926, %v6008, %v6007
        %v6010 = vsub.s32 4, %v5986
        %v6011 = vsel %vm5926, %v6010, %v5986
        %v6012 = vsel %vm5925, %v504, %v6009
        %v6013 = vsel %vm5925, 0, %v6011
        %v6014 = vcosq.f32.pop %v6012
        %v6015 = vsinq.f32.pop %v6012
        %vm6016 = vweird.f32 %v504
        %v6017 = vadd.s32 %v6013, 3
        %v6018 = vand.u32 %v6017, 3
        %vm6019 = vcmp.lt.s32.totalorder %v6018, 2
        %vm6020 = vcmp.eq.s32.totalorder %v6018, 0
        %v6021 = vxor.u32 %v6015, 2147483648
        %v6022 = vsel %vm6020, %v6014, %v6021
        %vm6023 = vcmp.eq.s32.totalorder %v6018, 2
        %v6024 = vxor.u32 %v6014, 2147483648
        %v6025 = vsel %vm6023, %v6024, %v6015
        %v6026 = vsel %vm6019, %v6022, %v6025
        %v6027 = vsel %vm6016, nan, %v6026
        %v6028 = vand.u32 2147483647, %v505
        %vm6029 = vcmp.le.f32.partialorder %v6028, 0.7853982
        %vm6030 = vcmp.lt.s32.totalorder %v505, 0
        %v6031 = vand.u32 %v505, 2139095040
        %v6032 = vshrl.u32 %v6031, 23
        %v6033 = vsub.s32 %v6032, 127
        %v6034 = vand.u32 2147483647, %v505
        %v6035 = vand.u32 %v6034, 8388607
        %v6036 = vor.u32 %v6035, 8388608
        %v6037 = vsub.s32 0, %v6036
        %v6038 = vadd.s32 %v6033, 1
        %vm6039 = vcmp.gt.s32.totalorder %v6038, 0
        %v6040 = vsel %vm6039, %v6038, 0
        %v6041 = vshrl.u32 %v6040, 5
        %v6042 = vand.u32 %v6040, 31
        %v6043 = vsub.s32 32, %v6042
        %v6044 = vshrl.u32 683565275, %v6043
        %v6045 = vshll.u32 683565275, %v6042
        %v6046 = vshrl.u32 2475754826, %v6043
        %v6047 = vor.u32 %v6045, %v6046
        %v6048 = vshll.u32 2475754826, %v6042
        %v6049 = vshrl.u32 2131351028, %v6043
        %v6050 = vor.u32 %v6048, %v6049
        %v6051 = vshll.u32 2131351028, %v6042
        %v6052 = vshrl.u32 2102212464, %v6043
        %v6053 = vor.u32 %v6051, %v6052
        %v6054 = vshll.u32 2102212464, %v6042
        %v6055 = vshrl.u32 920167782, %v6043
        %v6056 = vor.u32 %v6054, %v6055
        %v6057 = vshll.u32 920167782, %v6042
        %v6058 = vshrl.u32 1326507024, %v6043
        %v6059 = vor.u32 %v6057, %v6058
        %vm6060 = vcmp.lt.s32.totalorder %v6041, 1
        %vm6061 = vcmp.lt.s32.totalorder %v6041, 2
        %vm6062 = vcmp.lt.s32.totalorder %v6041, 3
        %vm6063 = vcmp.lt.s32.totalorder %v6041, 4
        %v6064 = vsel %vm6060, %v6044, %v6047
        %v6065 = vsel %vm6063, %v6053, 2102212464
        %v6066 = vsel %vm6062, %v6050, %v6065
        %v6067 = vsel %vm6061, %v6064, %v6066
        %v6068 = vsel %vm6060, %v6047, %v6050
        %v6069 = vsel %vm6063, %v6056, 920167782
        %v6070 = vsel %vm6062, %v6053, %v6069
        %v6071 = vsel %vm6061, %v6068, %v6070
        %v6072 = vsel %vm6060, %v6050, %v6053
        %v6073 = vsel %vm6063, %v6059, 1326507024
        %v6074 = vsel %vm6062, %v6056, %v6073
        %v6075 = vsel %vm6061, %v6072, %v6074
        %v6076 = vshll.u32 %v6036, 8
        %v6077 = vmul.u32.u64.compose %v6076, %v6075
        %v6078 = vextract.low.u32 %v6077
        %v6079 = vextract.high.u32 %v6077
        %v6080 = vmul.u32.u64.compose %v6076, %v6071
        %v6081 = vextract.low.u32 %v6080
        %v6082 = vextract.high.u32 %v6080
        %v6083 = vmul.u32 %v6076, %v6067
        %v6084 = vadd.s32 %v6079, %v6081
        %vm6085 = vc.u32 %v6079, %v6081
        %v6086 = vadd.s32 %v6082, 1
        %v6087 = vsel %vm6085, %v6086, %v6082
        %v6088 = vadd.s32 %v6083, %v6087
        %v6089 = vadd.s32 %v6088, 536870912
        %v6090 = vshrl.u32 %v6089, 30
        %v6091 = vshll.u32 %v6090, 30
        %v6092 = vsub.s32 %v6088, %v6091
        %vm6093 = vcmp.lt.s32.totalorder %v6092, 0
        %v6094 = vsub.s32 0, %v6092
        %v6095 = vsel %vm6093, %v6094, %v6092
        %v6096 = vclz %v6095
        %v6097 = vsub.s32 %v6096, 2
        %vm6098 = vcmp.gt.s32.totalorder 0, %v6097
        %v6099 = vsel %vm6098, 0, %v6097
        %v6100 = vsub.s32 32, %v6099
        %v6101 = vshll.u32 %v6092, %v6099
        %v6102 = vshrl.u32 %v6084, %v6100
        %v6103 = vor.u32 %v6101, %v6102
        %v6104 = vsub.s32 4294967266, %v6099
        %v6105 = vadd.s32 %v6104, 127
        %v6106 = vshll.u32 %v6105, 23
        %v6107 = vor.u32 4788187, %v6106
        %v6108 = vand.u32 2147483647, %v6107
        %v6110 = vcvt.s32.f32 %v6103
        %v6111 = vmul.f32 %v6110, %v6108
        %v6112 = vxor.u32 %v6111, 2147483648
        %v6113 = vsel %vm6030, %v6112, %v6111
        %v6114 = vsub.s32 4, %v6090
        %v6115 = vsel %vm6030, %v6114, %v6090
        %v6116 = vsel %vm6029, %v505, %v6113
        %v6117 = vsel %vm6029, 0, %v6115
        %v6118 = vcosq.f32.pop %v6116
        %v6119 = vsinq.f32.pop %v6116
        %vm6120 = vweird.f32 %v505
        %v6121 = vadd.s32 %v6117, 3
        %v6122 = vand.u32 %v6121, 3
        %vm6123 = vcmp.lt.s32.totalorder %v6122, 2
        %vm6124 = vcmp.eq.s32.totalorder %v6122, 0
        %v6125 = vxor.u32 %v6119, 2147483648
        %v6126 = vsel %vm6124, %v6118, %v6125
        %vm6127 = vcmp.eq.s32.totalorder %v6122, 2
        %v6128 = vxor.u32 %v6118, 2147483648
        %v6129 = vsel %vm6127, %v6128, %v6119
        %v6130 = vsel %vm6123, %v6126, %v6129
        %v6131 = vsel %vm6120, nan, %v6130
        %v6132 = vand.u32 2147483647, %v506
        %vm6133 = vcmp.le.f32.partialorder %v6132, 0.7853982
        %vm6134 = vcmp.lt.s32.totalorder %v506, 0
        %v6135 = vand.u32 %v506, 2139095040
        %v6136 = vshrl.u32 %v6135, 23
        %v6137 = vsub.s32 %v6136, 127
        %v6138 = vand.u32 2147483647, %v506
        %v6139 = vand.u32 %v6138, 8388607
        %v6140 = vor.u32 %v6139, 8388608
        %v6141 = vsub.s32 0, %v6140
        %v6142 = vadd.s32 %v6137, 1
        %vm6143 = vcmp.gt.s32.totalorder %v6142, 0
        %v6144 = vsel %vm6143, %v6142, 0
        %v6145 = vshrl.u32 %v6144, 5
        %v6146 = vand.u32 %v6144, 31
        %v6147 = vsub.s32 32, %v6146
        %v6148 = vshrl.u32 683565275, %v6147
        %v6149 = vshll.u32 683565275, %v6146
        %v6150 = vshrl.u32 2475754826, %v6147
        %v6151 = vor.u32 %v6149, %v6150
        %v6152 = vshll.u32 2475754826, %v6146
        %v6153 = vshrl.u32 2131351028, %v6147
        %v6154 = vor.u32 %v6152, %v6153
        %v6155 = vshll.u32 2131351028, %v6146
        %v6156 = vshrl.u32 2102212464, %v6147
        %v6157 = vor.u32 %v6155, %v6156
        %v6158 = vshll.u32 2102212464, %v6146
        %v6159 = vshrl.u32 920167782, %v6147
        %v6160 = vor.u32 %v6158, %v6159
        %v6161 = vshll.u32 920167782, %v6146
        %v6162 = vshrl.u32 1326507024, %v6147
        %v6163 = vor.u32 %v6161, %v6162
        %vm6164 = vcmp.lt.s32.totalorder %v6145, 1
        %vm6165 = vcmp.lt.s32.totalorder %v6145, 2
        %vm6166 = vcmp.lt.s32.totalorder %v6145, 3
        %vm6167 = vcmp.lt.s32.totalorder %v6145, 4
        %v6168 = vsel %vm6164, %v6148, %v6151
        %v6169 = vsel %vm6167, %v6157, 2102212464
        %v6170 = vsel %vm6166, %v6154, %v6169
        %v6171 = vsel %vm6165, %v6168, %v6170
        %v6172 = vsel %vm6164, %v6151, %v6154
        %v6173 = vsel %vm6167, %v6160, 920167782
        %v6174 = vsel %vm6166, %v6157, %v6173
        %v6175 = vsel %vm6165, %v6172, %v6174
        %v6176 = vsel %vm6164, %v6154, %v6157
        %v6177 = vsel %vm6167, %v6163, 1326507024
        %v6178 = vsel %vm6166, %v6160, %v6177
        %v6179 = vsel %vm6165, %v6176, %v6178
        %v6180 = vshll.u32 %v6140, 8
        %v6181 = vmul.u32.u64.compose %v6180, %v6179
        %v6182 = vextract.low.u32 %v6181
        %v6183 = vextract.high.u32 %v6181
        %v6184 = vmul.u32.u64.compose %v6180, %v6175
        %v6185 = vextract.low.u32 %v6184
        %v6186 = vextract.high.u32 %v6184
        %v6187 = vmul.u32 %v6180, %v6171
        %v6188 = vadd.s32 %v6183, %v6185
        %vm6189 = vc.u32 %v6183, %v6185
        %v6190 = vadd.s32 %v6186, 1
        %v6191 = vsel %vm6189, %v6190, %v6186
        %v6192 = vadd.s32 %v6187, %v6191
        %v6193 = vadd.s32 %v6192, 536870912
        %v6194 = vshrl.u32 %v6193, 30
        %v6195 = vshll.u32 %v6194, 30
        %v6196 = vsub.s32 %v6192, %v6195
        %vm6197 = vcmp.lt.s32.totalorder %v6196, 0
        %v6198 = vsub.s32 0, %v6196
        %v6199 = vsel %vm6197, %v6198, %v6196
        %v6200 = vclz %v6199
        %v6201 = vsub.s32 %v6200, 2
        %vm6202 = vcmp.gt.s32.totalorder 0, %v6201
        %v6203 = vsel %vm6202, 0, %v6201
        %v6204 = vsub.s32 32, %v6203
        %v6205 = vshll.u32 %v6196, %v6203
        %v6206 = vshrl.u32 %v6188, %v6204
        %v6207 = vor.u32 %v6205, %v6206
        %v6208 = vsub.s32 4294967266, %v6203
        %v6209 = vadd.s32 %v6208, 127
        %v6210 = vshll.u32 %v6209, 23
        %v6211 = vor.u32 4788187, %v6210
        %v6212 = vand.u32 2147483647, %v6211
        %v6214 = vcvt.s32.f32 %v6207
        %v6215 = vmul.f32 %v6214, %v6212
        %v6216 = vxor.u32 %v6215, 2147483648
        %v6217 = vsel %vm6134, %v6216, %v6215
        %v6218 = vsub.s32 4, %v6194
        %v6219 = vsel %vm6134, %v6218, %v6194
        %v6220 = vsel %vm6133, %v506, %v6217
        %v6221 = vsel %vm6133, 0, %v6219
        %v6222 = vcosq.f32.pop %v6220
        %v6223 = vsinq.f32.pop %v6220
        %vm6224 = vweird.f32 %v506
        %v6225 = vadd.s32 %v6221, 3
        %v6226 = vand.u32 %v6225, 3
        %vm6227 = vcmp.lt.s32.totalorder %v6226, 2
        %vm6228 = vcmp.eq.s32.totalorder %v6226, 0
        %v6229 = vxor.u32 %v6223, 2147483648
        %v6230 = vsel %vm6228, %v6222, %v6229
        %vm6231 = vcmp.eq.s32.totalorder %v6226, 2
        %v6232 = vxor.u32 %v6222, 2147483648
        %v6233 = vsel %vm6231, %v6232, %v6223
        %v6234 = vsel %vm6227, %v6230, %v6233
        %v6235 = vsel %vm6224, nan, %v6234
        %v6236 = vand.u32 2147483647, %v507
        %vm6237 = vcmp.le.f32.partialorder %v6236, 0.7853982
        %vm6238 = vcmp.lt.s32.totalorder %v507, 0
        %v6239 = vand.u32 %v507, 2139095040
        %v6240 = vshrl.u32 %v6239, 23
        %v6241 = vsub.s32 %v6240, 127
        %v6242 = vand.u32 2147483647, %v507
        %v6243 = vand.u32 %v6242, 8388607
        %v6244 = vor.u32 %v6243, 8388608
        %v6245 = vsub.s32 0, %v6244
        %v6246 = vadd.s32 %v6241, 1
        %vm6247 = vcmp.gt.s32.totalorder %v6246, 0
        %v6248 = vsel %vm6247, %v6246, 0
        %v6249 = vshrl.u32 %v6248, 5
        %v6250 = vand.u32 %v6248, 31
        %v6251 = vsub.s32 32, %v6250
        %v6252 = vshrl.u32 683565275, %v6251
        %v6253 = vshll.u32 683565275, %v6250
        %v6254 = vshrl.u32 2475754826, %v6251
        %v6255 = vor.u32 %v6253, %v6254
        %v6256 = vshll.u32 2475754826, %v6250
        %v6257 = vshrl.u32 2131351028, %v6251
        %v6258 = vor.u32 %v6256, %v6257
        %v6259 = vshll.u32 2131351028, %v6250
        %v6260 = vshrl.u32 2102212464, %v6251
        %v6261 = vor.u32 %v6259, %v6260
        %v6262 = vshll.u32 2102212464, %v6250
        %v6263 = vshrl.u32 920167782, %v6251
        %v6264 = vor.u32 %v6262, %v6263
        %v6265 = vshll.u32 920167782, %v6250
        %v6266 = vshrl.u32 1326507024, %v6251
        %v6267 = vor.u32 %v6265, %v6266
        %vm6268 = vcmp.lt.s32.totalorder %v6249, 1
        %vm6269 = vcmp.lt.s32.totalorder %v6249, 2
        %vm6270 = vcmp.lt.s32.totalorder %v6249, 3
        %vm6271 = vcmp.lt.s32.totalorder %v6249, 4
        %v6272 = vsel %vm6268, %v6252, %v6255
        %v6273 = vsel %vm6271, %v6261, 2102212464
        %v6274 = vsel %vm6270, %v6258, %v6273
        %v6275 = vsel %vm6269, %v6272, %v6274
        %v6276 = vsel %vm6268, %v6255, %v6258
        %v6277 = vsel %vm6271, %v6264, 920167782
        %v6278 = vsel %vm6270, %v6261, %v6277
        %v6279 = vsel %vm6269, %v6276, %v6278
        %v6280 = vsel %vm6268, %v6258, %v6261
        %v6281 = vsel %vm6271, %v6267, 1326507024
        %v6282 = vsel %vm6270, %v6264, %v6281
        %v6283 = vsel %vm6269, %v6280, %v6282
        %v6284 = vshll.u32 %v6244, 8
        %v6285 = vmul.u32.u64.compose %v6284, %v6283
        %v6286 = vextract.low.u32 %v6285
        %v6287 = vextract.high.u32 %v6285
        %v6288 = vmul.u32.u64.compose %v6284, %v6279
        %v6289 = vextract.low.u32 %v6288
        %v6290 = vextract.high.u32 %v6288
        %v6291 = vmul.u32 %v6284, %v6275
        %v6292 = vadd.s32 %v6287, %v6289
        %vm6293 = vc.u32 %v6287, %v6289
        %v6294 = vadd.s32 %v6290, 1
        %v6295 = vsel %vm6293, %v6294, %v6290
        %v6296 = vadd.s32 %v6291, %v6295
        %v6297 = vadd.s32 %v6296, 536870912
        %v6298 = vshrl.u32 %v6297, 30
        %v6299 = vshll.u32 %v6298, 30
        %v6300 = vsub.s32 %v6296, %v6299
        %vm6301 = vcmp.lt.s32.totalorder %v6300, 0
        %v6302 = vsub.s32 0, %v6300
        %v6303 = vsel %vm6301, %v6302, %v6300
        %v6304 = vclz %v6303
        %v6305 = vsub.s32 %v6304, 2
        %vm6306 = vcmp.gt.s32.totalorder 0, %v6305
        %v6307 = vsel %vm6306, 0, %v6305
        %v6308 = vsub.s32 32, %v6307
        %v6309 = vshll.u32 %v6300, %v6307
        %v6310 = vshrl.u32 %v6292, %v6308
        %v6311 = vor.u32 %v6309, %v6310
        %v6312 = vsub.s32 4294967266, %v6307
        %v6313 = vadd.s32 %v6312, 127
        %v6314 = vshll.u32 %v6313, 23
        %v6315 = vor.u32 4788187, %v6314
        %v6316 = vand.u32 2147483647, %v6315
        %v6318 = vcvt.s32.f32 %v6311
        %v6319 = vmul.f32 %v6318, %v6316
        %v6320 = vxor.u32 %v6319, 2147483648
        %v6321 = vsel %vm6238, %v6320, %v6319
        %v6322 = vsub.s32 4, %v6298
        %v6323 = vsel %vm6238, %v6322, %v6298
        %v6324 = vsel %vm6237, %v507, %v6321
        %v6325 = vsel %vm6237, 0, %v6323
        %v6326 = vcosq.f32.pop %v6324
        %v6327 = vsinq.f32.pop %v6324
        %vm6328 = vweird.f32 %v507
        %v6329 = vadd.s32 %v6325, 3
        %v6330 = vand.u32 %v6329, 3
        %vm6331 = vcmp.lt.s32.totalorder %v6330, 2
        %vm6332 = vcmp.eq.s32.totalorder %v6330, 0
        %v6333 = vxor.u32 %v6327, 2147483648
        %v6334 = vsel %vm6332, %v6326, %v6333
        %vm6335 = vcmp.eq.s32.totalorder %v6330, 2
        %v6336 = vxor.u32 %v6326, 2147483648
        %v6337 = vsel %vm6335, %v6336, %v6327
        %v6338 = vsel %vm6331, %v6334, %v6337
        %v6339 = vsel %vm6328, nan, %v6338
        %v6340 = vand.u32 2147483647, %v508
        %vm6341 = vcmp.le.f32.partialorder %v6340, 0.7853982
        %vm6342 = vcmp.lt.s32.totalorder %v508, 0
        %v6343 = vand.u32 %v508, 2139095040
        %v6344 = vshrl.u32 %v6343, 23
        %v6345 = vsub.s32 %v6344, 127
        %v6346 = vand.u32 2147483647, %v508
        %v6347 = vand.u32 %v6346, 8388607
        %v6348 = vor.u32 %v6347, 8388608
        %v6349 = vsub.s32 0, %v6348
        %v6350 = vadd.s32 %v6345, 1
        %vm6351 = vcmp.gt.s32.totalorder %v6350, 0
        %v6352 = vsel %vm6351, %v6350, 0
        %v6353 = vshrl.u32 %v6352, 5
        %v6354 = vand.u32 %v6352, 31
        %v6355 = vsub.s32 32, %v6354
        %v6356 = vshrl.u32 683565275, %v6355
        %v6357 = vshll.u32 683565275, %v6354
        %v6358 = vshrl.u32 2475754826, %v6355
        %v6359 = vor.u32 %v6357, %v6358
        %v6360 = vshll.u32 2475754826, %v6354
        %v6361 = vshrl.u32 2131351028, %v6355
        %v6362 = vor.u32 %v6360, %v6361
        %v6363 = vshll.u32 2131351028, %v6354
        %v6364 = vshrl.u32 2102212464, %v6355
        %v6365 = vor.u32 %v6363, %v6364
        %v6366 = vshll.u32 2102212464, %v6354
        %v6367 = vshrl.u32 920167782, %v6355
        %v6368 = vor.u32 %v6366, %v6367
        %v6369 = vshll.u32 920167782, %v6354
        %v6370 = vshrl.u32 1326507024, %v6355
        %v6371 = vor.u32 %v6369, %v6370
        %vm6372 = vcmp.lt.s32.totalorder %v6353, 1
        %vm6373 = vcmp.lt.s32.totalorder %v6353, 2
        %vm6374 = vcmp.lt.s32.totalorder %v6353, 3
        %vm6375 = vcmp.lt.s32.totalorder %v6353, 4
        %v6376 = vsel %vm6372, %v6356, %v6359
        %v6377 = vsel %vm6375, %v6365, 2102212464
        %v6378 = vsel %vm6374, %v6362, %v6377
        %v6379 = vsel %vm6373, %v6376, %v6378
        %v6380 = vsel %vm6372, %v6359, %v6362
        %v6381 = vsel %vm6375, %v6368, 920167782
        %v6382 = vsel %vm6374, %v6365, %v6381
        %v6383 = vsel %vm6373, %v6380, %v6382
        %v6384 = vsel %vm6372, %v6362, %v6365
        %v6385 = vsel %vm6375, %v6371, 1326507024
        %v6386 = vsel %vm6374, %v6368, %v6385
        %v6387 = vsel %vm6373, %v6384, %v6386
        %v6388 = vshll.u32 %v6348, 8
        %v6389 = vmul.u32.u64.compose %v6388, %v6387
        %v6390 = vextract.low.u32 %v6389
        %v6391 = vextract.high.u32 %v6389
        %v6392 = vmul.u32.u64.compose %v6388, %v6383
        %v6393 = vextract.low.u32 %v6392
        %v6394 = vextract.high.u32 %v6392
        %v6395 = vmul.u32 %v6388, %v6379
        %v6396 = vadd.s32 %v6391, %v6393
        %vm6397 = vc.u32 %v6391, %v6393
        %v6398 = vadd.s32 %v6394, 1
        %v6399 = vsel %vm6397, %v6398, %v6394
        %v6400 = vadd.s32 %v6395, %v6399
        %v6401 = vadd.s32 %v6400, 536870912
        %v6402 = vshrl.u32 %v6401, 30
        %v6403 = vshll.u32 %v6402, 30
        %v6404 = vsub.s32 %v6400, %v6403
        %vm6405 = vcmp.lt.s32.totalorder %v6404, 0
        %v6406 = vsub.s32 0, %v6404
        %v6407 = vsel %vm6405, %v6406, %v6404
        %v6408 = vclz %v6407
        %v6409 = vsub.s32 %v6408, 2
        %vm6410 = vcmp.gt.s32.totalorder 0, %v6409
        %v6411 = vsel %vm6410, 0, %v6409
        %v6412 = vsub.s32 32, %v6411
        %v6413 = vshll.u32 %v6404, %v6411
        %v6414 = vshrl.u32 %v6396, %v6412
        %v6415 = vor.u32 %v6413, %v6414
        %v6416 = vsub.s32 4294967266, %v6411
        %v6417 = vadd.s32 %v6416, 127
        %v6418 = vshll.u32 %v6417, 23
        %v6419 = vor.u32 4788187, %v6418
        %v6420 = vand.u32 2147483647, %v6419
        %v6422 = vcvt.s32.f32 %v6415
        %v6423 = vmul.f32 %v6422, %v6420
        %v6424 = vxor.u32 %v6423, 2147483648
        %v6425 = vsel %vm6342, %v6424, %v6423
        %v6426 = vsub.s32 4, %v6402
        %v6427 = vsel %vm6342, %v6426, %v6402
        %v6428 = vsel %vm6341, %v508, %v6425
        %v6429 = vsel %vm6341, 0, %v6427
        %v6430 = vcosq.f32.pop %v6428
        %v6431 = vsinq.f32.pop %v6428
        %vm6432 = vweird.f32 %v508
        %v6433 = vadd.s32 %v6429, 3
        %v6434 = vand.u32 %v6433, 3
        %vm6435 = vcmp.lt.s32.totalorder %v6434, 2
        %vm6436 = vcmp.eq.s32.totalorder %v6434, 0
        %v6437 = vxor.u32 %v6431, 2147483648
        %v6438 = vsel %vm6436, %v6430, %v6437
        %vm6439 = vcmp.eq.s32.totalorder %v6434, 2
        %v6440 = vxor.u32 %v6430, 2147483648
        %v6441 = vsel %vm6439, %v6440, %v6431
        %v6442 = vsel %vm6435, %v6438, %v6441
        %v6443 = vsel %vm6432, nan, %v6442
        %v6444 = vand.u32 2147483647, %v509
        %vm6445 = vcmp.le.f32.partialorder %v6444, 0.7853982
        %vm6446 = vcmp.lt.s32.totalorder %v509, 0
        %v6447 = vand.u32 %v509, 2139095040
        %v6448 = vshrl.u32 %v6447, 23
        %v6449 = vsub.s32 %v6448, 127
        %v6450 = vand.u32 2147483647, %v509
        %v6451 = vand.u32 %v6450, 8388607
        %v6452 = vor.u32 %v6451, 8388608
        %v6453 = vsub.s32 0, %v6452
        %v6454 = vadd.s32 %v6449, 1
        %vm6455 = vcmp.gt.s32.totalorder %v6454, 0
        %v6456 = vsel %vm6455, %v6454, 0
        %v6457 = vshrl.u32 %v6456, 5
        %v6458 = vand.u32 %v6456, 31
        %v6459 = vsub.s32 32, %v6458
        %v6460 = vshrl.u32 683565275, %v6459
        %v6461 = vshll.u32 683565275, %v6458
        %v6462 = vshrl.u32 2475754826, %v6459
        %v6463 = vor.u32 %v6461, %v6462
        %v6464 = vshll.u32 2475754826, %v6458
        %v6465 = vshrl.u32 2131351028, %v6459
        %v6466 = vor.u32 %v6464, %v6465
        %v6467 = vshll.u32 2131351028, %v6458
        %v6468 = vshrl.u32 2102212464, %v6459
        %v6469 = vor.u32 %v6467, %v6468
        %v6470 = vshll.u32 2102212464, %v6458
        %v6471 = vshrl.u32 920167782, %v6459
        %v6472 = vor.u32 %v6470, %v6471
        %v6473 = vshll.u32 920167782, %v6458
        %v6474 = vshrl.u32 1326507024, %v6459
        %v6475 = vor.u32 %v6473, %v6474
        %vm6476 = vcmp.lt.s32.totalorder %v6457, 1
        %vm6477 = vcmp.lt.s32.totalorder %v6457, 2
        %vm6478 = vcmp.lt.s32.totalorder %v6457, 3
        %vm6479 = vcmp.lt.s32.totalorder %v6457, 4
        %v6480 = vsel %vm6476, %v6460, %v6463
        %v6481 = vsel %vm6479, %v6469, 2102212464
        %v6482 = vsel %vm6478, %v6466, %v6481
        %v6483 = vsel %vm6477, %v6480, %v6482
        %v6484 = vsel %vm6476, %v6463, %v6466
        %v6485 = vsel %vm6479, %v6472, 920167782
        %v6486 = vsel %vm6478, %v6469, %v6485
        %v6487 = vsel %vm6477, %v6484, %v6486
        %v6488 = vsel %vm6476, %v6466, %v6469
        %v6489 = vsel %vm6479, %v6475, 1326507024
        %v6490 = vsel %vm6478, %v6472, %v6489
        %v6491 = vsel %vm6477, %v6488, %v6490
        %v6492 = vshll.u32 %v6452, 8
        %v6493 = vmul.u32.u64.compose %v6492, %v6491
        %v6494 = vextract.low.u32 %v6493
        %v6495 = vextract.high.u32 %v6493
        %v6496 = vmul.u32.u64.compose %v6492, %v6487
        %v6497 = vextract.low.u32 %v6496
        %v6498 = vextract.high.u32 %v6496
        %v6499 = vmul.u32 %v6492, %v6483
        %v6500 = vadd.s32 %v6495, %v6497
        %vm6501 = vc.u32 %v6495, %v6497
        %v6502 = vadd.s32 %v6498, 1
        %v6503 = vsel %vm6501, %v6502, %v6498
        %v6504 = vadd.s32 %v6499, %v6503
        %v6505 = vadd.s32 %v6504, 536870912
        %v6506 = vshrl.u32 %v6505, 30
        %v6507 = vshll.u32 %v6506, 30
        %v6508 = vsub.s32 %v6504, %v6507
        %vm6509 = vcmp.lt.s32.totalorder %v6508, 0
        %v6510 = vsub.s32 0, %v6508
        %v6511 = vsel %vm6509, %v6510, %v6508
        %v6512 = vclz %v6511
        %v6513 = vsub.s32 %v6512, 2
        %vm6514 = vcmp.gt.s32.totalorder 0, %v6513
        %v6515 = vsel %vm6514, 0, %v6513
        %v6516 = vsub.s32 32, %v6515
        %v6517 = vshll.u32 %v6508, %v6515
        %v6518 = vshrl.u32 %v6500, %v6516
        %v6519 = vor.u32 %v6517, %v6518
        %v6520 = vsub.s32 4294967266, %v6515
        %v6521 = vadd.s32 %v6520, 127
        %v6522 = vshll.u32 %v6521, 23
        %v6523 = vor.u32 4788187, %v6522
        %v6524 = vand.u32 2147483647, %v6523
        %v6526 = vcvt.s32.f32 %v6519
        %v6527 = vmul.f32 %v6526, %v6524
        %v6528 = vxor.u32 %v6527, 2147483648
        %v6529 = vsel %vm6446, %v6528, %v6527
        %v6530 = vsub.s32 4, %v6506
        %v6531 = vsel %vm6446, %v6530, %v6506
        %v6532 = vsel %vm6445, %v509, %v6529
        %v6533 = vsel %vm6445, 0, %v6531
        %v6534 = vcosq.f32.pop %v6532
        %v6535 = vsinq.f32.pop %v6532
        %vm6536 = vweird.f32 %v509
        %v6537 = vadd.s32 %v6533, 3
        %v6538 = vand.u32 %v6537, 3
        %vm6539 = vcmp.lt.s32.totalorder %v6538, 2
        %vm6540 = vcmp.eq.s32.totalorder %v6538, 0
        %v6541 = vxor.u32 %v6535, 2147483648
        %v6542 = vsel %vm6540, %v6534, %v6541
        %vm6543 = vcmp.eq.s32.totalorder %v6538, 2
        %v6544 = vxor.u32 %v6534, 2147483648
        %v6545 = vsel %vm6543, %v6544, %v6535
        %v6546 = vsel %vm6539, %v6542, %v6545
        %v6547 = vsel %vm6536, nan, %v6546
        %v6548 = vand.u32 2147483647, %v510
        %vm6549 = vcmp.le.f32.partialorder %v6548, 0.7853982
        %vm6550 = vcmp.lt.s32.totalorder %v510, 0
        %v6551 = vand.u32 %v510, 2139095040
        %v6552 = vshrl.u32 %v6551, 23
        %v6553 = vsub.s32 %v6552, 127
        %v6554 = vand.u32 2147483647, %v510
        %v6555 = vand.u32 %v6554, 8388607
        %v6556 = vor.u32 %v6555, 8388608
        %v6557 = vsub.s32 0, %v6556
        %v6558 = vadd.s32 %v6553, 1
        %vm6559 = vcmp.gt.s32.totalorder %v6558, 0
        %v6560 = vsel %vm6559, %v6558, 0
        %v6561 = vshrl.u32 %v6560, 5
        %v6562 = vand.u32 %v6560, 31
        %v6563 = vsub.s32 32, %v6562
        %v6564 = vshrl.u32 683565275, %v6563
        %v6565 = vshll.u32 683565275, %v6562
        %v6566 = vshrl.u32 2475754826, %v6563
        %v6567 = vor.u32 %v6565, %v6566
        %v6568 = vshll.u32 2475754826, %v6562
        %v6569 = vshrl.u32 2131351028, %v6563
        %v6570 = vor.u32 %v6568, %v6569
        %v6571 = vshll.u32 2131351028, %v6562
        %v6572 = vshrl.u32 2102212464, %v6563
        %v6573 = vor.u32 %v6571, %v6572
        %v6574 = vshll.u32 2102212464, %v6562
        %v6575 = vshrl.u32 920167782, %v6563
        %v6576 = vor.u32 %v6574, %v6575
        %v6577 = vshll.u32 920167782, %v6562
        %v6578 = vshrl.u32 1326507024, %v6563
        %v6579 = vor.u32 %v6577, %v6578
        %vm6580 = vcmp.lt.s32.totalorder %v6561, 1
        %vm6581 = vcmp.lt.s32.totalorder %v6561, 2
        %vm6582 = vcmp.lt.s32.totalorder %v6561, 3
        %vm6583 = vcmp.lt.s32.totalorder %v6561, 4
        %v6584 = vsel %vm6580, %v6564, %v6567
        %v6585 = vsel %vm6583, %v6573, 2102212464
        %v6586 = vsel %vm6582, %v6570, %v6585
        %v6587 = vsel %vm6581, %v6584, %v6586
        %v6588 = vsel %vm6580, %v6567, %v6570
        %v6589 = vsel %vm6583, %v6576, 920167782
        %v6590 = vsel %vm6582, %v6573, %v6589
        %v6591 = vsel %vm6581, %v6588, %v6590
        %v6592 = vsel %vm6580, %v6570, %v6573
        %v6593 = vsel %vm6583, %v6579, 1326507024
        %v6594 = vsel %vm6582, %v6576, %v6593
        %v6595 = vsel %vm6581, %v6592, %v6594
        %v6596 = vshll.u32 %v6556, 8
        %v6597 = vmul.u32.u64.compose %v6596, %v6595
        %v6598 = vextract.low.u32 %v6597
        %v6599 = vextract.high.u32 %v6597
        %v6600 = vmul.u32.u64.compose %v6596, %v6591
        %v6601 = vextract.low.u32 %v6600
        %v6602 = vextract.high.u32 %v6600
        %v6603 = vmul.u32 %v6596, %v6587
        %v6604 = vadd.s32 %v6599, %v6601
        %vm6605 = vc.u32 %v6599, %v6601
        %v6606 = vadd.s32 %v6602, 1
        %v6607 = vsel %vm6605, %v6606, %v6602
        %v6608 = vadd.s32 %v6603, %v6607
        %v6609 = vadd.s32 %v6608, 536870912
        %v6610 = vshrl.u32 %v6609, 30
        %v6611 = vshll.u32 %v6610, 30
        %v6612 = vsub.s32 %v6608, %v6611
        %vm6613 = vcmp.lt.s32.totalorder %v6612, 0
        %v6614 = vsub.s32 0, %v6612
        %v6615 = vsel %vm6613, %v6614, %v6612
        %v6616 = vclz %v6615
        %v6617 = vsub.s32 %v6616, 2
        %vm6618 = vcmp.gt.s32.totalorder 0, %v6617
        %v6619 = vsel %vm6618, 0, %v6617
        %v6620 = vsub.s32 32, %v6619
        %v6621 = vshll.u32 %v6612, %v6619
        %v6622 = vshrl.u32 %v6604, %v6620
        %v6623 = vor.u32 %v6621, %v6622
        %v6624 = vsub.s32 4294967266, %v6619
        %v6625 = vadd.s32 %v6624, 127
        %v6626 = vshll.u32 %v6625, 23
        %v6627 = vor.u32 4788187, %v6626
        %v6628 = vand.u32 2147483647, %v6627
        %v6630 = vcvt.s32.f32 %v6623
        %v6631 = vmul.f32 %v6630, %v6628
        %v6632 = vxor.u32 %v6631, 2147483648
        %v6633 = vsel %vm6550, %v6632, %v6631
        %v6634 = vsub.s32 4, %v6610
        %v6635 = vsel %vm6550, %v6634, %v6610
        %v6636 = vsel %vm6549, %v510, %v6633
        %v6637 = vsel %vm6549, 0, %v6635
        %v6638 = vcosq.f32.pop %v6636
        %v6639 = vsinq.f32.pop %v6636
        %vm6640 = vweird.f32 %v510
        %v6641 = vadd.s32 %v6637, 3
        %v6642 = vand.u32 %v6641, 3
        %vm6643 = vcmp.lt.s32.totalorder %v6642, 2
        %vm6644 = vcmp.eq.s32.totalorder %v6642, 0
        %v6645 = vxor.u32 %v6639, 2147483648
        %v6646 = vsel %vm6644, %v6638, %v6645
        %vm6647 = vcmp.eq.s32.totalorder %v6642, 2
        %v6648 = vxor.u32 %v6638, 2147483648
        %v6649 = vsel %vm6647, %v6648, %v6639
        %v6650 = vsel %vm6643, %v6646, %v6649
        %v6651 = vsel %vm6640, nan, %v6650
        %v6652 = vand.u32 2147483647, %v511
        %vm6653 = vcmp.le.f32.partialorder %v6652, 0.7853982
        %vm6654 = vcmp.lt.s32.totalorder %v511, 0
        %v6655 = vand.u32 %v511, 2139095040
        %v6656 = vshrl.u32 %v6655, 23
        %v6657 = vsub.s32 %v6656, 127
        %v6658 = vand.u32 2147483647, %v511
        %v6659 = vand.u32 %v6658, 8388607
        %v6660 = vor.u32 %v6659, 8388608
        %v6661 = vsub.s32 0, %v6660
        %v6662 = vadd.s32 %v6657, 1
        %vm6663 = vcmp.gt.s32.totalorder %v6662, 0
        %v6664 = vsel %vm6663, %v6662, 0
        %v6665 = vshrl.u32 %v6664, 5
        %v6666 = vand.u32 %v6664, 31
        %v6667 = vsub.s32 32, %v6666
        %v6668 = vshrl.u32 683565275, %v6667
        %v6669 = vshll.u32 683565275, %v6666
        %v6670 = vshrl.u32 2475754826, %v6667
        %v6671 = vor.u32 %v6669, %v6670
        %v6672 = vshll.u32 2475754826, %v6666
        %v6673 = vshrl.u32 2131351028, %v6667
        %v6674 = vor.u32 %v6672, %v6673
        %v6675 = vshll.u32 2131351028, %v6666
        %v6676 = vshrl.u32 2102212464, %v6667
        %v6677 = vor.u32 %v6675, %v6676
        %v6678 = vshll.u32 2102212464, %v6666
        %v6679 = vshrl.u32 920167782, %v6667
        %v6680 = vor.u32 %v6678, %v6679
        %v6681 = vshll.u32 920167782, %v6666
        %v6682 = vshrl.u32 1326507024, %v6667
        %v6683 = vor.u32 %v6681, %v6682
        %vm6684 = vcmp.lt.s32.totalorder %v6665, 1
        %vm6685 = vcmp.lt.s32.totalorder %v6665, 2
        %vm6686 = vcmp.lt.s32.totalorder %v6665, 3
        %vm6687 = vcmp.lt.s32.totalorder %v6665, 4
        %v6688 = vsel %vm6684, %v6668, %v6671
        %v6689 = vsel %vm6687, %v6677, 2102212464
        %v6690 = vsel %vm6686, %v6674, %v6689
        %v6691 = vsel %vm6685, %v6688, %v6690
        %v6692 = vsel %vm6684, %v6671, %v6674
        %v6693 = vsel %vm6687, %v6680, 920167782
        %v6694 = vsel %vm6686, %v6677, %v6693
        %v6695 = vsel %vm6685, %v6692, %v6694
        %v6696 = vsel %vm6684, %v6674, %v6677
        %v6697 = vsel %vm6687, %v6683, 1326507024
        %v6698 = vsel %vm6686, %v6680, %v6697
        %v6699 = vsel %vm6685, %v6696, %v6698
        %v6700 = vshll.u32 %v6660, 8
        %v6701 = vmul.u32.u64.compose %v6700, %v6699
        %v6702 = vextract.low.u32 %v6701
        %v6703 = vextract.high.u32 %v6701
        %v6704 = vmul.u32.u64.compose %v6700, %v6695
        %v6705 = vextract.low.u32 %v6704
        %v6706 = vextract.high.u32 %v6704
        %v6707 = vmul.u32 %v6700, %v6691
        %v6708 = vadd.s32 %v6703, %v6705
        %vm6709 = vc.u32 %v6703, %v6705
        %v6710 = vadd.s32 %v6706, 1
        %v6711 = vsel %vm6709, %v6710, %v6706
        %v6712 = vadd.s32 %v6707, %v6711
        %v6713 = vadd.s32 %v6712, 536870912
        %v6714 = vshrl.u32 %v6713, 30
        %v6715 = vshll.u32 %v6714, 30
        %v6716 = vsub.s32 %v6712, %v6715
        %vm6717 = vcmp.lt.s32.totalorder %v6716, 0
        %v6718 = vsub.s32 0, %v6716
        %v6719 = vsel %vm6717, %v6718, %v6716
        %v6720 = vclz %v6719
        %v6721 = vsub.s32 %v6720, 2
        %vm6722 = vcmp.gt.s32.totalorder 0, %v6721
        %v6723 = vsel %vm6722, 0, %v6721
        %v6724 = vsub.s32 32, %v6723
        %v6725 = vshll.u32 %v6716, %v6723
        %v6726 = vshrl.u32 %v6708, %v6724
        %v6727 = vor.u32 %v6725, %v6726
        %v6728 = vsub.s32 4294967266, %v6723
        %v6729 = vadd.s32 %v6728, 127
        %v6730 = vshll.u32 %v6729, 23
        %v6731 = vor.u32 4788187, %v6730
        %v6732 = vand.u32 2147483647, %v6731
        %v6734 = vcvt.s32.f32 %v6727
        %v6735 = vmul.f32 %v6734, %v6732
        %v6736 = vxor.u32 %v6735, 2147483648
        %v6737 = vsel %vm6654, %v6736, %v6735
        %v6738 = vsub.s32 4, %v6714
        %v6739 = vsel %vm6654, %v6738, %v6714
        %v6740 = vsel %vm6653, %v511, %v6737
        %v6741 = vsel %vm6653, 0, %v6739
        %v6742 = vcosq.f32.pop %v6740
        %v6743 = vsinq.f32.pop %v6740
        %vm6744 = vweird.f32 %v511
        %v6745 = vadd.s32 %v6741, 3
        %v6746 = vand.u32 %v6745, 3
        %vm6747 = vcmp.lt.s32.totalorder %v6746, 2
        %vm6748 = vcmp.eq.s32.totalorder %v6746, 0
        %v6749 = vxor.u32 %v6743, 2147483648
        %v6750 = vsel %vm6748, %v6742, %v6749
        %vm6751 = vcmp.eq.s32.totalorder %v6746, 2
        %v6752 = vxor.u32 %v6742, 2147483648
        %v6753 = vsel %vm6751, %v6752, %v6743
        %v6754 = vsel %vm6747, %v6750, %v6753
        %v6755 = vsel %vm6744, nan, %v6754
        %v6756 = vand.u32 2147483647, %v512
        %vm6757 = vcmp.le.f32.partialorder %v6756, 0.7853982
        %vm6758 = vcmp.lt.s32.totalorder %v512, 0
        %v6759 = vand.u32 %v512, 2139095040
        %v6760 = vshrl.u32 %v6759, 23
        %v6761 = vsub.s32 %v6760, 127
        %v6762 = vand.u32 2147483647, %v512
        %v6763 = vand.u32 %v6762, 8388607
        %v6764 = vor.u32 %v6763, 8388608
        %v6765 = vsub.s32 0, %v6764
        %v6766 = vadd.s32 %v6761, 1
        %vm6767 = vcmp.gt.s32.totalorder %v6766, 0
        %v6768 = vsel %vm6767, %v6766, 0
        %v6769 = vshrl.u32 %v6768, 5
        %v6770 = vand.u32 %v6768, 31
        %v6771 = vsub.s32 32, %v6770
        %v6772 = vshrl.u32 683565275, %v6771
        %v6773 = vshll.u32 683565275, %v6770
        %v6774 = vshrl.u32 2475754826, %v6771
        %v6775 = vor.u32 %v6773, %v6774
        %v6776 = vshll.u32 2475754826, %v6770
        %v6777 = vshrl.u32 2131351028, %v6771
        %v6778 = vor.u32 %v6776, %v6777
        %v6779 = vshll.u32 2131351028, %v6770
        %v6780 = vshrl.u32 2102212464, %v6771
        %v6781 = vor.u32 %v6779, %v6780
        %v6782 = vshll.u32 2102212464, %v6770
        %v6783 = vshrl.u32 920167782, %v6771
        %v6784 = vor.u32 %v6782, %v6783
        %v6785 = vshll.u32 920167782, %v6770
        %v6786 = vshrl.u32 1326507024, %v6771
        %v6787 = vor.u32 %v6785, %v6786
        %vm6788 = vcmp.lt.s32.totalorder %v6769, 1
        %vm6789 = vcmp.lt.s32.totalorder %v6769, 2
        %vm6790 = vcmp.lt.s32.totalorder %v6769, 3
        %vm6791 = vcmp.lt.s32.totalorder %v6769, 4
        %v6792 = vsel %vm6788, %v6772, %v6775
        %v6793 = vsel %vm6791, %v6781, 2102212464
        %v6794 = vsel %vm6790, %v6778, %v6793
        %v6795 = vsel %vm6789, %v6792, %v6794
        %v6796 = vsel %vm6788, %v6775, %v6778
        %v6797 = vsel %vm6791, %v6784, 920167782
        %v6798 = vsel %vm6790, %v6781, %v6797
        %v6799 = vsel %vm6789, %v6796, %v6798
        %v6800 = vsel %vm6788, %v6778, %v6781
        %v6801 = vsel %vm6791, %v6787, 1326507024
        %v6802 = vsel %vm6790, %v6784, %v6801
        %v6803 = vsel %vm6789, %v6800, %v6802
        %v6804 = vshll.u32 %v6764, 8
        %v6805 = vmul.u32.u64.compose %v6804, %v6803
        %v6806 = vextract.low.u32 %v6805
        %v6807 = vextract.high.u32 %v6805
        %v6808 = vmul.u32.u64.compose %v6804, %v6799
        %v6809 = vextract.low.u32 %v6808
        %v6810 = vextract.high.u32 %v6808
        %v6811 = vmul.u32 %v6804, %v6795
        %v6812 = vadd.s32 %v6807, %v6809
        %vm6813 = vc.u32 %v6807, %v6809
        %v6814 = vadd.s32 %v6810, 1
        %v6815 = vsel %vm6813, %v6814, %v6810
        %v6816 = vadd.s32 %v6811, %v6815
        %v6817 = vadd.s32 %v6816, 536870912
        %v6818 = vshrl.u32 %v6817, 30
        %v6819 = vshll.u32 %v6818, 30
        %v6820 = vsub.s32 %v6816, %v6819
        %vm6821 = vcmp.lt.s32.totalorder %v6820, 0
        %v6822 = vsub.s32 0, %v6820
        %v6823 = vsel %vm6821, %v6822, %v6820
        %v6824 = vclz %v6823
        %v6825 = vsub.s32 %v6824, 2
        %vm6826 = vcmp.gt.s32.totalorder 0, %v6825
        %v6827 = vsel %vm6826, 0, %v6825
        %v6828 = vsub.s32 32, %v6827
        %v6829 = vshll.u32 %v6820, %v6827
        %v6830 = vshrl.u32 %v6812, %v6828
        %v6831 = vor.u32 %v6829, %v6830
        %v6832 = vsub.s32 4294967266, %v6827
        %v6833 = vadd.s32 %v6832, 127
        %v6834 = vshll.u32 %v6833, 23
        %v6835 = vor.u32 4788187, %v6834
        %v6836 = vand.u32 2147483647, %v6835
        %v6838 = vcvt.s32.f32 %v6831
        %v6839 = vmul.f32 %v6838, %v6836
        %v6840 = vxor.u32 %v6839, 2147483648
        %v6841 = vsel %vm6758, %v6840, %v6839
        %v6842 = vsub.s32 4, %v6818
        %v6843 = vsel %vm6758, %v6842, %v6818
        %v6844 = vsel %vm6757, %v512, %v6841
        %v6845 = vsel %vm6757, 0, %v6843
        %v6846 = vcosq.f32.pop %v6844
        %v6847 = vsinq.f32.pop %v6844
        %vm6848 = vweird.f32 %v512
        %v6849 = vadd.s32 %v6845, 3
        %v6850 = vand.u32 %v6849, 3
        %vm6851 = vcmp.lt.s32.totalorder %v6850, 2
        %vm6852 = vcmp.eq.s32.totalorder %v6850, 0
        %v6853 = vxor.u32 %v6847, 2147483648
        %v6854 = vsel %vm6852, %v6846, %v6853
        %vm6855 = vcmp.eq.s32.totalorder %v6850, 2
        %v6856 = vxor.u32 %v6846, 2147483648
        %v6857 = vsel %vm6855, %v6856, %v6847
        %v6858 = vsel %vm6851, %v6854, %v6857
        %v6859 = vsel %vm6848, nan, %v6858
        %v6860 = vand.u32 2147483647, %v513
        %vm6861 = vcmp.le.f32.partialorder %v6860, 0.7853982
        %vm6862 = vcmp.lt.s32.totalorder %v513, 0
        %v6863 = vand.u32 %v513, 2139095040
        %v6864 = vshrl.u32 %v6863, 23
        %v6865 = vsub.s32 %v6864, 127
        %v6866 = vand.u32 2147483647, %v513
        %v6867 = vand.u32 %v6866, 8388607
        %v6868 = vor.u32 %v6867, 8388608
        %v6869 = vsub.s32 0, %v6868
        %v6870 = vadd.s32 %v6865, 1
        %vm6871 = vcmp.gt.s32.totalorder %v6870, 0
        %v6872 = vsel %vm6871, %v6870, 0
        %v6873 = vshrl.u32 %v6872, 5
        %v6874 = vand.u32 %v6872, 31
        %v6875 = vsub.s32 32, %v6874
        %v6876 = vshrl.u32 683565275, %v6875
        %v6877 = vshll.u32 683565275, %v6874
        %v6878 = vshrl.u32 2475754826, %v6875
        %v6879 = vor.u32 %v6877, %v6878
        %v6880 = vshll.u32 2475754826, %v6874
        %v6881 = vshrl.u32 2131351028, %v6875
        %v6882 = vor.u32 %v6880, %v6881
        %v6883 = vshll.u32 2131351028, %v6874
        %v6884 = vshrl.u32 2102212464, %v6875
        %v6885 = vor.u32 %v6883, %v6884
        %v6886 = vshll.u32 2102212464, %v6874
        %v6887 = vshrl.u32 920167782, %v6875
        %v6888 = vor.u32 %v6886, %v6887
        %v6889 = vshll.u32 920167782, %v6874
        %v6890 = vshrl.u32 1326507024, %v6875
        %v6891 = vor.u32 %v6889, %v6890
        %vm6892 = vcmp.lt.s32.totalorder %v6873, 1
        %vm6893 = vcmp.lt.s32.totalorder %v6873, 2
        %vm6894 = vcmp.lt.s32.totalorder %v6873, 3
        %vm6895 = vcmp.lt.s32.totalorder %v6873, 4
        %v6896 = vsel %vm6892, %v6876, %v6879
        %v6897 = vsel %vm6895, %v6885, 2102212464
        %v6898 = vsel %vm6894, %v6882, %v6897
        %v6899 = vsel %vm6893, %v6896, %v6898
        %v6900 = vsel %vm6892, %v6879, %v6882
        %v6901 = vsel %vm6895, %v6888, 920167782
        %v6902 = vsel %vm6894, %v6885, %v6901
        %v6903 = vsel %vm6893, %v6900, %v6902
        %v6904 = vsel %vm6892, %v6882, %v6885
        %v6905 = vsel %vm6895, %v6891, 1326507024
        %v6906 = vsel %vm6894, %v6888, %v6905
        %v6907 = vsel %vm6893, %v6904, %v6906
        %v6908 = vshll.u32 %v6868, 8
        %v6909 = vmul.u32.u64.compose %v6908, %v6907
        %v6910 = vextract.low.u32 %v6909
        %v6911 = vextract.high.u32 %v6909
        %v6912 = vmul.u32.u64.compose %v6908, %v6903
        %v6913 = vextract.low.u32 %v6912
        %v6914 = vextract.high.u32 %v6912
        %v6915 = vmul.u32 %v6908, %v6899
        %v6916 = vadd.s32 %v6911, %v6913
        %vm6917 = vc.u32 %v6911, %v6913
        %v6918 = vadd.s32 %v6914, 1
        %v6919 = vsel %vm6917, %v6918, %v6914
        %v6920 = vadd.s32 %v6915, %v6919
        %v6921 = vadd.s32 %v6920, 536870912
        %v6922 = vshrl.u32 %v6921, 30
        %v6923 = vshll.u32 %v6922, 30
        %v6924 = vsub.s32 %v6920, %v6923
        %vm6925 = vcmp.lt.s32.totalorder %v6924, 0
        %v6926 = vsub.s32 0, %v6924
        %v6927 = vsel %vm6925, %v6926, %v6924
        %v6928 = vclz %v6927
        %v6929 = vsub.s32 %v6928, 2
        %vm6930 = vcmp.gt.s32.totalorder 0, %v6929
        %v6931 = vsel %vm6930, 0, %v6929
        %v6932 = vsub.s32 32, %v6931
        %v6933 = vshll.u32 %v6924, %v6931
        %v6934 = vshrl.u32 %v6916, %v6932
        %v6935 = vor.u32 %v6933, %v6934
        %v6936 = vsub.s32 4294967266, %v6931
        %v6937 = vadd.s32 %v6936, 127
        %v6938 = vshll.u32 %v6937, 23
        %v6939 = vor.u32 4788187, %v6938
        %v6940 = vand.u32 2147483647, %v6939
        %v6942 = vcvt.s32.f32 %v6935
        %v6943 = vmul.f32 %v6942, %v6940
        %v6944 = vxor.u32 %v6943, 2147483648
        %v6945 = vsel %vm6862, %v6944, %v6943
        %v6946 = vsub.s32 4, %v6922
        %v6947 = vsel %vm6862, %v6946, %v6922
        %v6948 = vsel %vm6861, %v513, %v6945
        %v6949 = vsel %vm6861, 0, %v6947
        %v6950 = vcosq.f32.pop %v6948
        %v6951 = vsinq.f32.pop %v6948
        %vm6952 = vweird.f32 %v513
        %v6953 = vadd.s32 %v6949, 3
        %v6954 = vand.u32 %v6953, 3
        %vm6955 = vcmp.lt.s32.totalorder %v6954, 2
        %vm6956 = vcmp.eq.s32.totalorder %v6954, 0
        %v6957 = vxor.u32 %v6951, 2147483648
        %v6958 = vsel %vm6956, %v6950, %v6957
        %vm6959 = vcmp.eq.s32.totalorder %v6954, 2
        %v6960 = vxor.u32 %v6950, 2147483648
        %v6961 = vsel %vm6959, %v6960, %v6951
        %v6962 = vsel %vm6955, %v6958, %v6961
        %v6963 = vsel %vm6952, nan, %v6962
        %v6964 = vand.u32 2147483647, %v514
        %vm6965 = vcmp.le.f32.partialorder %v6964, 0.7853982
        %vm6966 = vcmp.lt.s32.totalorder %v514, 0
        %v6967 = vand.u32 %v514, 2139095040
        %v6968 = vshrl.u32 %v6967, 23
        %v6969 = vsub.s32 %v6968, 127
        %v6970 = vand.u32 2147483647, %v514
        %v6971 = vand.u32 %v6970, 8388607
        %v6972 = vor.u32 %v6971, 8388608
        %v6973 = vsub.s32 0, %v6972
        %v6974 = vadd.s32 %v6969, 1
        %vm6975 = vcmp.gt.s32.totalorder %v6974, 0
        %v6976 = vsel %vm6975, %v6974, 0
        %v6977 = vshrl.u32 %v6976, 5
        %v6978 = vand.u32 %v6976, 31
        %v6979 = vsub.s32 32, %v6978
        %v6980 = vshrl.u32 683565275, %v6979
        %v6981 = vshll.u32 683565275, %v6978
        %v6982 = vshrl.u32 2475754826, %v6979
        %v6983 = vor.u32 %v6981, %v6982
        %v6984 = vshll.u32 2475754826, %v6978
        %v6985 = vshrl.u32 2131351028, %v6979
        %v6986 = vor.u32 %v6984, %v6985
        %v6987 = vshll.u32 2131351028, %v6978
        %v6988 = vshrl.u32 2102212464, %v6979
        %v6989 = vor.u32 %v6987, %v6988
        %v6990 = vshll.u32 2102212464, %v6978
        %v6991 = vshrl.u32 920167782, %v6979
        %v6992 = vor.u32 %v6990, %v6991
        %v6993 = vshll.u32 920167782, %v6978
        %v6994 = vshrl.u32 1326507024, %v6979
        %v6995 = vor.u32 %v6993, %v6994
        %vm6996 = vcmp.lt.s32.totalorder %v6977, 1
        %vm6997 = vcmp.lt.s32.totalorder %v6977, 2
        %vm6998 = vcmp.lt.s32.totalorder %v6977, 3
        %vm6999 = vcmp.lt.s32.totalorder %v6977, 4
        %v7000 = vsel %vm6996, %v6980, %v6983
        %v7001 = vsel %vm6999, %v6989, 2102212464
        %v7002 = vsel %vm6998, %v6986, %v7001
        %v7003 = vsel %vm6997, %v7000, %v7002
        %v7004 = vsel %vm6996, %v6983, %v6986
        %v7005 = vsel %vm6999, %v6992, 920167782
        %v7006 = vsel %vm6998, %v6989, %v7005
        %v7007 = vsel %vm6997, %v7004, %v7006
        %v7008 = vsel %vm6996, %v6986, %v6989
        %v7009 = vsel %vm6999, %v6995, 1326507024
        %v7010 = vsel %vm6998, %v6992, %v7009
        %v7011 = vsel %vm6997, %v7008, %v7010
        %v7012 = vshll.u32 %v6972, 8
        %v7013 = vmul.u32.u64.compose %v7012, %v7011
        %v7014 = vextract.low.u32 %v7013
        %v7015 = vextract.high.u32 %v7013
        %v7016 = vmul.u32.u64.compose %v7012, %v7007
        %v7017 = vextract.low.u32 %v7016
        %v7018 = vextract.high.u32 %v7016
        %v7019 = vmul.u32 %v7012, %v7003
        %v7020 = vadd.s32 %v7015, %v7017
        %vm7021 = vc.u32 %v7015, %v7017
        %v7022 = vadd.s32 %v7018, 1
        %v7023 = vsel %vm7021, %v7022, %v7018
        %v7024 = vadd.s32 %v7019, %v7023
        %v7025 = vadd.s32 %v7024, 536870912
        %v7026 = vshrl.u32 %v7025, 30
        %v7027 = vshll.u32 %v7026, 30
        %v7028 = vsub.s32 %v7024, %v7027
        %vm7029 = vcmp.lt.s32.totalorder %v7028, 0
        %v7030 = vsub.s32 0, %v7028
        %v7031 = vsel %vm7029, %v7030, %v7028
        %v7032 = vclz %v7031
        %v7033 = vsub.s32 %v7032, 2
        %vm7034 = vcmp.gt.s32.totalorder 0, %v7033
        %v7035 = vsel %vm7034, 0, %v7033
        %v7036 = vsub.s32 32, %v7035
        %v7037 = vshll.u32 %v7028, %v7035
        %v7038 = vshrl.u32 %v7020, %v7036
        %v7039 = vor.u32 %v7037, %v7038
        %v7040 = vsub.s32 4294967266, %v7035
        %v7041 = vadd.s32 %v7040, 127
        %v7042 = vshll.u32 %v7041, 23
        %v7043 = vor.u32 4788187, %v7042
        %v7044 = vand.u32 2147483647, %v7043
        %v7046 = vcvt.s32.f32 %v7039
        %v7047 = vmul.f32 %v7046, %v7044
        %v7048 = vxor.u32 %v7047, 2147483648
        %v7049 = vsel %vm6966, %v7048, %v7047
        %v7050 = vsub.s32 4, %v7026
        %v7051 = vsel %vm6966, %v7050, %v7026
        %v7052 = vsel %vm6965, %v514, %v7049
        %v7053 = vsel %vm6965, 0, %v7051
        %v7054 = vcosq.f32.pop %v7052
        %v7055 = vsinq.f32.pop %v7052
        %vm7056 = vweird.f32 %v514
        %v7057 = vadd.s32 %v7053, 3
        %v7058 = vand.u32 %v7057, 3
        %vm7059 = vcmp.lt.s32.totalorder %v7058, 2
        %vm7060 = vcmp.eq.s32.totalorder %v7058, 0
        %v7061 = vxor.u32 %v7055, 2147483648
        %v7062 = vsel %vm7060, %v7054, %v7061
        %vm7063 = vcmp.eq.s32.totalorder %v7058, 2
        %v7064 = vxor.u32 %v7054, 2147483648
        %v7065 = vsel %vm7063, %v7064, %v7055
        %v7066 = vsel %vm7059, %v7062, %v7065
        %v7067 = vsel %vm7056, nan, %v7066
        %v7068 = vand.u32 2147483647, %v515
        %vm7069 = vcmp.le.f32.partialorder %v7068, 0.7853982
        %vm7070 = vcmp.lt.s32.totalorder %v515, 0
        %v7071 = vand.u32 %v515, 2139095040
        %v7072 = vshrl.u32 %v7071, 23
        %v7073 = vsub.s32 %v7072, 127
        %v7074 = vand.u32 2147483647, %v515
        %v7075 = vand.u32 %v7074, 8388607
        %v7076 = vor.u32 %v7075, 8388608
        %v7077 = vsub.s32 0, %v7076
        %v7078 = vadd.s32 %v7073, 1
        %vm7079 = vcmp.gt.s32.totalorder %v7078, 0
        %v7080 = vsel %vm7079, %v7078, 0
        %v7081 = vshrl.u32 %v7080, 5
        %v7082 = vand.u32 %v7080, 31
        %v7083 = vsub.s32 32, %v7082
        %v7084 = vshrl.u32 683565275, %v7083
        %v7085 = vshll.u32 683565275, %v7082
        %v7086 = vshrl.u32 2475754826, %v7083
        %v7087 = vor.u32 %v7085, %v7086
        %v7088 = vshll.u32 2475754826, %v7082
        %v7089 = vshrl.u32 2131351028, %v7083
        %v7090 = vor.u32 %v7088, %v7089
        %v7091 = vshll.u32 2131351028, %v7082
        %v7092 = vshrl.u32 2102212464, %v7083
        %v7093 = vor.u32 %v7091, %v7092
        %v7094 = vshll.u32 2102212464, %v7082
        %v7095 = vshrl.u32 920167782, %v7083
        %v7096 = vor.u32 %v7094, %v7095
        %v7097 = vshll.u32 920167782, %v7082
        %v7098 = vshrl.u32 1326507024, %v7083
        %v7099 = vor.u32 %v7097, %v7098
        %vm7100 = vcmp.lt.s32.totalorder %v7081, 1
        %vm7101 = vcmp.lt.s32.totalorder %v7081, 2
        %vm7102 = vcmp.lt.s32.totalorder %v7081, 3
        %vm7103 = vcmp.lt.s32.totalorder %v7081, 4
        %v7104 = vsel %vm7100, %v7084, %v7087
        %v7105 = vsel %vm7103, %v7093, 2102212464
        %v7106 = vsel %vm7102, %v7090, %v7105
        %v7107 = vsel %vm7101, %v7104, %v7106
        %v7108 = vsel %vm7100, %v7087, %v7090
        %v7109 = vsel %vm7103, %v7096, 920167782
        %v7110 = vsel %vm7102, %v7093, %v7109
        %v7111 = vsel %vm7101, %v7108, %v7110
        %v7112 = vsel %vm7100, %v7090, %v7093
        %v7113 = vsel %vm7103, %v7099, 1326507024
        %v7114 = vsel %vm7102, %v7096, %v7113
        %v7115 = vsel %vm7101, %v7112, %v7114
        %v7116 = vshll.u32 %v7076, 8
        %v7117 = vmul.u32.u64.compose %v7116, %v7115
        %v7118 = vextract.low.u32 %v7117
        %v7119 = vextract.high.u32 %v7117
        %v7120 = vmul.u32.u64.compose %v7116, %v7111
        %v7121 = vextract.low.u32 %v7120
        %v7122 = vextract.high.u32 %v7120
        %v7123 = vmul.u32 %v7116, %v7107
        %v7124 = vadd.s32 %v7119, %v7121
        %vm7125 = vc.u32 %v7119, %v7121
        %v7126 = vadd.s32 %v7122, 1
        %v7127 = vsel %vm7125, %v7126, %v7122
        %v7128 = vadd.s32 %v7123, %v7127
        %v7129 = vadd.s32 %v7128, 536870912
        %v7130 = vshrl.u32 %v7129, 30
        %v7131 = vshll.u32 %v7130, 30
        %v7132 = vsub.s32 %v7128, %v7131
        %vm7133 = vcmp.lt.s32.totalorder %v7132, 0
        %v7134 = vsub.s32 0, %v7132
        %v7135 = vsel %vm7133, %v7134, %v7132
        %v7136 = vclz %v7135
        %v7137 = vsub.s32 %v7136, 2
        %vm7138 = vcmp.gt.s32.totalorder 0, %v7137
        %v7139 = vsel %vm7138, 0, %v7137
        %v7140 = vsub.s32 32, %v7139
        %v7141 = vshll.u32 %v7132, %v7139
        %v7142 = vshrl.u32 %v7124, %v7140
        %v7143 = vor.u32 %v7141, %v7142
        %v7144 = vsub.s32 4294967266, %v7139
        %v7145 = vadd.s32 %v7144, 127
        %v7146 = vshll.u32 %v7145, 23
        %v7147 = vor.u32 4788187, %v7146
        %v7148 = vand.u32 2147483647, %v7147
        %v7150 = vcvt.s32.f32 %v7143
        %v7151 = vmul.f32 %v7150, %v7148
        %v7152 = vxor.u32 %v7151, 2147483648
        %v7153 = vsel %vm7070, %v7152, %v7151
        %v7154 = vsub.s32 4, %v7130
        %v7155 = vsel %vm7070, %v7154, %v7130
        %v7156 = vsel %vm7069, %v515, %v7153
        %v7157 = vsel %vm7069, 0, %v7155
        %v7158 = vcosq.f32.pop %v7156
        %v7159 = vsinq.f32.pop %v7156
        %vm7160 = vweird.f32 %v515
        %v7161 = vadd.s32 %v7157, 3
        %v7162 = vand.u32 %v7161, 3
        %vm7163 = vcmp.lt.s32.totalorder %v7162, 2
        %vm7164 = vcmp.eq.s32.totalorder %v7162, 0
        %v7165 = vxor.u32 %v7159, 2147483648
        %v7166 = vsel %vm7164, %v7158, %v7165
        %vm7167 = vcmp.eq.s32.totalorder %v7162, 2
        %v7168 = vxor.u32 %v7158, 2147483648
        %v7169 = vsel %vm7167, %v7168, %v7159
        %v7170 = vsel %vm7163, %v7166, %v7169
        %v7171 = vsel %vm7160, nan, %v7170
        %7172 = vst [vmem:[%s164] sm:$0xff] %v619
        %7173 = vst [vmem:[%s164 + $0x8] sm:$0xff] %v723
        %7174 = vst [vmem:[%s164 + $0x10] sm:$0xff] %v827
        %7175 = vst [vmem:[%s164 + $0x18] sm:$0xff] %v931
        %7176 = vst [vmem:[%s164 + $0x20] sm:$0xff] %v1035
        %7177 = vst [vmem:[%s164 + $0x28] sm:$0xff] %v1139
        %7178 = vst [vmem:[%s164 + $0x30] sm:$0xff] %v1243
        %7179 = vst [vmem:[%s164 + $0x38] sm:$0xff] %v1347
        %7180 = vst [vmem:[%s164 + $0x40] sm:$0xff] %v1451
        %7181 = vst [vmem:[%s164 + $0x48] sm:$0xff] %v1555
        %7182 = vst [vmem:[%s164 + $0x50] sm:$0xff] %v1659
        %7183 = vst [vmem:[%s164 + $0x58] sm:$0xff] %v1763
        %7184 = vst [vmem:[%s164 + $0x60] sm:$0xff] %v1867
        %7185 = vst [vmem:[%s164 + $0x68] sm:$0xff] %v1971
        %7186 = vst [vmem:[%s164 + $0x70] sm:$0xff] %v2075
        %7187 = vst [vmem:[%s164 + $0x78] sm:$0xff] %v2179
        %7188 = vst [vmem:[%s164 + $0x80] sm:$0xff] %v2283
        %7189 = vst [vmem:[%s164 + $0x88] sm:$0xff] %v2387
        %7190 = vst [vmem:[%s164 + $0x90] sm:$0xff] %v2491
        %7191 = vst [vmem:[%s164 + $0x98] sm:$0xff] %v2595
        %7192 = vst [vmem:[%s164 + $0xa0] sm:$0xff] %v2699
        %7193 = vst [vmem:[%s164 + $0xa8] sm:$0xff] %v2803
        %7194 = vst [vmem:[%s164 + $0xb0] sm:$0xff] %v2907
        %7195 = vst [vmem:[%s164 + $0xb8] sm:$0xff] %v3011
        %7196 = vst [vmem:[%s164 + $0xc0] sm:$0xff] %v3115
        %7197 = vst [vmem:[%s164 + $0xc8] sm:$0xff] %v3219
        %7198 = vst [vmem:[%s164 + $0xd0] sm:$0xff] %v3323
        %7199 = vst [vmem:[%s164 + $0xd8] sm:$0xff] %v3427
        %7200 = vst [vmem:[%s164 + $0xe0] sm:$0xff] %v3531
        %7201 = vst [vmem:[%s164 + $0xe8] sm:$0xff] %v3635
        %7202 = vst [vmem:[%s164 + $0xf0] sm:$0xff] %v3739
        %7203 = vst [vmem:[%s164 + $0xf8] sm:$0xff] %v3843
        %7204 = vst [vmem:[%s164 + $0x100] sm:$0xff] %v3947
        %7205 = vst [vmem:[%s164 + $0x108] sm:$0xff] %v4051
        %7206 = vst [vmem:[%s164 + $0x110] sm:$0xff] %v4155
        %7207 = vst [vmem:[%s164 + $0x118] sm:$0xff] %v4259
        %7208 = vst [vmem:[%s164 + $0x120] sm:$0xff] %v4363
        %7209 = vst [vmem:[%s164 + $0x128] sm:$0xff] %v4467
        %7210 = vst [vmem:[%s164 + $0x130] sm:$0xff] %v4571
        %7211 = vst [vmem:[%s164 + $0x138] sm:$0xff] %v4675
        %7212 = vst [vmem:[%s164 + $0x140] sm:$0xff] %v4779
        %7213 = vst [vmem:[%s164 + $0x148] sm:$0xff] %v4883
        %7214 = vst [vmem:[%s164 + $0x150] sm:$0xff] %v4987
        %7215 = vst [vmem:[%s164 + $0x158] sm:$0xff] %v5091
        %7216 = vst [vmem:[%s164 + $0x160] sm:$0xff] %v5195
        %7217 = vst [vmem:[%s164 + $0x168] sm:$0xff] %v5299
        %7218 = vst [vmem:[%s164 + $0x170] sm:$0xff] %v5403
        %7219 = vst [vmem:[%s164 + $0x178] sm:$0xff] %v5507
        %7220 = vst [vmem:[%s164 + $0x180] sm:$0xff] %v5611
        %7221 = vst [vmem:[%s164 + $0x188] sm:$0xff] %v5715
        %7222 = vst [vmem:[%s164 + $0x190] sm:$0xff] %v5819
        %7223 = vst [vmem:[%s164 + $0x198] sm:$0xff] %v5923
        %7224 = vst [vmem:[%s164 + $0x1a0] sm:$0xff] %v6027
        %7225 = vst [vmem:[%s164 + $0x1a8] sm:$0xff] %v6131
        %7226 = vst [vmem:[%s164 + $0x1b0] sm:$0xff] %v6235
        %7227 = vst [vmem:[%s164 + $0x1b8] sm:$0xff] %v6339
        %7228 = vst [vmem:[%s164 + $0x1c0] sm:$0xff] %v6443
        %7229 = vst [vmem:[%s164 + $0x1c8] sm:$0xff] %v6547
        %7230 = vst [vmem:[%s164 + $0x1d0] sm:$0xff] %v6651
        %7231 = vst [vmem:[%s164 + $0x1d8] sm:$0xff] %v6755
        %7232 = vst [vmem:[%s164 + $0x1e0] sm:$0xff] %v6859
        %7233 = vst [vmem:[%s164 + $0x1e8] sm:$0xff] %v6963
        %7234 = vst [vmem:[%s164 + $0x1f0] sm:$0xff] %v7067
        %7235 = vst [vmem:[%s164 + $0x1f8] sm:$0xff] %v7171
        %s7236 = sand.u32 %s93, 1
        %s7237 = scalar_lea.sflag [#allocation3], %s7236
        %s7238 = sand.u32 %s93, 1
        %s7239 = smul.addr %s7238, 512
        %s7240 = scalar_lea.vmem [#allocation2], %s7239
        // Predicated region
        $region33: #{tpu_custom_call.1} parent=31 // pred_check
          %p7241 = pneg %p103
        $region34: #{tpu_custom_call.1} parent=31 // pred_check_branch
          %7243 = sbr.rel (%p7241) target = $region36
        $region35: #{tpu_custom_call.1} parent=31 // pred_region
          %s7244 = smul.u32 32, %s17
          %s7246 = ssub.s32 8192, 8192
          %7247 = vsyncadd %s7237, %s7246
          %s7248 = smul.addr %s7244, 2
          %s7249 = smul.addr %s7248, 128
          %s7250 = scalar_lea.hbm %s3, %s7249
          %s7251 = sshll.u32 %s7240, 4
          %s7252 = int_to_ptr.vmem [resolvable:$true] %s7251
          %7257 = dma.vmem_to_hbm [thread:$0]  %s7252, 8192, %s7250, %s7237, 256, 256, 16
        $region36: #{tpu_custom_call.1} parent=31 // pred_fallthru
          _
      $region32: #{tpu_custom_call.1} parent=5 // pred_fallthru
        _
      %p7258 = scmp.le.s32.totalorder 2, %s12
      // Predicated region
      $region37: #{tpu_custom_call.1} parent=5 // pred_check
        %p7259 = pneg %p7258
      $region38: #{tpu_custom_call.1} parent=5 // pred_check_branch
        %7261 = sbr.rel (%p7259) target = $region40
      $region39: #{tpu_custom_call.1} parent=5 // pred_region
        %s7262 = ssub.s32 %s12, 2
        // Predicated region
        $region41: #{tpu_custom_call.1} parent=39 // pred_check
          %p7263 = pneg %p109
        $region42: #{tpu_custom_call.1} parent=39 // pred_check_branch
          %7265 = sbr.rel (%p7263) target = $region44
        $region43: #{tpu_custom_call.1} parent=39 // pred_region
          %s7266 = sand.u32 %s94, 1
          %s7267 = scalar_lea.sflag [#allocation3], %s7266
          %s7268 = sand.u32 %s94, 1
          %s7269 = smul.addr %s7268, 512
          %s7270 = scalar_lea.vmem [#allocation2], %s7269
          %7271 = dma.done %s7267, 8192
        $region44: #{tpu_custom_call.1} parent=39 // pred_fallthru
          _
      $region40: #{tpu_custom_call.1} parent=5 // pred_fallthru
        _
    $region6: #{tpu_custom_call.1} parent=1 // loop_footer
      %s16 = sadd.s32 1, %s12
    $region7: #{tpu_custom_call.1} parent=1 // loop_footer_branch
      %11 = sbr.rel target = $region3
    $region8: #{tpu_custom_call.1} parent=1 // loop_exit
      _
    %7272 = vsyncpa [#allocation3], 1
    %s7273 = scalar_lea.sflag [#allocation3], 1
    %7274 = vsyncpa %s7273, 1

</llo_original>
